<compile_context>
chip_gen: v6e
topology: v6e:2x2x1
jax: 0.10.0
libtpu: 0.0.40
codegen_flags: <defaults>
</compile_context>

<pallas_src>
import jax
import jax.numpy as jnp
from jax.experimental import pallas as pl
from jax.experimental.pallas import tpu as pltpu


# ---------------------------------------------------------------------------
# Fused Pallas kernel (one grid step = one batch element)
# ---------------------------------------------------------------------------
def _decoder_block_kernel(x1_ref, x2_ref, w1_ref, b1_ref, w2_ref, b2_ref,
                          o_ref, s_in, s_mid, col1, col2):
    # x1_ref : (1, H/2, W, C1)   decoder feature, width-upsampled only (bf16)
    # x2_ref : (1, H, W, C2)     skip connection (bf16)
    # w1_ref : (9*Cin, Cmid)     conv1 weights, BN1 scale folded in (bf16)
    # b1_ref : (1, Cmid)         folded BN1 bias (f32)
    # w2_ref : (9*Cmid, Cpad)    conv2 weights, BN2 folded, zero-padded (bf16)
    # b2_ref : (1, Cpad)         folded BN2 bias, zero-padded (f32)
    # o_ref  : (1, H*W, Cpad)    lane-dense output (f32)
    # s_in   : (H+2, W+2, Cin)   bf16 halo-padded conv1 input scratch
    # s_mid  : (H+2, W+2, Cmid)  bf16 halo-padded conv2 input scratch
    # col1   : (H*W, 9*Cin)      bf16 im2col scratch for conv1
    # col2   : (H*W, 9*Cmid)     bf16 im2col scratch for conv2
    Hp, Wp, c_in = s_in.shape
    H, W = Hp - 2, Wp - 2
    H2 = x1_ref.shape[1]
    c1 = x1_ref.shape[-1]
    c_mid = s_mid.shape[-1]

    # --- zero only the 1-pixel halo border (interior is rewritten below) ----
    def zero_halo(ref):
        hp, wp, c = ref.shape
        z_row = jnp.zeros((1, wp, c), ref.dtype)
        z_col = jnp.zeros((hp, 1, c), ref.dtype)
        ref[0:1, :, :] = z_row
        ref[hp - 1:hp, :, :] = z_row
        ref[:, 0:1, :] = z_col
        ref[:, wp - 1:wp, :] = z_col

    zero_halo(s_in)
    zero_halo(s_mid)

    # --- fused nearest-2x HEIGHT duplication + channel concat into s_in -----
    x1w = x1_ref[0]                                            # (H/2, W, C1)
    x1u = jnp.broadcast_to(x1w[:, None], (H2, 2, W, c1)).reshape(H, W, c1)
    s_in[1:H + 1, 1:W + 1, 0:c1] = x1u
    s_in[1:H + 1, 1:W + 1, c1:c_in] = x2_ref[0]

    def conv3x3_bias_relu(src_ref, col_ref, w_ref, b_ref, c):
        # im2col: write the 9 shifted taps straight into the preallocated bf16
        # scratch (no concat copy), then a single MXU matmul with contraction
        # depth 9*c and f32 accumulation.
        t = 0
        for dy in range(3):
            for dx in range(3):
                col_ref[:, t * c:(t + 1) * c] = (
                    src_ref[dy:dy + H, dx:dx + W, :].reshape(H * W, c))
                t += 1
        acc = jnp.dot(col_ref[...], w_ref[...],
                      preferred_element_type=jnp.float32)
        return jnp.maximum(acc + b_ref[...], 0.0)              # f32 epilogue

    # --- conv1 + BN1 + ReLU; intermediate stays in VMEM (bf16) --------------
    h1 = conv3x3_bias_relu(s_in, col1, w1_ref, b1_ref, c_in)   # (H*W, Cmid)
    s_mid[1:H + 1, 1:W + 1, :] = h1.reshape(H, W, c_mid).astype(s_mid.dtype)

    # --- conv2 + BN2 + ReLU -> lane-dense (Cpad=128k) HBM output ------------
    h2 = conv3x3_bias_relu(s_mid, col2, w2_ref, b2_ref, c_mid)  # (H*W, Cpad)
    o_ref[0] = h2.astype(o_ref.dtype)


# ---------------------------------------------------------------------------
# Parameters (deterministic synthetic init)
# ---------------------------------------------------------------------------
def init_decoder_block_params(key, cin, cadd, cout):
    c1_in = cin + cadd
    ks = jax.random.split(key, 4)

    def bn(k, c):
        kg, kb, km, kv = jax.random.split(k, 4)
        return dict(
            gamma=1.0 + 0.1 * jax.random.normal(kg, (c,), jnp.float32),
            beta=0.1 * jax.random.normal(kb, (c,), jnp.float32),
            mean=0.1 * jax.random.normal(km, (c,), jnp.float32),
            var=0.5 + jnp.abs(jax.random.normal(kv, (c,), jnp.float32)),
        )

    return dict(
        w1=0.1 * jax.random.normal(ks[0], (3, 3, c1_in, cout), jnp.float32),
        bn1=bn(ks[1], cout),
        w2=0.1 * jax.random.normal(ks[2], (3, 3, cout, cout), jnp.float32),
        bn2=bn(ks[3], cout),
        cin_total=c1_in,
    )


def _fold_bn(w_hwio, bn, eps=1e-5):
    scale = bn["gamma"] / jnp.sqrt(bn["var"] + eps)            # (Cout,)
    w = w_hwio * scale[None, None, None, :]
    b = bn["beta"] - bn["mean"] * scale
    return w, b


# ---------------------------------------------------------------------------
# DecoderBlock forward (matches the PyTorch module semantics, NCHW API)
# ---------------------------------------------------------------------------
def decoder_block_forward(params, x1_nchw, x2_nchw=None):
    x1 = jnp.transpose(x1_nchw, (0, 2, 3, 1))                  # NCHW -> NHWC (low-res)
    N, H2, W2, c1_full = x1.shape
    H, W = 2 * H2, 2 * W2

    c_in_total = params["cin_total"]
    c1_used = min(c1_full, c_in_total)
    c2_used = c_in_total - c1_used

    w1, b1 = _fold_bn(params["w1"], params["bn1"])
    w2, b2 = _fold_bn(params["w2"], params["bn2"])
    c_mid = w1.shape[-1]
    c_out = w2.shape[-1]

    # Width-only nearest 2x on the LOW-RES tensor (height duplication is done
    # inside the kernel), then ship to the kernel in bf16.
    x1_k = jnp.repeat(x1[..., :c1_used], 2, axis=2).astype(jnp.bfloat16)

    if c2_used > 0:
        if x2_nchw is None:
            raise ValueError("x2 is required when cin_total > x1 channels")
        x2 = jnp.transpose(x2_nchw, (0, 2, 3, 1))[..., :c2_used]
    else:
        # degenerate path (no skip needed): one dummy zero channel + matching
        # zero weight rows so the kernel signature stays fixed.
        x2 = jnp.zeros((N, H, W, 1), jnp.float32)
        w1 = jnp.concatenate([w1, jnp.zeros((3, 3, 1, c_mid), w1.dtype)],
                             axis=2)
    x2_k = x2.astype(jnp.bfloat16)
    c2_k = x2_k.shape[-1]
    c_in_k = c1_used + c2_k

    # Zero-pad conv2's output channels to a multiple of 128 so the kernel's
    # output store is lane-dense (unmasked vst); padding is sliced off below.
    c_pad = ((c_out + 127) // 128) * 128
    w2p = jnp.zeros((3, 3, c_mid, c_pad), w2.dtype).at[..., :c_out].set(w2)
    b2p = jnp.zeros((c_pad,), jnp.float32).at[:c_out].set(b2)

    w1_k = w1.reshape(9 * c_in_k, c_mid).astype(jnp.bfloat16)
    w2_k = w2p.reshape(9 * c_mid, c_pad).astype(jnp.bfloat16)
    b1_k = b1.reshape(1, c_mid).astype(jnp.float32)
    b2_k = b2p.reshape(1, c_pad)

    out = pl.pallas_call(
        _decoder_block_kernel,
        out_shape=jax.ShapeDtypeStruct((N, H * W, c_pad), jnp.float32),
        grid=(N,),
        in_specs=[
            pl.BlockSpec((1, H2, W, c1_used), lambda n: (n, 0, 0, 0)),
            pl.BlockSpec((1, H, W, c2_k), lambda n: (n, 0, 0, 0)),
            pl.BlockSpec((9 * c_in_k, c_mid), lambda n: (0, 0)),
            pl.BlockSpec((1, c_mid), lambda n: (0, 0)),
            pl.BlockSpec((9 * c_mid, c_pad), lambda n: (0, 0)),
            pl.BlockSpec((1, c_pad), lambda n: (0, 0)),
        ],
        out_specs=pl.BlockSpec((1, H * W, c_pad), lambda n: (n, 0, 0)),
        scratch_shapes=[
            pltpu.VMEM((H + 2, W + 2, c_in_k), jnp.bfloat16),
            pltpu.VMEM((H + 2, W + 2, c_mid), jnp.bfloat16),
            pltpu.VMEM((H * W, 9 * c_in_k), jnp.bfloat16),
            pltpu.VMEM((H * W, 9 * c_mid), jnp.bfloat16),
        ],
        compiler_params=pltpu.CompilerParams(
            dimension_semantics=("parallel",),
            vmem_limit_bytes=48 * 1024 * 1024),   # fits v7x (64 MiB) guidance
    )(x1_k, x2_k, w1_k, b1_k, w2_k, b2_k)

    # slice lane padding off; XLA fuses this with the NHWC->NCHW transpose.
    y = out[..., :c_out].reshape(N, H, W, c_out)
    return jnp.transpose(y, (0, 3, 1, 2))                      # back to NCHW


# ---------------------------------------------------------------------------
# Pure-JAX f32 reference (for correctness check)
# ---------------------------------------------------------------------------
def _ref_conv_bn_relu(x_nhwc, w, bn, eps=1e-5):
    y = jax.lax.conv_general_dilated(
        x_nhwc, w, window_strides=(1, 1), padding="SAME",
        dimension_numbers=("NHWC", "HWIO", "NHWC"))
    scale = bn["gamma"] / jnp.sqrt(bn["var"] + eps)
    return jnp.maximum(y * scale + (bn["beta"] - bn["mean"] * scale), 0.0)


def _ref_forward(params, x1_nchw, x2_nchw):
    x1 = jnp.transpose(x1_nchw, (0, 2, 3, 1))
    x1 = jnp.repeat(jnp.repeat(x1, 2, axis=1), 2, axis=2)
    x2 = jnp.transpose(x2_nchw, (0, 2, 3, 1))
    x1 = jnp.concatenate([x1, x2], axis=-1)[..., :params["cin_total"]]
    y = _ref_conv_bn_relu(x1, params["w1"], params["bn1"])
    y = _ref_conv_bn_relu(y, params["w2"], params["bn2"])
    return jnp.transpose(y, (0, 3, 1, 2))


if __name__ == "__main__":
    cin, cadd, cout = 4, 4, 8
    key = jax.random.PRNGKey(0)
    kp, k1, k2 = jax.random.split(key, 3)

    params = init_decoder_block_params(kp, cin, cadd, cout)

    # x1: low-res decoder feature (NCHW), x2: skip connection (NCHW)
    x1 = jax.random.normal(k1, (2, cin, 8, 8), jnp.float32)
    x2 = jax.random.normal(k2, (2, cadd, 16, 16), jnp.float32)

    out = decoder_block_forward(params, x1, x2)
    out = jax.block_until_ready(out)
    assert out.shape == (2, cout, 16, 16), out.shape

    ref = jax.block_until_ready(_ref_forward(params, x1, x2))
    # bf16 matmul inputs with f32 accumulation -> loosened tolerance vs f32 ref.
    assert jnp.allclose(out, ref, atol=5e-2, rtol=5e-2), \
        float(jnp.max(jnp.abs(out - ref)))

    print("KERNEL_OK")
</pallas_src>

<mosaic_0001>
module attributes {stable_mosaic.version = 11 : i64} {
  func.func @_decoder_block_kernel(%arg0: i32, %arg1: memref<1x8x16x4xbf16, #tpu.memory_space<vmem>>, %arg2: memref<1x16x16x4xbf16, #tpu.memory_space<vmem>>, %arg3: memref<72x8xbf16, #tpu.memory_space<vmem>>, %arg4: memref<1x8xf32, #tpu.memory_space<vmem>>, %arg5: memref<72x128xbf16, #tpu.memory_space<vmem>>, %arg6: memref<1x128xf32, #tpu.memory_space<vmem>>, %arg7: memref<1x256x128xf32, #tpu.memory_space<vmem>>, %arg8: memref<18x18x8xbf16, #tpu.memory_space<vmem>>, %arg9: memref<18x18x8xbf16, #tpu.memory_space<vmem>>, %arg10: memref<256x72xbf16, #tpu.memory_space<vmem>>, %arg11: memref<256x72xbf16, #tpu.memory_space<vmem>>) attributes {dimension_semantics = [#tpu.dimension_semantics<parallel>], iteration_bounds = array<i64: 2>, scalar_prefetch = 0 : i64, scratch_operands = 4 : i64, tpu.core_type = #tpu.core_type<tc>, window_params = [{transform_indices = @transform_0, window_bounds = array<i64: 1, 8, 16, 4>}, {transform_indices = @transform_1, window_bounds = array<i64: 1, 16, 16, 4>}, {pipeline_mode = #tpu.pipeline_mode<synchronous>, transform_indices = @transform_2, window_bounds = array<i64: 72, 8>}, {pipeline_mode = #tpu.pipeline_mode<synchronous>, transform_indices = @transform_3, window_bounds = array<i64: 1, 8>}, {pipeline_mode = #tpu.pipeline_mode<synchronous>, transform_indices = @transform_4, window_bounds = array<i64: 72, 128>}, {pipeline_mode = #tpu.pipeline_mode<synchronous>, transform_indices = @transform_5, window_bounds = array<i64: 1, 128>}, {transform_indices = @transform_6, window_bounds = array<i64: 1, 256, 128>}]} {
    %cst = arith.constant 0.000000e+00 : bf16
    %0 = vector.broadcast %cst : bf16 to vector<1x18x8xbf16>
    %cst_0 = arith.constant 0.000000e+00 : bf16
    %1 = vector.broadcast %cst_0 : bf16 to vector<18x1x8xbf16>
    %c0 = arith.constant 0 : index
    %c0_1 = arith.constant 0 : index
    %c0_2 = arith.constant 0 : index
    %2 = vector.load %arg8[%c0, %c0_1, %c0_2] : memref<18x18x8xbf16, #tpu.memory_space<vmem>>, vector<1x18x8xbf16>
    tpu.vector_store %arg8[%c0, %c0_1, %c0_2], %0 {strides = array<i32>} : memref<18x18x8xbf16, #tpu.memory_space<vmem>>, vector<1x18x8xbf16>,
    %c17 = arith.constant 17 : index
    %c0_3 = arith.constant 0 : index
    %c0_4 = arith.constant 0 : index
    %3 = vector.load %arg8[%c17, %c0_3, %c0_4] : memref<18x18x8xbf16, #tpu.memory_space<vmem>>, vector<1x18x8xbf16>
    tpu.vector_store %arg8[%c17, %c0_3, %c0_4], %0 {strides = array<i32>} : memref<18x18x8xbf16, #tpu.memory_space<vmem>>, vector<1x18x8xbf16>,
    %c0_5 = arith.constant 0 : index
    %c0_6 = arith.constant 0 : index
    %c0_7 = arith.constant 0 : index
    %4 = vector.load %arg8[%c0_5, %c0_6, %c0_7] : memref<18x18x8xbf16, #tpu.memory_space<vmem>>, vector<18x1x8xbf16>
    tpu.vector_store %arg8[%c0_5, %c0_6, %c0_7], %1 {strides = array<i32>} : memref<18x18x8xbf16, #tpu.memory_space<vmem>>, vector<18x1x8xbf16>,
    %c0_8 = arith.constant 0 : index
    %c17_9 = arith.constant 17 : index
    %c0_10 = arith.constant 0 : index
    %5 = vector.load %arg8[%c0_8, %c17_9, %c0_10] : memref<18x18x8xbf16, #tpu.memory_space<vmem>>, vector<18x1x8xbf16>
    tpu.vector_store %arg8[%c0_8, %c17_9, %c0_10], %1 {strides = array<i32>} : memref<18x18x8xbf16, #tpu.memory_space<vmem>>, vector<18x1x8xbf16>,
    %cst_11 = arith.constant 0.000000e+00 : bf16
    %6 = vector.broadcast %cst_11 : bf16 to vector<1x18x8xbf16>
    %cst_12 = arith.constant 0.000000e+00 : bf16
    %7 = vector.broadcast %cst_12 : bf16 to vector<18x1x8xbf16>
    %c0_13 = arith.constant 0 : index
    %c0_14 = arith.constant 0 : index
    %c0_15 = arith.constant 0 : index
    %8 = vector.load %arg9[%c0_13, %c0_14, %c0_15] : memref<18x18x8xbf16, #tpu.memory_space<vmem>>, vector<1x18x8xbf16>
    tpu.vector_store %arg9[%c0_13, %c0_14, %c0_15], %6 {strides = array<i32>} : memref<18x18x8xbf16, #tpu.memory_space<vmem>>, vector<1x18x8xbf16>,
    %c17_16 = arith.constant 17 : index
    %c0_17 = arith.constant 0 : index
    %c0_18 = arith.constant 0 : index
    %9 = vector.load %arg9[%c17_16, %c0_17, %c0_18] : memref<18x18x8xbf16, #tpu.memory_space<vmem>>, vector<1x18x8xbf16>
    tpu.vector_store %arg9[%c17_16, %c0_17, %c0_18], %6 {strides = array<i32>} : memref<18x18x8xbf16, #tpu.memory_space<vmem>>, vector<1x18x8xbf16>,
    %c0_19 = arith.constant 0 : index
    %c0_20 = arith.constant 0 : index
    %c0_21 = arith.constant 0 : index
    %10 = vector.load %arg9[%c0_19, %c0_20, %c0_21] : memref<18x18x8xbf16, #tpu.memory_space<vmem>>, vector<18x1x8xbf16>
    tpu.vector_store %arg9[%c0_19, %c0_20, %c0_21], %7 {strides = array<i32>} : memref<18x18x8xbf16, #tpu.memory_space<vmem>>, vector<18x1x8xbf16>,
    %c0_22 = arith.constant 0 : index
    %c17_23 = arith.constant 17 : index
    %c0_24 = arith.constant 0 : index
    %11 = vector.load %arg9[%c0_22, %c17_23, %c0_24] : memref<18x18x8xbf16, #tpu.memory_space<vmem>>, vector<18x1x8xbf16>
    tpu.vector_store %arg9[%c0_22, %c17_23, %c0_24], %7 {strides = array<i32>} : memref<18x18x8xbf16, #tpu.memory_space<vmem>>, vector<18x1x8xbf16>,
    %c0_25 = arith.constant 0 : index
    %c0_26 = arith.constant 0 : index
    %c0_27 = arith.constant 0 : index
    %c0_28 = arith.constant 0 : index
    %12 = vector.load %arg1[%c0_25, %c0_26, %c0_27, %c0_28] : memref<1x8x16x4xbf16, #tpu.memory_space<vmem>>, vector<1x8x16x4xbf16>
    %13 = vector.shape_cast %12 : vector<1x8x16x4xbf16> to vector<8x16x4xbf16>
    %14 = vector.shape_cast %13 : vector<8x16x4xbf16> to vector<8x1x16x4xbf16>
    %15 = vector.shape_cast %14 : vector<8x1x16x4xbf16> to vector<8x1x16x4xbf16>
    %16 = vector.broadcast %15 : vector<8x1x16x4xbf16> to vector<8x2x16x4xbf16>
    %17 = vector.shape_cast %16 : vector<8x2x16x4xbf16> to vector<16x16x4xbf16>
    %c1 = arith.constant 1 : index
    %c1_29 = arith.constant 1 : index
    %c0_30 = arith.constant 0 : index
    %18 = vector.load %arg8[%c1, %c1_29, %c0_30] : memref<18x18x8xbf16, #tpu.memory_space<vmem>>, vector<16x16x4xbf16>
    tpu.vector_store %arg8[%c1, %c1_29, %c0_30], %17 {strides = array<i32>} : memref<18x18x8xbf16, #tpu.memory_space<vmem>>, vector<16x16x4xbf16>,
    %c0_31 = arith.constant 0 : index
    %c0_32 = arith.constant 0 : index
    %c0_33 = arith.constant 0 : index
    %c0_34 = arith.constant 0 : index
    %19 = vector.load %arg2[%c0_31, %c0_32, %c0_33, %c0_34] : memref<1x16x16x4xbf16, #tpu.memory_space<vmem>>, vector<1x16x16x4xbf16>
    %20 = vector.shape_cast %19 : vector<1x16x16x4xbf16> to vector<16x16x4xbf16>
    %c1_35 = arith.constant 1 : index
    %c1_36 = arith.constant 1 : index
    %c4 = arith.constant 4 : index
    %21 = vector.load %arg8[%c1_35, %c1_36, %c4] : memref<18x18x8xbf16, #tpu.memory_space<vmem>>, vector<16x16x4xbf16>
    tpu.vector_store %arg8[%c1_35, %c1_36, %c4], %20 {strides = array<i32>} : memref<18x18x8xbf16, #tpu.memory_space<vmem>>, vector<16x16x4xbf16>,
    %c0_37 = arith.constant 0 : index
    %c0_38 = arith.constant 0 : index
    %c0_39 = arith.constant 0 : index
    %22 = vector.load %arg8[%c0_37, %c0_38, %c0_39] : memref<18x18x8xbf16, #tpu.memory_space<vmem>>, vector<16x16x8xbf16>
    %23 = vector.shape_cast %22 : vector<16x16x8xbf16> to vector<256x8xbf16>
    %c0_40 = arith.constant 0 : index
    %c0_41 = arith.constant 0 : index
    %24 = vector.load %arg10[%c0_40, %c0_41] : memref<256x72xbf16, #tpu.memory_space<vmem>>, vector<256x8xbf16>
    tpu.vector_store %arg10[%c0_40, %c0_41], %23 {strides = array<i32>} : memref<256x72xbf16, #tpu.memory_space<vmem>>, vector<256x8xbf16>,
    %c0_42 = arith.constant 0 : index
    %c1_43 = arith.constant 1 : index
    %c0_44 = arith.constant 0 : index
    %25 = vector.load %arg8[%c0_42, %c1_43, %c0_44] : memref<18x18x8xbf16, #tpu.memory_space<vmem>>, vector<16x16x8xbf16>
    %26 = vector.shape_cast %25 : vector<16x16x8xbf16> to vector<256x8xbf16>
    %c0_45 = arith.constant 0 : index
    %c8 = arith.constant 8 : index
    %27 = vector.load %arg10[%c0_45, %c8] : memref<256x72xbf16, #tpu.memory_space<vmem>>, vector<256x8xbf16>
    tpu.vector_store %arg10[%c0_45, %c8], %26 {strides = array<i32>} : memref<256x72xbf16, #tpu.memory_space<vmem>>, vector<256x8xbf16>,
    %c0_46 = arith.constant 0 : index
    %c2 = arith.constant 2 : index
    %c0_47 = arith.constant 0 : index
    %28 = vector.load %arg8[%c0_46, %c2, %c0_47] : memref<18x18x8xbf16, #tpu.memory_space<vmem>>, vector<16x16x8xbf16>
    %29 = vector.shape_cast %28 : vector<16x16x8xbf16> to vector<256x8xbf16>
    %c0_48 = arith.constant 0 : index
    %c16 = arith.constant 16 : index
    %30 = vector.load %arg10[%c0_48, %c16] : memref<256x72xbf16, #tpu.memory_space<vmem>>, vector<256x8xbf16>
    tpu.vector_store %arg10[%c0_48, %c16], %29 {strides = array<i32>} : memref<256x72xbf16, #tpu.memory_space<vmem>>, vector<256x8xbf16>,
    %c1_49 = arith.constant 1 : index
    %c0_50 = arith.constant 0 : index
    %c0_51 = arith.constant 0 : index
    %31 = vector.load %arg8[%c1_49, %c0_50, %c0_51] : memref<18x18x8xbf16, #tpu.memory_space<vmem>>, vector<16x16x8xbf16>
    %32 = vector.shape_cast %31 : vector<16x16x8xbf16> to vector<256x8xbf16>
    %c0_52 = arith.constant 0 : index
    %c24 = arith.constant 24 : index
    %33 = vector.load %arg10[%c0_52, %c24] : memref<256x72xbf16, #tpu.memory_space<vmem>>, vector<256x8xbf16>
    tpu.vector_store %arg10[%c0_52, %c24], %32 {strides = array<i32>} : memref<256x72xbf16, #tpu.memory_space<vmem>>, vector<256x8xbf16>,
    %c1_53 = arith.constant 1 : index
    %c1_54 = arith.constant 1 : index
    %c0_55 = arith.constant 0 : index
    %34 = vector.load %arg8[%c1_53, %c1_54, %c0_55] : memref<18x18x8xbf16, #tpu.memory_space<vmem>>, vector<16x16x8xbf16>
    %35 = vector.shape_cast %34 : vector<16x16x8xbf16> to vector<256x8xbf16>
    %c0_56 = arith.constant 0 : index
    %c32 = arith.constant 32 : index
    %36 = vector.load %arg10[%c0_56, %c32] : memref<256x72xbf16, #tpu.memory_space<vmem>>, vector<256x8xbf16>
    tpu.vector_store %arg10[%c0_56, %c32], %35 {strides = array<i32>} : memref<256x72xbf16, #tpu.memory_space<vmem>>, vector<256x8xbf16>,
    %c1_57 = arith.constant 1 : index
    %c2_58 = arith.constant 2 : index
    %c0_59 = arith.constant 0 : index
    %37 = vector.load %arg8[%c1_57, %c2_58, %c0_59] : memref<18x18x8xbf16, #tpu.memory_space<vmem>>, vector<16x16x8xbf16>
    %38 = vector.shape_cast %37 : vector<16x16x8xbf16> to vector<256x8xbf16>
    %c0_60 = arith.constant 0 : index
    %c40 = arith.constant 40 : index
    %39 = vector.load %arg10[%c0_60, %c40] : memref<256x72xbf16, #tpu.memory_space<vmem>>, vector<256x8xbf16>
    tpu.vector_store %arg10[%c0_60, %c40], %38 {strides = array<i32>} : memref<256x72xbf16, #tpu.memory_space<vmem>>, vector<256x8xbf16>,
    %c2_61 = arith.constant 2 : index
    %c0_62 = arith.constant 0 : index
    %c0_63 = arith.constant 0 : index
    %40 = vector.load %arg8[%c2_61, %c0_62, %c0_63] : memref<18x18x8xbf16, #tpu.memory_space<vmem>>, vector<16x16x8xbf16>
    %41 = vector.shape_cast %40 : vector<16x16x8xbf16> to vector<256x8xbf16>
    %c0_64 = arith.constant 0 : index
    %c48 = arith.constant 48 : index
    %42 = vector.load %arg10[%c0_64, %c48] : memref<256x72xbf16, #tpu.memory_space<vmem>>, vector<256x8xbf16>
    tpu.vector_store %arg10[%c0_64, %c48], %41 {strides = array<i32>} : memref<256x72xbf16, #tpu.memory_space<vmem>>, vector<256x8xbf16>,
    %c2_65 = arith.constant 2 : index
    %c1_66 = arith.constant 1 : index
    %c0_67 = arith.constant 0 : index
    %43 = vector.load %arg8[%c2_65, %c1_66, %c0_67] : memref<18x18x8xbf16, #tpu.memory_space<vmem>>, vector<16x16x8xbf16>
    %44 = vector.shape_cast %43 : vector<16x16x8xbf16> to vector<256x8xbf16>
    %c0_68 = arith.constant 0 : index
    %c56 = arith.constant 56 : index
    %45 = vector.load %arg10[%c0_68, %c56] : memref<256x72xbf16, #tpu.memory_space<vmem>>, vector<256x8xbf16>
    tpu.vector_store %arg10[%c0_68, %c56], %44 {strides = array<i32>} : memref<256x72xbf16, #tpu.memory_space<vmem>>, vector<256x8xbf16>,
    %c2_69 = arith.constant 2 : index
    %c2_70 = arith.constant 2 : index
    %c0_71 = arith.constant 0 : index
    %46 = vector.load %arg8[%c2_69, %c2_70, %c0_71] : memref<18x18x8xbf16, #tpu.memory_space<vmem>>, vector<16x16x8xbf16>
    %47 = vector.shape_cast %46 : vector<16x16x8xbf16> to vector<256x8xbf16>
    %c0_72 = arith.constant 0 : index
    %c64 = arith.constant 64 : index
    %48 = vector.load %arg10[%c0_72, %c64] : memref<256x72xbf16, #tpu.memory_space<vmem>>, vector<256x8xbf16>
    tpu.vector_store %arg10[%c0_72, %c64], %47 {strides = array<i32>} : memref<256x72xbf16, #tpu.memory_space<vmem>>, vector<256x8xbf16>,
    %c0_73 = arith.constant 0 : index
    %c0_74 = arith.constant 0 : index
    %49 = vector.load %arg10[%c0_73, %c0_74] : memref<256x72xbf16, #tpu.memory_space<vmem>>, vector<256x72xbf16>
    %c0_75 = arith.constant 0 : index
    %c0_76 = arith.constant 0 : index
    %50 = vector.load %arg3[%c0_75, %c0_76] : memref<72x8xbf16, #tpu.memory_space<vmem>>, vector<72x8xbf16>
    %cst_77 = arith.constant dense<0.000000e+00> : vector<256x8xf32>
    %51 = tpu.matmul %49, %50, %cst_77 {dimension_numbers = #tpu.dot_dimension_numbers<[1], [0], [0], [1], [0, 0, 1, 1], [], []>} : vector<256x72xbf16>, vector<72x8xbf16>, vector<256x8xf32> -> vector<256x8xf32>
    %c0_78 = arith.constant 0 : index
    %c0_79 = arith.constant 0 : index
    %52 = vector.load %arg4[%c0_78, %c0_79] : memref<1x8xf32, #tpu.memory_space<vmem>>, vector<1x8xf32>
    %53 = vector.broadcast %52 : vector<1x8xf32> to vector<256x8xf32>
    %54 = arith.addf %51, %53 : vector<256x8xf32>
    %cst_80 = arith.constant 0.000000e+00 : f32
    %55 = vector.broadcast %cst_80 : f32 to vector<256x8xf32>
    %56 = arith.maximumf %54, %55 : vector<256x8xf32>
    %57 = vector.shape_cast %56 : vector<256x8xf32> to vector<16x16x8xf32>
    %58 = arith.truncf %57 : vector<16x16x8xf32> to vector<16x16x8xbf16>
    %c1_81 = arith.constant 1 : index
    %c1_82 = arith.constant 1 : index
    %c0_83 = arith.constant 0 : index
    %59 = vector.load %arg9[%c1_81, %c1_82, %c0_83] : memref<18x18x8xbf16, #tpu.memory_space<vmem>>, vector<16x16x8xbf16>
    tpu.vector_store %arg9[%c1_81, %c1_82, %c0_83], %58 {strides = array<i32>} : memref<18x18x8xbf16, #tpu.memory_space<vmem>>, vector<16x16x8xbf16>,
    %c0_84 = arith.constant 0 : index
    %c0_85 = arith.constant 0 : index
    %c0_86 = arith.constant 0 : index
    %60 = vector.load %arg9[%c0_84, %c0_85, %c0_86] : memref<18x18x8xbf16, #tpu.memory_space<vmem>>, vector<16x16x8xbf16>
    %61 = vector.shape_cast %60 : vector<16x16x8xbf16> to vector<256x8xbf16>
    %c0_87 = arith.constant 0 : index
    %c0_88 = arith.constant 0 : index
    %62 = vector.load %arg11[%c0_87, %c0_88] : memref<256x72xbf16, #tpu.memory_space<vmem>>, vector<256x8xbf16>
    tpu.vector_store %arg11[%c0_87, %c0_88], %61 {strides = array<i32>} : memref<256x72xbf16, #tpu.memory_space<vmem>>, vector<256x8xbf16>,
    %c0_89 = arith.constant 0 : index
    %c1_90 = arith.constant 1 : index
    %c0_91 = arith.constant 0 : index
    %63 = vector.load %arg9[%c0_89, %c1_90, %c0_91] : memref<18x18x8xbf16, #tpu.memory_space<vmem>>, vector<16x16x8xbf16>
    %64 = vector.shape_cast %63 : vector<16x16x8xbf16> to vector<256x8xbf16>
    %c0_92 = arith.constant 0 : index
    %c8_93 = arith.constant 8 : index
    %65 = vector.load %arg11[%c0_92, %c8_93] : memref<256x72xbf16, #tpu.memory_space<vmem>>, vector<256x8xbf16>
    tpu.vector_store %arg11[%c0_92, %c8_93], %64 {strides = array<i32>} : memref<256x72xbf16, #tpu.memory_space<vmem>>, vector<256x8xbf16>,
    %c0_94 = arith.constant 0 : index
    %c2_95 = arith.constant 2 : index
    %c0_96 = arith.constant 0 : index
    %66 = vector.load %arg9[%c0_94, %c2_95, %c0_96] : memref<18x18x8xbf16, #tpu.memory_space<vmem>>, vector<16x16x8xbf16>
    %67 = vector.shape_cast %66 : vector<16x16x8xbf16> to vector<256x8xbf16>
    %c0_97 = arith.constant 0 : index
    %c16_98 = arith.constant 16 : index
    %68 = vector.load %arg11[%c0_97, %c16_98] : memref<256x72xbf16, #tpu.memory_space<vmem>>, vector<256x8xbf16>
    tpu.vector_store %arg11[%c0_97, %c16_98], %67 {strides = array<i32>} : memref<256x72xbf16, #tpu.memory_space<vmem>>, vector<256x8xbf16>,
    %c1_99 = arith.constant 1 : index
    %c0_100 = arith.constant 0 : index
    %c0_101 = arith.constant 0 : index
    %69 = vector.load %arg9[%c1_99, %c0_100, %c0_101] : memref<18x18x8xbf16, #tpu.memory_space<vmem>>, vector<16x16x8xbf16>
    %70 = vector.shape_cast %69 : vector<16x16x8xbf16> to vector<256x8xbf16>
    %c0_102 = arith.constant 0 : index
    %c24_103 = arith.constant 24 : index
    %71 = vector.load %arg11[%c0_102, %c24_103] : memref<256x72xbf16, #tpu.memory_space<vmem>>, vector<256x8xbf16>
    tpu.vector_store %arg11[%c0_102, %c24_103], %70 {strides = array<i32>} : memref<256x72xbf16, #tpu.memory_space<vmem>>, vector<256x8xbf16>,
    %c1_104 = arith.constant 1 : index
    %c1_105 = arith.constant 1 : index
    %c0_106 = arith.constant 0 : index
    %72 = vector.load %arg9[%c1_104, %c1_105, %c0_106] : memref<18x18x8xbf16, #tpu.memory_space<vmem>>, vector<16x16x8xbf16>
    %73 = vector.shape_cast %72 : vector<16x16x8xbf16> to vector<256x8xbf16>
    %c0_107 = arith.constant 0 : index
    %c32_108 = arith.constant 32 : index
    %74 = vector.load %arg11[%c0_107, %c32_108] : memref<256x72xbf16, #tpu.memory_space<vmem>>, vector<256x8xbf16>
    tpu.vector_store %arg11[%c0_107, %c32_108], %73 {strides = array<i32>} : memref<256x72xbf16, #tpu.memory_space<vmem>>, vector<256x8xbf16>,
    %c1_109 = arith.constant 1 : index
    %c2_110 = arith.constant 2 : index
    %c0_111 = arith.constant 0 : index
    %75 = vector.load %arg9[%c1_109, %c2_110, %c0_111] : memref<18x18x8xbf16, #tpu.memory_space<vmem>>, vector<16x16x8xbf16>
    %76 = vector.shape_cast %75 : vector<16x16x8xbf16> to vector<256x8xbf16>
    %c0_112 = arith.constant 0 : index
    %c40_113 = arith.constant 40 : index
    %77 = vector.load %arg11[%c0_112, %c40_113] : memref<256x72xbf16, #tpu.memory_space<vmem>>, vector<256x8xbf16>
    tpu.vector_store %arg11[%c0_112, %c40_113], %76 {strides = array<i32>} : memref<256x72xbf16, #tpu.memory_space<vmem>>, vector<256x8xbf16>,
    %c2_114 = arith.constant 2 : index
    %c0_115 = arith.constant 0 : index
    %c0_116 = arith.constant 0 : index
    %78 = vector.load %arg9[%c2_114, %c0_115, %c0_116] : memref<18x18x8xbf16, #tpu.memory_space<vmem>>, vector<16x16x8xbf16>
    %79 = vector.shape_cast %78 : vector<16x16x8xbf16> to vector<256x8xbf16>
    %c0_117 = arith.constant 0 : index
    %c48_118 = arith.constant 48 : index
    %80 = vector.load %arg11[%c0_117, %c48_118] : memref<256x72xbf16, #tpu.memory_space<vmem>>, vector<256x8xbf16>
    tpu.vector_store %arg11[%c0_117, %c48_118], %79 {strides = array<i32>} : memref<256x72xbf16, #tpu.memory_space<vmem>>, vector<256x8xbf16>,
    %c2_119 = arith.constant 2 : index
    %c1_120 = arith.constant 1 : index
    %c0_121 = arith.constant 0 : index
    %81 = vector.load %arg9[%c2_119, %c1_120, %c0_121] : memref<18x18x8xbf16, #tpu.memory_space<vmem>>, vector<16x16x8xbf16>
    %82 = vector.shape_cast %81 : vector<16x16x8xbf16> to vector<256x8xbf16>
    %c0_122 = arith.constant 0 : index
    %c56_123 = arith.constant 56 : index
    %83 = vector.load %arg11[%c0_122, %c56_123] : memref<256x72xbf16, #tpu.memory_space<vmem>>, vector<256x8xbf16>
    tpu.vector_store %arg11[%c0_122, %c56_123], %82 {strides = array<i32>} : memref<256x72xbf16, #tpu.memory_space<vmem>>, vector<256x8xbf16>,
    %c2_124 = arith.constant 2 : index
    %c2_125 = arith.constant 2 : index
    %c0_126 = arith.constant 0 : index
    %84 = vector.load %arg9[%c2_124, %c2_125, %c0_126] : memref<18x18x8xbf16, #tpu.memory_space<vmem>>, vector<16x16x8xbf16>
    %85 = vector.shape_cast %84 : vector<16x16x8xbf16> to vector<256x8xbf16>
    %c0_127 = arith.constant 0 : index
    %c64_128 = arith.constant 64 : index
    %86 = vector.load %arg11[%c0_127, %c64_128] : memref<256x72xbf16, #tpu.memory_space<vmem>>, vector<256x8xbf16>
    tpu.vector_store %arg11[%c0_127, %c64_128], %85 {strides = array<i32>} : memref<256x72xbf16, #tpu.memory_space<vmem>>, vector<256x8xbf16>,
    %c0_129 = arith.constant 0 : index
    %c0_130 = arith.constant 0 : index
    %87 = vector.load %arg11[%c0_129, %c0_130] : memref<256x72xbf16, #tpu.memory_space<vmem>>, vector<256x72xbf16>
    %c0_131 = arith.constant 0 : index
    %c0_132 = arith.constant 0 : index
    %88 = vector.load %arg5[%c0_131, %c0_132] : memref<72x128xbf16, #tpu.memory_space<vmem>>, vector<72x128xbf16>
    %cst_133 = arith.constant dense<0.000000e+00> : vector<256x128xf32>
    %89 = tpu.matmul %87, %88, %cst_133 {dimension_numbers = #tpu.dot_dimension_numbers<[1], [0], [0], [1], [0, 0, 1, 1], [], []>} : vector<256x72xbf16>, vector<72x128xbf16>, vector<256x128xf32> -> vector<256x128xf32>
    %c0_134 = arith.constant 0 : index
    %c0_135 = arith.constant 0 : index
    %90 = vector.load %arg6[%c0_134, %c0_135] : memref<1x128xf32, #tpu.memory_space<vmem>>, vector<1x128xf32>
    %91 = vector.broadcast %90 : vector<1x128xf32> to vector<256x128xf32>
    %92 = arith.addf %89, %91 : vector<256x128xf32>
    %cst_136 = arith.constant 0.000000e+00 : f32
    %93 = vector.broadcast %cst_136 : f32 to vector<256x128xf32>
    %94 = arith.maximumf %92, %93 : vector<256x128xf32>
    %c0_137 = arith.constant 0 : index
    %c0_138 = arith.constant 0 : index
    %c0_139 = arith.constant 0 : index
    %95 = vector.load %arg7[%c0_137, %c0_138, %c0_139] : memref<1x256x128xf32, #tpu.memory_space<vmem>>, vector<1x256x128xf32>
    %96 = vector.shape_cast %95 : vector<1x256x128xf32> to vector<256x128xf32>
    %97 = vector.shape_cast %94 : vector<256x128xf32> to vector<1x256x128xf32>
    tpu.vector_store %arg7[%c0_137, %c0_138, %c0_139], %97 {strides = array<i32>} : memref<1x256x128xf32, #tpu.memory_space<vmem>>, vector<1x256x128xf32>,
    return
  }
  func.func @transform_0(%arg0: i32) -> (i32, i32, i32, i32) {
    %c0_i32 = arith.constant 0 : i32
    %c0_i32_0 = arith.constant 0 : i32
    %c0_i32_1 = arith.constant 0 : i32
    %c0_i32_2 = arith.constant 0 : i32
    return %arg0, %c0_i32, %c0_i32_0, %c0_i32_1 : i32, i32, i32, i32
  }
  func.func @transform_1(%arg0: i32) -> (i32, i32, i32, i32) {
    %c0_i32 = arith.constant 0 : i32
    %c0_i32_0 = arith.constant 0 : i32
    %c0_i32_1 = arith.constant 0 : i32
    %c0_i32_2 = arith.constant 0 : i32
    return %arg0, %c0_i32, %c0_i32_0, %c0_i32_1 : i32, i32, i32, i32
  }
  func.func @transform_2(%arg0: i32) -> (i32, i32) {
    %c0_i32 = arith.constant 0 : i32
    %c0_i32_0 = arith.constant 0 : i32
    %c0_i32_1 = arith.constant 0 : i32
    return %c0_i32, %c0_i32_0 : i32, i32
  }
  func.func @transform_3(%arg0: i32) -> (i32, i32) {
    %c0_i32 = arith.constant 0 : i32
    %c0_i32_0 = arith.constant 0 : i32
    %c0_i32_1 = arith.constant 0 : i32
    return %c0_i32, %c0_i32_0 : i32, i32
  }
  func.func @transform_4(%arg0: i32) -> (i32, i32) {
    %c0_i32 = arith.constant 0 : i32
    %c0_i32_0 = arith.constant 0 : i32
    %c0_i32_1 = arith.constant 0 : i32
    return %c0_i32, %c0_i32_0 : i32, i32
  }
  func.func @transform_5(%arg0: i32) -> (i32, i32) {
    %c0_i32 = arith.constant 0 : i32
    %c0_i32_0 = arith.constant 0 : i32
    %c0_i32_1 = arith.constant 0 : i32
    return %c0_i32, %c0_i32_0 : i32, i32
  }
  func.func @transform_6(%arg0: i32) -> (i32, i32, i32) {
    %c0_i32 = arith.constant 0 : i32
    %c0_i32_0 = arith.constant 0 : i32
    %c0_i32_1 = arith.constant 0 : i32
    return %arg0, %c0_i32, %c0_i32_0 : i32, i32, i32
  }
}

</mosaic_0001>

<llo_original>
// kernel: tpu_custom_call.1
$region0: #{tpu_custom_call.1}
  #allocation0 [shape = 'u32[]', space=smem, size = 0x4, offset = 0x4, fixed_abs, tag = 'smem constant byte address 0x4 - core index']
  #allocation1 [shape = 'u32[144,128]{1,0:T(1,128)}', space=vmem, size = 0x12000, scoped, tag = 'internal scratch']
  #allocation2 [shape = 'bf16[18,18,8]{2,1,0:T(8,128)(2,1)}', space=vmem, size = 0x1b000, scoped, tag = 'scratch operand']
  #allocation3 [shape = 'bf16[18,18,8]{2,1,0:T(8,128)(2,1)}', space=vmem, size = 0x1b000, scoped, tag = 'scratch operand']
  #allocation4 [shape = 'bf16[256,72]{1,0:T(8,128)(2,1)}', space=vmem, size = 0x10000, scoped, tag = 'scratch operand']
  #allocation5 [shape = 'bf16[256,72]{1,0:T(8,128)(2,1)}', space=vmem, size = 0x10000, scoped, tag = 'scratch operand']
  %s0 = inlined_call_operand.vmem [shape: bf16[2,8,16,4], index: 0, kind: input, shape index: {}]
  %s1 = inlined_call_operand.vmem [shape: bf16[2,16,16,4], index: 1, kind: input, shape index: {}]
  %s2 = inlined_call_operand.vmem [shape: bf16[72,8], index: 2, kind: input, shape index: {}]
  %s3 = inlined_call_operand.vmem [shape: f32[1,8], index: 3, kind: input, shape index: {}]
  %s4 = inlined_call_operand.vmem [shape: bf16[72,128], index: 4, kind: input, shape index: {}]
  %s5 = inlined_call_operand.vmem [shape: f32[1,128], index: 5, kind: input, shape index: {}]
  %s6 = inlined_call_operand.hbm [shape: f32[2,256,128], index: 6, kind: output, shape index: {}]
  %s7 = sld [smem:[#allocation0]]
  $region57: #{tpu_custom_call.1} parent=0
    _
  %s9 = ssub.s32 1, %s7
  %s10 = scalar_select 0, %s9, %s7
  $region1: #{tpu_custom_call.1} parent=0
    #allocation6 [shape = 'u8[262144]{0}', space=vmem, size = 0x40000, scoped, tag = 'output window, operand 0']
    #allocation7 [shape = 's32[2]{0}', space=sflag, size = 0x8, scoped, tag = 'scoped memory for tpu_custom_call.1']
    %11 = vsyncpa [#allocation7], 0
    %s12 = scalar_lea.sflag [#allocation7], 1
    %13 = vsyncpa %s12, 0
    loop: start=0, step=1, limit=4
    $region2: #{tpu_custom_call.1} parent=1 // loop_pre_header
      _
    $region3: #{tpu_custom_call.1} parent=1 // loop_header
      %s15 = sphi 0, %s19
      %p16 = scmp.ge.s32.totalorder %s15, 4
      %s25 = sphi 0, %s27
      %s28 = sphi 0, %s25
      %s29 = sphi 0, %s28
      %s45 = sphi 0, %s29
      %s51 = sphi 0, %s53
      %s54 = sphi 0, %s51
      %s55 = sphi 0, %s54
      %s71 = sphi 0, %s55
      %s75 = sphi 0, %s75
      %s77 = sphi 0, %s75
      %s78 = sphi 0, %s77
      %s92 = sphi 0, %s78
      %s96 = sphi 0, %s96
      %s98 = sphi 0, %s96
      %s99 = sphi 0, %s98
      %s113 = sphi 0, %s99
      %s117 = sphi 0, %s117
      %s119 = sphi 0, %s117
      %s120 = sphi 0, %s119
      %s134 = sphi 0, %s120
      %s138 = sphi 0, %s138
      %s140 = sphi 0, %s138
      %s141 = sphi 0, %s140
      %s155 = sphi 0, %s141
      %s161 = sphi 0, %s163
      %s164 = sphi 0, %s161
      %s165 = sphi 0, %s164
      %s181 = sphi 0, %s165
    $region4: #{tpu_custom_call.1} parent=1 // loop_header_branch
      %18 = sbr.rel (%p16) target = $region8
    $region5: #{tpu_custom_call.1} parent=1 // loop_body
      %s20 = ssub.s32 %s15, 1
      %s21 = ssub.s32 %s15, 2
      %s22 = sadd.s32 %s15, 1
      %s23 = ssub.s32 %s15, %s22
      %p24 = scmp.eq.s32.totalorder %s23, 0
      %s26 = sadd.s32 %s25, 1
      %s27 = scalar_select %p24, %s25, %s26
      %p30 = pneg %p24
      %p31 = scmp.eq.s32.totalorder %s15, 1
      %p32 = por %p30, %p31
      %p33 = scmp.ne.s32.totalorder %s25, %s28
      %p34 = scmp.eq.s32.totalorder %s15, 0
      %p35 = por %p33, %p34
      %p36 = scmp.ne.s32.totalorder %s25, %s28
      %p37 = scmp.eq.s32.totalorder %s20, 1
      %p38 = por %p36, %p37
      %p39 = scmp.ne.s32.totalorder %s28, %s29
      %p40 = scmp.eq.s32.totalorder %s20, 0
      %p41 = por %p39, %p40
      %p42 = scmp.ne.s32.totalorder %s28, %s29
      %p43 = scmp.eq.s32.totalorder %s21, 1
      %p44 = por %p42, %p43
      %p46 = scmp.ne.s32.totalorder %s29, %s45
      %p47 = scmp.eq.s32.totalorder %s21, 0
      %p48 = por %p46, %p47
      %s49 = ssub.s32 %s15, %s22
      %p50 = scmp.eq.s32.totalorder %s49, 0
      %s52 = sadd.s32 %s51, 1
      %s53 = scalar_select %p50, %s51, %s52
      %p56 = pneg %p50
      %p57 = scmp.eq.s32.totalorder %s15, 1
      %p58 = por %p56, %p57
      %p59 = scmp.ne.s32.totalorder %s51, %s54
      %p60 = scmp.eq.s32.totalorder %s15, 0
      %p61 = por %p59, %p60
      %p62 = scmp.ne.s32.totalorder %s51, %s54
      %p63 = scmp.eq.s32.totalorder %s20, 1
      %p64 = por %p62, %p63
      %p65 = scmp.ne.s32.totalorder %s54, %s55
      %p66 = scmp.eq.s32.totalorder %s20, 0
      %p67 = por %p65, %p66
      %p68 = scmp.ne.s32.totalorder %s54, %s55
      %p69 = scmp.eq.s32.totalorder %s21, 1
      %p70 = por %p68, %p69
      %p72 = scmp.ne.s32.totalorder %s55, %s71
      %p73 = scmp.eq.s32.totalorder %s21, 0
      %p74 = por %p72, %p73
      %s76 = sadd.s32 %s75, 1
      %p79 = scmp.eq.s32.totalorder %s15, 1
      %p80 = scmp.ne.s32.totalorder %s75, %s77
      %p81 = scmp.eq.s32.totalorder %s15, 0
      %p82 = por %p80, %p81
      %p83 = scmp.ne.s32.totalorder %s75, %s77
      %p84 = scmp.eq.s32.totalorder %s20, 1
      %p85 = por %p83, %p84
      %p86 = scmp.ne.s32.totalorder %s77, %s78
      %p87 = scmp.eq.s32.totalorder %s20, 0
      %p88 = por %p86, %p87
      %p89 = scmp.ne.s32.totalorder %s77, %s78
      %p90 = scmp.eq.s32.totalorder %s21, 1
      %p91 = por %p89, %p90
      %p93 = scmp.ne.s32.totalorder %s78, %s92
      %p94 = scmp.eq.s32.totalorder %s21, 0
      %p95 = por %p93, %p94
      %s97 = sadd.s32 %s96, 1
      %p100 = scmp.eq.s32.totalorder %s15, 1
      %p101 = scmp.ne.s32.totalorder %s96, %s98
      %p102 = scmp.eq.s32.totalorder %s15, 0
      %p103 = por %p101, %p102
      %p104 = scmp.ne.s32.totalorder %s96, %s98
      %p105 = scmp.eq.s32.totalorder %s20, 1
      %p106 = por %p104, %p105
      %p107 = scmp.ne.s32.totalorder %s98, %s99
      %p108 = scmp.eq.s32.totalorder %s20, 0
      %p109 = por %p107, %p108
      %p110 = scmp.ne.s32.totalorder %s98, %s99
      %p111 = scmp.eq.s32.totalorder %s21, 1
      %p112 = por %p110, %p111
      %p114 = scmp.ne.s32.totalorder %s99, %s113
      %p115 = scmp.eq.s32.totalorder %s21, 0
      %p116 = por %p114, %p115
      %s118 = sadd.s32 %s117, 1
      %p121 = scmp.eq.s32.totalorder %s15, 1
      %p122 = scmp.ne.s32.totalorder %s117, %s119
      %p123 = scmp.eq.s32.totalorder %s15, 0
      %p124 = por %p122, %p123
      %p125 = scmp.ne.s32.totalorder %s117, %s119
      %p126 = scmp.eq.s32.totalorder %s20, 1
      %p127 = por %p125, %p126
      %p128 = scmp.ne.s32.totalorder %s119, %s120
      %p129 = scmp.eq.s32.totalorder %s20, 0
      %p130 = por %p128, %p129
      %p131 = scmp.ne.s32.totalorder %s119, %s120
      %p132 = scmp.eq.s32.totalorder %s21, 1
      %p133 = por %p131, %p132
      %p135 = scmp.ne.s32.totalorder %s120, %s134
      %p136 = scmp.eq.s32.totalorder %s21, 0
      %p137 = por %p135, %p136
      %s139 = sadd.s32 %s138, 1
      %p142 = scmp.eq.s32.totalorder %s15, 1
      %p143 = scmp.ne.s32.totalorder %s138, %s140
      %p144 = scmp.eq.s32.totalorder %s15, 0
      %p145 = por %p143, %p144
      %p146 = scmp.ne.s32.totalorder %s138, %s140
      %p147 = scmp.eq.s32.totalorder %s20, 1
      %p148 = por %p146, %p147
      %p149 = scmp.ne.s32.totalorder %s140, %s141
      %p150 = scmp.eq.s32.totalorder %s20, 0
      %p151 = por %p149, %p150
      %p152 = scmp.ne.s32.totalorder %s140, %s141
      %p153 = scmp.eq.s32.totalorder %s21, 1
      %p154 = por %p152, %p153
      %p156 = scmp.ne.s32.totalorder %s141, %s155
      %p157 = scmp.eq.s32.totalorder %s21, 0
      %p158 = por %p156, %p157
      %s159 = ssub.s32 %s15, %s22
      %p160 = scmp.eq.s32.totalorder %s159, 0
      %s162 = sadd.s32 %s161, 1
      %s163 = scalar_select %p160, %s161, %s162
      %p166 = pneg %p160
      %p167 = scmp.eq.s32.totalorder %s15, 1
      %p168 = por %p166, %p167
      %p169 = scmp.ne.s32.totalorder %s161, %s164
      %p170 = scmp.eq.s32.totalorder %s15, 0
      %p171 = por %p169, %p170
      %p172 = scmp.ne.s32.totalorder %s161, %s164
      %p173 = scmp.eq.s32.totalorder %s20, 1
      %p174 = por %p172, %p173
      %p175 = scmp.ne.s32.totalorder %s164, %s165
      %p176 = scmp.eq.s32.totalorder %s20, 0
      %p177 = por %p175, %p176
      %p178 = scmp.ne.s32.totalorder %s164, %s165
      %p179 = scmp.eq.s32.totalorder %s21, 1
      %p180 = por %p178, %p179
      %p182 = scmp.ne.s32.totalorder %s165, %s181
      %p183 = scmp.eq.s32.totalorder %s21, 0
      %p184 = por %p182, %p183
      %p185 = scmp.le.s32.totalorder 1, %s15
      %p186 = scmp.lt.s32.totalorder %s15, 3
      %p187 = pnand %p185, %p186
      %p188 = pneg %p187
      // Predicated region
      $region9: #{tpu_custom_call.1} parent=5 // pred_check
        _
      $region10: #{tpu_custom_call.1} parent=5 // pred_check_branch
        %190 = sbr.rel (%p187) target = $region12
      $region11: #{tpu_custom_call.1} parent=5 // pred_region
        %s191 = ssub.s32 %s15, 1
        // Predicated region
        $region13: #{tpu_custom_call.1} parent=11 // pred_check
          %p192 = pneg %p88
        $region14: #{tpu_custom_call.1} parent=11 // pred_check_branch
          %194 = sbr.rel (%p192) target = $region16
        $region15: #{tpu_custom_call.1} parent=11 // pred_region
          _
        $region16: #{tpu_custom_call.1} parent=11 // pred_fallthru
          _
        // Predicated region
        $region17: #{tpu_custom_call.1} parent=11 // pred_check
          %p195 = pneg %p109
        $region18: #{tpu_custom_call.1} parent=11 // pred_check_branch
          %197 = sbr.rel (%p195) target = $region20
        $region19: #{tpu_custom_call.1} parent=11 // pred_region
          _
        $region20: #{tpu_custom_call.1} parent=11 // pred_fallthru
          _
        // Predicated region
        $region21: #{tpu_custom_call.1} parent=11 // pred_check
          %p198 = pneg %p130
        $region22: #{tpu_custom_call.1} parent=11 // pred_check_branch
          %200 = sbr.rel (%p198) target = $region24
        $region23: #{tpu_custom_call.1} parent=11 // pred_region
          _
        $region24: #{tpu_custom_call.1} parent=11 // pred_fallthru
          _
        // Predicated region
        $region25: #{tpu_custom_call.1} parent=11 // pred_check
          %p201 = pneg %p151
        $region26: #{tpu_custom_call.1} parent=11 // pred_check_branch
          %203 = sbr.rel (%p201) target = $region28
        $region27: #{tpu_custom_call.1} parent=11 // pred_region
          _
        $region28: #{tpu_custom_call.1} parent=11 // pred_fallthru
          _
      $region12: #{tpu_custom_call.1} parent=5 // pred_fallthru
        _
      %p204 = scmp.lt.s32.totalorder %s15, 2
      // Predicated region
      $region29: #{tpu_custom_call.1} parent=5 // pred_check
        %p205 = pneg %p204
      $region30: #{tpu_custom_call.1} parent=5 // pred_check_branch
        %207 = sbr.rel (%p205) target = $region32
      $region31: #{tpu_custom_call.1} parent=5 // pred_region
        // Predicated region
        $region33: #{tpu_custom_call.1} parent=31 // pred_check
          %p208 = pneg %p35
        $region34: #{tpu_custom_call.1} parent=31 // pred_check_branch
          %210 = sbr.rel (%p208) target = $region36
        $region35: #{tpu_custom_call.1} parent=31 // pred_region
          %p211 = scmp.lt.s32.totalorder %s15, 1
          %s212 = scalar_select %p211, %s15, 1
          %s213 = smul.addr %s212, 16
          %s214 = smul.addr %s213, 4
          %s215 = scalar_lea.vmem %s0, %s214
        $region36: #{tpu_custom_call.1} parent=31 // pred_fallthru
          _
        // Predicated region
        $region37: #{tpu_custom_call.1} parent=31 // pred_check
          %p216 = pneg %p61
        $region38: #{tpu_custom_call.1} parent=31 // pred_check_branch
          %218 = sbr.rel (%p216) target = $region40
        $region39: #{tpu_custom_call.1} parent=31 // pred_region
          %p219 = scmp.lt.s32.totalorder %s15, 1
          %s220 = scalar_select %p219, %s15, 1
          %s221 = smul.addr %s220, 32
          %s222 = smul.addr %s221, 4
          %s223 = scalar_lea.vmem %s1, %s222
        $region40: #{tpu_custom_call.1} parent=31 // pred_fallthru
          _
      $region32: #{tpu_custom_call.1} parent=5 // pred_fallthru
        _
      %p224 = scmp.le.s32.totalorder 1, %s15
      %p225 = scmp.lt.s32.totalorder %s15, 3
      %p226 = pnand %p224, %p225
      %p227 = pneg %p226
      // Predicated region
      $region41: #{tpu_custom_call.1} parent=5 // pred_check
        _
      $region42: #{tpu_custom_call.1} parent=5 // pred_check_branch
        %229 = sbr.rel (%p226) target = $region44
      $region43: #{tpu_custom_call.1} parent=5 // pred_region
        %s230 = ssub.s32 %s15, 1
        %p231 = scmp.lt.s32.totalorder %s20, 1
        %s232 = scalar_select %p231, %s20, 1
        %s233 = smul.addr %s232, 16
        %s234 = smul.addr %s233, 4
        %s235 = scalar_lea.vmem %s0, %s234
        %p236 = pneg %p41
        %p237 = pneg %p38
        %p238 = scmp.lt.s32.totalorder %s20, 1
        %s239 = scalar_select %p238, %s20, 1
        %s240 = smul.addr %s239, 32
        %s241 = smul.addr %s240, 4
        %s242 = scalar_lea.vmem %s1, %s241
        %p243 = pneg %p67
        %p244 = pneg %p64
        %p245 = pneg %p88
        %p246 = pneg %p85
        %p247 = pneg %p109
        %p248 = pneg %p106
        %p249 = pneg %p130
        %p250 = pneg %p127
        %p251 = pneg %p151
        %p252 = pneg %p148
        %p253 = pneg %p177
        %p254 = pneg %p174
        %s255 = sand.u32 %s164, 1
        %s256 = scalar_lea.sflag [#allocation7], %s255
        %s257 = sand.u32 %s164, 1
        %s258 = smul.addr %s257, 256
        %s259 = scalar_lea.vmem [#allocation6], %s258
        %p260 = scmp.lt.s32.totalorder %s20, 1
        %s261 = scalar_select %p260, %s20, 1
        %s262 = smul.addr %s261, 16
        %s263 = smul.addr %s262, 4
        %s264 = scalar_lea.vmem %s0, %s263
        %p265 = scmp.lt.s32.totalorder %s20, 1
        %s266 = scalar_select %p265, %s20, 1
        %s267 = smul.addr %s266, 32
        %s268 = smul.addr %s267, 4
        %s269 = scalar_lea.vmem %s1, %s268
        %vm271 = vcmask 60416
        %272 = vst.msk [vmem:[#allocation2] sm:$0xf] %vm271, 0
        %273 = vst.msk [vmem:[#allocation2 + $0x4] sm:$0xf] %vm271, 0
        %vm274 = vcmask 57344
        %275 = vst.msk [vmem:[#allocation2 + $0x8] sm:$0x1] %vm274, 0
        %s276 = scalar_lea.vmem [#allocation2], 204
        %277 = vst.msk [vmem:[%s276] sm:$0xf] %vm271, 0
        %278 = vst.msk [vmem:[%s276 + $0x4] sm:$0xf] %vm271, 0
        %279 = vst.msk [vmem:[%s276 + $0x8] sm:$0x1] %vm274, 0
        %vm280 = vcmask 57344
        %vm281 = vsmask.f32 256
        %vm282 = vmand %vm280, %vm281
        %v283 = vld [vmem:[#allocation2] sm:$0x1]
        %v284 = vsel %vm282, 0, %v283
        %285 = vst [vmem:[#allocation2] sm:$0x1] %v284
        %v286 = vld [vmem:[#allocation2 + $0xc] sm:$0x1]
        %v287 = vsel %vm282, 0, %v286
        %288 = vst [vmem:[#allocation2 + $0xc] sm:$0x1] %v287
        %v289 = vld [vmem:[#allocation2 + $0x18] sm:$0x1]
        %v290 = vsel %vm282, 0, %v289
        %291 = vst [vmem:[#allocation2 + $0x18] sm:$0x1] %v290
        %v292 = vld [vmem:[#allocation2 + $0x24] sm:$0x1]
        %v293 = vsel %vm282, 0, %v292
        %294 = vst [vmem:[#allocation2 + $0x24] sm:$0x1] %v293
        %v295 = vld [vmem:[#allocation2 + $0x30] sm:$0x1]
        %v296 = vsel %vm282, 0, %v295
        %297 = vst [vmem:[#allocation2 + $0x30] sm:$0x1] %v296
        %v298 = vld [vmem:[#allocation2 + $0x3c] sm:$0x1]
        %v299 = vsel %vm282, 0, %v298
        %300 = vst [vmem:[#allocation2 + $0x3c] sm:$0x1] %v299
        %v301 = vld [vmem:[#allocation2 + $0x48] sm:$0x1]
        %v302 = vsel %vm282, 0, %v301
        %303 = vst [vmem:[#allocation2 + $0x48] sm:$0x1] %v302
        %v304 = vld [vmem:[#allocation2 + $0x54] sm:$0x1]
        %v305 = vsel %vm282, 0, %v304
        %306 = vst [vmem:[#allocation2 + $0x54] sm:$0x1] %v305
        %v307 = vld [vmem:[#allocation2 + $0x60] sm:$0x1]
        %v308 = vsel %vm282, 0, %v307
        %309 = vst [vmem:[#allocation2 + $0x60] sm:$0x1] %v308
        %v310 = vld [vmem:[#allocation2 + $0x6c] sm:$0x1]
        %v311 = vsel %vm282, 0, %v310
        %312 = vst [vmem:[#allocation2 + $0x6c] sm:$0x1] %v311
        %v313 = vld [vmem:[#allocation2 + $0x78] sm:$0x1]
        %v314 = vsel %vm282, 0, %v313
        %315 = vst [vmem:[#allocation2 + $0x78] sm:$0x1] %v314
        %v316 = vld [vmem:[#allocation2 + $0x84] sm:$0x1]
        %v317 = vsel %vm282, 0, %v316
        %318 = vst [vmem:[#allocation2 + $0x84] sm:$0x1] %v317
        %v319 = vld [vmem:[#allocation2 + $0x90] sm:$0x1]
        %v320 = vsel %vm282, 0, %v319
        %321 = vst [vmem:[#allocation2 + $0x90] sm:$0x1] %v320
        %v322 = vld [vmem:[#allocation2 + $0x9c] sm:$0x1]
        %v323 = vsel %vm282, 0, %v322
        %324 = vst [vmem:[#allocation2 + $0x9c] sm:$0x1] %v323
        %v325 = vld [vmem:[#allocation2 + $0xa8] sm:$0x1]
        %v326 = vsel %vm282, 0, %v325
        %327 = vst [vmem:[#allocation2 + $0xa8] sm:$0x1] %v326
        %v328 = vld [vmem:[#allocation2 + $0xb4] sm:$0x1]
        %v329 = vsel %vm282, 0, %v328
        %330 = vst [vmem:[#allocation2 + $0xb4] sm:$0x1] %v329
        %v331 = vld [vmem:[#allocation2 + $0xc0] sm:$0x1]
        %v332 = vsel %vm282, 0, %v331
        %333 = vst [vmem:[#allocation2 + $0xc0] sm:$0x1] %v332
        %v334 = vld [vmem:[#allocation2 + $0xcc] sm:$0x1]
        %v335 = vsel %vm282, 0, %v334
        %336 = vst [vmem:[#allocation2 + $0xcc] sm:$0x1] %v335
        %vm337 = vsmask.f32 7938
        %vm338 = vmand %vm280, %vm337
        %v339 = vld [vmem:[#allocation2 + $0x8] sm:$0x1]
        %v340 = vsel %vm338, 0, %v339
        %341 = vst [vmem:[#allocation2 + $0x8] sm:$0x1] %v340
        %v342 = vld [vmem:[#allocation2 + $0x14] sm:$0x1]
        %v343 = vsel %vm338, 0, %v342
        %344 = vst [vmem:[#allocation2 + $0x14] sm:$0x1] %v343
        %v345 = vld [vmem:[#allocation2 + $0x20] sm:$0x1]
        %v346 = vsel %vm338, 0, %v345
        %347 = vst [vmem:[#allocation2 + $0x20] sm:$0x1] %v346
        %v348 = vld [vmem:[#allocation2 + $0x2c] sm:$0x1]
        %v349 = vsel %vm338, 0, %v348
        %350 = vst [vmem:[#allocation2 + $0x2c] sm:$0x1] %v349
        %v351 = vld [vmem:[#allocation2 + $0x38] sm:$0x1]
        %v352 = vsel %vm338, 0, %v351
        %353 = vst [vmem:[#allocation2 + $0x38] sm:$0x1] %v352
        %v354 = vld [vmem:[#allocation2 + $0x44] sm:$0x1]
        %v355 = vsel %vm338, 0, %v354
        %356 = vst [vmem:[#allocation2 + $0x44] sm:$0x1] %v355
        %v357 = vld [vmem:[#allocation2 + $0x50] sm:$0x1]
        %v358 = vsel %vm338, 0, %v357
        %359 = vst [vmem:[#allocation2 + $0x50] sm:$0x1] %v358
        %v360 = vld [vmem:[#allocation2 + $0x5c] sm:$0x1]
        %v361 = vsel %vm338, 0, %v360
        %362 = vst [vmem:[#allocation2 + $0x5c] sm:$0x1] %v361
        %v363 = vld [vmem:[#allocation2 + $0x68] sm:$0x1]
        %v364 = vsel %vm338, 0, %v363
        %365 = vst [vmem:[#allocation2 + $0x68] sm:$0x1] %v364
        %v366 = vld [vmem:[#allocation2 + $0x74] sm:$0x1]
        %v367 = vsel %vm338, 0, %v366
        %368 = vst [vmem:[#allocation2 + $0x74] sm:$0x1] %v367
        %v369 = vld [vmem:[#allocation2 + $0x80] sm:$0x1]
        %v370 = vsel %vm338, 0, %v369
        %371 = vst [vmem:[#allocation2 + $0x80] sm:$0x1] %v370
        %v372 = vld [vmem:[#allocation2 + $0x8c] sm:$0x1]
        %v373 = vsel %vm338, 0, %v372
        %374 = vst [vmem:[#allocation2 + $0x8c] sm:$0x1] %v373
        %v375 = vld [vmem:[#allocation2 + $0x98] sm:$0x1]
        %v376 = vsel %vm338, 0, %v375
        %377 = vst [vmem:[#allocation2 + $0x98] sm:$0x1] %v376
        %v378 = vld [vmem:[#allocation2 + $0xa4] sm:$0x1]
        %v379 = vsel %vm338, 0, %v378
        %380 = vst [vmem:[#allocation2 + $0xa4] sm:$0x1] %v379
        %v381 = vld [vmem:[#allocation2 + $0xb0] sm:$0x1]
        %v382 = vsel %vm338, 0, %v381
        %383 = vst [vmem:[#allocation2 + $0xb0] sm:$0x1] %v382
        %v384 = vld [vmem:[#allocation2 + $0xbc] sm:$0x1]
        %v385 = vsel %vm338, 0, %v384
        %386 = vst [vmem:[#allocation2 + $0xbc] sm:$0x1] %v385
        %v387 = vld [vmem:[#allocation2 + $0xc8] sm:$0x1]
        %v388 = vsel %vm338, 0, %v387
        %389 = vst [vmem:[#allocation2 + $0xc8] sm:$0x1] %v388
        %v390 = vld [vmem:[#allocation2 + $0xd4] sm:$0x1]
        %v391 = vsel %vm338, 0, %v390
        %392 = vst [vmem:[#allocation2 + $0xd4] sm:$0x1] %v391
        %393 = vst.msk [vmem:[#allocation3] sm:$0xf] %vm271, 0
        %394 = vst.msk [vmem:[#allocation3 + $0x4] sm:$0xf] %vm271, 0
        %395 = vst.msk [vmem:[#allocation3 + $0x8] sm:$0x1] %vm274, 0
        %s396 = scalar_lea.vmem [#allocation3], 204
        %397 = vst.msk [vmem:[%s396] sm:$0xf] %vm271, 0
        %398 = vst.msk [vmem:[%s396 + $0x4] sm:$0xf] %vm271, 0
        %399 = vst.msk [vmem:[%s396 + $0x8] sm:$0x1] %vm274, 0
        %v400 = vld [vmem:[#allocation3] sm:$0x1]
        %v401 = vsel %vm282, 0, %v400
        %402 = vst [vmem:[#allocation3] sm:$0x1] %v401
        %v403 = vld [vmem:[#allocation3 + $0xc] sm:$0x1]
        %v404 = vsel %vm282, 0, %v403
        %405 = vst [vmem:[#allocation3 + $0xc] sm:$0x1] %v404
        %v406 = vld [vmem:[#allocation3 + $0x18] sm:$0x1]
        %v407 = vsel %vm282, 0, %v406
        %408 = vst [vmem:[#allocation3 + $0x18] sm:$0x1] %v407
        %v409 = vld [vmem:[#allocation3 + $0x24] sm:$0x1]
        %v410 = vsel %vm282, 0, %v409
        %411 = vst [vmem:[#allocation3 + $0x24] sm:$0x1] %v410
        %v412 = vld [vmem:[#allocation3 + $0x30] sm:$0x1]
        %v413 = vsel %vm282, 0, %v412
        %414 = vst [vmem:[#allocation3 + $0x30] sm:$0x1] %v413
        %v415 = vld [vmem:[#allocation3 + $0x3c] sm:$0x1]
        %v416 = vsel %vm282, 0, %v415
        %417 = vst [vmem:[#allocation3 + $0x3c] sm:$0x1] %v416
        %v418 = vld [vmem:[#allocation3 + $0x48] sm:$0x1]
        %v419 = vsel %vm282, 0, %v418
        %420 = vst [vmem:[#allocation3 + $0x48] sm:$0x1] %v419
        %v421 = vld [vmem:[#allocation3 + $0x54] sm:$0x1]
        %v422 = vsel %vm282, 0, %v421
        %423 = vst [vmem:[#allocation3 + $0x54] sm:$0x1] %v422
        %v424 = vld [vmem:[#allocation3 + $0x60] sm:$0x1]
        %v425 = vsel %vm282, 0, %v424
        %426 = vst [vmem:[#allocation3 + $0x60] sm:$0x1] %v425
        %v427 = vld [vmem:[#allocation3 + $0x6c] sm:$0x1]
        %v428 = vsel %vm282, 0, %v427
        %429 = vst [vmem:[#allocation3 + $0x6c] sm:$0x1] %v428
        %v430 = vld [vmem:[#allocation3 + $0x78] sm:$0x1]
        %v431 = vsel %vm282, 0, %v430
        %432 = vst [vmem:[#allocation3 + $0x78] sm:$0x1] %v431
        %v433 = vld [vmem:[#allocation3 + $0x84] sm:$0x1]
        %v434 = vsel %vm282, 0, %v433
        %435 = vst [vmem:[#allocation3 + $0x84] sm:$0x1] %v434
        %v436 = vld [vmem:[#allocation3 + $0x90] sm:$0x1]
        %v437 = vsel %vm282, 0, %v436
        %438 = vst [vmem:[#allocation3 + $0x90] sm:$0x1] %v437
        %v439 = vld [vmem:[#allocation3 + $0x9c] sm:$0x1]
        %v440 = vsel %vm282, 0, %v439
        %441 = vst [vmem:[#allocation3 + $0x9c] sm:$0x1] %v440
        %v442 = vld [vmem:[#allocation3 + $0xa8] sm:$0x1]
        %v443 = vsel %vm282, 0, %v442
        %444 = vst [vmem:[#allocation3 + $0xa8] sm:$0x1] %v443
        %v445 = vld [vmem:[#allocation3 + $0xb4] sm:$0x1]
        %v446 = vsel %vm282, 0, %v445
        %447 = vst [vmem:[#allocation3 + $0xb4] sm:$0x1] %v446
        %v448 = vld [vmem:[#allocation3 + $0xc0] sm:$0x1]
        %v449 = vsel %vm282, 0, %v448
        %450 = vst [vmem:[#allocation3 + $0xc0] sm:$0x1] %v449
        %v451 = vld [vmem:[#allocation3 + $0xcc] sm:$0x1]
        %v452 = vsel %vm282, 0, %v451
        %453 = vst [vmem:[#allocation3 + $0xcc] sm:$0x1] %v452
        %v454 = vld [vmem:[#allocation3 + $0x8] sm:$0x1]
        %v455 = vsel %vm338, 0, %v454
        %456 = vst [vmem:[#allocation3 + $0x8] sm:$0x1] %v455
        %v457 = vld [vmem:[#allocation3 + $0x14] sm:$0x1]
        %v458 = vsel %vm338, 0, %v457
        %459 = vst [vmem:[#allocation3 + $0x14] sm:$0x1] %v458
        %v460 = vld [vmem:[#allocation3 + $0x20] sm:$0x1]
        %v461 = vsel %vm338, 0, %v460
        %462 = vst [vmem:[#allocation3 + $0x20] sm:$0x1] %v461
        %v463 = vld [vmem:[#allocation3 + $0x2c] sm:$0x1]
        %v464 = vsel %vm338, 0, %v463
        %465 = vst [vmem:[#allocation3 + $0x2c] sm:$0x1] %v464
        %v466 = vld [vmem:[#allocation3 + $0x38] sm:$0x1]
        %v467 = vsel %vm338, 0, %v466
        %468 = vst [vmem:[#allocation3 + $0x38] sm:$0x1] %v467
        %v469 = vld [vmem:[#allocation3 + $0x44] sm:$0x1]
        %v470 = vsel %vm338, 0, %v469
        %471 = vst [vmem:[#allocation3 + $0x44] sm:$0x1] %v470
        %v472 = vld [vmem:[#allocation3 + $0x50] sm:$0x1]
        %v473 = vsel %vm338, 0, %v472
        %474 = vst [vmem:[#allocation3 + $0x50] sm:$0x1] %v473
        %v475 = vld [vmem:[#allocation3 + $0x5c] sm:$0x1]
        %v476 = vsel %vm338, 0, %v475
        %477 = vst [vmem:[#allocation3 + $0x5c] sm:$0x1] %v476
        %v478 = vld [vmem:[#allocation3 + $0x68] sm:$0x1]
        %v479 = vsel %vm338, 0, %v478
        %480 = vst [vmem:[#allocation3 + $0x68] sm:$0x1] %v479
        %v481 = vld [vmem:[#allocation3 + $0x74] sm:$0x1]
        %v482 = vsel %vm338, 0, %v481
        %483 = vst [vmem:[#allocation3 + $0x74] sm:$0x1] %v482
        %v484 = vld [vmem:[#allocation3 + $0x80] sm:$0x1]
        %v485 = vsel %vm338, 0, %v484
        %486 = vst [vmem:[#allocation3 + $0x80] sm:$0x1] %v485
        %v487 = vld [vmem:[#allocation3 + $0x8c] sm:$0x1]
        %v488 = vsel %vm338, 0, %v487
        %489 = vst [vmem:[#allocation3 + $0x8c] sm:$0x1] %v488
        %v490 = vld [vmem:[#allocation3 + $0x98] sm:$0x1]
        %v491 = vsel %vm338, 0, %v490
        %492 = vst [vmem:[#allocation3 + $0x98] sm:$0x1] %v491
        %v493 = vld [vmem:[#allocation3 + $0xa4] sm:$0x1]
        %v494 = vsel %vm338, 0, %v493
        %495 = vst [vmem:[#allocation3 + $0xa4] sm:$0x1] %v494
        %v496 = vld [vmem:[#allocation3 + $0xb0] sm:$0x1]
        %v497 = vsel %vm338, 0, %v496
        %498 = vst [vmem:[#allocation3 + $0xb0] sm:$0x1] %v497
        %v499 = vld [vmem:[#allocation3 + $0xbc] sm:$0x1]
        %v500 = vsel %vm338, 0, %v499
        %501 = vst [vmem:[#allocation3 + $0xbc] sm:$0x1] %v500
        %v502 = vld [vmem:[#allocation3 + $0xc8] sm:$0x1]
        %v503 = vsel %vm338, 0, %v502
        %504 = vst [vmem:[#allocation3 + $0xc8] sm:$0x1] %v503
        %v505 = vld [vmem:[#allocation3 + $0xd4] sm:$0x1]
        %v506 = vsel %vm338, 0, %v505
        %507 = vst [vmem:[#allocation3 + $0xd4] sm:$0x1] %v506
        %v508 = vld [vmem:[%s264] sm:$0xf]
        %v509 = vld [vmem:[%s264 + $0x4] sm:$0xf]
        %v510 = vld [vmem:[%s264 + $0x8] sm:$0xf]
        %v511 = vld [vmem:[%s264 + $0xc] sm:$0xf]
        %v512 = vld [vmem:[%s264 + $0x10] sm:$0xf]
        %v513 = vld [vmem:[%s264 + $0x14] sm:$0xf]
        %v514 = vld [vmem:[%s264 + $0x18] sm:$0xf]
        %v515 = vld [vmem:[%s264 + $0x1c] sm:$0xf]
        %v516 = vld [vmem:[%s264 + $0x20] sm:$0xf]
        %v517 = vld [vmem:[%s264 + $0x24] sm:$0xf]
        %v518 = vld [vmem:[%s264 + $0x28] sm:$0xf]
        %v519 = vld [vmem:[%s264 + $0x2c] sm:$0xf]
        %v520 = vld [vmem:[%s264 + $0x30] sm:$0xf]
        %v521 = vld [vmem:[%s264 + $0x34] sm:$0xf]
        %v522 = vld [vmem:[%s264 + $0x38] sm:$0xf]
        %v523 = vld [vmem:[%s264 + $0x3c] sm:$0xf]
        %vm524 = vsmask.f32 4368
        %vm525 = vmor %vm281, %vm524
        %v527 = vshrl.u32 %v508, 16
        %v529 = vrot.slane %v527, 7
        %v530 = vshll.u32 %v508, 16
        %v532 = vor.u32 %v529, %v530
        %v533 = vrot.slane %v529, 4
        %v535 = vshrl.u32 %v509, 16
        %v537 = vrot.slane %v535, 7
        %v538 = vshll.u32 %v509, 16
        %v540 = vor.u32 %v537, %v538
        %v541 = vsel %vm525, %v533, %v540
        %v542 = vrot.slane %v537, 4
        %v544 = vshrl.u32 %v510, 16
        %v546 = vrot.slane %v544, 7
        %v547 = vshll.u32 %v510, 16
        %v549 = vor.u32 %v546, %v547
        %v550 = vrot.slane %v546, 4
        %v552 = vshrl.u32 %v511, 16
        %v554 = vrot.slane %v552, 7
        %v555 = vshll.u32 %v511, 16
        %v557 = vor.u32 %v554, %v555
        %v558 = vsel %vm525, %v550, %v557
        %v559 = vrot.slane %v554, 4
        %v561 = vshrl.u32 %v512, 16
        %v563 = vrot.slane %v561, 7
        %v564 = vshll.u32 %v512, 16
        %v566 = vor.u32 %v563, %v564
        %v567 = vrot.slane %v563, 4
        %v569 = vshrl.u32 %v513, 16
        %v571 = vrot.slane %v569, 7
        %v572 = vshll.u32 %v513, 16
        %v574 = vor.u32 %v571, %v572
        %v575 = vsel %vm525, %v567, %v574
        %v576 = vrot.slane %v571, 4
        %v578 = vshrl.u32 %v514, 16
        %v580 = vrot.slane %v578, 7
        %v581 = vshll.u32 %v514, 16
        %v583 = vor.u32 %v580, %v581
        %v584 = vrot.slane %v580, 4
        %v586 = vshrl.u32 %v515, 16
        %v588 = vrot.slane %v586, 7
        %v589 = vshll.u32 %v515, 16
        %v591 = vor.u32 %v588, %v589
        %v592 = vsel %vm525, %v584, %v591
        %v593 = vrot.slane %v588, 4
        %v595 = vshrl.u32 %v516, 16
        %v597 = vrot.slane %v595, 7
        %v598 = vshll.u32 %v516, 16
        %v600 = vor.u32 %v597, %v598
        %v601 = vrot.slane %v597, 4
        %v603 = vshrl.u32 %v517, 16
        %v605 = vrot.slane %v603, 7
        %v606 = vshll.u32 %v517, 16
        %v608 = vor.u32 %v605, %v606
        %v609 = vsel %vm525, %v601, %v608
        %v610 = vrot.slane %v605, 4
        %v612 = vshrl.u32 %v518, 16
        %v614 = vrot.slane %v612, 7
        %v615 = vshll.u32 %v518, 16
        %v617 = vor.u32 %v614, %v615
        %v618 = vrot.slane %v614, 4
        %v620 = vshrl.u32 %v519, 16
        %v622 = vrot.slane %v620, 7
        %v623 = vshll.u32 %v519, 16
        %v625 = vor.u32 %v622, %v623
        %v626 = vsel %vm525, %v618, %v625
        %v627 = vrot.slane %v622, 4
        %v629 = vshrl.u32 %v520, 16
        %v631 = vrot.slane %v629, 7
        %v632 = vshll.u32 %v520, 16
        %v634 = vor.u32 %v631, %v632
        %v635 = vrot.slane %v631, 4
        %v637 = vshrl.u32 %v521, 16
        %v639 = vrot.slane %v637, 7
        %v640 = vshll.u32 %v521, 16
        %v642 = vor.u32 %v639, %v640
        %v643 = vsel %vm525, %v635, %v642
        %v644 = vrot.slane %v639, 4
        %v646 = vshrl.u32 %v522, 16
        %v648 = vrot.slane %v646, 7
        %v649 = vshll.u32 %v522, 16
        %v651 = vor.u32 %v648, %v649
        %v652 = vrot.slane %v648, 4
        %v654 = vshrl.u32 %v523, 16
        %v656 = vrot.slane %v654, 7
        %v657 = vshll.u32 %v523, 16
        %v659 = vor.u32 %v656, %v657
        %v660 = vsel %vm525, %v652, %v659
        %v661 = vrot.slane %v656, 4
        %s686 = scalar_lea.vmem [#allocation2], 12
        %vm687 = vcmask 27648
        %vm688 = vmand %vm687, %vm337
        %v689 = vld [vmem:[%s686] sm:$0xf]
        %v690 = vsel %vm688, %v532, %v689
        %691 = vst [vmem:[%s686] sm:$0xf] %v690
        %vm692 = vcmask 27648
        %693 = vst.msk [vmem:[%s686 + $0x4] sm:$0xf] %vm692, %v541
        %vm694 = vcmask 24576
        %vm695 = vmand %vm694, %vm281
        %v696 = vld [vmem:[%s686 + $0x8] sm:$0x1]
        %v697 = vsel %vm695, %v542, %v696
        %698 = vst [vmem:[%s686 + $0x8] sm:$0x1] %v697
        %v699 = vld [vmem:[%s686 + $0xc] sm:$0xf]
        %v700 = vsel %vm688, %v532, %v699
        %701 = vst [vmem:[%s686 + $0xc] sm:$0xf] %v700
        %702 = vst.msk [vmem:[%s686 + $0x10] sm:$0xf] %vm692, %v541
        %v703 = vld [vmem:[%s686 + $0x14] sm:$0x1]
        %v704 = vsel %vm695, %v542, %v703
        %705 = vst [vmem:[%s686 + $0x14] sm:$0x1] %v704
        %v706 = vld [vmem:[%s686 + $0x18] sm:$0xf]
        %v707 = vsel %vm688, %v549, %v706
        %708 = vst [vmem:[%s686 + $0x18] sm:$0xf] %v707
        %709 = vst.msk [vmem:[%s686 + $0x1c] sm:$0xf] %vm692, %v558
        %v710 = vld [vmem:[%s686 + $0x20] sm:$0x1]
        %v711 = vsel %vm695, %v559, %v710
        %712 = vst [vmem:[%s686 + $0x20] sm:$0x1] %v711
        %v713 = vld [vmem:[%s686 + $0x24] sm:$0xf]
        %v714 = vsel %vm688, %v549, %v713
        %715 = vst [vmem:[%s686 + $0x24] sm:$0xf] %v714
        %716 = vst.msk [vmem:[%s686 + $0x28] sm:$0xf] %vm692, %v558
        %v717 = vld [vmem:[%s686 + $0x2c] sm:$0x1]
        %v718 = vsel %vm695, %v559, %v717
        %719 = vst [vmem:[%s686 + $0x2c] sm:$0x1] %v718
        %v720 = vld [vmem:[%s686 + $0x30] sm:$0xf]
        %v721 = vsel %vm688, %v566, %v720
        %722 = vst [vmem:[%s686 + $0x30] sm:$0xf] %v721
        %723 = vst.msk [vmem:[%s686 + $0x34] sm:$0xf] %vm692, %v575
        %v724 = vld [vmem:[%s686 + $0x38] sm:$0x1]
        %v725 = vsel %vm695, %v576, %v724
        %726 = vst [vmem:[%s686 + $0x38] sm:$0x1] %v725
        %v727 = vld [vmem:[%s686 + $0x3c] sm:$0xf]
        %v728 = vsel %vm688, %v566, %v727
        %729 = vst [vmem:[%s686 + $0x3c] sm:$0xf] %v728
        %730 = vst.msk [vmem:[%s686 + $0x40] sm:$0xf] %vm692, %v575
        %v731 = vld [vmem:[%s686 + $0x44] sm:$0x1]
        %v732 = vsel %vm695, %v576, %v731
        %733 = vst [vmem:[%s686 + $0x44] sm:$0x1] %v732
        %v734 = vld [vmem:[%s686 + $0x48] sm:$0xf]
        %v735 = vsel %vm688, %v583, %v734
        %736 = vst [vmem:[%s686 + $0x48] sm:$0xf] %v735
        %737 = vst.msk [vmem:[%s686 + $0x4c] sm:$0xf] %vm692, %v592
        %v738 = vld [vmem:[%s686 + $0x50] sm:$0x1]
        %v739 = vsel %vm695, %v593, %v738
        %740 = vst [vmem:[%s686 + $0x50] sm:$0x1] %v739
        %v741 = vld [vmem:[%s686 + $0x54] sm:$0xf]
        %v742 = vsel %vm688, %v583, %v741
        %743 = vst [vmem:[%s686 + $0x54] sm:$0xf] %v742
        %744 = vst.msk [vmem:[%s686 + $0x58] sm:$0xf] %vm692, %v592
        %v745 = vld [vmem:[%s686 + $0x5c] sm:$0x1]
        %v746 = vsel %vm695, %v593, %v745
        %747 = vst [vmem:[%s686 + $0x5c] sm:$0x1] %v746
        %v748 = vld [vmem:[%s686 + $0x60] sm:$0xf]
        %v749 = vsel %vm688, %v600, %v748
        %750 = vst [vmem:[%s686 + $0x60] sm:$0xf] %v749
        %751 = vst.msk [vmem:[%s686 + $0x64] sm:$0xf] %vm692, %v609
        %v752 = vld [vmem:[%s686 + $0x68] sm:$0x1]
        %v753 = vsel %vm695, %v610, %v752
        %754 = vst [vmem:[%s686 + $0x68] sm:$0x1] %v753
        %v755 = vld [vmem:[%s686 + $0x6c] sm:$0xf]
        %v756 = vsel %vm688, %v600, %v755
        %757 = vst [vmem:[%s686 + $0x6c] sm:$0xf] %v756
        %758 = vst.msk [vmem:[%s686 + $0x70] sm:$0xf] %vm692, %v609
        %v759 = vld [vmem:[%s686 + $0x74] sm:$0x1]
        %v760 = vsel %vm695, %v610, %v759
        %761 = vst [vmem:[%s686 + $0x74] sm:$0x1] %v760
        %v762 = vld [vmem:[%s686 + $0x78] sm:$0xf]
        %v763 = vsel %vm688, %v617, %v762
        %764 = vst [vmem:[%s686 + $0x78] sm:$0xf] %v763
        %765 = vst.msk [vmem:[%s686 + $0x7c] sm:$0xf] %vm692, %v626
        %v766 = vld [vmem:[%s686 + $0x80] sm:$0x1]
        %v767 = vsel %vm695, %v627, %v766
        %768 = vst [vmem:[%s686 + $0x80] sm:$0x1] %v767
        %v769 = vld [vmem:[%s686 + $0x84] sm:$0xf]
        %v770 = vsel %vm688, %v617, %v769
        %771 = vst [vmem:[%s686 + $0x84] sm:$0xf] %v770
        %772 = vst.msk [vmem:[%s686 + $0x88] sm:$0xf] %vm692, %v626
        %v773 = vld [vmem:[%s686 + $0x8c] sm:$0x1]
        %v774 = vsel %vm695, %v627, %v773
        %775 = vst [vmem:[%s686 + $0x8c] sm:$0x1] %v774
        %v776 = vld [vmem:[%s686 + $0x90] sm:$0xf]
        %v777 = vsel %vm688, %v634, %v776
        %778 = vst [vmem:[%s686 + $0x90] sm:$0xf] %v777
        %779 = vst.msk [vmem:[%s686 + $0x94] sm:$0xf] %vm692, %v643
        %v780 = vld [vmem:[%s686 + $0x98] sm:$0x1]
        %v781 = vsel %vm695, %v644, %v780
        %782 = vst [vmem:[%s686 + $0x98] sm:$0x1] %v781
        %v783 = vld [vmem:[%s686 + $0x9c] sm:$0xf]
        %v784 = vsel %vm688, %v634, %v783
        %785 = vst [vmem:[%s686 + $0x9c] sm:$0xf] %v784
        %786 = vst.msk [vmem:[%s686 + $0xa0] sm:$0xf] %vm692, %v643
        %v787 = vld [vmem:[%s686 + $0xa4] sm:$0x1]
        %v788 = vsel %vm695, %v644, %v787
        %789 = vst [vmem:[%s686 + $0xa4] sm:$0x1] %v788
        %v790 = vld [vmem:[%s686 + $0xa8] sm:$0xf]
        %v791 = vsel %vm688, %v651, %v790
        %792 = vst [vmem:[%s686 + $0xa8] sm:$0xf] %v791
        %793 = vst.msk [vmem:[%s686 + $0xac] sm:$0xf] %vm692, %v660
        %v794 = vld [vmem:[%s686 + $0xb0] sm:$0x1]
        %v795 = vsel %vm695, %v661, %v794
        %796 = vst [vmem:[%s686 + $0xb0] sm:$0x1] %v795
        %v797 = vld [vmem:[%s686 + $0xb4] sm:$0xf]
        %v798 = vsel %vm688, %v651, %v797
        %799 = vst [vmem:[%s686 + $0xb4] sm:$0xf] %v798
        %800 = vst.msk [vmem:[%s686 + $0xb8] sm:$0xf] %vm692, %v660
        %v801 = vld [vmem:[%s686 + $0xbc] sm:$0x1]
        %v802 = vsel %vm695, %v661, %v801
        %803 = vst [vmem:[%s686 + $0xbc] sm:$0x1] %v802
        %v804 = vld [vmem:[%s269] sm:$0xf]
        %v805 = vld [vmem:[%s269 + $0x4] sm:$0xf]
        %v806 = vld [vmem:[%s269 + $0x8] sm:$0xf]
        %v807 = vld [vmem:[%s269 + $0xc] sm:$0xf]
        %v808 = vld [vmem:[%s269 + $0x10] sm:$0xf]
        %v809 = vld [vmem:[%s269 + $0x14] sm:$0xf]
        %v810 = vld [vmem:[%s269 + $0x18] sm:$0xf]
        %v811 = vld [vmem:[%s269 + $0x1c] sm:$0xf]
        %v812 = vld [vmem:[%s269 + $0x20] sm:$0xf]
        %v813 = vld [vmem:[%s269 + $0x24] sm:$0xf]
        %v814 = vld [vmem:[%s269 + $0x28] sm:$0xf]
        %v815 = vld [vmem:[%s269 + $0x2c] sm:$0xf]
        %v816 = vld [vmem:[%s269 + $0x30] sm:$0xf]
        %v817 = vld [vmem:[%s269 + $0x34] sm:$0xf]
        %v818 = vld [vmem:[%s269 + $0x38] sm:$0xf]
        %v819 = vld [vmem:[%s269 + $0x3c] sm:$0xf]
        %v820 = vld [vmem:[%s269 + $0x40] sm:$0xf]
        %v821 = vld [vmem:[%s269 + $0x44] sm:$0xf]
        %v822 = vld [vmem:[%s269 + $0x48] sm:$0xf]
        %v823 = vld [vmem:[%s269 + $0x4c] sm:$0xf]
        %v824 = vld [vmem:[%s269 + $0x50] sm:$0xf]
        %v825 = vld [vmem:[%s269 + $0x54] sm:$0xf]
        %v826 = vld [vmem:[%s269 + $0x58] sm:$0xf]
        %v827 = vld [vmem:[%s269 + $0x5c] sm:$0xf]
        %v828 = vld [vmem:[%s269 + $0x60] sm:$0xf]
        %v829 = vld [vmem:[%s269 + $0x64] sm:$0xf]
        %v830 = vld [vmem:[%s269 + $0x68] sm:$0xf]
        %v831 = vld [vmem:[%s269 + $0x6c] sm:$0xf]
        %v832 = vld [vmem:[%s269 + $0x70] sm:$0xf]
        %v833 = vld [vmem:[%s269 + $0x74] sm:$0xf]
        %v834 = vld [vmem:[%s269 + $0x78] sm:$0xf]
        %v835 = vld [vmem:[%s269 + $0x7c] sm:$0xf]
        %v837 = vshrl.u32 %v804, 16
        %v839 = vrot.slane %v837, 7
        %v840 = vshll.u32 %v804, 16
        %v842 = vor.u32 %v839, %v840
        %v843 = vrot.slane %v839, 4
        %v845 = vshrl.u32 %v805, 16
        %v847 = vrot.slane %v845, 7
        %v848 = vshll.u32 %v805, 16
        %v850 = vor.u32 %v847, %v848
        %v851 = vsel %vm525, %v843, %v850
        %v852 = vrot.slane %v847, 4
        %v854 = vshrl.u32 %v806, 16
        %v856 = vrot.slane %v854, 7
        %v857 = vshll.u32 %v806, 16
        %v859 = vor.u32 %v856, %v857
        %v860 = vrot.slane %v856, 4
        %v862 = vshrl.u32 %v807, 16
        %v864 = vrot.slane %v862, 7
        %v865 = vshll.u32 %v807, 16
        %v867 = vor.u32 %v864, %v865
        %v868 = vsel %vm525, %v860, %v867
        %v869 = vrot.slane %v864, 4
        %v871 = vshrl.u32 %v808, 16
        %v873 = vrot.slane %v871, 7
        %v874 = vshll.u32 %v808, 16
        %v876 = vor.u32 %v873, %v874
        %v877 = vrot.slane %v873, 4
        %v879 = vshrl.u32 %v809, 16
        %v881 = vrot.slane %v879, 7
        %v882 = vshll.u32 %v809, 16
        %v884 = vor.u32 %v881, %v882
        %v885 = vsel %vm525, %v877, %v884
        %v886 = vrot.slane %v881, 4
        %v888 = vshrl.u32 %v810, 16
        %v890 = vrot.slane %v888, 7
        %v891 = vshll.u32 %v810, 16
        %v893 = vor.u32 %v890, %v891
        %v894 = vrot.slane %v890, 4
        %v896 = vshrl.u32 %v811, 16
        %v898 = vrot.slane %v896, 7
        %v899 = vshll.u32 %v811, 16
        %v901 = vor.u32 %v898, %v899
        %v902 = vsel %vm525, %v894, %v901
        %v903 = vrot.slane %v898, 4
        %v905 = vshrl.u32 %v812, 16
        %v907 = vrot.slane %v905, 7
        %v908 = vshll.u32 %v812, 16
        %v910 = vor.u32 %v907, %v908
        %v911 = vrot.slane %v907, 4
        %v913 = vshrl.u32 %v813, 16
        %v915 = vrot.slane %v913, 7
        %v916 = vshll.u32 %v813, 16
        %v918 = vor.u32 %v915, %v916
        %v919 = vsel %vm525, %v911, %v918
        %v920 = vrot.slane %v915, 4
        %v922 = vshrl.u32 %v814, 16
        %v924 = vrot.slane %v922, 7
        %v925 = vshll.u32 %v814, 16
        %v927 = vor.u32 %v924, %v925
        %v928 = vrot.slane %v924, 4
        %v930 = vshrl.u32 %v815, 16
        %v932 = vrot.slane %v930, 7
        %v933 = vshll.u32 %v815, 16
        %v935 = vor.u32 %v932, %v933
        %v936 = vsel %vm525, %v928, %v935
        %v937 = vrot.slane %v932, 4
        %v939 = vshrl.u32 %v816, 16
        %v941 = vrot.slane %v939, 7
        %v942 = vshll.u32 %v816, 16
        %v944 = vor.u32 %v941, %v942
        %v945 = vrot.slane %v941, 4
        %v947 = vshrl.u32 %v817, 16
        %v949 = vrot.slane %v947, 7
        %v950 = vshll.u32 %v817, 16
        %v952 = vor.u32 %v949, %v950
        %v953 = vsel %vm525, %v945, %v952
        %v954 = vrot.slane %v949, 4
        %v956 = vshrl.u32 %v818, 16
        %v958 = vrot.slane %v956, 7
        %v959 = vshll.u32 %v818, 16
        %v961 = vor.u32 %v958, %v959
        %v962 = vrot.slane %v958, 4
        %v964 = vshrl.u32 %v819, 16
        %v966 = vrot.slane %v964, 7
        %v967 = vshll.u32 %v819, 16
        %v969 = vor.u32 %v966, %v967
        %v970 = vsel %vm525, %v962, %v969
        %v971 = vrot.slane %v966, 4
        %v973 = vshrl.u32 %v820, 16
        %v975 = vrot.slane %v973, 7
        %v976 = vshll.u32 %v820, 16
        %v978 = vor.u32 %v975, %v976
        %v979 = vrot.slane %v975, 4
        %v981 = vshrl.u32 %v821, 16
        %v983 = vrot.slane %v981, 7
        %v984 = vshll.u32 %v821, 16
        %v986 = vor.u32 %v983, %v984
        %v987 = vsel %vm525, %v979, %v986
        %v988 = vrot.slane %v983, 4
        %v990 = vshrl.u32 %v822, 16
        %v992 = vrot.slane %v990, 7
        %v993 = vshll.u32 %v822, 16
        %v995 = vor.u32 %v992, %v993
        %v996 = vrot.slane %v992, 4
        %v998 = vshrl.u32 %v823, 16
        %v1000 = vrot.slane %v998, 7
        %v1001 = vshll.u32 %v823, 16
        %v1003 = vor.u32 %v1000, %v1001
        %v1004 = vsel %vm525, %v996, %v1003
        %v1005 = vrot.slane %v1000, 4
        %v1007 = vshrl.u32 %v824, 16
        %v1009 = vrot.slane %v1007, 7
        %v1010 = vshll.u32 %v824, 16
        %v1012 = vor.u32 %v1009, %v1010
        %v1013 = vrot.slane %v1009, 4
        %v1015 = vshrl.u32 %v825, 16
        %v1017 = vrot.slane %v1015, 7
        %v1018 = vshll.u32 %v825, 16
        %v1020 = vor.u32 %v1017, %v1018
        %v1021 = vsel %vm525, %v1013, %v1020
        %v1022 = vrot.slane %v1017, 4
        %v1024 = vshrl.u32 %v826, 16
        %v1026 = vrot.slane %v1024, 7
        %v1027 = vshll.u32 %v826, 16
        %v1029 = vor.u32 %v1026, %v1027
        %v1030 = vrot.slane %v1026, 4
        %v1032 = vshrl.u32 %v827, 16
        %v1034 = vrot.slane %v1032, 7
        %v1035 = vshll.u32 %v827, 16
        %v1037 = vor.u32 %v1034, %v1035
        %v1038 = vsel %vm525, %v1030, %v1037
        %v1039 = vrot.slane %v1034, 4
        %v1041 = vshrl.u32 %v828, 16
        %v1043 = vrot.slane %v1041, 7
        %v1044 = vshll.u32 %v828, 16
        %v1046 = vor.u32 %v1043, %v1044
        %v1047 = vrot.slane %v1043, 4
        %v1049 = vshrl.u32 %v829, 16
        %v1051 = vrot.slane %v1049, 7
        %v1052 = vshll.u32 %v829, 16
        %v1054 = vor.u32 %v1051, %v1052
        %v1055 = vsel %vm525, %v1047, %v1054
        %v1056 = vrot.slane %v1051, 4
        %v1058 = vshrl.u32 %v830, 16
        %v1060 = vrot.slane %v1058, 7
        %v1061 = vshll.u32 %v830, 16
        %v1063 = vor.u32 %v1060, %v1061
        %v1064 = vrot.slane %v1060, 4
        %v1066 = vshrl.u32 %v831, 16
        %v1068 = vrot.slane %v1066, 7
        %v1069 = vshll.u32 %v831, 16
        %v1071 = vor.u32 %v1068, %v1069
        %v1072 = vsel %vm525, %v1064, %v1071
        %v1073 = vrot.slane %v1068, 4
        %v1075 = vshrl.u32 %v832, 16
        %v1077 = vrot.slane %v1075, 7
        %v1078 = vshll.u32 %v832, 16
        %v1080 = vor.u32 %v1077, %v1078
        %v1081 = vrot.slane %v1077, 4
        %v1083 = vshrl.u32 %v833, 16
        %v1085 = vrot.slane %v1083, 7
        %v1086 = vshll.u32 %v833, 16
        %v1088 = vor.u32 %v1085, %v1086
        %v1089 = vsel %vm525, %v1081, %v1088
        %v1090 = vrot.slane %v1085, 4
        %v1092 = vshrl.u32 %v834, 16
        %v1094 = vrot.slane %v1092, 7
        %v1095 = vshll.u32 %v834, 16
        %v1097 = vor.u32 %v1094, %v1095
        %v1098 = vrot.slane %v1094, 4
        %v1100 = vshrl.u32 %v835, 16
        %v1102 = vrot.slane %v1100, 7
        %v1103 = vshll.u32 %v835, 16
        %v1105 = vor.u32 %v1102, %v1103
        %v1106 = vsel %vm525, %v1098, %v1105
        %v1107 = vrot.slane %v1102, 4
        %1108 = vrot.lane.b32.xlu0 %v842, 4
        %v1109 = vpop.permute.xlu0 %1108
        %1110 = vrot.lane.b32.xlu0 %v851, 4
        %v1111 = vpop.permute.xlu0 %1110
        %1112 = vrot.lane.b32.xlu0 %v852, 4
        %v1113 = vpop.permute.xlu0 %1112
        %1114 = vrot.lane.b32.xlu0 %v859, 4
        %v1115 = vpop.permute.xlu0 %1114
        %1116 = vrot.lane.b32.xlu0 %v868, 4
        %v1117 = vpop.permute.xlu0 %1116
        %1118 = vrot.lane.b32.xlu0 %v869, 4
        %v1119 = vpop.permute.xlu0 %1118
        %1120 = vrot.lane.b32.xlu0 %v876, 4
        %v1121 = vpop.permute.xlu0 %1120
        %1122 = vrot.lane.b32.xlu0 %v885, 4
        %v1123 = vpop.permute.xlu0 %1122
        %1124 = vrot.lane.b32.xlu0 %v886, 4
        %v1125 = vpop.permute.xlu0 %1124
        %1126 = vrot.lane.b32.xlu0 %v893, 4
        %v1127 = vpop.permute.xlu0 %1126
        %1128 = vrot.lane.b32.xlu0 %v902, 4
        %v1129 = vpop.permute.xlu0 %1128
        %1130 = vrot.lane.b32.xlu0 %v903, 4
        %v1131 = vpop.permute.xlu0 %1130
        %1132 = vrot.lane.b32.xlu0 %v910, 4
        %v1133 = vpop.permute.xlu0 %1132
        %1134 = vrot.lane.b32.xlu0 %v919, 4
        %v1135 = vpop.permute.xlu0 %1134
        %1136 = vrot.lane.b32.xlu0 %v920, 4
        %v1137 = vpop.permute.xlu0 %1136
        %1138 = vrot.lane.b32.xlu0 %v927, 4
        %v1139 = vpop.permute.xlu0 %1138
        %1140 = vrot.lane.b32.xlu0 %v936, 4
        %v1141 = vpop.permute.xlu0 %1140
        %1142 = vrot.lane.b32.xlu0 %v937, 4
        %v1143 = vpop.permute.xlu0 %1142
        %1144 = vrot.lane.b32.xlu0 %v944, 4
        %v1145 = vpop.permute.xlu0 %1144
        %1146 = vrot.lane.b32.xlu0 %v953, 4
        %v1147 = vpop.permute.xlu0 %1146
        %1148 = vrot.lane.b32.xlu0 %v954, 4
        %v1149 = vpop.permute.xlu0 %1148
        %1150 = vrot.lane.b32.xlu0 %v961, 4
        %v1151 = vpop.permute.xlu0 %1150
        %1152 = vrot.lane.b32.xlu0 %v970, 4
        %v1153 = vpop.permute.xlu0 %1152
        %1154 = vrot.lane.b32.xlu0 %v971, 4
        %v1155 = vpop.permute.xlu0 %1154
        %1156 = vrot.lane.b32.xlu0 %v978, 4
        %v1157 = vpop.permute.xlu0 %1156
        %1158 = vrot.lane.b32.xlu0 %v987, 4
        %v1159 = vpop.permute.xlu0 %1158
        %1160 = vrot.lane.b32.xlu0 %v988, 4
        %v1161 = vpop.permute.xlu0 %1160
        %1162 = vrot.lane.b32.xlu0 %v995, 4
        %v1163 = vpop.permute.xlu0 %1162
        %1164 = vrot.lane.b32.xlu0 %v1004, 4
        %v1165 = vpop.permute.xlu0 %1164
        %1166 = vrot.lane.b32.xlu0 %v1005, 4
        %v1167 = vpop.permute.xlu0 %1166
        %1168 = vrot.lane.b32.xlu0 %v1012, 4
        %v1169 = vpop.permute.xlu0 %1168
        %1170 = vrot.lane.b32.xlu0 %v1021, 4
        %v1171 = vpop.permute.xlu0 %1170
        %1172 = vrot.lane.b32.xlu0 %v1022, 4
        %v1173 = vpop.permute.xlu0 %1172
        %1174 = vrot.lane.b32.xlu0 %v1029, 4
        %v1175 = vpop.permute.xlu0 %1174
        %1176 = vrot.lane.b32.xlu0 %v1038, 4
        %v1177 = vpop.permute.xlu0 %1176
        %1178 = vrot.lane.b32.xlu0 %v1039, 4
        %v1179 = vpop.permute.xlu0 %1178
        %1180 = vrot.lane.b32.xlu0 %v1046, 4
        %v1181 = vpop.permute.xlu0 %1180
        %1182 = vrot.lane.b32.xlu0 %v1055, 4
        %v1183 = vpop.permute.xlu0 %1182
        %1184 = vrot.lane.b32.xlu0 %v1056, 4
        %v1185 = vpop.permute.xlu0 %1184
        %1186 = vrot.lane.b32.xlu0 %v1063, 4
        %v1187 = vpop.permute.xlu0 %1186
        %1188 = vrot.lane.b32.xlu0 %v1072, 4
        %v1189 = vpop.permute.xlu0 %1188
        %1190 = vrot.lane.b32.xlu0 %v1073, 4
        %v1191 = vpop.permute.xlu0 %1190
        %1192 = vrot.lane.b32.xlu0 %v1080, 4
        %v1193 = vpop.permute.xlu0 %1192
        %1194 = vrot.lane.b32.xlu0 %v1089, 4
        %v1195 = vpop.permute.xlu0 %1194
        %1196 = vrot.lane.b32.xlu0 %v1090, 4
        %v1197 = vpop.permute.xlu0 %1196
        %1198 = vrot.lane.b32.xlu0 %v1097, 4
        %v1199 = vpop.permute.xlu0 %1198
        %1200 = vrot.lane.b32.xlu0 %v1106, 4
        %v1201 = vpop.permute.xlu0 %1200
        %1202 = vrot.lane.b32.xlu0 %v1107, 4
        %v1203 = vpop.permute.xlu0 %1202
        %vm1252 = vcmask 60448
        %vm1253 = vmand %vm1252, %vm337
        %v1254 = vld [vmem:[%s686] sm:$0xf]
        %v1255 = vsel %vm1253, %v1109, %v1254
        %1256 = vst [vmem:[%s686] sm:$0xf] %v1255
        %vm1257 = vcmask 60448
        %1258 = vst.msk [vmem:[%s686 + $0x4] sm:$0xf] %vm1257, %v1111
        %vm1259 = vcmask 57376
        %vm1260 = vmand %vm1259, %vm281
        %v1261 = vld [vmem:[%s686 + $0x8] sm:$0x1]
        %v1262 = vsel %vm1260, %v1113, %v1261
        %1263 = vst [vmem:[%s686 + $0x8] sm:$0x1] %v1262
        %v1264 = vld [vmem:[%s686 + $0xc] sm:$0xf]
        %v1265 = vsel %vm1253, %v1115, %v1264
        %1266 = vst [vmem:[%s686 + $0xc] sm:$0xf] %v1265
        %1267 = vst.msk [vmem:[%s686 + $0x10] sm:$0xf] %vm1257, %v1117
        %v1268 = vld [vmem:[%s686 + $0x14] sm:$0x1]
        %v1269 = vsel %vm1260, %v1119, %v1268
        %1270 = vst [vmem:[%s686 + $0x14] sm:$0x1] %v1269
        %v1271 = vld [vmem:[%s686 + $0x18] sm:$0xf]
        %v1272 = vsel %vm1253, %v1121, %v1271
        %1273 = vst [vmem:[%s686 + $0x18] sm:$0xf] %v1272
        %1274 = vst.msk [vmem:[%s686 + $0x1c] sm:$0xf] %vm1257, %v1123
        %v1275 = vld [vmem:[%s686 + $0x20] sm:$0x1]
        %v1276 = vsel %vm1260, %v1125, %v1275
        %1277 = vst [vmem:[%s686 + $0x20] sm:$0x1] %v1276
        %v1278 = vld [vmem:[%s686 + $0x24] sm:$0xf]
        %v1279 = vsel %vm1253, %v1127, %v1278
        %1280 = vst [vmem:[%s686 + $0x24] sm:$0xf] %v1279
        %1281 = vst.msk [vmem:[%s686 + $0x28] sm:$0xf] %vm1257, %v1129
        %v1282 = vld [vmem:[%s686 + $0x2c] sm:$0x1]
        %v1283 = vsel %vm1260, %v1131, %v1282
        %1284 = vst [vmem:[%s686 + $0x2c] sm:$0x1] %v1283
        %v1285 = vld [vmem:[%s686 + $0x30] sm:$0xf]
        %v1286 = vsel %vm1253, %v1133, %v1285
        %1287 = vst [vmem:[%s686 + $0x30] sm:$0xf] %v1286
        %1288 = vst.msk [vmem:[%s686 + $0x34] sm:$0xf] %vm1257, %v1135
        %v1289 = vld [vmem:[%s686 + $0x38] sm:$0x1]
        %v1290 = vsel %vm1260, %v1137, %v1289
        %1291 = vst [vmem:[%s686 + $0x38] sm:$0x1] %v1290
        %v1292 = vld [vmem:[%s686 + $0x3c] sm:$0xf]
        %v1293 = vsel %vm1253, %v1139, %v1292
        %1294 = vst [vmem:[%s686 + $0x3c] sm:$0xf] %v1293
        %1295 = vst.msk [vmem:[%s686 + $0x40] sm:$0xf] %vm1257, %v1141
        %v1296 = vld [vmem:[%s686 + $0x44] sm:$0x1]
        %v1297 = vsel %vm1260, %v1143, %v1296
        %1298 = vst [vmem:[%s686 + $0x44] sm:$0x1] %v1297
        %v1299 = vld [vmem:[%s686 + $0x48] sm:$0xf]
        %v1300 = vsel %vm1253, %v1145, %v1299
        %1301 = vst [vmem:[%s686 + $0x48] sm:$0xf] %v1300
        %1302 = vst.msk [vmem:[%s686 + $0x4c] sm:$0xf] %vm1257, %v1147
        %v1303 = vld [vmem:[%s686 + $0x50] sm:$0x1]
        %v1304 = vsel %vm1260, %v1149, %v1303
        %1305 = vst [vmem:[%s686 + $0x50] sm:$0x1] %v1304
        %v1306 = vld [vmem:[%s686 + $0x54] sm:$0xf]
        %v1307 = vsel %vm1253, %v1151, %v1306
        %1308 = vst [vmem:[%s686 + $0x54] sm:$0xf] %v1307
        %1309 = vst.msk [vmem:[%s686 + $0x58] sm:$0xf] %vm1257, %v1153
        %v1310 = vld [vmem:[%s686 + $0x5c] sm:$0x1]
        %v1311 = vsel %vm1260, %v1155, %v1310
        %1312 = vst [vmem:[%s686 + $0x5c] sm:$0x1] %v1311
        %v1313 = vld [vmem:[%s686 + $0x60] sm:$0xf]
        %v1314 = vsel %vm1253, %v1157, %v1313
        %1315 = vst [vmem:[%s686 + $0x60] sm:$0xf] %v1314
        %1316 = vst.msk [vmem:[%s686 + $0x64] sm:$0xf] %vm1257, %v1159
        %v1317 = vld [vmem:[%s686 + $0x68] sm:$0x1]
        %v1318 = vsel %vm1260, %v1161, %v1317
        %1319 = vst [vmem:[%s686 + $0x68] sm:$0x1] %v1318
        %v1320 = vld [vmem:[%s686 + $0x6c] sm:$0xf]
        %v1321 = vsel %vm1253, %v1163, %v1320
        %1322 = vst [vmem:[%s686 + $0x6c] sm:$0xf] %v1321
        %1323 = vst.msk [vmem:[%s686 + $0x70] sm:$0xf] %vm1257, %v1165
        %v1324 = vld [vmem:[%s686 + $0x74] sm:$0x1]
        %v1325 = vsel %vm1260, %v1167, %v1324
        %1326 = vst [vmem:[%s686 + $0x74] sm:$0x1] %v1325
        %v1327 = vld [vmem:[%s686 + $0x78] sm:$0xf]
        %v1328 = vsel %vm1253, %v1169, %v1327
        %1329 = vst [vmem:[%s686 + $0x78] sm:$0xf] %v1328
        %1330 = vst.msk [vmem:[%s686 + $0x7c] sm:$0xf] %vm1257, %v1171
        %v1331 = vld [vmem:[%s686 + $0x80] sm:$0x1]
        %v1332 = vsel %vm1260, %v1173, %v1331
        %1333 = vst [vmem:[%s686 + $0x80] sm:$0x1] %v1332
        %v1334 = vld [vmem:[%s686 + $0x84] sm:$0xf]
        %v1335 = vsel %vm1253, %v1175, %v1334
        %1336 = vst [vmem:[%s686 + $0x84] sm:$0xf] %v1335
        %1337 = vst.msk [vmem:[%s686 + $0x88] sm:$0xf] %vm1257, %v1177
        %v1338 = vld [vmem:[%s686 + $0x8c] sm:$0x1]
        %v1339 = vsel %vm1260, %v1179, %v1338
        %1340 = vst [vmem:[%s686 + $0x8c] sm:$0x1] %v1339
        %v1341 = vld [vmem:[%s686 + $0x90] sm:$0xf]
        %v1342 = vsel %vm1253, %v1181, %v1341
        %1343 = vst [vmem:[%s686 + $0x90] sm:$0xf] %v1342
        %1344 = vst.msk [vmem:[%s686 + $0x94] sm:$0xf] %vm1257, %v1183
        %v1345 = vld [vmem:[%s686 + $0x98] sm:$0x1]
        %v1346 = vsel %vm1260, %v1185, %v1345
        %1347 = vst [vmem:[%s686 + $0x98] sm:$0x1] %v1346
        %v1348 = vld [vmem:[%s686 + $0x9c] sm:$0xf]
        %v1349 = vsel %vm1253, %v1187, %v1348
        %1350 = vst [vmem:[%s686 + $0x9c] sm:$0xf] %v1349
        %1351 = vst.msk [vmem:[%s686 + $0xa0] sm:$0xf] %vm1257, %v1189
        %v1352 = vld [vmem:[%s686 + $0xa4] sm:$0x1]
        %v1353 = vsel %vm1260, %v1191, %v1352
        %1354 = vst [vmem:[%s686 + $0xa4] sm:$0x1] %v1353
        %v1355 = vld [vmem:[%s686 + $0xa8] sm:$0xf]
        %v1356 = vsel %vm1253, %v1193, %v1355
        %1357 = vst [vmem:[%s686 + $0xa8] sm:$0xf] %v1356
        %1358 = vst.msk [vmem:[%s686 + $0xac] sm:$0xf] %vm1257, %v1195
        %v1359 = vld [vmem:[%s686 + $0xb0] sm:$0x1]
        %v1360 = vsel %vm1260, %v1197, %v1359
        %1361 = vst [vmem:[%s686 + $0xb0] sm:$0x1] %v1360
        %v1362 = vld [vmem:[%s686 + $0xb4] sm:$0xf]
        %v1363 = vsel %vm1253, %v1199, %v1362
        %1364 = vst [vmem:[%s686 + $0xb4] sm:$0xf] %v1363
        %1365 = vst.msk [vmem:[%s686 + $0xb8] sm:$0xf] %vm1257, %v1201
        %v1366 = vld [vmem:[%s686 + $0xbc] sm:$0x1]
        %v1367 = vsel %vm1260, %v1203, %v1366
        %1368 = vst [vmem:[%s686 + $0xbc] sm:$0x1] %v1367
        %v1369 = vld [vmem:[#allocation2] sm:$0xf]
        %v1370 = vld [vmem:[#allocation2 + $0x4] sm:$0xf]
        %v1371 = vld [vmem:[#allocation2 + $0xc] sm:$0xf]
        %v1372 = vld [vmem:[#allocation2 + $0x10] sm:$0xf]
        %v1373 = vld [vmem:[#allocation2 + $0x18] sm:$0xf]
        %v1374 = vld [vmem:[#allocation2 + $0x1c] sm:$0xf]
        %v1375 = vld [vmem:[#allocation2 + $0x24] sm:$0xf]
        %v1376 = vld [vmem:[#allocation2 + $0x28] sm:$0xf]
        %v1377 = vld [vmem:[#allocation2 + $0x30] sm:$0xf]
        %v1378 = vld [vmem:[#allocation2 + $0x34] sm:$0xf]
        %v1379 = vld [vmem:[#allocation2 + $0x3c] sm:$0xf]
        %v1380 = vld [vmem:[#allocation2 + $0x40] sm:$0xf]
        %v1381 = vld [vmem:[#allocation2 + $0x48] sm:$0xf]
        %v1382 = vld [vmem:[#allocation2 + $0x4c] sm:$0xf]
        %v1383 = vld [vmem:[#allocation2 + $0x54] sm:$0xf]
        %v1384 = vld [vmem:[#allocation2 + $0x58] sm:$0xf]
        %v1385 = vld [vmem:[#allocation2 + $0x60] sm:$0xf]
        %v1386 = vld [vmem:[#allocation2 + $0x64] sm:$0xf]
        %v1387 = vld [vmem:[#allocation2 + $0x6c] sm:$0xf]
        %v1388 = vld [vmem:[#allocation2 + $0x70] sm:$0xf]
        %v1389 = vld [vmem:[#allocation2 + $0x78] sm:$0xf]
        %v1390 = vld [vmem:[#allocation2 + $0x7c] sm:$0xf]
        %v1391 = vld [vmem:[#allocation2 + $0x84] sm:$0xf]
        %v1392 = vld [vmem:[#allocation2 + $0x88] sm:$0xf]
        %v1393 = vld [vmem:[#allocation2 + $0x90] sm:$0xf]
        %v1394 = vld [vmem:[#allocation2 + $0x94] sm:$0xf]
        %v1395 = vld [vmem:[#allocation2 + $0x9c] sm:$0xf]
        %v1396 = vld [vmem:[#allocation2 + $0xa0] sm:$0xf]
        %v1397 = vld [vmem:[#allocation2 + $0xa8] sm:$0xf]
        %v1398 = vld [vmem:[#allocation2 + $0xac] sm:$0xf]
        %v1399 = vld [vmem:[#allocation2 + $0xb4] sm:$0xf]
        %v1400 = vld [vmem:[#allocation2 + $0xb8] sm:$0xf]
        %1401 = vst.msk [vmem:[#allocation4] sm:$0xf] %vm271, %v1369
        %1402 = vst.msk [vmem:[#allocation4 + $0x4] sm:$0xf] %vm271, %v1370
        %1403 = vst.msk [vmem:[#allocation4 + $0x8] sm:$0xf] %vm271, %v1371
        %1404 = vst.msk [vmem:[#allocation4 + $0xc] sm:$0xf] %vm271, %v1372
        %1405 = vst.msk [vmem:[#allocation4 + $0x10] sm:$0xf] %vm271, %v1373
        %1406 = vst.msk [vmem:[#allocation4 + $0x14] sm:$0xf] %vm271, %v1374
        %1407 = vst.msk [vmem:[#allocation4 + $0x18] sm:$0xf] %vm271, %v1375
        %1408 = vst.msk [vmem:[#allocation4 + $0x1c] sm:$0xf] %vm271, %v1376
        %1409 = vst.msk [vmem:[#allocation4 + $0x20] sm:$0xf] %vm271, %v1377
        %1410 = vst.msk [vmem:[#allocation4 + $0x24] sm:$0xf] %vm271, %v1378
        %1411 = vst.msk [vmem:[#allocation4 + $0x28] sm:$0xf] %vm271, %v1379
        %1412 = vst.msk [vmem:[#allocation4 + $0x2c] sm:$0xf] %vm271, %v1380
        %1413 = vst.msk [vmem:[#allocation4 + $0x30] sm:$0xf] %vm271, %v1381
        %1414 = vst.msk [vmem:[#allocation4 + $0x34] sm:$0xf] %vm271, %v1382
        %1415 = vst.msk [vmem:[#allocation4 + $0x38] sm:$0xf] %vm271, %v1383
        %1416 = vst.msk [vmem:[#allocation4 + $0x3c] sm:$0xf] %vm271, %v1384
        %1417 = vst.msk [vmem:[#allocation4 + $0x40] sm:$0xf] %vm271, %v1385
        %1418 = vst.msk [vmem:[#allocation4 + $0x44] sm:$0xf] %vm271, %v1386
        %1419 = vst.msk [vmem:[#allocation4 + $0x48] sm:$0xf] %vm271, %v1387
        %1420 = vst.msk [vmem:[#allocation4 + $0x4c] sm:$0xf] %vm271, %v1388
        %1421 = vst.msk [vmem:[#allocation4 + $0x50] sm:$0xf] %vm271, %v1389
        %1422 = vst.msk [vmem:[#allocation4 + $0x54] sm:$0xf] %vm271, %v1390
        %1423 = vst.msk [vmem:[#allocation4 + $0x58] sm:$0xf] %vm271, %v1391
        %1424 = vst.msk [vmem:[#allocation4 + $0x5c] sm:$0xf] %vm271, %v1392
        %1425 = vst.msk [vmem:[#allocation4 + $0x60] sm:$0xf] %vm271, %v1393
        %1426 = vst.msk [vmem:[#allocation4 + $0x64] sm:$0xf] %vm271, %v1394
        %1427 = vst.msk [vmem:[#allocation4 + $0x68] sm:$0xf] %vm271, %v1395
        %1428 = vst.msk [vmem:[#allocation4 + $0x6c] sm:$0xf] %vm271, %v1396
        %1429 = vst.msk [vmem:[#allocation4 + $0x70] sm:$0xf] %vm271, %v1397
        %1430 = vst.msk [vmem:[#allocation4 + $0x74] sm:$0xf] %vm271, %v1398
        %1431 = vst.msk [vmem:[#allocation4 + $0x78] sm:$0xf] %vm271, %v1399
        %1432 = vst.msk [vmem:[#allocation4 + $0x7c] sm:$0xf] %vm271, %v1400
        %v1433 = vld [vmem:[#allocation2] sm:$0xf]
        %v1434 = vld [vmem:[#allocation2 + $0x4] sm:$0xf]
        %v1435 = vld [vmem:[#allocation2 + $0x8] sm:$0x1]
        %v1436 = vld [vmem:[#allocation2 + $0xc] sm:$0xf]
        %v1437 = vld [vmem:[#allocation2 + $0x10] sm:$0xf]
        %v1438 = vld [vmem:[#allocation2 + $0x14] sm:$0x1]
        %v1439 = vld [vmem:[#allocation2 + $0x18] sm:$0xf]
        %v1440 = vld [vmem:[#allocation2 + $0x1c] sm:$0xf]
        %v1441 = vld [vmem:[#allocation2 + $0x20] sm:$0x1]
        %v1442 = vld [vmem:[#allocation2 + $0x24] sm:$0xf]
        %v1443 = vld [vmem:[#allocation2 + $0x28] sm:$0xf]
        %v1444 = vld [vmem:[#allocation2 + $0x2c] sm:$0x1]
        %v1445 = vld [vmem:[#allocation2 + $0x30] sm:$0xf]
        %v1446 = vld [vmem:[#allocation2 + $0x34] sm:$0xf]
        %v1447 = vld [vmem:[#allocation2 + $0x38] sm:$0x1]
        %v1448 = vld [vmem:[#allocation2 + $0x3c] sm:$0xf]
        %v1449 = vld [vmem:[#allocation2 + $0x40] sm:$0xf]
        %v1450 = vld [vmem:[#allocation2 + $0x44] sm:$0x1]
        %v1451 = vld [vmem:[#allocation2 + $0x48] sm:$0xf]
        %v1452 = vld [vmem:[#allocation2 + $0x4c] sm:$0xf]
        %v1453 = vld [vmem:[#allocation2 + $0x50] sm:$0x1]
        %v1454 = vld [vmem:[#allocation2 + $0x54] sm:$0xf]
        %v1455 = vld [vmem:[#allocation2 + $0x58] sm:$0xf]
        %v1456 = vld [vmem:[#allocation2 + $0x5c] sm:$0x1]
        %v1457 = vld [vmem:[#allocation2 + $0x60] sm:$0xf]
        %v1458 = vld [vmem:[#allocation2 + $0x64] sm:$0xf]
        %v1459 = vld [vmem:[#allocation2 + $0x68] sm:$0x1]
        %v1460 = vld [vmem:[#allocation2 + $0x6c] sm:$0xf]
        %v1461 = vld [vmem:[#allocation2 + $0x70] sm:$0xf]
        %v1462 = vld [vmem:[#allocation2 + $0x74] sm:$0x1]
        %v1463 = vld [vmem:[#allocation2 + $0x78] sm:$0xf]
        %v1464 = vld [vmem:[#allocation2 + $0x7c] sm:$0xf]
        %v1465 = vld [vmem:[#allocation2 + $0x80] sm:$0x1]
        %v1466 = vld [vmem:[#allocation2 + $0x84] sm:$0xf]
        %v1467 = vld [vmem:[#allocation2 + $0x88] sm:$0xf]
        %v1468 = vld [vmem:[#allocation2 + $0x8c] sm:$0x1]
        %v1469 = vld [vmem:[#allocation2 + $0x90] sm:$0xf]
        %v1470 = vld [vmem:[#allocation2 + $0x94] sm:$0xf]
        %v1471 = vld [vmem:[#allocation2 + $0x98] sm:$0x1]
        %v1472 = vld [vmem:[#allocation2 + $0x9c] sm:$0xf]
        %v1473 = vld [vmem:[#allocation2 + $0xa0] sm:$0xf]
        %v1474 = vld [vmem:[#allocation2 + $0xa4] sm:$0x1]
        %v1475 = vld [vmem:[#allocation2 + $0xa8] sm:$0xf]
        %v1476 = vld [vmem:[#allocation2 + $0xac] sm:$0xf]
        %v1477 = vld [vmem:[#allocation2 + $0xb0] sm:$0x1]
        %v1478 = vld [vmem:[#allocation2 + $0xb4] sm:$0xf]
        %v1479 = vld [vmem:[#allocation2 + $0xb8] sm:$0xf]
        %v1480 = vld [vmem:[#allocation2 + $0xbc] sm:$0x1]
        %vm1481 = vsmask.f32 3328
        %vm1482 = vsmask.f32 7440
        %vm1483 = vmor %vm1481, %vm1482
        %v1485 = vshrl.u32 %v1433, 16
        %v1487 = vrot.slane %v1485, 4
        %v1488 = vshll.u32 %v1433, 16
        %v1490 = vrot.slane %v1488, 5
        %v1491 = vor.u32 %v1487, %v1490
        %v1492 = vrot.slane %v1491, 4
        %v1494 = vshll.u32 %v1434, 16
        %v1496 = vrot.slane %v1494, 5
        %v1497 = vsel %vm1483, %v1492, %v1496
        %v1498 = vshrl.u32 %v1434, 16
        %v1500 = vrot.slane %v1498, 4
        %v1501 = vor.u32 %v1500, %v1496
        %v1502 = vrot.slane %v1501, 4
        %v1504 = vshll.u32 %v1435, 16
        %v1506 = vrot.slane %v1504, 5
        %v1507 = vsel %vm1483, %v1502, %v1506
        %v1509 = vshrl.u32 %v1436, 16
        %v1511 = vrot.slane %v1509, 4
        %v1512 = vshll.u32 %v1436, 16
        %v1514 = vrot.slane %v1512, 5
        %v1515 = vor.u32 %v1511, %v1514
        %v1516 = vrot.slane %v1515, 4
        %v1518 = vshll.u32 %v1437, 16
        %v1520 = vrot.slane %v1518, 5
        %v1521 = vsel %vm1483, %v1516, %v1520
        %v1522 = vshrl.u32 %v1437, 16
        %v1524 = vrot.slane %v1522, 4
        %v1525 = vor.u32 %v1524, %v1520
        %v1526 = vrot.slane %v1525, 4
        %v1528 = vshll.u32 %v1438, 16
        %v1530 = vrot.slane %v1528, 5
        %v1531 = vsel %vm1483, %v1526, %v1530
        %v1533 = vshrl.u32 %v1439, 16
        %v1535 = vrot.slane %v1533, 4
        %v1536 = vshll.u32 %v1439, 16
        %v1538 = vrot.slane %v1536, 5
        %v1539 = vor.u32 %v1535, %v1538
        %v1540 = vrot.slane %v1539, 4
        %v1542 = vshll.u32 %v1440, 16
        %v1544 = vrot.slane %v1542, 5
        %v1545 = vsel %vm1483, %v1540, %v1544
        %v1546 = vshrl.u32 %v1440, 16
        %v1548 = vrot.slane %v1546, 4
        %v1549 = vor.u32 %v1548, %v1544
        %v1550 = vrot.slane %v1549, 4
        %v1552 = vshll.u32 %v1441, 16
        %v1554 = vrot.slane %v1552, 5
        %v1555 = vsel %vm1483, %v1550, %v1554
        %v1557 = vshrl.u32 %v1442, 16
        %v1559 = vrot.slane %v1557, 4
        %v1560 = vshll.u32 %v1442, 16
        %v1562 = vrot.slane %v1560, 5
        %v1563 = vor.u32 %v1559, %v1562
        %v1564 = vrot.slane %v1563, 4
        %v1566 = vshll.u32 %v1443, 16
        %v1568 = vrot.slane %v1566, 5
        %v1569 = vsel %vm1483, %v1564, %v1568
        %v1570 = vshrl.u32 %v1443, 16
        %v1572 = vrot.slane %v1570, 4
        %v1573 = vor.u32 %v1572, %v1568
        %v1574 = vrot.slane %v1573, 4
        %v1576 = vshll.u32 %v1444, 16
        %v1578 = vrot.slane %v1576, 5
        %v1579 = vsel %vm1483, %v1574, %v1578
        %v1581 = vshrl.u32 %v1445, 16
        %v1583 = vrot.slane %v1581, 4
        %v1584 = vshll.u32 %v1445, 16
        %v1586 = vrot.slane %v1584, 5
        %v1587 = vor.u32 %v1583, %v1586
        %v1588 = vrot.slane %v1587, 4
        %v1590 = vshll.u32 %v1446, 16
        %v1592 = vrot.slane %v1590, 5
        %v1593 = vsel %vm1483, %v1588, %v1592
        %v1594 = vshrl.u32 %v1446, 16
        %v1596 = vrot.slane %v1594, 4
        %v1597 = vor.u32 %v1596, %v1592
        %v1598 = vrot.slane %v1597, 4
        %v1600 = vshll.u32 %v1447, 16
        %v1602 = vrot.slane %v1600, 5
        %v1603 = vsel %vm1483, %v1598, %v1602
        %v1605 = vshrl.u32 %v1448, 16
        %v1607 = vrot.slane %v1605, 4
        %v1608 = vshll.u32 %v1448, 16
        %v1610 = vrot.slane %v1608, 5
        %v1611 = vor.u32 %v1607, %v1610
        %v1612 = vrot.slane %v1611, 4
        %v1614 = vshll.u32 %v1449, 16
        %v1616 = vrot.slane %v1614, 5
        %v1617 = vsel %vm1483, %v1612, %v1616
        %v1618 = vshrl.u32 %v1449, 16
        %v1620 = vrot.slane %v1618, 4
        %v1621 = vor.u32 %v1620, %v1616
        %v1622 = vrot.slane %v1621, 4
        %v1624 = vshll.u32 %v1450, 16
        %v1626 = vrot.slane %v1624, 5
        %v1627 = vsel %vm1483, %v1622, %v1626
        %v1629 = vshrl.u32 %v1451, 16
        %v1631 = vrot.slane %v1629, 4
        %v1632 = vshll.u32 %v1451, 16
        %v1634 = vrot.slane %v1632, 5
        %v1635 = vor.u32 %v1631, %v1634
        %v1636 = vrot.slane %v1635, 4
        %v1638 = vshll.u32 %v1452, 16
        %v1640 = vrot.slane %v1638, 5
        %v1641 = vsel %vm1483, %v1636, %v1640
        %v1642 = vshrl.u32 %v1452, 16
        %v1644 = vrot.slane %v1642, 4
        %v1645 = vor.u32 %v1644, %v1640
        %v1646 = vrot.slane %v1645, 4
        %v1648 = vshll.u32 %v1453, 16
        %v1650 = vrot.slane %v1648, 5
        %v1651 = vsel %vm1483, %v1646, %v1650
        %v1653 = vshrl.u32 %v1454, 16
        %v1655 = vrot.slane %v1653, 4
        %v1656 = vshll.u32 %v1454, 16
        %v1658 = vrot.slane %v1656, 5
        %v1659 = vor.u32 %v1655, %v1658
        %v1660 = vrot.slane %v1659, 4
        %v1662 = vshll.u32 %v1455, 16
        %v1664 = vrot.slane %v1662, 5
        %v1665 = vsel %vm1483, %v1660, %v1664
        %v1666 = vshrl.u32 %v1455, 16
        %v1668 = vrot.slane %v1666, 4
        %v1669 = vor.u32 %v1668, %v1664
        %v1670 = vrot.slane %v1669, 4
        %v1672 = vshll.u32 %v1456, 16
        %v1674 = vrot.slane %v1672, 5
        %v1675 = vsel %vm1483, %v1670, %v1674
        %v1677 = vshrl.u32 %v1457, 16
        %v1679 = vrot.slane %v1677, 4
        %v1680 = vshll.u32 %v1457, 16
        %v1682 = vrot.slane %v1680, 5
        %v1683 = vor.u32 %v1679, %v1682
        %v1684 = vrot.slane %v1683, 4
        %v1686 = vshll.u32 %v1458, 16
        %v1688 = vrot.slane %v1686, 5
        %v1689 = vsel %vm1483, %v1684, %v1688
        %v1690 = vshrl.u32 %v1458, 16
        %v1692 = vrot.slane %v1690, 4
        %v1693 = vor.u32 %v1692, %v1688
        %v1694 = vrot.slane %v1693, 4
        %v1696 = vshll.u32 %v1459, 16
        %v1698 = vrot.slane %v1696, 5
        %v1699 = vsel %vm1483, %v1694, %v1698
        %v1701 = vshrl.u32 %v1460, 16
        %v1703 = vrot.slane %v1701, 4
        %v1704 = vshll.u32 %v1460, 16
        %v1706 = vrot.slane %v1704, 5
        %v1707 = vor.u32 %v1703, %v1706
        %v1708 = vrot.slane %v1707, 4
        %v1710 = vshll.u32 %v1461, 16
        %v1712 = vrot.slane %v1710, 5
        %v1713 = vsel %vm1483, %v1708, %v1712
        %v1714 = vshrl.u32 %v1461, 16
        %v1716 = vrot.slane %v1714, 4
        %v1717 = vor.u32 %v1716, %v1712
        %v1718 = vrot.slane %v1717, 4
        %v1720 = vshll.u32 %v1462, 16
        %v1722 = vrot.slane %v1720, 5
        %v1723 = vsel %vm1483, %v1718, %v1722
        %v1725 = vshrl.u32 %v1463, 16
        %v1727 = vrot.slane %v1725, 4
        %v1728 = vshll.u32 %v1463, 16
        %v1730 = vrot.slane %v1728, 5
        %v1731 = vor.u32 %v1727, %v1730
        %v1732 = vrot.slane %v1731, 4
        %v1734 = vshll.u32 %v1464, 16
        %v1736 = vrot.slane %v1734, 5
        %v1737 = vsel %vm1483, %v1732, %v1736
        %v1738 = vshrl.u32 %v1464, 16
        %v1740 = vrot.slane %v1738, 4
        %v1741 = vor.u32 %v1740, %v1736
        %v1742 = vrot.slane %v1741, 4
        %v1744 = vshll.u32 %v1465, 16
        %v1746 = vrot.slane %v1744, 5
        %v1747 = vsel %vm1483, %v1742, %v1746
        %v1749 = vshrl.u32 %v1466, 16
        %v1751 = vrot.slane %v1749, 4
        %v1752 = vshll.u32 %v1466, 16
        %v1754 = vrot.slane %v1752, 5
        %v1755 = vor.u32 %v1751, %v1754
        %v1756 = vrot.slane %v1755, 4
        %v1758 = vshll.u32 %v1467, 16
        %v1760 = vrot.slane %v1758, 5
        %v1761 = vsel %vm1483, %v1756, %v1760
        %v1762 = vshrl.u32 %v1467, 16
        %v1764 = vrot.slane %v1762, 4
        %v1765 = vor.u32 %v1764, %v1760
        %v1766 = vrot.slane %v1765, 4
        %v1768 = vshll.u32 %v1468, 16
        %v1770 = vrot.slane %v1768, 5
        %v1771 = vsel %vm1483, %v1766, %v1770
        %v1773 = vshrl.u32 %v1469, 16
        %v1775 = vrot.slane %v1773, 4
        %v1776 = vshll.u32 %v1469, 16
        %v1778 = vrot.slane %v1776, 5
        %v1779 = vor.u32 %v1775, %v1778
        %v1780 = vrot.slane %v1779, 4
        %v1782 = vshll.u32 %v1470, 16
        %v1784 = vrot.slane %v1782, 5
        %v1785 = vsel %vm1483, %v1780, %v1784
        %v1786 = vshrl.u32 %v1470, 16
        %v1788 = vrot.slane %v1786, 4
        %v1789 = vor.u32 %v1788, %v1784
        %v1790 = vrot.slane %v1789, 4
        %v1792 = vshll.u32 %v1471, 16
        %v1794 = vrot.slane %v1792, 5
        %v1795 = vsel %vm1483, %v1790, %v1794
        %v1797 = vshrl.u32 %v1472, 16
        %v1799 = vrot.slane %v1797, 4
        %v1800 = vshll.u32 %v1472, 16
        %v1802 = vrot.slane %v1800, 5
        %v1803 = vor.u32 %v1799, %v1802
        %v1804 = vrot.slane %v1803, 4
        %v1806 = vshll.u32 %v1473, 16
        %v1808 = vrot.slane %v1806, 5
        %v1809 = vsel %vm1483, %v1804, %v1808
        %v1810 = vshrl.u32 %v1473, 16
        %v1812 = vrot.slane %v1810, 4
        %v1813 = vor.u32 %v1812, %v1808
        %v1814 = vrot.slane %v1813, 4
        %v1816 = vshll.u32 %v1474, 16
        %v1818 = vrot.slane %v1816, 5
        %v1819 = vsel %vm1483, %v1814, %v1818
        %v1821 = vshrl.u32 %v1475, 16
        %v1823 = vrot.slane %v1821, 4
        %v1824 = vshll.u32 %v1475, 16
        %v1826 = vrot.slane %v1824, 5
        %v1827 = vor.u32 %v1823, %v1826
        %v1828 = vrot.slane %v1827, 4
        %v1830 = vshll.u32 %v1476, 16
        %v1832 = vrot.slane %v1830, 5
        %v1833 = vsel %vm1483, %v1828, %v1832
        %v1834 = vshrl.u32 %v1476, 16
        %v1836 = vrot.slane %v1834, 4
        %v1837 = vor.u32 %v1836, %v1832
        %v1838 = vrot.slane %v1837, 4
        %v1840 = vshll.u32 %v1477, 16
        %v1842 = vrot.slane %v1840, 5
        %v1843 = vsel %vm1483, %v1838, %v1842
        %v1845 = vshrl.u32 %v1478, 16
        %v1847 = vrot.slane %v1845, 4
        %v1848 = vshll.u32 %v1478, 16
        %v1850 = vrot.slane %v1848, 5
        %v1851 = vor.u32 %v1847, %v1850
        %v1852 = vrot.slane %v1851, 4
        %v1854 = vshll.u32 %v1479, 16
        %v1856 = vrot.slane %v1854, 5
        %v1857 = vsel %vm1483, %v1852, %v1856
        %v1858 = vshrl.u32 %v1479, 16
        %v1860 = vrot.slane %v1858, 4
        %v1861 = vor.u32 %v1860, %v1856
        %v1862 = vrot.slane %v1861, 4
        %v1864 = vshll.u32 %v1480, 16
        %v1866 = vrot.slane %v1864, 5
        %v1867 = vsel %vm1483, %v1862, %v1866
        %1868 = vrot.lane.b32.xlu0 %v1497, 8
        %v1869 = vpop.permute.xlu0 %1868
        %1870 = vrot.lane.b32.xlu0 %v1507, 8
        %v1871 = vpop.permute.xlu0 %1870
        %1872 = vrot.lane.b32.xlu0 %v1521, 8
        %v1873 = vpop.permute.xlu0 %1872
        %1874 = vrot.lane.b32.xlu0 %v1531, 8
        %v1875 = vpop.permute.xlu0 %1874
        %1876 = vrot.lane.b32.xlu0 %v1545, 8
        %v1877 = vpop.permute.xlu0 %1876
        %1878 = vrot.lane.b32.xlu0 %v1555, 8
        %v1879 = vpop.permute.xlu0 %1878
        %1880 = vrot.lane.b32.xlu0 %v1569, 8
        %v1881 = vpop.permute.xlu0 %1880
        %1882 = vrot.lane.b32.xlu0 %v1579, 8
        %v1883 = vpop.permute.xlu0 %1882
        %1884 = vrot.lane.b32.xlu0 %v1593, 8
        %v1885 = vpop.permute.xlu0 %1884
        %1886 = vrot.lane.b32.xlu0 %v1603, 8
        %v1887 = vpop.permute.xlu0 %1886
        %1888 = vrot.lane.b32.xlu0 %v1617, 8
        %v1889 = vpop.permute.xlu0 %1888
        %1890 = vrot.lane.b32.xlu0 %v1627, 8
        %v1891 = vpop.permute.xlu0 %1890
        %1892 = vrot.lane.b32.xlu0 %v1641, 8
        %v1893 = vpop.permute.xlu0 %1892
        %1894 = vrot.lane.b32.xlu0 %v1651, 8
        %v1895 = vpop.permute.xlu0 %1894
        %1896 = vrot.lane.b32.xlu0 %v1665, 8
        %v1897 = vpop.permute.xlu0 %1896
        %1898 = vrot.lane.b32.xlu0 %v1675, 8
        %v1899 = vpop.permute.xlu0 %1898
        %1900 = vrot.lane.b32.xlu0 %v1689, 8
        %v1901 = vpop.permute.xlu0 %1900
        %1902 = vrot.lane.b32.xlu0 %v1699, 8
        %v1903 = vpop.permute.xlu0 %1902
        %1904 = vrot.lane.b32.xlu0 %v1713, 8
        %v1905 = vpop.permute.xlu0 %1904
        %1906 = vrot.lane.b32.xlu0 %v1723, 8
        %v1907 = vpop.permute.xlu0 %1906
        %1908 = vrot.lane.b32.xlu0 %v1737, 8
        %v1909 = vpop.permute.xlu0 %1908
        %1910 = vrot.lane.b32.xlu0 %v1747, 8
        %v1911 = vpop.permute.xlu0 %1910
        %1912 = vrot.lane.b32.xlu0 %v1761, 8
        %v1913 = vpop.permute.xlu0 %1912
        %1914 = vrot.lane.b32.xlu0 %v1771, 8
        %v1915 = vpop.permute.xlu0 %1914
        %1916 = vrot.lane.b32.xlu0 %v1785, 8
        %v1917 = vpop.permute.xlu0 %1916
        %1918 = vrot.lane.b32.xlu0 %v1795, 8
        %v1919 = vpop.permute.xlu0 %1918
        %1920 = vrot.lane.b32.xlu0 %v1809, 8
        %v1921 = vpop.permute.xlu0 %1920
        %1922 = vrot.lane.b32.xlu0 %v1819, 8
        %v1923 = vpop.permute.xlu0 %1922
        %1924 = vrot.lane.b32.xlu0 %v1833, 8
        %v1925 = vpop.permute.xlu0 %1924
        %1926 = vrot.lane.b32.xlu0 %v1843, 8
        %v1927 = vpop.permute.xlu0 %1926
        %1928 = vrot.lane.b32.xlu0 %v1857, 8
        %v1929 = vpop.permute.xlu0 %1928
        %1930 = vrot.lane.b32.xlu0 %v1867, 8
        %v1931 = vpop.permute.xlu0 %1930
        %vm1964 = vcmask 126016
        %1965 = vst.msk [vmem:[#allocation4] sm:$0xf] %vm1964, %v1869
        %1966 = vst.msk [vmem:[#allocation4 + $0x4] sm:$0xf] %vm1964, %v1871
        %1967 = vst.msk [vmem:[#allocation4 + $0x8] sm:$0xf] %vm1964, %v1873
        %1968 = vst.msk [vmem:[#allocation4 + $0xc] sm:$0xf] %vm1964, %v1875
        %1969 = vst.msk [vmem:[#allocation4 + $0x10] sm:$0xf] %vm1964, %v1877
        %1970 = vst.msk [vmem:[#allocation4 + $0x14] sm:$0xf] %vm1964, %v1879
        %1971 = vst.msk [vmem:[#allocation4 + $0x18] sm:$0xf] %vm1964, %v1881
        %1972 = vst.msk [vmem:[#allocation4 + $0x1c] sm:$0xf] %vm1964, %v1883
        %1973 = vst.msk [vmem:[#allocation4 + $0x20] sm:$0xf] %vm1964, %v1885
        %1974 = vst.msk [vmem:[#allocation4 + $0x24] sm:$0xf] %vm1964, %v1887
        %1975 = vst.msk [vmem:[#allocation4 + $0x28] sm:$0xf] %vm1964, %v1889
        %1976 = vst.msk [vmem:[#allocation4 + $0x2c] sm:$0xf] %vm1964, %v1891
        %1977 = vst.msk [vmem:[#allocation4 + $0x30] sm:$0xf] %vm1964, %v1893
        %1978 = vst.msk [vmem:[#allocation4 + $0x34] sm:$0xf] %vm1964, %v1895
        %1979 = vst.msk [vmem:[#allocation4 + $0x38] sm:$0xf] %vm1964, %v1897
        %1980 = vst.msk [vmem:[#allocation4 + $0x3c] sm:$0xf] %vm1964, %v1899
        %1981 = vst.msk [vmem:[#allocation4 + $0x40] sm:$0xf] %vm1964, %v1901
        %1982 = vst.msk [vmem:[#allocation4 + $0x44] sm:$0xf] %vm1964, %v1903
        %1983 = vst.msk [vmem:[#allocation4 + $0x48] sm:$0xf] %vm1964, %v1905
        %1984 = vst.msk [vmem:[#allocation4 + $0x4c] sm:$0xf] %vm1964, %v1907
        %1985 = vst.msk [vmem:[#allocation4 + $0x50] sm:$0xf] %vm1964, %v1909
        %1986 = vst.msk [vmem:[#allocation4 + $0x54] sm:$0xf] %vm1964, %v1911
        %1987 = vst.msk [vmem:[#allocation4 + $0x58] sm:$0xf] %vm1964, %v1913
        %1988 = vst.msk [vmem:[#allocation4 + $0x5c] sm:$0xf] %vm1964, %v1915
        %1989 = vst.msk [vmem:[#allocation4 + $0x60] sm:$0xf] %vm1964, %v1917
        %1990 = vst.msk [vmem:[#allocation4 + $0x64] sm:$0xf] %vm1964, %v1919
        %1991 = vst.msk [vmem:[#allocation4 + $0x68] sm:$0xf] %vm1964, %v1921
        %1992 = vst.msk [vmem:[#allocation4 + $0x6c] sm:$0xf] %vm1964, %v1923
        %1993 = vst.msk [vmem:[#allocation4 + $0x70] sm:$0xf] %vm1964, %v1925
        %1994 = vst.msk [vmem:[#allocation4 + $0x74] sm:$0xf] %vm1964, %v1927
        %1995 = vst.msk [vmem:[#allocation4 + $0x78] sm:$0xf] %vm1964, %v1929
        %1996 = vst.msk [vmem:[#allocation4 + $0x7c] sm:$0xf] %vm1964, %v1931
        %v1997 = vld [vmem:[#allocation2] sm:$0xe]
        %v1998 = vld [vmem:[#allocation2 + $0x4] sm:$0xf]
        %v1999 = vld [vmem:[#allocation2 + $0x8] sm:$0x1]
        %v2000 = vld [vmem:[#allocation2 + $0xc] sm:$0xe]
        %v2001 = vld [vmem:[#allocation2 + $0x10] sm:$0xf]
        %v2002 = vld [vmem:[#allocation2 + $0x14] sm:$0x1]
        %v2003 = vld [vmem:[#allocation2 + $0x18] sm:$0xe]
        %v2004 = vld [vmem:[#allocation2 + $0x1c] sm:$0xf]
        %v2005 = vld [vmem:[#allocation2 + $0x20] sm:$0x1]
        %v2006 = vld [vmem:[#allocation2 + $0x24] sm:$0xe]
        %v2007 = vld [vmem:[#allocation2 + $0x28] sm:$0xf]
        %v2008 = vld [vmem:[#allocation2 + $0x2c] sm:$0x1]
        %v2009 = vld [vmem:[#allocation2 + $0x30] sm:$0xe]
        %v2010 = vld [vmem:[#allocation2 + $0x34] sm:$0xf]
        %v2011 = vld [vmem:[#allocation2 + $0x38] sm:$0x1]
        %v2012 = vld [vmem:[#allocation2 + $0x3c] sm:$0xe]
        %v2013 = vld [vmem:[#allocation2 + $0x40] sm:$0xf]
        %v2014 = vld [vmem:[#allocation2 + $0x44] sm:$0x1]
        %v2015 = vld [vmem:[#allocation2 + $0x48] sm:$0xe]
        %v2016 = vld [vmem:[#allocation2 + $0x4c] sm:$0xf]
        %v2017 = vld [vmem:[#allocation2 + $0x50] sm:$0x1]
        %v2018 = vld [vmem:[#allocation2 + $0x54] sm:$0xe]
        %v2019 = vld [vmem:[#allocation2 + $0x58] sm:$0xf]
        %v2020 = vld [vmem:[#allocation2 + $0x5c] sm:$0x1]
        %v2021 = vld [vmem:[#allocation2 + $0x60] sm:$0xe]
        %v2022 = vld [vmem:[#allocation2 + $0x64] sm:$0xf]
        %v2023 = vld [vmem:[#allocation2 + $0x68] sm:$0x1]
        %v2024 = vld [vmem:[#allocation2 + $0x6c] sm:$0xe]
        %v2025 = vld [vmem:[#allocation2 + $0x70] sm:$0xf]
        %v2026 = vld [vmem:[#allocation2 + $0x74] sm:$0x1]
        %v2027 = vld [vmem:[#allocation2 + $0x78] sm:$0xe]
        %v2028 = vld [vmem:[#allocation2 + $0x7c] sm:$0xf]
        %v2029 = vld [vmem:[#allocation2 + $0x80] sm:$0x1]
        %v2030 = vld [vmem:[#allocation2 + $0x84] sm:$0xe]
        %v2031 = vld [vmem:[#allocation2 + $0x88] sm:$0xf]
        %v2032 = vld [vmem:[#allocation2 + $0x8c] sm:$0x1]
        %v2033 = vld [vmem:[#allocation2 + $0x90] sm:$0xe]
        %v2034 = vld [vmem:[#allocation2 + $0x94] sm:$0xf]
        %v2035 = vld [vmem:[#allocation2 + $0x98] sm:$0x1]
        %v2036 = vld [vmem:[#allocation2 + $0x9c] sm:$0xe]
        %v2037 = vld [vmem:[#allocation2 + $0xa0] sm:$0xf]
        %v2038 = vld [vmem:[#allocation2 + $0xa4] sm:$0x1]
        %v2039 = vld [vmem:[#allocation2 + $0xa8] sm:$0xe]
        %v2040 = vld [vmem:[#allocation2 + $0xac] sm:$0xf]
        %v2041 = vld [vmem:[#allocation2 + $0xb0] sm:$0x1]
        %v2042 = vld [vmem:[#allocation2 + $0xb4] sm:$0xe]
        %v2043 = vld [vmem:[#allocation2 + $0xb8] sm:$0xf]
        %v2044 = vld [vmem:[#allocation2 + $0xbc] sm:$0x1]
        %vm2093 = vcmask 1042432
        %vm2094 = vcmask 1046532
        %vm2095 = vmor %vm2093, %vm2094
        %v2096 = vrot.slane %v1997, 5
        %v2097 = vrot.slane %v2096, 4
        %v2098 = vrot.slane %v1998, 5
        %v2099 = vsel %vm2095, %v2097, %v2098
        %v2100 = vrot.slane %v2098, 4
        %v2101 = vrot.slane %v1999, 5
        %v2102 = vsel %vm2095, %v2100, %v2101
        %v2103 = vrot.slane %v2000, 5
        %v2104 = vrot.slane %v2103, 4
        %v2105 = vrot.slane %v2001, 5
        %v2106 = vsel %vm2095, %v2104, %v2105
        %v2107 = vrot.slane %v2105, 4
        %v2108 = vrot.slane %v2002, 5
        %v2109 = vsel %vm2095, %v2107, %v2108
        %v2110 = vrot.slane %v2003, 5
        %v2111 = vrot.slane %v2110, 4
        %v2112 = vrot.slane %v2004, 5
        %v2113 = vsel %vm2095, %v2111, %v2112
        %v2114 = vrot.slane %v2112, 4
        %v2115 = vrot.slane %v2005, 5
        %v2116 = vsel %vm2095, %v2114, %v2115
        %v2117 = vrot.slane %v2006, 5
        %v2118 = vrot.slane %v2117, 4
        %v2119 = vrot.slane %v2007, 5
        %v2120 = vsel %vm2095, %v2118, %v2119
        %v2121 = vrot.slane %v2119, 4
        %v2122 = vrot.slane %v2008, 5
        %v2123 = vsel %vm2095, %v2121, %v2122
        %v2124 = vrot.slane %v2009, 5
        %v2125 = vrot.slane %v2124, 4
        %v2126 = vrot.slane %v2010, 5
        %v2127 = vsel %vm2095, %v2125, %v2126
        %v2128 = vrot.slane %v2126, 4
        %v2129 = vrot.slane %v2011, 5
        %v2130 = vsel %vm2095, %v2128, %v2129
        %v2131 = vrot.slane %v2012, 5
        %v2132 = vrot.slane %v2131, 4
        %v2133 = vrot.slane %v2013, 5
        %v2134 = vsel %vm2095, %v2132, %v2133
        %v2135 = vrot.slane %v2133, 4
        %v2136 = vrot.slane %v2014, 5
        %v2137 = vsel %vm2095, %v2135, %v2136
        %v2138 = vrot.slane %v2015, 5
        %v2139 = vrot.slane %v2138, 4
        %v2140 = vrot.slane %v2016, 5
        %v2141 = vsel %vm2095, %v2139, %v2140
        %v2142 = vrot.slane %v2140, 4
        %v2143 = vrot.slane %v2017, 5
        %v2144 = vsel %vm2095, %v2142, %v2143
        %v2145 = vrot.slane %v2018, 5
        %v2146 = vrot.slane %v2145, 4
        %v2147 = vrot.slane %v2019, 5
        %v2148 = vsel %vm2095, %v2146, %v2147
        %v2149 = vrot.slane %v2147, 4
        %v2150 = vrot.slane %v2020, 5
        %v2151 = vsel %vm2095, %v2149, %v2150
        %v2152 = vrot.slane %v2021, 5
        %v2153 = vrot.slane %v2152, 4
        %v2154 = vrot.slane %v2022, 5
        %v2155 = vsel %vm2095, %v2153, %v2154
        %v2156 = vrot.slane %v2154, 4
        %v2157 = vrot.slane %v2023, 5
        %v2158 = vsel %vm2095, %v2156, %v2157
        %v2159 = vrot.slane %v2024, 5
        %v2160 = vrot.slane %v2159, 4
        %v2161 = vrot.slane %v2025, 5
        %v2162 = vsel %vm2095, %v2160, %v2161
        %v2163 = vrot.slane %v2161, 4
        %v2164 = vrot.slane %v2026, 5
        %v2165 = vsel %vm2095, %v2163, %v2164
        %v2166 = vrot.slane %v2027, 5
        %v2167 = vrot.slane %v2166, 4
        %v2168 = vrot.slane %v2028, 5
        %v2169 = vsel %vm2095, %v2167, %v2168
        %v2170 = vrot.slane %v2168, 4
        %v2171 = vrot.slane %v2029, 5
        %v2172 = vsel %vm2095, %v2170, %v2171
        %v2173 = vrot.slane %v2030, 5
        %v2174 = vrot.slane %v2173, 4
        %v2175 = vrot.slane %v2031, 5
        %v2176 = vsel %vm2095, %v2174, %v2175
        %v2177 = vrot.slane %v2175, 4
        %v2178 = vrot.slane %v2032, 5
        %v2179 = vsel %vm2095, %v2177, %v2178
        %v2180 = vrot.slane %v2033, 5
        %v2181 = vrot.slane %v2180, 4
        %v2182 = vrot.slane %v2034, 5
        %v2183 = vsel %vm2095, %v2181, %v2182
        %v2184 = vrot.slane %v2182, 4
        %v2185 = vrot.slane %v2035, 5
        %v2186 = vsel %vm2095, %v2184, %v2185
        %v2187 = vrot.slane %v2036, 5
        %v2188 = vrot.slane %v2187, 4
        %v2189 = vrot.slane %v2037, 5
        %v2190 = vsel %vm2095, %v2188, %v2189
        %v2191 = vrot.slane %v2189, 4
        %v2192 = vrot.slane %v2038, 5
        %v2193 = vsel %vm2095, %v2191, %v2192
        %v2194 = vrot.slane %v2039, 5
        %v2195 = vrot.slane %v2194, 4
        %v2196 = vrot.slane %v2040, 5
        %v2197 = vsel %vm2095, %v2195, %v2196
        %v2198 = vrot.slane %v2196, 4
        %v2199 = vrot.slane %v2041, 5
        %v2200 = vsel %vm2095, %v2198, %v2199
        %v2201 = vrot.slane %v2042, 5
        %v2202 = vrot.slane %v2201, 4
        %v2203 = vrot.slane %v2043, 5
        %v2204 = vsel %vm2095, %v2202, %v2203
        %v2205 = vrot.slane %v2203, 4
        %v2206 = vrot.slane %v2044, 5
        %v2207 = vsel %vm2095, %v2205, %v2206
        %2208 = vrot.lane.b32.xlu0 %v2099, 16
        %v2209 = vpop.permute.xlu0 %2208
        %2210 = vrot.lane.b32.xlu0 %v2102, 16
        %v2211 = vpop.permute.xlu0 %2210
        %2212 = vrot.lane.b32.xlu0 %v2106, 16
        %v2213 = vpop.permute.xlu0 %2212
        %2214 = vrot.lane.b32.xlu0 %v2109, 16
        %v2215 = vpop.permute.xlu0 %2214
        %2216 = vrot.lane.b32.xlu0 %v2113, 16
        %v2217 = vpop.permute.xlu0 %2216
        %2218 = vrot.lane.b32.xlu0 %v2116, 16
        %v2219 = vpop.permute.xlu0 %2218
        %2220 = vrot.lane.b32.xlu0 %v2120, 16
        %v2221 = vpop.permute.xlu0 %2220
        %2222 = vrot.lane.b32.xlu0 %v2123, 16
        %v2223 = vpop.permute.xlu0 %2222
        %2224 = vrot.lane.b32.xlu0 %v2127, 16
        %v2225 = vpop.permute.xlu0 %2224
        %2226 = vrot.lane.b32.xlu0 %v2130, 16
        %v2227 = vpop.permute.xlu0 %2226
        %2228 = vrot.lane.b32.xlu0 %v2134, 16
        %v2229 = vpop.permute.xlu0 %2228
        %2230 = vrot.lane.b32.xlu0 %v2137, 16
        %v2231 = vpop.permute.xlu0 %2230
        %2232 = vrot.lane.b32.xlu0 %v2141, 16
        %v2233 = vpop.permute.xlu0 %2232
        %2234 = vrot.lane.b32.xlu0 %v2144, 16
        %v2235 = vpop.permute.xlu0 %2234
        %2236 = vrot.lane.b32.xlu0 %v2148, 16
        %v2237 = vpop.permute.xlu0 %2236
        %2238 = vrot.lane.b32.xlu0 %v2151, 16
        %v2239 = vpop.permute.xlu0 %2238
        %2240 = vrot.lane.b32.xlu0 %v2155, 16
        %v2241 = vpop.permute.xlu0 %2240
        %2242 = vrot.lane.b32.xlu0 %v2158, 16
        %v2243 = vpop.permute.xlu0 %2242
        %2244 = vrot.lane.b32.xlu0 %v2162, 16
        %v2245 = vpop.permute.xlu0 %2244
        %2246 = vrot.lane.b32.xlu0 %v2165, 16
        %v2247 = vpop.permute.xlu0 %2246
        %2248 = vrot.lane.b32.xlu0 %v2169, 16
        %v2249 = vpop.permute.xlu0 %2248
        %2250 = vrot.lane.b32.xlu0 %v2172, 16
        %v2251 = vpop.permute.xlu0 %2250
        %2252 = vrot.lane.b32.xlu0 %v2176, 16
        %v2253 = vpop.permute.xlu0 %2252
        %2254 = vrot.lane.b32.xlu0 %v2179, 16
        %v2255 = vpop.permute.xlu0 %2254
        %2256 = vrot.lane.b32.xlu0 %v2183, 16
        %v2257 = vpop.permute.xlu0 %2256
        %2258 = vrot.lane.b32.xlu0 %v2186, 16
        %v2259 = vpop.permute.xlu0 %2258
        %2260 = vrot.lane.b32.xlu0 %v2190, 16
        %v2261 = vpop.permute.xlu0 %2260
        %2262 = vrot.lane.b32.xlu0 %v2193, 16
        %v2263 = vpop.permute.xlu0 %2262
        %2264 = vrot.lane.b32.xlu0 %v2197, 16
        %v2265 = vpop.permute.xlu0 %2264
        %2266 = vrot.lane.b32.xlu0 %v2200, 16
        %v2267 = vpop.permute.xlu0 %2266
        %2268 = vrot.lane.b32.xlu0 %v2204, 16
        %v2269 = vpop.permute.xlu0 %2268
        %2270 = vrot.lane.b32.xlu0 %v2207, 16
        %v2271 = vpop.permute.xlu0 %2270
        %vm2304 = vcmask 191616
        %2305 = vst.msk [vmem:[#allocation4] sm:$0xf] %vm2304, %v2209
        %2306 = vst.msk [vmem:[#allocation4 + $0x4] sm:$0xf] %vm2304, %v2211
        %2307 = vst.msk [vmem:[#allocation4 + $0x8] sm:$0xf] %vm2304, %v2213
        %2308 = vst.msk [vmem:[#allocation4 + $0xc] sm:$0xf] %vm2304, %v2215
        %2309 = vst.msk [vmem:[#allocation4 + $0x10] sm:$0xf] %vm2304, %v2217
        %2310 = vst.msk [vmem:[#allocation4 + $0x14] sm:$0xf] %vm2304, %v2219
        %2311 = vst.msk [vmem:[#allocation4 + $0x18] sm:$0xf] %vm2304, %v2221
        %2312 = vst.msk [vmem:[#allocation4 + $0x1c] sm:$0xf] %vm2304, %v2223
        %2313 = vst.msk [vmem:[#allocation4 + $0x20] sm:$0xf] %vm2304, %v2225
        %2314 = vst.msk [vmem:[#allocation4 + $0x24] sm:$0xf] %vm2304, %v2227
        %2315 = vst.msk [vmem:[#allocation4 + $0x28] sm:$0xf] %vm2304, %v2229
        %2316 = vst.msk [vmem:[#allocation4 + $0x2c] sm:$0xf] %vm2304, %v2231
        %2317 = vst.msk [vmem:[#allocation4 + $0x30] sm:$0xf] %vm2304, %v2233
        %2318 = vst.msk [vmem:[#allocation4 + $0x34] sm:$0xf] %vm2304, %v2235
        %2319 = vst.msk [vmem:[#allocation4 + $0x38] sm:$0xf] %vm2304, %v2237
        %2320 = vst.msk [vmem:[#allocation4 + $0x3c] sm:$0xf] %vm2304, %v2239
        %2321 = vst.msk [vmem:[#allocation4 + $0x40] sm:$0xf] %vm2304, %v2241
        %2322 = vst.msk [vmem:[#allocation4 + $0x44] sm:$0xf] %vm2304, %v2243
        %2323 = vst.msk [vmem:[#allocation4 + $0x48] sm:$0xf] %vm2304, %v2245
        %2324 = vst.msk [vmem:[#allocation4 + $0x4c] sm:$0xf] %vm2304, %v2247
        %2325 = vst.msk [vmem:[#allocation4 + $0x50] sm:$0xf] %vm2304, %v2249
        %2326 = vst.msk [vmem:[#allocation4 + $0x54] sm:$0xf] %vm2304, %v2251
        %2327 = vst.msk [vmem:[#allocation4 + $0x58] sm:$0xf] %vm2304, %v2253
        %2328 = vst.msk [vmem:[#allocation4 + $0x5c] sm:$0xf] %vm2304, %v2255
        %2329 = vst.msk [vmem:[#allocation4 + $0x60] sm:$0xf] %vm2304, %v2257
        %2330 = vst.msk [vmem:[#allocation4 + $0x64] sm:$0xf] %vm2304, %v2259
        %2331 = vst.msk [vmem:[#allocation4 + $0x68] sm:$0xf] %vm2304, %v2261
        %2332 = vst.msk [vmem:[#allocation4 + $0x6c] sm:$0xf] %vm2304, %v2263
        %2333 = vst.msk [vmem:[#allocation4 + $0x70] sm:$0xf] %vm2304, %v2265
        %2334 = vst.msk [vmem:[#allocation4 + $0x74] sm:$0xf] %vm2304, %v2267
        %2335 = vst.msk [vmem:[#allocation4 + $0x78] sm:$0xf] %vm2304, %v2269
        %2336 = vst.msk [vmem:[#allocation4 + $0x7c] sm:$0xf] %vm2304, %v2271
        %v2337 = vld [vmem:[%s686] sm:$0xf]
        %v2338 = vld [vmem:[%s686 + $0x4] sm:$0xf]
        %v2339 = vld [vmem:[%s686 + $0xc] sm:$0xf]
        %v2340 = vld [vmem:[%s686 + $0x10] sm:$0xf]
        %v2341 = vld [vmem:[%s686 + $0x18] sm:$0xf]
        %v2342 = vld [vmem:[%s686 + $0x1c] sm:$0xf]
        %v2343 = vld [vmem:[%s686 + $0x24] sm:$0xf]
        %v2344 = vld [vmem:[%s686 + $0x28] sm:$0xf]
        %v2345 = vld [vmem:[%s686 + $0x30] sm:$0xf]
        %v2346 = vld [vmem:[%s686 + $0x34] sm:$0xf]
        %v2347 = vld [vmem:[%s686 + $0x3c] sm:$0xf]
        %v2348 = vld [vmem:[%s686 + $0x40] sm:$0xf]
        %v2349 = vld [vmem:[%s686 + $0x48] sm:$0xf]
        %v2350 = vld [vmem:[%s686 + $0x4c] sm:$0xf]
        %v2351 = vld [vmem:[%s686 + $0x54] sm:$0xf]
        %v2352 = vld [vmem:[%s686 + $0x58] sm:$0xf]
        %v2353 = vld [vmem:[%s686 + $0x60] sm:$0xf]
        %v2354 = vld [vmem:[%s686 + $0x64] sm:$0xf]
        %v2355 = vld [vmem:[%s686 + $0x6c] sm:$0xf]
        %v2356 = vld [vmem:[%s686 + $0x70] sm:$0xf]
        %v2357 = vld [vmem:[%s686 + $0x78] sm:$0xf]
        %v2358 = vld [vmem:[%s686 + $0x7c] sm:$0xf]
        %v2359 = vld [vmem:[%s686 + $0x84] sm:$0xf]
        %v2360 = vld [vmem:[%s686 + $0x88] sm:$0xf]
        %v2361 = vld [vmem:[%s686 + $0x90] sm:$0xf]
        %v2362 = vld [vmem:[%s686 + $0x94] sm:$0xf]
        %v2363 = vld [vmem:[%s686 + $0x9c] sm:$0xf]
        %v2364 = vld [vmem:[%s686 + $0xa0] sm:$0xf]
        %v2365 = vld [vmem:[%s686 + $0xa8] sm:$0xf]
        %v2366 = vld [vmem:[%s686 + $0xac] sm:$0xf]
        %v2367 = vld [vmem:[%s686 + $0xb4] sm:$0xf]
        %v2368 = vld [vmem:[%s686 + $0xb8] sm:$0xf]
        %2401 = vrot.lane.b32.xlu0 %v2337, 24
        %v2402 = vpop.permute.xlu0 %2401
        %2403 = vrot.lane.b32.xlu0 %v2338, 24
        %v2404 = vpop.permute.xlu0 %2403
        %2405 = vrot.lane.b32.xlu0 %v2339, 24
        %v2406 = vpop.permute.xlu0 %2405
        %2407 = vrot.lane.b32.xlu0 %v2340, 24
        %v2408 = vpop.permute.xlu0 %2407
        %2409 = vrot.lane.b32.xlu0 %v2341, 24
        %v2410 = vpop.permute.xlu0 %2409
        %2411 = vrot.lane.b32.xlu0 %v2342, 24
        %v2412 = vpop.permute.xlu0 %2411
        %2413 = vrot.lane.b32.xlu0 %v2343, 24
        %v2414 = vpop.permute.xlu0 %2413
        %2415 = vrot.lane.b32.xlu0 %v2344, 24
        %v2416 = vpop.permute.xlu0 %2415
        %2417 = vrot.lane.b32.xlu0 %v2345, 24
        %v2418 = vpop.permute.xlu0 %2417
        %2419 = vrot.lane.b32.xlu0 %v2346, 24
        %v2420 = vpop.permute.xlu0 %2419
        %2421 = vrot.lane.b32.xlu0 %v2347, 24
        %v2422 = vpop.permute.xlu0 %2421
        %2423 = vrot.lane.b32.xlu0 %v2348, 24
        %v2424 = vpop.permute.xlu0 %2423
        %2425 = vrot.lane.b32.xlu0 %v2349, 24
        %v2426 = vpop.permute.xlu0 %2425
        %2427 = vrot.lane.b32.xlu0 %v2350, 24
        %v2428 = vpop.permute.xlu0 %2427
        %2429 = vrot.lane.b32.xlu0 %v2351, 24
        %v2430 = vpop.permute.xlu0 %2429
        %2431 = vrot.lane.b32.xlu0 %v2352, 24
        %v2432 = vpop.permute.xlu0 %2431
        %2433 = vrot.lane.b32.xlu0 %v2353, 24
        %v2434 = vpop.permute.xlu0 %2433
        %2435 = vrot.lane.b32.xlu0 %v2354, 24
        %v2436 = vpop.permute.xlu0 %2435
        %2437 = vrot.lane.b32.xlu0 %v2355, 24
        %v2438 = vpop.permute.xlu0 %2437
        %2439 = vrot.lane.b32.xlu0 %v2356, 24
        %v2440 = vpop.permute.xlu0 %2439
        %2441 = vrot.lane.b32.xlu0 %v2357, 24
        %v2442 = vpop.permute.xlu0 %2441
        %2443 = vrot.lane.b32.xlu0 %v2358, 24
        %v2444 = vpop.permute.xlu0 %2443
        %2445 = vrot.lane.b32.xlu0 %v2359, 24
        %v2446 = vpop.permute.xlu0 %2445
        %2447 = vrot.lane.b32.xlu0 %v2360, 24
        %v2448 = vpop.permute.xlu0 %2447
        %2449 = vrot.lane.b32.xlu0 %v2361, 24
        %v2450 = vpop.permute.xlu0 %2449
        %2451 = vrot.lane.b32.xlu0 %v2362, 24
        %v2452 = vpop.permute.xlu0 %2451
        %2453 = vrot.lane.b32.xlu0 %v2363, 24
        %v2454 = vpop.permute.xlu0 %2453
        %2455 = vrot.lane.b32.xlu0 %v2364, 24
        %v2456 = vpop.permute.xlu0 %2455
        %2457 = vrot.lane.b32.xlu0 %v2365, 24
        %v2458 = vpop.permute.xlu0 %2457
        %2459 = vrot.lane.b32.xlu0 %v2366, 24
        %v2460 = vpop.permute.xlu0 %2459
        %2461 = vrot.lane.b32.xlu0 %v2367, 24
        %v2462 = vpop.permute.xlu0 %2461
        %2463 = vrot.lane.b32.xlu0 %v2368, 24
        %v2464 = vpop.permute.xlu0 %2463
        %vm2497 = vcmask 257216
        %2498 = vst.msk [vmem:[#allocation4] sm:$0xf] %vm2497, %v2402
        %2499 = vst.msk [vmem:[#allocation4 + $0x4] sm:$0xf] %vm2497, %v2404
        %2500 = vst.msk [vmem:[#allocation4 + $0x8] sm:$0xf] %vm2497, %v2406
        %2501 = vst.msk [vmem:[#allocation4 + $0xc] sm:$0xf] %vm2497, %v2408
        %2502 = vst.msk [vmem:[#allocation4 + $0x10] sm:$0xf] %vm2497, %v2410
        %2503 = vst.msk [vmem:[#allocation4 + $0x14] sm:$0xf] %vm2497, %v2412
        %2504 = vst.msk [vmem:[#allocation4 + $0x18] sm:$0xf] %vm2497, %v2414
        %2505 = vst.msk [vmem:[#allocation4 + $0x1c] sm:$0xf] %vm2497, %v2416
        %2506 = vst.msk [vmem:[#allocation4 + $0x20] sm:$0xf] %vm2497, %v2418
        %2507 = vst.msk [vmem:[#allocation4 + $0x24] sm:$0xf] %vm2497, %v2420
        %2508 = vst.msk [vmem:[#allocation4 + $0x28] sm:$0xf] %vm2497, %v2422
        %2509 = vst.msk [vmem:[#allocation4 + $0x2c] sm:$0xf] %vm2497, %v2424
        %2510 = vst.msk [vmem:[#allocation4 + $0x30] sm:$0xf] %vm2497, %v2426
        %2511 = vst.msk [vmem:[#allocation4 + $0x34] sm:$0xf] %vm2497, %v2428
        %2512 = vst.msk [vmem:[#allocation4 + $0x38] sm:$0xf] %vm2497, %v2430
        %2513 = vst.msk [vmem:[#allocation4 + $0x3c] sm:$0xf] %vm2497, %v2432
        %2514 = vst.msk [vmem:[#allocation4 + $0x40] sm:$0xf] %vm2497, %v2434
        %2515 = vst.msk [vmem:[#allocation4 + $0x44] sm:$0xf] %vm2497, %v2436
        %2516 = vst.msk [vmem:[#allocation4 + $0x48] sm:$0xf] %vm2497, %v2438
        %2517 = vst.msk [vmem:[#allocation4 + $0x4c] sm:$0xf] %vm2497, %v2440
        %2518 = vst.msk [vmem:[#allocation4 + $0x50] sm:$0xf] %vm2497, %v2442
        %2519 = vst.msk [vmem:[#allocation4 + $0x54] sm:$0xf] %vm2497, %v2444
        %2520 = vst.msk [vmem:[#allocation4 + $0x58] sm:$0xf] %vm2497, %v2446
        %2521 = vst.msk [vmem:[#allocation4 + $0x5c] sm:$0xf] %vm2497, %v2448
        %2522 = vst.msk [vmem:[#allocation4 + $0x60] sm:$0xf] %vm2497, %v2450
        %2523 = vst.msk [vmem:[#allocation4 + $0x64] sm:$0xf] %vm2497, %v2452
        %2524 = vst.msk [vmem:[#allocation4 + $0x68] sm:$0xf] %vm2497, %v2454
        %2525 = vst.msk [vmem:[#allocation4 + $0x6c] sm:$0xf] %vm2497, %v2456
        %2526 = vst.msk [vmem:[#allocation4 + $0x70] sm:$0xf] %vm2497, %v2458
        %2527 = vst.msk [vmem:[#allocation4 + $0x74] sm:$0xf] %vm2497, %v2460
        %2528 = vst.msk [vmem:[#allocation4 + $0x78] sm:$0xf] %vm2497, %v2462
        %2529 = vst.msk [vmem:[#allocation4 + $0x7c] sm:$0xf] %vm2497, %v2464
        %v2530 = vld [vmem:[%s686] sm:$0xf]
        %v2531 = vld [vmem:[%s686 + $0x4] sm:$0xf]
        %v2532 = vld [vmem:[%s686 + $0x8] sm:$0x1]
        %v2533 = vld [vmem:[%s686 + $0xc] sm:$0xf]
        %v2534 = vld [vmem:[%s686 + $0x10] sm:$0xf]
        %v2535 = vld [vmem:[%s686 + $0x14] sm:$0x1]
        %v2536 = vld [vmem:[%s686 + $0x18] sm:$0xf]
        %v2537 = vld [vmem:[%s686 + $0x1c] sm:$0xf]
        %v2538 = vld [vmem:[%s686 + $0x20] sm:$0x1]
        %v2539 = vld [vmem:[%s686 + $0x24] sm:$0xf]
        %v2540 = vld [vmem:[%s686 + $0x28] sm:$0xf]
        %v2541 = vld [vmem:[%s686 + $0x2c] sm:$0x1]
        %v2542 = vld [vmem:[%s686 + $0x30] sm:$0xf]
        %v2543 = vld [vmem:[%s686 + $0x34] sm:$0xf]
        %v2544 = vld [vmem:[%s686 + $0x38] sm:$0x1]
        %v2545 = vld [vmem:[%s686 + $0x3c] sm:$0xf]
        %v2546 = vld [vmem:[%s686 + $0x40] sm:$0xf]
        %v2547 = vld [vmem:[%s686 + $0x44] sm:$0x1]
        %v2548 = vld [vmem:[%s686 + $0x48] sm:$0xf]
        %v2549 = vld [vmem:[%s686 + $0x4c] sm:$0xf]
        %v2550 = vld [vmem:[%s686 + $0x50] sm:$0x1]
        %v2551 = vld [vmem:[%s686 + $0x54] sm:$0xf]
        %v2552 = vld [vmem:[%s686 + $0x58] sm:$0xf]
        %v2553 = vld [vmem:[%s686 + $0x5c] sm:$0x1]
        %v2554 = vld [vmem:[%s686 + $0x60] sm:$0xf]
        %v2555 = vld [vmem:[%s686 + $0x64] sm:$0xf]
        %v2556 = vld [vmem:[%s686 + $0x68] sm:$0x1]
        %v2557 = vld [vmem:[%s686 + $0x6c] sm:$0xf]
        %v2558 = vld [vmem:[%s686 + $0x70] sm:$0xf]
        %v2559 = vld [vmem:[%s686 + $0x74] sm:$0x1]
        %v2560 = vld [vmem:[%s686 + $0x78] sm:$0xf]
        %v2561 = vld [vmem:[%s686 + $0x7c] sm:$0xf]
        %v2562 = vld [vmem:[%s686 + $0x80] sm:$0x1]
        %v2563 = vld [vmem:[%s686 + $0x84] sm:$0xf]
        %v2564 = vld [vmem:[%s686 + $0x88] sm:$0xf]
        %v2565 = vld [vmem:[%s686 + $0x8c] sm:$0x1]
        %v2566 = vld [vmem:[%s686 + $0x90] sm:$0xf]
        %v2567 = vld [vmem:[%s686 + $0x94] sm:$0xf]
        %v2568 = vld [vmem:[%s686 + $0x98] sm:$0x1]
        %v2569 = vld [vmem:[%s686 + $0x9c] sm:$0xf]
        %v2570 = vld [vmem:[%s686 + $0xa0] sm:$0xf]
        %v2571 = vld [vmem:[%s686 + $0xa4] sm:$0x1]
        %v2572 = vld [vmem:[%s686 + $0xa8] sm:$0xf]
        %v2573 = vld [vmem:[%s686 + $0xac] sm:$0xf]
        %v2574 = vld [vmem:[%s686 + $0xb0] sm:$0x1]
        %v2575 = vld [vmem:[%s686 + $0xb4] sm:$0xf]
        %v2576 = vld [vmem:[%s686 + $0xb8] sm:$0xf]
        %v2577 = vld [vmem:[%s686 + $0xbc] sm:$0x1]
        %v2579 = vshrl.u32 %v2530, 16
        %v2581 = vrot.slane %v2579, 4
        %v2582 = vshll.u32 %v2530, 16
        %v2584 = vrot.slane %v2582, 5
        %v2585 = vor.u32 %v2581, %v2584
        %v2586 = vrot.slane %v2585, 4
        %v2588 = vshll.u32 %v2531, 16
        %v2590 = vrot.slane %v2588, 5
        %v2591 = vsel %vm1483, %v2586, %v2590
        %v2592 = vshrl.u32 %v2531, 16
        %v2594 = vrot.slane %v2592, 4
        %v2595 = vor.u32 %v2594, %v2590
        %v2596 = vrot.slane %v2595, 4
        %v2598 = vshll.u32 %v2532, 16
        %v2600 = vrot.slane %v2598, 5
        %v2601 = vsel %vm1483, %v2596, %v2600
        %v2603 = vshrl.u32 %v2533, 16
        %v2605 = vrot.slane %v2603, 4
        %v2606 = vshll.u32 %v2533, 16
        %v2608 = vrot.slane %v2606, 5
        %v2609 = vor.u32 %v2605, %v2608
        %v2610 = vrot.slane %v2609, 4
        %v2612 = vshll.u32 %v2534, 16
        %v2614 = vrot.slane %v2612, 5
        %v2615 = vsel %vm1483, %v2610, %v2614
        %v2616 = vshrl.u32 %v2534, 16
        %v2618 = vrot.slane %v2616, 4
        %v2619 = vor.u32 %v2618, %v2614
        %v2620 = vrot.slane %v2619, 4
        %v2622 = vshll.u32 %v2535, 16
        %v2624 = vrot.slane %v2622, 5
        %v2625 = vsel %vm1483, %v2620, %v2624
        %v2627 = vshrl.u32 %v2536, 16
        %v2629 = vrot.slane %v2627, 4
        %v2630 = vshll.u32 %v2536, 16
        %v2632 = vrot.slane %v2630, 5
        %v2633 = vor.u32 %v2629, %v2632
        %v2634 = vrot.slane %v2633, 4
        %v2636 = vshll.u32 %v2537, 16
        %v2638 = vrot.slane %v2636, 5
        %v2639 = vsel %vm1483, %v2634, %v2638
        %v2640 = vshrl.u32 %v2537, 16
        %v2642 = vrot.slane %v2640, 4
        %v2643 = vor.u32 %v2642, %v2638
        %v2644 = vrot.slane %v2643, 4
        %v2646 = vshll.u32 %v2538, 16
        %v2648 = vrot.slane %v2646, 5
        %v2649 = vsel %vm1483, %v2644, %v2648
        %v2651 = vshrl.u32 %v2539, 16
        %v2653 = vrot.slane %v2651, 4
        %v2654 = vshll.u32 %v2539, 16
        %v2656 = vrot.slane %v2654, 5
        %v2657 = vor.u32 %v2653, %v2656
        %v2658 = vrot.slane %v2657, 4
        %v2660 = vshll.u32 %v2540, 16
        %v2662 = vrot.slane %v2660, 5
        %v2663 = vsel %vm1483, %v2658, %v2662
        %v2664 = vshrl.u32 %v2540, 16
        %v2666 = vrot.slane %v2664, 4
        %v2667 = vor.u32 %v2666, %v2662
        %v2668 = vrot.slane %v2667, 4
        %v2670 = vshll.u32 %v2541, 16
        %v2672 = vrot.slane %v2670, 5
        %v2673 = vsel %vm1483, %v2668, %v2672
        %v2675 = vshrl.u32 %v2542, 16
        %v2677 = vrot.slane %v2675, 4
        %v2678 = vshll.u32 %v2542, 16
        %v2680 = vrot.slane %v2678, 5
        %v2681 = vor.u32 %v2677, %v2680
        %v2682 = vrot.slane %v2681, 4
        %v2684 = vshll.u32 %v2543, 16
        %v2686 = vrot.slane %v2684, 5
        %v2687 = vsel %vm1483, %v2682, %v2686
        %v2688 = vshrl.u32 %v2543, 16
        %v2690 = vrot.slane %v2688, 4
        %v2691 = vor.u32 %v2690, %v2686
        %v2692 = vrot.slane %v2691, 4
        %v2694 = vshll.u32 %v2544, 16
        %v2696 = vrot.slane %v2694, 5
        %v2697 = vsel %vm1483, %v2692, %v2696
        %v2699 = vshrl.u32 %v2545, 16
        %v2701 = vrot.slane %v2699, 4
        %v2702 = vshll.u32 %v2545, 16
        %v2704 = vrot.slane %v2702, 5
        %v2705 = vor.u32 %v2701, %v2704
        %v2706 = vrot.slane %v2705, 4
        %v2708 = vshll.u32 %v2546, 16
        %v2710 = vrot.slane %v2708, 5
        %v2711 = vsel %vm1483, %v2706, %v2710
        %v2712 = vshrl.u32 %v2546, 16
        %v2714 = vrot.slane %v2712, 4
        %v2715 = vor.u32 %v2714, %v2710
        %v2716 = vrot.slane %v2715, 4
        %v2718 = vshll.u32 %v2547, 16
        %v2720 = vrot.slane %v2718, 5
        %v2721 = vsel %vm1483, %v2716, %v2720
        %v2723 = vshrl.u32 %v2548, 16
        %v2725 = vrot.slane %v2723, 4
        %v2726 = vshll.u32 %v2548, 16
        %v2728 = vrot.slane %v2726, 5
        %v2729 = vor.u32 %v2725, %v2728
        %v2730 = vrot.slane %v2729, 4
        %v2732 = vshll.u32 %v2549, 16
        %v2734 = vrot.slane %v2732, 5
        %v2735 = vsel %vm1483, %v2730, %v2734
        %v2736 = vshrl.u32 %v2549, 16
        %v2738 = vrot.slane %v2736, 4
        %v2739 = vor.u32 %v2738, %v2734
        %v2740 = vrot.slane %v2739, 4
        %v2742 = vshll.u32 %v2550, 16
        %v2744 = vrot.slane %v2742, 5
        %v2745 = vsel %vm1483, %v2740, %v2744
        %v2747 = vshrl.u32 %v2551, 16
        %v2749 = vrot.slane %v2747, 4
        %v2750 = vshll.u32 %v2551, 16
        %v2752 = vrot.slane %v2750, 5
        %v2753 = vor.u32 %v2749, %v2752
        %v2754 = vrot.slane %v2753, 4
        %v2756 = vshll.u32 %v2552, 16
        %v2758 = vrot.slane %v2756, 5
        %v2759 = vsel %vm1483, %v2754, %v2758
        %v2760 = vshrl.u32 %v2552, 16
        %v2762 = vrot.slane %v2760, 4
        %v2763 = vor.u32 %v2762, %v2758
        %v2764 = vrot.slane %v2763, 4
        %v2766 = vshll.u32 %v2553, 16
        %v2768 = vrot.slane %v2766, 5
        %v2769 = vsel %vm1483, %v2764, %v2768
        %v2771 = vshrl.u32 %v2554, 16
        %v2773 = vrot.slane %v2771, 4
        %v2774 = vshll.u32 %v2554, 16
        %v2776 = vrot.slane %v2774, 5
        %v2777 = vor.u32 %v2773, %v2776
        %v2778 = vrot.slane %v2777, 4
        %v2780 = vshll.u32 %v2555, 16
        %v2782 = vrot.slane %v2780, 5
        %v2783 = vsel %vm1483, %v2778, %v2782
        %v2784 = vshrl.u32 %v2555, 16
        %v2786 = vrot.slane %v2784, 4
        %v2787 = vor.u32 %v2786, %v2782
        %v2788 = vrot.slane %v2787, 4
        %v2790 = vshll.u32 %v2556, 16
        %v2792 = vrot.slane %v2790, 5
        %v2793 = vsel %vm1483, %v2788, %v2792
        %v2795 = vshrl.u32 %v2557, 16
        %v2797 = vrot.slane %v2795, 4
        %v2798 = vshll.u32 %v2557, 16
        %v2800 = vrot.slane %v2798, 5
        %v2801 = vor.u32 %v2797, %v2800
        %v2802 = vrot.slane %v2801, 4
        %v2804 = vshll.u32 %v2558, 16
        %v2806 = vrot.slane %v2804, 5
        %v2807 = vsel %vm1483, %v2802, %v2806
        %v2808 = vshrl.u32 %v2558, 16
        %v2810 = vrot.slane %v2808, 4
        %v2811 = vor.u32 %v2810, %v2806
        %v2812 = vrot.slane %v2811, 4
        %v2814 = vshll.u32 %v2559, 16
        %v2816 = vrot.slane %v2814, 5
        %v2817 = vsel %vm1483, %v2812, %v2816
        %v2819 = vshrl.u32 %v2560, 16
        %v2821 = vrot.slane %v2819, 4
        %v2822 = vshll.u32 %v2560, 16
        %v2824 = vrot.slane %v2822, 5
        %v2825 = vor.u32 %v2821, %v2824
        %v2826 = vrot.slane %v2825, 4
        %v2828 = vshll.u32 %v2561, 16
        %v2830 = vrot.slane %v2828, 5
        %v2831 = vsel %vm1483, %v2826, %v2830
        %v2832 = vshrl.u32 %v2561, 16
        %v2834 = vrot.slane %v2832, 4
        %v2835 = vor.u32 %v2834, %v2830
        %v2836 = vrot.slane %v2835, 4
        %v2838 = vshll.u32 %v2562, 16
        %v2840 = vrot.slane %v2838, 5
        %v2841 = vsel %vm1483, %v2836, %v2840
        %v2843 = vshrl.u32 %v2563, 16
        %v2845 = vrot.slane %v2843, 4
        %v2846 = vshll.u32 %v2563, 16
        %v2848 = vrot.slane %v2846, 5
        %v2849 = vor.u32 %v2845, %v2848
        %v2850 = vrot.slane %v2849, 4
        %v2852 = vshll.u32 %v2564, 16
        %v2854 = vrot.slane %v2852, 5
        %v2855 = vsel %vm1483, %v2850, %v2854
        %v2856 = vshrl.u32 %v2564, 16
        %v2858 = vrot.slane %v2856, 4
        %v2859 = vor.u32 %v2858, %v2854
        %v2860 = vrot.slane %v2859, 4
        %v2862 = vshll.u32 %v2565, 16
        %v2864 = vrot.slane %v2862, 5
        %v2865 = vsel %vm1483, %v2860, %v2864
        %v2867 = vshrl.u32 %v2566, 16
        %v2869 = vrot.slane %v2867, 4
        %v2870 = vshll.u32 %v2566, 16
        %v2872 = vrot.slane %v2870, 5
        %v2873 = vor.u32 %v2869, %v2872
        %v2874 = vrot.slane %v2873, 4
        %v2876 = vshll.u32 %v2567, 16
        %v2878 = vrot.slane %v2876, 5
        %v2879 = vsel %vm1483, %v2874, %v2878
        %v2880 = vshrl.u32 %v2567, 16
        %v2882 = vrot.slane %v2880, 4
        %v2883 = vor.u32 %v2882, %v2878
        %v2884 = vrot.slane %v2883, 4
        %v2886 = vshll.u32 %v2568, 16
        %v2888 = vrot.slane %v2886, 5
        %v2889 = vsel %vm1483, %v2884, %v2888
        %v2891 = vshrl.u32 %v2569, 16
        %v2893 = vrot.slane %v2891, 4
        %v2894 = vshll.u32 %v2569, 16
        %v2896 = vrot.slane %v2894, 5
        %v2897 = vor.u32 %v2893, %v2896
        %v2898 = vrot.slane %v2897, 4
        %v2900 = vshll.u32 %v2570, 16
        %v2902 = vrot.slane %v2900, 5
        %v2903 = vsel %vm1483, %v2898, %v2902
        %v2904 = vshrl.u32 %v2570, 16
        %v2906 = vrot.slane %v2904, 4
        %v2907 = vor.u32 %v2906, %v2902
        %v2908 = vrot.slane %v2907, 4
        %v2910 = vshll.u32 %v2571, 16
        %v2912 = vrot.slane %v2910, 5
        %v2913 = vsel %vm1483, %v2908, %v2912
        %v2915 = vshrl.u32 %v2572, 16
        %v2917 = vrot.slane %v2915, 4
        %v2918 = vshll.u32 %v2572, 16
        %v2920 = vrot.slane %v2918, 5
        %v2921 = vor.u32 %v2917, %v2920
        %v2922 = vrot.slane %v2921, 4
        %v2924 = vshll.u32 %v2573, 16
        %v2926 = vrot.slane %v2924, 5
        %v2927 = vsel %vm1483, %v2922, %v2926
        %v2928 = vshrl.u32 %v2573, 16
        %v2930 = vrot.slane %v2928, 4
        %v2931 = vor.u32 %v2930, %v2926
        %v2932 = vrot.slane %v2931, 4
        %v2934 = vshll.u32 %v2574, 16
        %v2936 = vrot.slane %v2934, 5
        %v2937 = vsel %vm1483, %v2932, %v2936
        %v2939 = vshrl.u32 %v2575, 16
        %v2941 = vrot.slane %v2939, 4
        %v2942 = vshll.u32 %v2575, 16
        %v2944 = vrot.slane %v2942, 5
        %v2945 = vor.u32 %v2941, %v2944
        %v2946 = vrot.slane %v2945, 4
        %v2948 = vshll.u32 %v2576, 16
        %v2950 = vrot.slane %v2948, 5
        %v2951 = vsel %vm1483, %v2946, %v2950
        %v2952 = vshrl.u32 %v2576, 16
        %v2954 = vrot.slane %v2952, 4
        %v2955 = vor.u32 %v2954, %v2950
        %v2956 = vrot.slane %v2955, 4
        %v2958 = vshll.u32 %v2577, 16
        %v2960 = vrot.slane %v2958, 5
        %v2961 = vsel %vm1483, %v2956, %v2960
        %2962 = vrot.lane.b32.xlu0 %v2591, 32
        %v2963 = vpop.permute.xlu0 %2962
        %2964 = vrot.lane.b32.xlu0 %v2601, 32
        %v2965 = vpop.permute.xlu0 %2964
        %2966 = vrot.lane.b32.xlu0 %v2615, 32
        %v2967 = vpop.permute.xlu0 %2966
        %2968 = vrot.lane.b32.xlu0 %v2625, 32
        %v2969 = vpop.permute.xlu0 %2968
        %2970 = vrot.lane.b32.xlu0 %v2639, 32
        %v2971 = vpop.permute.xlu0 %2970
        %2972 = vrot.lane.b32.xlu0 %v2649, 32
        %v2973 = vpop.permute.xlu0 %2972
        %2974 = vrot.lane.b32.xlu0 %v2663, 32
        %v2975 = vpop.permute.xlu0 %2974
        %2976 = vrot.lane.b32.xlu0 %v2673, 32
        %v2977 = vpop.permute.xlu0 %2976
        %2978 = vrot.lane.b32.xlu0 %v2687, 32
        %v2979 = vpop.permute.xlu0 %2978
        %2980 = vrot.lane.b32.xlu0 %v2697, 32
        %v2981 = vpop.permute.xlu0 %2980
        %2982 = vrot.lane.b32.xlu0 %v2711, 32
        %v2983 = vpop.permute.xlu0 %2982
        %2984 = vrot.lane.b32.xlu0 %v2721, 32
        %v2985 = vpop.permute.xlu0 %2984
        %2986 = vrot.lane.b32.xlu0 %v2735, 32
        %v2987 = vpop.permute.xlu0 %2986
        %2988 = vrot.lane.b32.xlu0 %v2745, 32
        %v2989 = vpop.permute.xlu0 %2988
        %2990 = vrot.lane.b32.xlu0 %v2759, 32
        %v2991 = vpop.permute.xlu0 %2990
        %2992 = vrot.lane.b32.xlu0 %v2769, 32
        %v2993 = vpop.permute.xlu0 %2992
        %2994 = vrot.lane.b32.xlu0 %v2783, 32
        %v2995 = vpop.permute.xlu0 %2994
        %2996 = vrot.lane.b32.xlu0 %v2793, 32
        %v2997 = vpop.permute.xlu0 %2996
        %2998 = vrot.lane.b32.xlu0 %v2807, 32
        %v2999 = vpop.permute.xlu0 %2998
        %3000 = vrot.lane.b32.xlu0 %v2817, 32
        %v3001 = vpop.permute.xlu0 %3000
        %3002 = vrot.lane.b32.xlu0 %v2831, 32
        %v3003 = vpop.permute.xlu0 %3002
        %3004 = vrot.lane.b32.xlu0 %v2841, 32
        %v3005 = vpop.permute.xlu0 %3004
        %3006 = vrot.lane.b32.xlu0 %v2855, 32
        %v3007 = vpop.permute.xlu0 %3006
        %3008 = vrot.lane.b32.xlu0 %v2865, 32
        %v3009 = vpop.permute.xlu0 %3008
        %3010 = vrot.lane.b32.xlu0 %v2879, 32
        %v3011 = vpop.permute.xlu0 %3010
        %3012 = vrot.lane.b32.xlu0 %v2889, 32
        %v3013 = vpop.permute.xlu0 %3012
        %3014 = vrot.lane.b32.xlu0 %v2903, 32
        %v3015 = vpop.permute.xlu0 %3014
        %3016 = vrot.lane.b32.xlu0 %v2913, 32
        %v3017 = vpop.permute.xlu0 %3016
        %3018 = vrot.lane.b32.xlu0 %v2927, 32
        %v3019 = vpop.permute.xlu0 %3018
        %3020 = vrot.lane.b32.xlu0 %v2937, 32
        %v3021 = vpop.permute.xlu0 %3020
        %3022 = vrot.lane.b32.xlu0 %v2951, 32
        %v3023 = vpop.permute.xlu0 %3022
        %3024 = vrot.lane.b32.xlu0 %v2961, 32
        %v3025 = vpop.permute.xlu0 %3024
        %vm3058 = vcmask 322816
        %3059 = vst.msk [vmem:[#allocation4] sm:$0xf] %vm3058, %v2963
        %3060 = vst.msk [vmem:[#allocation4 + $0x4] sm:$0xf] %vm3058, %v2965
        %3061 = vst.msk [vmem:[#allocation4 + $0x8] sm:$0xf] %vm3058, %v2967
        %3062 = vst.msk [vmem:[#allocation4 + $0xc] sm:$0xf] %vm3058, %v2969
        %3063 = vst.msk [vmem:[#allocation4 + $0x10] sm:$0xf] %vm3058, %v2971
        %3064 = vst.msk [vmem:[#allocation4 + $0x14] sm:$0xf] %vm3058, %v2973
        %3065 = vst.msk [vmem:[#allocation4 + $0x18] sm:$0xf] %vm3058, %v2975
        %3066 = vst.msk [vmem:[#allocation4 + $0x1c] sm:$0xf] %vm3058, %v2977
        %3067 = vst.msk [vmem:[#allocation4 + $0x20] sm:$0xf] %vm3058, %v2979
        %3068 = vst.msk [vmem:[#allocation4 + $0x24] sm:$0xf] %vm3058, %v2981
        %3069 = vst.msk [vmem:[#allocation4 + $0x28] sm:$0xf] %vm3058, %v2983
        %3070 = vst.msk [vmem:[#allocation4 + $0x2c] sm:$0xf] %vm3058, %v2985
        %3071 = vst.msk [vmem:[#allocation4 + $0x30] sm:$0xf] %vm3058, %v2987
        %3072 = vst.msk [vmem:[#allocation4 + $0x34] sm:$0xf] %vm3058, %v2989
        %3073 = vst.msk [vmem:[#allocation4 + $0x38] sm:$0xf] %vm3058, %v2991
        %3074 = vst.msk [vmem:[#allocation4 + $0x3c] sm:$0xf] %vm3058, %v2993
        %3075 = vst.msk [vmem:[#allocation4 + $0x40] sm:$0xf] %vm3058, %v2995
        %3076 = vst.msk [vmem:[#allocation4 + $0x44] sm:$0xf] %vm3058, %v2997
        %3077 = vst.msk [vmem:[#allocation4 + $0x48] sm:$0xf] %vm3058, %v2999
        %3078 = vst.msk [vmem:[#allocation4 + $0x4c] sm:$0xf] %vm3058, %v3001
        %3079 = vst.msk [vmem:[#allocation4 + $0x50] sm:$0xf] %vm3058, %v3003
        %3080 = vst.msk [vmem:[#allocation4 + $0x54] sm:$0xf] %vm3058, %v3005
        %3081 = vst.msk [vmem:[#allocation4 + $0x58] sm:$0xf] %vm3058, %v3007
        %3082 = vst.msk [vmem:[#allocation4 + $0x5c] sm:$0xf] %vm3058, %v3009
        %3083 = vst.msk [vmem:[#allocation4 + $0x60] sm:$0xf] %vm3058, %v3011
        %3084 = vst.msk [vmem:[#allocation4 + $0x64] sm:$0xf] %vm3058, %v3013
        %3085 = vst.msk [vmem:[#allocation4 + $0x68] sm:$0xf] %vm3058, %v3015
        %3086 = vst.msk [vmem:[#allocation4 + $0x6c] sm:$0xf] %vm3058, %v3017
        %3087 = vst.msk [vmem:[#allocation4 + $0x70] sm:$0xf] %vm3058, %v3019
        %3088 = vst.msk [vmem:[#allocation4 + $0x74] sm:$0xf] %vm3058, %v3021
        %3089 = vst.msk [vmem:[#allocation4 + $0x78] sm:$0xf] %vm3058, %v3023
        %3090 = vst.msk [vmem:[#allocation4 + $0x7c] sm:$0xf] %vm3058, %v3025
        %v3091 = vld [vmem:[%s686] sm:$0xe]
        %v3092 = vld [vmem:[%s686 + $0x4] sm:$0xf]
        %v3093 = vld [vmem:[%s686 + $0x8] sm:$0x1]
        %v3094 = vld [vmem:[%s686 + $0xc] sm:$0xe]
        %v3095 = vld [vmem:[%s686 + $0x10] sm:$0xf]
        %v3096 = vld [vmem:[%s686 + $0x14] sm:$0x1]
        %v3097 = vld [vmem:[%s686 + $0x18] sm:$0xe]
        %v3098 = vld [vmem:[%s686 + $0x1c] sm:$0xf]
        %v3099 = vld [vmem:[%s686 + $0x20] sm:$0x1]
        %v3100 = vld [vmem:[%s686 + $0x24] sm:$0xe]
        %v3101 = vld [vmem:[%s686 + $0x28] sm:$0xf]
        %v3102 = vld [vmem:[%s686 + $0x2c] sm:$0x1]
        %v3103 = vld [vmem:[%s686 + $0x30] sm:$0xe]
        %v3104 = vld [vmem:[%s686 + $0x34] sm:$0xf]
        %v3105 = vld [vmem:[%s686 + $0x38] sm:$0x1]
        %v3106 = vld [vmem:[%s686 + $0x3c] sm:$0xe]
        %v3107 = vld [vmem:[%s686 + $0x40] sm:$0xf]
        %v3108 = vld [vmem:[%s686 + $0x44] sm:$0x1]
        %v3109 = vld [vmem:[%s686 + $0x48] sm:$0xe]
        %v3110 = vld [vmem:[%s686 + $0x4c] sm:$0xf]
        %v3111 = vld [vmem:[%s686 + $0x50] sm:$0x1]
        %v3112 = vld [vmem:[%s686 + $0x54] sm:$0xe]
        %v3113 = vld [vmem:[%s686 + $0x58] sm:$0xf]
        %v3114 = vld [vmem:[%s686 + $0x5c] sm:$0x1]
        %v3115 = vld [vmem:[%s686 + $0x60] sm:$0xe]
        %v3116 = vld [vmem:[%s686 + $0x64] sm:$0xf]
        %v3117 = vld [vmem:[%s686 + $0x68] sm:$0x1]
        %v3118 = vld [vmem:[%s686 + $0x6c] sm:$0xe]
        %v3119 = vld [vmem:[%s686 + $0x70] sm:$0xf]
        %v3120 = vld [vmem:[%s686 + $0x74] sm:$0x1]
        %v3121 = vld [vmem:[%s686 + $0x78] sm:$0xe]
        %v3122 = vld [vmem:[%s686 + $0x7c] sm:$0xf]
        %v3123 = vld [vmem:[%s686 + $0x80] sm:$0x1]
        %v3124 = vld [vmem:[%s686 + $0x84] sm:$0xe]
        %v3125 = vld [vmem:[%s686 + $0x88] sm:$0xf]
        %v3126 = vld [vmem:[%s686 + $0x8c] sm:$0x1]
        %v3127 = vld [vmem:[%s686 + $0x90] sm:$0xe]
        %v3128 = vld [vmem:[%s686 + $0x94] sm:$0xf]
        %v3129 = vld [vmem:[%s686 + $0x98] sm:$0x1]
        %v3130 = vld [vmem:[%s686 + $0x9c] sm:$0xe]
        %v3131 = vld [vmem:[%s686 + $0xa0] sm:$0xf]
        %v3132 = vld [vmem:[%s686 + $0xa4] sm:$0x1]
        %v3133 = vld [vmem:[%s686 + $0xa8] sm:$0xe]
        %v3134 = vld [vmem:[%s686 + $0xac] sm:$0xf]
        %v3135 = vld [vmem:[%s686 + $0xb0] sm:$0x1]
        %v3136 = vld [vmem:[%s686 + $0xb4] sm:$0xe]
        %v3137 = vld [vmem:[%s686 + $0xb8] sm:$0xf]
        %v3138 = vld [vmem:[%s686 + $0xbc] sm:$0x1]
        %v3187 = vrot.slane %v3091, 5
        %v3188 = vrot.slane %v3187, 4
        %v3189 = vrot.slane %v3092, 5
        %v3190 = vsel %vm2095, %v3188, %v3189
        %v3191 = vrot.slane %v3189, 4
        %v3192 = vrot.slane %v3093, 5
        %v3193 = vsel %vm2095, %v3191, %v3192
        %v3194 = vrot.slane %v3094, 5
        %v3195 = vrot.slane %v3194, 4
        %v3196 = vrot.slane %v3095, 5
        %v3197 = vsel %vm2095, %v3195, %v3196
        %v3198 = vrot.slane %v3196, 4
        %v3199 = vrot.slane %v3096, 5
        %v3200 = vsel %vm2095, %v3198, %v3199
        %v3201 = vrot.slane %v3097, 5
        %v3202 = vrot.slane %v3201, 4
        %v3203 = vrot.slane %v3098, 5
        %v3204 = vsel %vm2095, %v3202, %v3203
        %v3205 = vrot.slane %v3203, 4
        %v3206 = vrot.slane %v3099, 5
        %v3207 = vsel %vm2095, %v3205, %v3206
        %v3208 = vrot.slane %v3100, 5
        %v3209 = vrot.slane %v3208, 4
        %v3210 = vrot.slane %v3101, 5
        %v3211 = vsel %vm2095, %v3209, %v3210
        %v3212 = vrot.slane %v3210, 4
        %v3213 = vrot.slane %v3102, 5
        %v3214 = vsel %vm2095, %v3212, %v3213
        %v3215 = vrot.slane %v3103, 5
        %v3216 = vrot.slane %v3215, 4
        %v3217 = vrot.slane %v3104, 5
        %v3218 = vsel %vm2095, %v3216, %v3217
        %v3219 = vrot.slane %v3217, 4
        %v3220 = vrot.slane %v3105, 5
        %v3221 = vsel %vm2095, %v3219, %v3220
        %v3222 = vrot.slane %v3106, 5
        %v3223 = vrot.slane %v3222, 4
        %v3224 = vrot.slane %v3107, 5
        %v3225 = vsel %vm2095, %v3223, %v3224
        %v3226 = vrot.slane %v3224, 4
        %v3227 = vrot.slane %v3108, 5
        %v3228 = vsel %vm2095, %v3226, %v3227
        %v3229 = vrot.slane %v3109, 5
        %v3230 = vrot.slane %v3229, 4
        %v3231 = vrot.slane %v3110, 5
        %v3232 = vsel %vm2095, %v3230, %v3231
        %v3233 = vrot.slane %v3231, 4
        %v3234 = vrot.slane %v3111, 5
        %v3235 = vsel %vm2095, %v3233, %v3234
        %v3236 = vrot.slane %v3112, 5
        %v3237 = vrot.slane %v3236, 4
        %v3238 = vrot.slane %v3113, 5
        %v3239 = vsel %vm2095, %v3237, %v3238
        %v3240 = vrot.slane %v3238, 4
        %v3241 = vrot.slane %v3114, 5
        %v3242 = vsel %vm2095, %v3240, %v3241
        %v3243 = vrot.slane %v3115, 5
        %v3244 = vrot.slane %v3243, 4
        %v3245 = vrot.slane %v3116, 5
        %v3246 = vsel %vm2095, %v3244, %v3245
        %v3247 = vrot.slane %v3245, 4
        %v3248 = vrot.slane %v3117, 5
        %v3249 = vsel %vm2095, %v3247, %v3248
        %v3250 = vrot.slane %v3118, 5
        %v3251 = vrot.slane %v3250, 4
        %v3252 = vrot.slane %v3119, 5
        %v3253 = vsel %vm2095, %v3251, %v3252
        %v3254 = vrot.slane %v3252, 4
        %v3255 = vrot.slane %v3120, 5
        %v3256 = vsel %vm2095, %v3254, %v3255
        %v3257 = vrot.slane %v3121, 5
        %v3258 = vrot.slane %v3257, 4
        %v3259 = vrot.slane %v3122, 5
        %v3260 = vsel %vm2095, %v3258, %v3259
        %v3261 = vrot.slane %v3259, 4
        %v3262 = vrot.slane %v3123, 5
        %v3263 = vsel %vm2095, %v3261, %v3262
        %v3264 = vrot.slane %v3124, 5
        %v3265 = vrot.slane %v3264, 4
        %v3266 = vrot.slane %v3125, 5
        %v3267 = vsel %vm2095, %v3265, %v3266
        %v3268 = vrot.slane %v3266, 4
        %v3269 = vrot.slane %v3126, 5
        %v3270 = vsel %vm2095, %v3268, %v3269
        %v3271 = vrot.slane %v3127, 5
        %v3272 = vrot.slane %v3271, 4
        %v3273 = vrot.slane %v3128, 5
        %v3274 = vsel %vm2095, %v3272, %v3273
        %v3275 = vrot.slane %v3273, 4
        %v3276 = vrot.slane %v3129, 5
        %v3277 = vsel %vm2095, %v3275, %v3276
        %v3278 = vrot.slane %v3130, 5
        %v3279 = vrot.slane %v3278, 4
        %v3280 = vrot.slane %v3131, 5
        %v3281 = vsel %vm2095, %v3279, %v3280
        %v3282 = vrot.slane %v3280, 4
        %v3283 = vrot.slane %v3132, 5
        %v3284 = vsel %vm2095, %v3282, %v3283
        %v3285 = vrot.slane %v3133, 5
        %v3286 = vrot.slane %v3285, 4
        %v3287 = vrot.slane %v3134, 5
        %v3288 = vsel %vm2095, %v3286, %v3287
        %v3289 = vrot.slane %v3287, 4
        %v3290 = vrot.slane %v3135, 5
        %v3291 = vsel %vm2095, %v3289, %v3290
        %v3292 = vrot.slane %v3136, 5
        %v3293 = vrot.slane %v3292, 4
        %v3294 = vrot.slane %v3137, 5
        %v3295 = vsel %vm2095, %v3293, %v3294
        %v3296 = vrot.slane %v3294, 4
        %v3297 = vrot.slane %v3138, 5
        %v3298 = vsel %vm2095, %v3296, %v3297
        %3299 = vrot.lane.b32.xlu0 %v3190, 40
        %v3300 = vpop.permute.xlu0 %3299
        %3301 = vrot.lane.b32.xlu0 %v3193, 40
        %v3302 = vpop.permute.xlu0 %3301
        %3303 = vrot.lane.b32.xlu0 %v3197, 40
        %v3304 = vpop.permute.xlu0 %3303
        %3305 = vrot.lane.b32.xlu0 %v3200, 40
        %v3306 = vpop.permute.xlu0 %3305
        %3307 = vrot.lane.b32.xlu0 %v3204, 40
        %v3308 = vpop.permute.xlu0 %3307
        %3309 = vrot.lane.b32.xlu0 %v3207, 40
        %v3310 = vpop.permute.xlu0 %3309
        %3311 = vrot.lane.b32.xlu0 %v3211, 40
        %v3312 = vpop.permute.xlu0 %3311
        %3313 = vrot.lane.b32.xlu0 %v3214, 40
        %v3314 = vpop.permute.xlu0 %3313
        %3315 = vrot.lane.b32.xlu0 %v3218, 40
        %v3316 = vpop.permute.xlu0 %3315
        %3317 = vrot.lane.b32.xlu0 %v3221, 40
        %v3318 = vpop.permute.xlu0 %3317
        %3319 = vrot.lane.b32.xlu0 %v3225, 40
        %v3320 = vpop.permute.xlu0 %3319
        %3321 = vrot.lane.b32.xlu0 %v3228, 40
        %v3322 = vpop.permute.xlu0 %3321
        %3323 = vrot.lane.b32.xlu0 %v3232, 40
        %v3324 = vpop.permute.xlu0 %3323
        %3325 = vrot.lane.b32.xlu0 %v3235, 40
        %v3326 = vpop.permute.xlu0 %3325
        %3327 = vrot.lane.b32.xlu0 %v3239, 40
        %v3328 = vpop.permute.xlu0 %3327
        %3329 = vrot.lane.b32.xlu0 %v3242, 40
        %v3330 = vpop.permute.xlu0 %3329
        %3331 = vrot.lane.b32.xlu0 %v3246, 40
        %v3332 = vpop.permute.xlu0 %3331
        %3333 = vrot.lane.b32.xlu0 %v3249, 40
        %v3334 = vpop.permute.xlu0 %3333
        %3335 = vrot.lane.b32.xlu0 %v3253, 40
        %v3336 = vpop.permute.xlu0 %3335
        %3337 = vrot.lane.b32.xlu0 %v3256, 40
        %v3338 = vpop.permute.xlu0 %3337
        %3339 = vrot.lane.b32.xlu0 %v3260, 40
        %v3340 = vpop.permute.xlu0 %3339
        %3341 = vrot.lane.b32.xlu0 %v3263, 40
        %v3342 = vpop.permute.xlu0 %3341
        %3343 = vrot.lane.b32.xlu0 %v3267, 40
        %v3344 = vpop.permute.xlu0 %3343
        %3345 = vrot.lane.b32.xlu0 %v3270, 40
        %v3346 = vpop.permute.xlu0 %3345
        %3347 = vrot.lane.b32.xlu0 %v3274, 40
        %v3348 = vpop.permute.xlu0 %3347
        %3349 = vrot.lane.b32.xlu0 %v3277, 40
        %v3350 = vpop.permute.xlu0 %3349
        %3351 = vrot.lane.b32.xlu0 %v3281, 40
        %v3352 = vpop.permute.xlu0 %3351
        %3353 = vrot.lane.b32.xlu0 %v3284, 40
        %v3354 = vpop.permute.xlu0 %3353
        %3355 = vrot.lane.b32.xlu0 %v3288, 40
        %v3356 = vpop.permute.xlu0 %3355
        %3357 = vrot.lane.b32.xlu0 %v3291, 40
        %v3358 = vpop.permute.xlu0 %3357
        %3359 = vrot.lane.b32.xlu0 %v3295, 40
        %v3360 = vpop.permute.xlu0 %3359
        %3361 = vrot.lane.b32.xlu0 %v3298, 40
        %v3362 = vpop.permute.xlu0 %3361
        %vm3395 = vcmask 388416
        %3396 = vst.msk [vmem:[#allocation4] sm:$0xf] %vm3395, %v3300
        %3397 = vst.msk [vmem:[#allocation4 + $0x4] sm:$0xf] %vm3395, %v3302
        %3398 = vst.msk [vmem:[#allocation4 + $0x8] sm:$0xf] %vm3395, %v3304
        %3399 = vst.msk [vmem:[#allocation4 + $0xc] sm:$0xf] %vm3395, %v3306
        %3400 = vst.msk [vmem:[#allocation4 + $0x10] sm:$0xf] %vm3395, %v3308
        %3401 = vst.msk [vmem:[#allocation4 + $0x14] sm:$0xf] %vm3395, %v3310
        %3402 = vst.msk [vmem:[#allocation4 + $0x18] sm:$0xf] %vm3395, %v3312
        %3403 = vst.msk [vmem:[#allocation4 + $0x1c] sm:$0xf] %vm3395, %v3314
        %3404 = vst.msk [vmem:[#allocation4 + $0x20] sm:$0xf] %vm3395, %v3316
        %3405 = vst.msk [vmem:[#allocation4 + $0x24] sm:$0xf] %vm3395, %v3318
        %3406 = vst.msk [vmem:[#allocation4 + $0x28] sm:$0xf] %vm3395, %v3320
        %3407 = vst.msk [vmem:[#allocation4 + $0x2c] sm:$0xf] %vm3395, %v3322
        %3408 = vst.msk [vmem:[#allocation4 + $0x30] sm:$0xf] %vm3395, %v3324
        %3409 = vst.msk [vmem:[#allocation4 + $0x34] sm:$0xf] %vm3395, %v3326
        %3410 = vst.msk [vmem:[#allocation4 + $0x38] sm:$0xf] %vm3395, %v3328
        %3411 = vst.msk [vmem:[#allocation4 + $0x3c] sm:$0xf] %vm3395, %v3330
        %3412 = vst.msk [vmem:[#allocation4 + $0x40] sm:$0xf] %vm3395, %v3332
        %3413 = vst.msk [vmem:[#allocation4 + $0x44] sm:$0xf] %vm3395, %v3334
        %3414 = vst.msk [vmem:[#allocation4 + $0x48] sm:$0xf] %vm3395, %v3336
        %3415 = vst.msk [vmem:[#allocation4 + $0x4c] sm:$0xf] %vm3395, %v3338
        %3416 = vst.msk [vmem:[#allocation4 + $0x50] sm:$0xf] %vm3395, %v3340
        %3417 = vst.msk [vmem:[#allocation4 + $0x54] sm:$0xf] %vm3395, %v3342
        %3418 = vst.msk [vmem:[#allocation4 + $0x58] sm:$0xf] %vm3395, %v3344
        %3419 = vst.msk [vmem:[#allocation4 + $0x5c] sm:$0xf] %vm3395, %v3346
        %3420 = vst.msk [vmem:[#allocation4 + $0x60] sm:$0xf] %vm3395, %v3348
        %3421 = vst.msk [vmem:[#allocation4 + $0x64] sm:$0xf] %vm3395, %v3350
        %3422 = vst.msk [vmem:[#allocation4 + $0x68] sm:$0xf] %vm3395, %v3352
        %3423 = vst.msk [vmem:[#allocation4 + $0x6c] sm:$0xf] %vm3395, %v3354
        %3424 = vst.msk [vmem:[#allocation4 + $0x70] sm:$0xf] %vm3395, %v3356
        %3425 = vst.msk [vmem:[#allocation4 + $0x74] sm:$0xf] %vm3395, %v3358
        %3426 = vst.msk [vmem:[#allocation4 + $0x78] sm:$0xf] %vm3395, %v3360
        %3427 = vst.msk [vmem:[#allocation4 + $0x7c] sm:$0xf] %vm3395, %v3362
        %s3428 = scalar_lea.vmem [#allocation2], 24
        %v3429 = vld [vmem:[%s3428] sm:$0xf]
        %v3430 = vld [vmem:[%s3428 + $0x4] sm:$0xf]
        %v3431 = vld [vmem:[%s3428 + $0xc] sm:$0xf]
        %v3432 = vld [vmem:[%s3428 + $0x10] sm:$0xf]
        %v3433 = vld [vmem:[%s3428 + $0x18] sm:$0xf]
        %v3434 = vld [vmem:[%s3428 + $0x1c] sm:$0xf]
        %v3435 = vld [vmem:[%s3428 + $0x24] sm:$0xf]
        %v3436 = vld [vmem:[%s3428 + $0x28] sm:$0xf]
        %v3437 = vld [vmem:[%s3428 + $0x30] sm:$0xf]
        %v3438 = vld [vmem:[%s3428 + $0x34] sm:$0xf]
        %v3439 = vld [vmem:[%s3428 + $0x3c] sm:$0xf]
        %v3440 = vld [vmem:[%s3428 + $0x40] sm:$0xf]
        %v3441 = vld [vmem:[%s3428 + $0x48] sm:$0xf]
        %v3442 = vld [vmem:[%s3428 + $0x4c] sm:$0xf]
        %v3443 = vld [vmem:[%s3428 + $0x54] sm:$0xf]
        %v3444 = vld [vmem:[%s3428 + $0x58] sm:$0xf]
        %v3445 = vld [vmem:[%s3428 + $0x60] sm:$0xf]
        %v3446 = vld [vmem:[%s3428 + $0x64] sm:$0xf]
        %v3447 = vld [vmem:[%s3428 + $0x6c] sm:$0xf]
        %v3448 = vld [vmem:[%s3428 + $0x70] sm:$0xf]
        %v3449 = vld [vmem:[%s3428 + $0x78] sm:$0xf]
        %v3450 = vld [vmem:[%s3428 + $0x7c] sm:$0xf]
        %v3451 = vld [vmem:[%s3428 + $0x84] sm:$0xf]
        %v3452 = vld [vmem:[%s3428 + $0x88] sm:$0xf]
        %v3453 = vld [vmem:[%s3428 + $0x90] sm:$0xf]
        %v3454 = vld [vmem:[%s3428 + $0x94] sm:$0xf]
        %v3455 = vld [vmem:[%s3428 + $0x9c] sm:$0xf]
        %v3456 = vld [vmem:[%s3428 + $0xa0] sm:$0xf]
        %v3457 = vld [vmem:[%s3428 + $0xa8] sm:$0xf]
        %v3458 = vld [vmem:[%s3428 + $0xac] sm:$0xf]
        %v3459 = vld [vmem:[%s3428 + $0xb4] sm:$0xf]
        %v3460 = vld [vmem:[%s3428 + $0xb8] sm:$0xf]
        %3493 = vrot.lane.b32.xlu0 %v3429, 48
        %v3494 = vpop.permute.xlu0 %3493
        %3495 = vrot.lane.b32.xlu0 %v3430, 48
        %v3496 = vpop.permute.xlu0 %3495
        %3497 = vrot.lane.b32.xlu0 %v3431, 48
        %v3498 = vpop.permute.xlu0 %3497
        %3499 = vrot.lane.b32.xlu0 %v3432, 48
        %v3500 = vpop.permute.xlu0 %3499
        %3501 = vrot.lane.b32.xlu0 %v3433, 48
        %v3502 = vpop.permute.xlu0 %3501
        %3503 = vrot.lane.b32.xlu0 %v3434, 48
        %v3504 = vpop.permute.xlu0 %3503
        %3505 = vrot.lane.b32.xlu0 %v3435, 48
        %v3506 = vpop.permute.xlu0 %3505
        %3507 = vrot.lane.b32.xlu0 %v3436, 48
        %v3508 = vpop.permute.xlu0 %3507
        %3509 = vrot.lane.b32.xlu0 %v3437, 48
        %v3510 = vpop.permute.xlu0 %3509
        %3511 = vrot.lane.b32.xlu0 %v3438, 48
        %v3512 = vpop.permute.xlu0 %3511
        %3513 = vrot.lane.b32.xlu0 %v3439, 48
        %v3514 = vpop.permute.xlu0 %3513
        %3515 = vrot.lane.b32.xlu0 %v3440, 48
        %v3516 = vpop.permute.xlu0 %3515
        %3517 = vrot.lane.b32.xlu0 %v3441, 48
        %v3518 = vpop.permute.xlu0 %3517
        %3519 = vrot.lane.b32.xlu0 %v3442, 48
        %v3520 = vpop.permute.xlu0 %3519
        %3521 = vrot.lane.b32.xlu0 %v3443, 48
        %v3522 = vpop.permute.xlu0 %3521
        %3523 = vrot.lane.b32.xlu0 %v3444, 48
        %v3524 = vpop.permute.xlu0 %3523
        %3525 = vrot.lane.b32.xlu0 %v3445, 48
        %v3526 = vpop.permute.xlu0 %3525
        %3527 = vrot.lane.b32.xlu0 %v3446, 48
        %v3528 = vpop.permute.xlu0 %3527
        %3529 = vrot.lane.b32.xlu0 %v3447, 48
        %v3530 = vpop.permute.xlu0 %3529
        %3531 = vrot.lane.b32.xlu0 %v3448, 48
        %v3532 = vpop.permute.xlu0 %3531
        %3533 = vrot.lane.b32.xlu0 %v3449, 48
        %v3534 = vpop.permute.xlu0 %3533
        %3535 = vrot.lane.b32.xlu0 %v3450, 48
        %v3536 = vpop.permute.xlu0 %3535
        %3537 = vrot.lane.b32.xlu0 %v3451, 48
        %v3538 = vpop.permute.xlu0 %3537
        %3539 = vrot.lane.b32.xlu0 %v3452, 48
        %v3540 = vpop.permute.xlu0 %3539
        %3541 = vrot.lane.b32.xlu0 %v3453, 48
        %v3542 = vpop.permute.xlu0 %3541
        %3543 = vrot.lane.b32.xlu0 %v3454, 48
        %v3544 = vpop.permute.xlu0 %3543
        %3545 = vrot.lane.b32.xlu0 %v3455, 48
        %v3546 = vpop.permute.xlu0 %3545
        %3547 = vrot.lane.b32.xlu0 %v3456, 48
        %v3548 = vpop.permute.xlu0 %3547
        %3549 = vrot.lane.b32.xlu0 %v3457, 48
        %v3550 = vpop.permute.xlu0 %3549
        %3551 = vrot.lane.b32.xlu0 %v3458, 48
        %v3552 = vpop.permute.xlu0 %3551
        %3553 = vrot.lane.b32.xlu0 %v3459, 48
        %v3554 = vpop.permute.xlu0 %3553
        %3555 = vrot.lane.b32.xlu0 %v3460, 48
        %v3556 = vpop.permute.xlu0 %3555
        %vm3589 = vcmask 454016
        %3590 = vst.msk [vmem:[#allocation4] sm:$0xf] %vm3589, %v3494
        %3591 = vst.msk [vmem:[#allocation4 + $0x4] sm:$0xf] %vm3589, %v3496
        %3592 = vst.msk [vmem:[#allocation4 + $0x8] sm:$0xf] %vm3589, %v3498
        %3593 = vst.msk [vmem:[#allocation4 + $0xc] sm:$0xf] %vm3589, %v3500
        %3594 = vst.msk [vmem:[#allocation4 + $0x10] sm:$0xf] %vm3589, %v3502
        %3595 = vst.msk [vmem:[#allocation4 + $0x14] sm:$0xf] %vm3589, %v3504
        %3596 = vst.msk [vmem:[#allocation4 + $0x18] sm:$0xf] %vm3589, %v3506
        %3597 = vst.msk [vmem:[#allocation4 + $0x1c] sm:$0xf] %vm3589, %v3508
        %3598 = vst.msk [vmem:[#allocation4 + $0x20] sm:$0xf] %vm3589, %v3510
        %3599 = vst.msk [vmem:[#allocation4 + $0x24] sm:$0xf] %vm3589, %v3512
        %3600 = vst.msk [vmem:[#allocation4 + $0x28] sm:$0xf] %vm3589, %v3514
        %3601 = vst.msk [vmem:[#allocation4 + $0x2c] sm:$0xf] %vm3589, %v3516
        %3602 = vst.msk [vmem:[#allocation4 + $0x30] sm:$0xf] %vm3589, %v3518
        %3603 = vst.msk [vmem:[#allocation4 + $0x34] sm:$0xf] %vm3589, %v3520
        %3604 = vst.msk [vmem:[#allocation4 + $0x38] sm:$0xf] %vm3589, %v3522
        %3605 = vst.msk [vmem:[#allocation4 + $0x3c] sm:$0xf] %vm3589, %v3524
        %3606 = vst.msk [vmem:[#allocation4 + $0x40] sm:$0xf] %vm3589, %v3526
        %3607 = vst.msk [vmem:[#allocation4 + $0x44] sm:$0xf] %vm3589, %v3528
        %3608 = vst.msk [vmem:[#allocation4 + $0x48] sm:$0xf] %vm3589, %v3530
        %3609 = vst.msk [vmem:[#allocation4 + $0x4c] sm:$0xf] %vm3589, %v3532
        %3610 = vst.msk [vmem:[#allocation4 + $0x50] sm:$0xf] %vm3589, %v3534
        %3611 = vst.msk [vmem:[#allocation4 + $0x54] sm:$0xf] %vm3589, %v3536
        %3612 = vst.msk [vmem:[#allocation4 + $0x58] sm:$0xf] %vm3589, %v3538
        %3613 = vst.msk [vmem:[#allocation4 + $0x5c] sm:$0xf] %vm3589, %v3540
        %3614 = vst.msk [vmem:[#allocation4 + $0x60] sm:$0xf] %vm3589, %v3542
        %3615 = vst.msk [vmem:[#allocation4 + $0x64] sm:$0xf] %vm3589, %v3544
        %3616 = vst.msk [vmem:[#allocation4 + $0x68] sm:$0xf] %vm3589, %v3546
        %3617 = vst.msk [vmem:[#allocation4 + $0x6c] sm:$0xf] %vm3589, %v3548
        %3618 = vst.msk [vmem:[#allocation4 + $0x70] sm:$0xf] %vm3589, %v3550
        %3619 = vst.msk [vmem:[#allocation4 + $0x74] sm:$0xf] %vm3589, %v3552
        %3620 = vst.msk [vmem:[#allocation4 + $0x78] sm:$0xf] %vm3589, %v3554
        %3621 = vst.msk [vmem:[#allocation4 + $0x7c] sm:$0xf] %vm3589, %v3556
        %v3622 = vld [vmem:[%s3428] sm:$0xf]
        %v3623 = vld [vmem:[%s3428 + $0x4] sm:$0xf]
        %v3624 = vld [vmem:[%s3428 + $0x8] sm:$0x1]
        %v3625 = vld [vmem:[%s3428 + $0xc] sm:$0xf]
        %v3626 = vld [vmem:[%s3428 + $0x10] sm:$0xf]
        %v3627 = vld [vmem:[%s3428 + $0x14] sm:$0x1]
        %v3628 = vld [vmem:[%s3428 + $0x18] sm:$0xf]
        %v3629 = vld [vmem:[%s3428 + $0x1c] sm:$0xf]
        %v3630 = vld [vmem:[%s3428 + $0x20] sm:$0x1]
        %v3631 = vld [vmem:[%s3428 + $0x24] sm:$0xf]
        %v3632 = vld [vmem:[%s3428 + $0x28] sm:$0xf]
        %v3633 = vld [vmem:[%s3428 + $0x2c] sm:$0x1]
        %v3634 = vld [vmem:[%s3428 + $0x30] sm:$0xf]
        %v3635 = vld [vmem:[%s3428 + $0x34] sm:$0xf]
        %v3636 = vld [vmem:[%s3428 + $0x38] sm:$0x1]
        %v3637 = vld [vmem:[%s3428 + $0x3c] sm:$0xf]
        %v3638 = vld [vmem:[%s3428 + $0x40] sm:$0xf]
        %v3639 = vld [vmem:[%s3428 + $0x44] sm:$0x1]
        %v3640 = vld [vmem:[%s3428 + $0x48] sm:$0xf]
        %v3641 = vld [vmem:[%s3428 + $0x4c] sm:$0xf]
        %v3642 = vld [vmem:[%s3428 + $0x50] sm:$0x1]
        %v3643 = vld [vmem:[%s3428 + $0x54] sm:$0xf]
        %v3644 = vld [vmem:[%s3428 + $0x58] sm:$0xf]
        %v3645 = vld [vmem:[%s3428 + $0x5c] sm:$0x1]
        %v3646 = vld [vmem:[%s3428 + $0x60] sm:$0xf]
        %v3647 = vld [vmem:[%s3428 + $0x64] sm:$0xf]
        %v3648 = vld [vmem:[%s3428 + $0x68] sm:$0x1]
        %v3649 = vld [vmem:[%s3428 + $0x6c] sm:$0xf]
        %v3650 = vld [vmem:[%s3428 + $0x70] sm:$0xf]
        %v3651 = vld [vmem:[%s3428 + $0x74] sm:$0x1]
        %v3652 = vld [vmem:[%s3428 + $0x78] sm:$0xf]
        %v3653 = vld [vmem:[%s3428 + $0x7c] sm:$0xf]
        %v3654 = vld [vmem:[%s3428 + $0x80] sm:$0x1]
        %v3655 = vld [vmem:[%s3428 + $0x84] sm:$0xf]
        %v3656 = vld [vmem:[%s3428 + $0x88] sm:$0xf]
        %v3657 = vld [vmem:[%s3428 + $0x8c] sm:$0x1]
        %v3658 = vld [vmem:[%s3428 + $0x90] sm:$0xf]
        %v3659 = vld [vmem:[%s3428 + $0x94] sm:$0xf]
        %v3660 = vld [vmem:[%s3428 + $0x98] sm:$0x1]
        %v3661 = vld [vmem:[%s3428 + $0x9c] sm:$0xf]
        %v3662 = vld [vmem:[%s3428 + $0xa0] sm:$0xf]
        %v3663 = vld [vmem:[%s3428 + $0xa4] sm:$0x1]
        %v3664 = vld [vmem:[%s3428 + $0xa8] sm:$0xf]
        %v3665 = vld [vmem:[%s3428 + $0xac] sm:$0xf]
        %v3666 = vld [vmem:[%s3428 + $0xb0] sm:$0x1]
        %v3667 = vld [vmem:[%s3428 + $0xb4] sm:$0xf]
        %v3668 = vld [vmem:[%s3428 + $0xb8] sm:$0xf]
        %v3669 = vld [vmem:[%s3428 + $0xbc] sm:$0x1]
        %v3671 = vshrl.u32 %v3622, 16
        %v3673 = vrot.slane %v3671, 4
        %v3674 = vshll.u32 %v3622, 16
        %v3676 = vrot.slane %v3674, 5
        %v3677 = vor.u32 %v3673, %v3676
        %v3678 = vrot.slane %v3677, 4
        %v3680 = vshll.u32 %v3623, 16
        %v3682 = vrot.slane %v3680, 5
        %v3683 = vsel %vm1483, %v3678, %v3682
        %v3684 = vshrl.u32 %v3623, 16
        %v3686 = vrot.slane %v3684, 4
        %v3687 = vor.u32 %v3686, %v3682
        %v3688 = vrot.slane %v3687, 4
        %v3690 = vshll.u32 %v3624, 16
        %v3692 = vrot.slane %v3690, 5
        %v3693 = vsel %vm1483, %v3688, %v3692
        %v3695 = vshrl.u32 %v3625, 16
        %v3697 = vrot.slane %v3695, 4
        %v3698 = vshll.u32 %v3625, 16
        %v3700 = vrot.slane %v3698, 5
        %v3701 = vor.u32 %v3697, %v3700
        %v3702 = vrot.slane %v3701, 4
        %v3704 = vshll.u32 %v3626, 16
        %v3706 = vrot.slane %v3704, 5
        %v3707 = vsel %vm1483, %v3702, %v3706
        %v3708 = vshrl.u32 %v3626, 16
        %v3710 = vrot.slane %v3708, 4
        %v3711 = vor.u32 %v3710, %v3706
        %v3712 = vrot.slane %v3711, 4
        %v3714 = vshll.u32 %v3627, 16
        %v3716 = vrot.slane %v3714, 5
        %v3717 = vsel %vm1483, %v3712, %v3716
        %v3719 = vshrl.u32 %v3628, 16
        %v3721 = vrot.slane %v3719, 4
        %v3722 = vshll.u32 %v3628, 16
        %v3724 = vrot.slane %v3722, 5
        %v3725 = vor.u32 %v3721, %v3724
        %v3726 = vrot.slane %v3725, 4
        %v3728 = vshll.u32 %v3629, 16
        %v3730 = vrot.slane %v3728, 5
        %v3731 = vsel %vm1483, %v3726, %v3730
        %v3732 = vshrl.u32 %v3629, 16
        %v3734 = vrot.slane %v3732, 4
        %v3735 = vor.u32 %v3734, %v3730
        %v3736 = vrot.slane %v3735, 4
        %v3738 = vshll.u32 %v3630, 16
        %v3740 = vrot.slane %v3738, 5
        %v3741 = vsel %vm1483, %v3736, %v3740
        %v3743 = vshrl.u32 %v3631, 16
        %v3745 = vrot.slane %v3743, 4
        %v3746 = vshll.u32 %v3631, 16
        %v3748 = vrot.slane %v3746, 5
        %v3749 = vor.u32 %v3745, %v3748
        %v3750 = vrot.slane %v3749, 4
        %v3752 = vshll.u32 %v3632, 16
        %v3754 = vrot.slane %v3752, 5
        %v3755 = vsel %vm1483, %v3750, %v3754
        %v3756 = vshrl.u32 %v3632, 16
        %v3758 = vrot.slane %v3756, 4
        %v3759 = vor.u32 %v3758, %v3754
        %v3760 = vrot.slane %v3759, 4
        %v3762 = vshll.u32 %v3633, 16
        %v3764 = vrot.slane %v3762, 5
        %v3765 = vsel %vm1483, %v3760, %v3764
        %v3767 = vshrl.u32 %v3634, 16
        %v3769 = vrot.slane %v3767, 4
        %v3770 = vshll.u32 %v3634, 16
        %v3772 = vrot.slane %v3770, 5
        %v3773 = vor.u32 %v3769, %v3772
        %v3774 = vrot.slane %v3773, 4
        %v3776 = vshll.u32 %v3635, 16
        %v3778 = vrot.slane %v3776, 5
        %v3779 = vsel %vm1483, %v3774, %v3778
        %v3780 = vshrl.u32 %v3635, 16
        %v3782 = vrot.slane %v3780, 4
        %v3783 = vor.u32 %v3782, %v3778
        %v3784 = vrot.slane %v3783, 4
        %v3786 = vshll.u32 %v3636, 16
        %v3788 = vrot.slane %v3786, 5
        %v3789 = vsel %vm1483, %v3784, %v3788
        %v3791 = vshrl.u32 %v3637, 16
        %v3793 = vrot.slane %v3791, 4
        %v3794 = vshll.u32 %v3637, 16
        %v3796 = vrot.slane %v3794, 5
        %v3797 = vor.u32 %v3793, %v3796
        %v3798 = vrot.slane %v3797, 4
        %v3800 = vshll.u32 %v3638, 16
        %v3802 = vrot.slane %v3800, 5
        %v3803 = vsel %vm1483, %v3798, %v3802
        %v3804 = vshrl.u32 %v3638, 16
        %v3806 = vrot.slane %v3804, 4
        %v3807 = vor.u32 %v3806, %v3802
        %v3808 = vrot.slane %v3807, 4
        %v3810 = vshll.u32 %v3639, 16
        %v3812 = vrot.slane %v3810, 5
        %v3813 = vsel %vm1483, %v3808, %v3812
        %v3815 = vshrl.u32 %v3640, 16
        %v3817 = vrot.slane %v3815, 4
        %v3818 = vshll.u32 %v3640, 16
        %v3820 = vrot.slane %v3818, 5
        %v3821 = vor.u32 %v3817, %v3820
        %v3822 = vrot.slane %v3821, 4
        %v3824 = vshll.u32 %v3641, 16
        %v3826 = vrot.slane %v3824, 5
        %v3827 = vsel %vm1483, %v3822, %v3826
        %v3828 = vshrl.u32 %v3641, 16
        %v3830 = vrot.slane %v3828, 4
        %v3831 = vor.u32 %v3830, %v3826
        %v3832 = vrot.slane %v3831, 4
        %v3834 = vshll.u32 %v3642, 16
        %v3836 = vrot.slane %v3834, 5
        %v3837 = vsel %vm1483, %v3832, %v3836
        %v3839 = vshrl.u32 %v3643, 16
        %v3841 = vrot.slane %v3839, 4
        %v3842 = vshll.u32 %v3643, 16
        %v3844 = vrot.slane %v3842, 5
        %v3845 = vor.u32 %v3841, %v3844
        %v3846 = vrot.slane %v3845, 4
        %v3848 = vshll.u32 %v3644, 16
        %v3850 = vrot.slane %v3848, 5
        %v3851 = vsel %vm1483, %v3846, %v3850
        %v3852 = vshrl.u32 %v3644, 16
        %v3854 = vrot.slane %v3852, 4
        %v3855 = vor.u32 %v3854, %v3850
        %v3856 = vrot.slane %v3855, 4
        %v3858 = vshll.u32 %v3645, 16
        %v3860 = vrot.slane %v3858, 5
        %v3861 = vsel %vm1483, %v3856, %v3860
        %v3863 = vshrl.u32 %v3646, 16
        %v3865 = vrot.slane %v3863, 4
        %v3866 = vshll.u32 %v3646, 16
        %v3868 = vrot.slane %v3866, 5
        %v3869 = vor.u32 %v3865, %v3868
        %v3870 = vrot.slane %v3869, 4
        %v3872 = vshll.u32 %v3647, 16
        %v3874 = vrot.slane %v3872, 5
        %v3875 = vsel %vm1483, %v3870, %v3874
        %v3876 = vshrl.u32 %v3647, 16
        %v3878 = vrot.slane %v3876, 4
        %v3879 = vor.u32 %v3878, %v3874
        %v3880 = vrot.slane %v3879, 4
        %v3882 = vshll.u32 %v3648, 16
        %v3884 = vrot.slane %v3882, 5
        %v3885 = vsel %vm1483, %v3880, %v3884
        %v3887 = vshrl.u32 %v3649, 16
        %v3889 = vrot.slane %v3887, 4
        %v3890 = vshll.u32 %v3649, 16
        %v3892 = vrot.slane %v3890, 5
        %v3893 = vor.u32 %v3889, %v3892
        %v3894 = vrot.slane %v3893, 4
        %v3896 = vshll.u32 %v3650, 16
        %v3898 = vrot.slane %v3896, 5
        %v3899 = vsel %vm1483, %v3894, %v3898
        %v3900 = vshrl.u32 %v3650, 16
        %v3902 = vrot.slane %v3900, 4
        %v3903 = vor.u32 %v3902, %v3898
        %v3904 = vrot.slane %v3903, 4
        %v3906 = vshll.u32 %v3651, 16
        %v3908 = vrot.slane %v3906, 5
        %v3909 = vsel %vm1483, %v3904, %v3908
        %v3911 = vshrl.u32 %v3652, 16
        %v3913 = vrot.slane %v3911, 4
        %v3914 = vshll.u32 %v3652, 16
        %v3916 = vrot.slane %v3914, 5
        %v3917 = vor.u32 %v3913, %v3916
        %v3918 = vrot.slane %v3917, 4
        %v3920 = vshll.u32 %v3653, 16
        %v3922 = vrot.slane %v3920, 5
        %v3923 = vsel %vm1483, %v3918, %v3922
        %v3924 = vshrl.u32 %v3653, 16
        %v3926 = vrot.slane %v3924, 4
        %v3927 = vor.u32 %v3926, %v3922
        %v3928 = vrot.slane %v3927, 4
        %v3930 = vshll.u32 %v3654, 16
        %v3932 = vrot.slane %v3930, 5
        %v3933 = vsel %vm1483, %v3928, %v3932
        %v3935 = vshrl.u32 %v3655, 16
        %v3937 = vrot.slane %v3935, 4
        %v3938 = vshll.u32 %v3655, 16
        %v3940 = vrot.slane %v3938, 5
        %v3941 = vor.u32 %v3937, %v3940
        %v3942 = vrot.slane %v3941, 4
        %v3944 = vshll.u32 %v3656, 16
        %v3946 = vrot.slane %v3944, 5
        %v3947 = vsel %vm1483, %v3942, %v3946
        %v3948 = vshrl.u32 %v3656, 16
        %v3950 = vrot.slane %v3948, 4
        %v3951 = vor.u32 %v3950, %v3946
        %v3952 = vrot.slane %v3951, 4
        %v3954 = vshll.u32 %v3657, 16
        %v3956 = vrot.slane %v3954, 5
        %v3957 = vsel %vm1483, %v3952, %v3956
        %v3959 = vshrl.u32 %v3658, 16
        %v3961 = vrot.slane %v3959, 4
        %v3962 = vshll.u32 %v3658, 16
        %v3964 = vrot.slane %v3962, 5
        %v3965 = vor.u32 %v3961, %v3964
        %v3966 = vrot.slane %v3965, 4
        %v3968 = vshll.u32 %v3659, 16
        %v3970 = vrot.slane %v3968, 5
        %v3971 = vsel %vm1483, %v3966, %v3970
        %v3972 = vshrl.u32 %v3659, 16
        %v3974 = vrot.slane %v3972, 4
        %v3975 = vor.u32 %v3974, %v3970
        %v3976 = vrot.slane %v3975, 4
        %v3978 = vshll.u32 %v3660, 16
        %v3980 = vrot.slane %v3978, 5
        %v3981 = vsel %vm1483, %v3976, %v3980
        %v3983 = vshrl.u32 %v3661, 16
        %v3985 = vrot.slane %v3983, 4
        %v3986 = vshll.u32 %v3661, 16
        %v3988 = vrot.slane %v3986, 5
        %v3989 = vor.u32 %v3985, %v3988
        %v3990 = vrot.slane %v3989, 4
        %v3992 = vshll.u32 %v3662, 16
        %v3994 = vrot.slane %v3992, 5
        %v3995 = vsel %vm1483, %v3990, %v3994
        %v3996 = vshrl.u32 %v3662, 16
        %v3998 = vrot.slane %v3996, 4
        %v3999 = vor.u32 %v3998, %v3994
        %v4000 = vrot.slane %v3999, 4
        %v4002 = vshll.u32 %v3663, 16
        %v4004 = vrot.slane %v4002, 5
        %v4005 = vsel %vm1483, %v4000, %v4004
        %v4007 = vshrl.u32 %v3664, 16
        %v4009 = vrot.slane %v4007, 4
        %v4010 = vshll.u32 %v3664, 16
        %v4012 = vrot.slane %v4010, 5
        %v4013 = vor.u32 %v4009, %v4012
        %v4014 = vrot.slane %v4013, 4
        %v4016 = vshll.u32 %v3665, 16
        %v4018 = vrot.slane %v4016, 5
        %v4019 = vsel %vm1483, %v4014, %v4018
        %v4020 = vshrl.u32 %v3665, 16
        %v4022 = vrot.slane %v4020, 4
        %v4023 = vor.u32 %v4022, %v4018
        %v4024 = vrot.slane %v4023, 4
        %v4026 = vshll.u32 %v3666, 16
        %v4028 = vrot.slane %v4026, 5
        %v4029 = vsel %vm1483, %v4024, %v4028
        %v4031 = vshrl.u32 %v3667, 16
        %v4033 = vrot.slane %v4031, 4
        %v4034 = vshll.u32 %v3667, 16
        %v4036 = vrot.slane %v4034, 5
        %v4037 = vor.u32 %v4033, %v4036
        %v4038 = vrot.slane %v4037, 4
        %v4040 = vshll.u32 %v3668, 16
        %v4042 = vrot.slane %v4040, 5
        %v4043 = vsel %vm1483, %v4038, %v4042
        %v4044 = vshrl.u32 %v3668, 16
        %v4046 = vrot.slane %v4044, 4
        %v4047 = vor.u32 %v4046, %v4042
        %v4048 = vrot.slane %v4047, 4
        %v4050 = vshll.u32 %v3669, 16
        %v4052 = vrot.slane %v4050, 5
        %v4053 = vsel %vm1483, %v4048, %v4052
        %4054 = vrot.lane.b32.xlu0 %v3683, 56
        %v4055 = vpop.permute.xlu0 %4054
        %4056 = vrot.lane.b32.xlu0 %v3693, 56
        %v4057 = vpop.permute.xlu0 %4056
        %4058 = vrot.lane.b32.xlu0 %v3707, 56
        %v4059 = vpop.permute.xlu0 %4058
        %4060 = vrot.lane.b32.xlu0 %v3717, 56
        %v4061 = vpop.permute.xlu0 %4060
        %4062 = vrot.lane.b32.xlu0 %v3731, 56
        %v4063 = vpop.permute.xlu0 %4062
        %4064 = vrot.lane.b32.xlu0 %v3741, 56
        %v4065 = vpop.permute.xlu0 %4064
        %4066 = vrot.lane.b32.xlu0 %v3755, 56
        %v4067 = vpop.permute.xlu0 %4066
        %4068 = vrot.lane.b32.xlu0 %v3765, 56
        %v4069 = vpop.permute.xlu0 %4068
        %4070 = vrot.lane.b32.xlu0 %v3779, 56
        %v4071 = vpop.permute.xlu0 %4070
        %4072 = vrot.lane.b32.xlu0 %v3789, 56
        %v4073 = vpop.permute.xlu0 %4072
        %4074 = vrot.lane.b32.xlu0 %v3803, 56
        %v4075 = vpop.permute.xlu0 %4074
        %4076 = vrot.lane.b32.xlu0 %v3813, 56
        %v4077 = vpop.permute.xlu0 %4076
        %4078 = vrot.lane.b32.xlu0 %v3827, 56
        %v4079 = vpop.permute.xlu0 %4078
        %4080 = vrot.lane.b32.xlu0 %v3837, 56
        %v4081 = vpop.permute.xlu0 %4080
        %4082 = vrot.lane.b32.xlu0 %v3851, 56
        %v4083 = vpop.permute.xlu0 %4082
        %4084 = vrot.lane.b32.xlu0 %v3861, 56
        %v4085 = vpop.permute.xlu0 %4084
        %4086 = vrot.lane.b32.xlu0 %v3875, 56
        %v4087 = vpop.permute.xlu0 %4086
        %4088 = vrot.lane.b32.xlu0 %v3885, 56
        %v4089 = vpop.permute.xlu0 %4088
        %4090 = vrot.lane.b32.xlu0 %v3899, 56
        %v4091 = vpop.permute.xlu0 %4090
        %4092 = vrot.lane.b32.xlu0 %v3909, 56
        %v4093 = vpop.permute.xlu0 %4092
        %4094 = vrot.lane.b32.xlu0 %v3923, 56
        %v4095 = vpop.permute.xlu0 %4094
        %4096 = vrot.lane.b32.xlu0 %v3933, 56
        %v4097 = vpop.permute.xlu0 %4096
        %4098 = vrot.lane.b32.xlu0 %v3947, 56
        %v4099 = vpop.permute.xlu0 %4098
        %4100 = vrot.lane.b32.xlu0 %v3957, 56
        %v4101 = vpop.permute.xlu0 %4100
        %4102 = vrot.lane.b32.xlu0 %v3971, 56
        %v4103 = vpop.permute.xlu0 %4102
        %4104 = vrot.lane.b32.xlu0 %v3981, 56
        %v4105 = vpop.permute.xlu0 %4104
        %4106 = vrot.lane.b32.xlu0 %v3995, 56
        %v4107 = vpop.permute.xlu0 %4106
        %4108 = vrot.lane.b32.xlu0 %v4005, 56
        %v4109 = vpop.permute.xlu0 %4108
        %4110 = vrot.lane.b32.xlu0 %v4019, 56
        %v4111 = vpop.permute.xlu0 %4110
        %4112 = vrot.lane.b32.xlu0 %v4029, 56
        %v4113 = vpop.permute.xlu0 %4112
        %4114 = vrot.lane.b32.xlu0 %v4043, 56
        %v4115 = vpop.permute.xlu0 %4114
        %4116 = vrot.lane.b32.xlu0 %v4053, 56
        %v4117 = vpop.permute.xlu0 %4116
        %vm4150 = vcmask 519616
        %4151 = vst.msk [vmem:[#allocation4] sm:$0xf] %vm4150, %v4055
        %4152 = vst.msk [vmem:[#allocation4 + $0x4] sm:$0xf] %vm4150, %v4057
        %4153 = vst.msk [vmem:[#allocation4 + $0x8] sm:$0xf] %vm4150, %v4059
        %4154 = vst.msk [vmem:[#allocation4 + $0xc] sm:$0xf] %vm4150, %v4061
        %4155 = vst.msk [vmem:[#allocation4 + $0x10] sm:$0xf] %vm4150, %v4063
        %4156 = vst.msk [vmem:[#allocation4 + $0x14] sm:$0xf] %vm4150, %v4065
        %4157 = vst.msk [vmem:[#allocation4 + $0x18] sm:$0xf] %vm4150, %v4067
        %4158 = vst.msk [vmem:[#allocation4 + $0x1c] sm:$0xf] %vm4150, %v4069
        %4159 = vst.msk [vmem:[#allocation4 + $0x20] sm:$0xf] %vm4150, %v4071
        %4160 = vst.msk [vmem:[#allocation4 + $0x24] sm:$0xf] %vm4150, %v4073
        %4161 = vst.msk [vmem:[#allocation4 + $0x28] sm:$0xf] %vm4150, %v4075
        %4162 = vst.msk [vmem:[#allocation4 + $0x2c] sm:$0xf] %vm4150, %v4077
        %4163 = vst.msk [vmem:[#allocation4 + $0x30] sm:$0xf] %vm4150, %v4079
        %4164 = vst.msk [vmem:[#allocation4 + $0x34] sm:$0xf] %vm4150, %v4081
        %4165 = vst.msk [vmem:[#allocation4 + $0x38] sm:$0xf] %vm4150, %v4083
        %4166 = vst.msk [vmem:[#allocation4 + $0x3c] sm:$0xf] %vm4150, %v4085
        %4167 = vst.msk [vmem:[#allocation4 + $0x40] sm:$0xf] %vm4150, %v4087
        %4168 = vst.msk [vmem:[#allocation4 + $0x44] sm:$0xf] %vm4150, %v4089
        %4169 = vst.msk [vmem:[#allocation4 + $0x48] sm:$0xf] %vm4150, %v4091
        %4170 = vst.msk [vmem:[#allocation4 + $0x4c] sm:$0xf] %vm4150, %v4093
        %4171 = vst.msk [vmem:[#allocation4 + $0x50] sm:$0xf] %vm4150, %v4095
        %4172 = vst.msk [vmem:[#allocation4 + $0x54] sm:$0xf] %vm4150, %v4097
        %4173 = vst.msk [vmem:[#allocation4 + $0x58] sm:$0xf] %vm4150, %v4099
        %4174 = vst.msk [vmem:[#allocation4 + $0x5c] sm:$0xf] %vm4150, %v4101
        %4175 = vst.msk [vmem:[#allocation4 + $0x60] sm:$0xf] %vm4150, %v4103
        %4176 = vst.msk [vmem:[#allocation4 + $0x64] sm:$0xf] %vm4150, %v4105
        %4177 = vst.msk [vmem:[#allocation4 + $0x68] sm:$0xf] %vm4150, %v4107
        %4178 = vst.msk [vmem:[#allocation4 + $0x6c] sm:$0xf] %vm4150, %v4109
        %4179 = vst.msk [vmem:[#allocation4 + $0x70] sm:$0xf] %vm4150, %v4111
        %4180 = vst.msk [vmem:[#allocation4 + $0x74] sm:$0xf] %vm4150, %v4113
        %4181 = vst.msk [vmem:[#allocation4 + $0x78] sm:$0xf] %vm4150, %v4115
        %4182 = vst.msk [vmem:[#allocation4 + $0x7c] sm:$0xf] %vm4150, %v4117
        %v4183 = vld [vmem:[%s3428] sm:$0xe]
        %v4184 = vld [vmem:[%s3428 + $0x4] sm:$0xf]
        %v4185 = vld [vmem:[%s3428 + $0x8] sm:$0x1]
        %v4186 = vld [vmem:[%s3428 + $0xc] sm:$0xe]
        %v4187 = vld [vmem:[%s3428 + $0x10] sm:$0xf]
        %v4188 = vld [vmem:[%s3428 + $0x14] sm:$0x1]
        %v4189 = vld [vmem:[%s3428 + $0x18] sm:$0xe]
        %v4190 = vld [vmem:[%s3428 + $0x1c] sm:$0xf]
        %v4191 = vld [vmem:[%s3428 + $0x20] sm:$0x1]
        %v4192 = vld [vmem:[%s3428 + $0x24] sm:$0xe]
        %v4193 = vld [vmem:[%s3428 + $0x28] sm:$0xf]
        %v4194 = vld [vmem:[%s3428 + $0x2c] sm:$0x1]
        %v4195 = vld [vmem:[%s3428 + $0x30] sm:$0xe]
        %v4196 = vld [vmem:[%s3428 + $0x34] sm:$0xf]
        %v4197 = vld [vmem:[%s3428 + $0x38] sm:$0x1]
        %v4198 = vld [vmem:[%s3428 + $0x3c] sm:$0xe]
        %v4199 = vld [vmem:[%s3428 + $0x40] sm:$0xf]
        %v4200 = vld [vmem:[%s3428 + $0x44] sm:$0x1]
        %v4201 = vld [vmem:[%s3428 + $0x48] sm:$0xe]
        %v4202 = vld [vmem:[%s3428 + $0x4c] sm:$0xf]
        %v4203 = vld [vmem:[%s3428 + $0x50] sm:$0x1]
        %v4204 = vld [vmem:[%s3428 + $0x54] sm:$0xe]
        %v4205 = vld [vmem:[%s3428 + $0x58] sm:$0xf]
        %v4206 = vld [vmem:[%s3428 + $0x5c] sm:$0x1]
        %v4207 = vld [vmem:[%s3428 + $0x60] sm:$0xe]
        %v4208 = vld [vmem:[%s3428 + $0x64] sm:$0xf]
        %v4209 = vld [vmem:[%s3428 + $0x68] sm:$0x1]
        %v4210 = vld [vmem:[%s3428 + $0x6c] sm:$0xe]
        %v4211 = vld [vmem:[%s3428 + $0x70] sm:$0xf]
        %v4212 = vld [vmem:[%s3428 + $0x74] sm:$0x1]
        %v4213 = vld [vmem:[%s3428 + $0x78] sm:$0xe]
        %v4214 = vld [vmem:[%s3428 + $0x7c] sm:$0xf]
        %v4215 = vld [vmem:[%s3428 + $0x80] sm:$0x1]
        %v4216 = vld [vmem:[%s3428 + $0x84] sm:$0xe]
        %v4217 = vld [vmem:[%s3428 + $0x88] sm:$0xf]
        %v4218 = vld [vmem:[%s3428 + $0x8c] sm:$0x1]
        %v4219 = vld [vmem:[%s3428 + $0x90] sm:$0xe]
        %v4220 = vld [vmem:[%s3428 + $0x94] sm:$0xf]
        %v4221 = vld [vmem:[%s3428 + $0x98] sm:$0x1]
        %v4222 = vld [vmem:[%s3428 + $0x9c] sm:$0xe]
        %v4223 = vld [vmem:[%s3428 + $0xa0] sm:$0xf]
        %v4224 = vld [vmem:[%s3428 + $0xa4] sm:$0x1]
        %v4225 = vld [vmem:[%s3428 + $0xa8] sm:$0xe]
        %v4226 = vld [vmem:[%s3428 + $0xac] sm:$0xf]
        %v4227 = vld [vmem:[%s3428 + $0xb0] sm:$0x1]
        %v4228 = vld [vmem:[%s3428 + $0xb4] sm:$0xe]
        %v4229 = vld [vmem:[%s3428 + $0xb8] sm:$0xf]
        %v4230 = vld [vmem:[%s3428 + $0xbc] sm:$0x1]
        %v4279 = vrot.slane %v4183, 5
        %v4280 = vrot.slane %v4279, 4
        %v4281 = vrot.slane %v4184, 5
        %v4282 = vsel %vm2095, %v4280, %v4281
        %v4283 = vrot.slane %v4281, 4
        %v4284 = vrot.slane %v4185, 5
        %v4285 = vsel %vm2095, %v4283, %v4284
        %v4286 = vrot.slane %v4186, 5
        %v4287 = vrot.slane %v4286, 4
        %v4288 = vrot.slane %v4187, 5
        %v4289 = vsel %vm2095, %v4287, %v4288
        %v4290 = vrot.slane %v4288, 4
        %v4291 = vrot.slane %v4188, 5
        %v4292 = vsel %vm2095, %v4290, %v4291
        %v4293 = vrot.slane %v4189, 5
        %v4294 = vrot.slane %v4293, 4
        %v4295 = vrot.slane %v4190, 5
        %v4296 = vsel %vm2095, %v4294, %v4295
        %v4297 = vrot.slane %v4295, 4
        %v4298 = vrot.slane %v4191, 5
        %v4299 = vsel %vm2095, %v4297, %v4298
        %v4300 = vrot.slane %v4192, 5
        %v4301 = vrot.slane %v4300, 4
        %v4302 = vrot.slane %v4193, 5
        %v4303 = vsel %vm2095, %v4301, %v4302
        %v4304 = vrot.slane %v4302, 4
        %v4305 = vrot.slane %v4194, 5
        %v4306 = vsel %vm2095, %v4304, %v4305
        %v4307 = vrot.slane %v4195, 5
        %v4308 = vrot.slane %v4307, 4
        %v4309 = vrot.slane %v4196, 5
        %v4310 = vsel %vm2095, %v4308, %v4309
        %v4311 = vrot.slane %v4309, 4
        %v4312 = vrot.slane %v4197, 5
        %v4313 = vsel %vm2095, %v4311, %v4312
        %v4314 = vrot.slane %v4198, 5
        %v4315 = vrot.slane %v4314, 4
        %v4316 = vrot.slane %v4199, 5
        %v4317 = vsel %vm2095, %v4315, %v4316
        %v4318 = vrot.slane %v4316, 4
        %v4319 = vrot.slane %v4200, 5
        %v4320 = vsel %vm2095, %v4318, %v4319
        %v4321 = vrot.slane %v4201, 5
        %v4322 = vrot.slane %v4321, 4
        %v4323 = vrot.slane %v4202, 5
        %v4324 = vsel %vm2095, %v4322, %v4323
        %v4325 = vrot.slane %v4323, 4
        %v4326 = vrot.slane %v4203, 5
        %v4327 = vsel %vm2095, %v4325, %v4326
        %v4328 = vrot.slane %v4204, 5
        %v4329 = vrot.slane %v4328, 4
        %v4330 = vrot.slane %v4205, 5
        %v4331 = vsel %vm2095, %v4329, %v4330
        %v4332 = vrot.slane %v4330, 4
        %v4333 = vrot.slane %v4206, 5
        %v4334 = vsel %vm2095, %v4332, %v4333
        %v4335 = vrot.slane %v4207, 5
        %v4336 = vrot.slane %v4335, 4
        %v4337 = vrot.slane %v4208, 5
        %v4338 = vsel %vm2095, %v4336, %v4337
        %v4339 = vrot.slane %v4337, 4
        %v4340 = vrot.slane %v4209, 5
        %v4341 = vsel %vm2095, %v4339, %v4340
        %v4342 = vrot.slane %v4210, 5
        %v4343 = vrot.slane %v4342, 4
        %v4344 = vrot.slane %v4211, 5
        %v4345 = vsel %vm2095, %v4343, %v4344
        %v4346 = vrot.slane %v4344, 4
        %v4347 = vrot.slane %v4212, 5
        %v4348 = vsel %vm2095, %v4346, %v4347
        %v4349 = vrot.slane %v4213, 5
        %v4350 = vrot.slane %v4349, 4
        %v4351 = vrot.slane %v4214, 5
        %v4352 = vsel %vm2095, %v4350, %v4351
        %v4353 = vrot.slane %v4351, 4
        %v4354 = vrot.slane %v4215, 5
        %v4355 = vsel %vm2095, %v4353, %v4354
        %v4356 = vrot.slane %v4216, 5
        %v4357 = vrot.slane %v4356, 4
        %v4358 = vrot.slane %v4217, 5
        %v4359 = vsel %vm2095, %v4357, %v4358
        %v4360 = vrot.slane %v4358, 4
        %v4361 = vrot.slane %v4218, 5
        %v4362 = vsel %vm2095, %v4360, %v4361
        %v4363 = vrot.slane %v4219, 5
        %v4364 = vrot.slane %v4363, 4
        %v4365 = vrot.slane %v4220, 5
        %v4366 = vsel %vm2095, %v4364, %v4365
        %v4367 = vrot.slane %v4365, 4
        %v4368 = vrot.slane %v4221, 5
        %v4369 = vsel %vm2095, %v4367, %v4368
        %v4370 = vrot.slane %v4222, 5
        %v4371 = vrot.slane %v4370, 4
        %v4372 = vrot.slane %v4223, 5
        %v4373 = vsel %vm2095, %v4371, %v4372
        %v4374 = vrot.slane %v4372, 4
        %v4375 = vrot.slane %v4224, 5
        %v4376 = vsel %vm2095, %v4374, %v4375
        %v4377 = vrot.slane %v4225, 5
        %v4378 = vrot.slane %v4377, 4
        %v4379 = vrot.slane %v4226, 5
        %v4380 = vsel %vm2095, %v4378, %v4379
        %v4381 = vrot.slane %v4379, 4
        %v4382 = vrot.slane %v4227, 5
        %v4383 = vsel %vm2095, %v4381, %v4382
        %v4384 = vrot.slane %v4228, 5
        %v4385 = vrot.slane %v4384, 4
        %v4386 = vrot.slane %v4229, 5
        %v4387 = vsel %vm2095, %v4385, %v4386
        %v4388 = vrot.slane %v4386, 4
        %v4389 = vrot.slane %v4230, 5
        %v4390 = vsel %vm2095, %v4388, %v4389
        %4391 = vrot.lane.b32.xlu0 %v4282, 64
        %v4392 = vpop.permute.xlu0 %4391
        %4393 = vrot.lane.b32.xlu0 %v4285, 64
        %v4394 = vpop.permute.xlu0 %4393
        %4395 = vrot.lane.b32.xlu0 %v4289, 64
        %v4396 = vpop.permute.xlu0 %4395
        %4397 = vrot.lane.b32.xlu0 %v4292, 64
        %v4398 = vpop.permute.xlu0 %4397
        %4399 = vrot.lane.b32.xlu0 %v4296, 64
        %v4400 = vpop.permute.xlu0 %4399
        %4401 = vrot.lane.b32.xlu0 %v4299, 64
        %v4402 = vpop.permute.xlu0 %4401
        %4403 = vrot.lane.b32.xlu0 %v4303, 64
        %v4404 = vpop.permute.xlu0 %4403
        %4405 = vrot.lane.b32.xlu0 %v4306, 64
        %v4406 = vpop.permute.xlu0 %4405
        %4407 = vrot.lane.b32.xlu0 %v4310, 64
        %v4408 = vpop.permute.xlu0 %4407
        %4409 = vrot.lane.b32.xlu0 %v4313, 64
        %v4410 = vpop.permute.xlu0 %4409
        %4411 = vrot.lane.b32.xlu0 %v4317, 64
        %v4412 = vpop.permute.xlu0 %4411
        %4413 = vrot.lane.b32.xlu0 %v4320, 64
        %v4414 = vpop.permute.xlu0 %4413
        %4415 = vrot.lane.b32.xlu0 %v4324, 64
        %v4416 = vpop.permute.xlu0 %4415
        %4417 = vrot.lane.b32.xlu0 %v4327, 64
        %v4418 = vpop.permute.xlu0 %4417
        %4419 = vrot.lane.b32.xlu0 %v4331, 64
        %v4420 = vpop.permute.xlu0 %4419
        %4421 = vrot.lane.b32.xlu0 %v4334, 64
        %v4422 = vpop.permute.xlu0 %4421
        %4423 = vrot.lane.b32.xlu0 %v4338, 64
        %v4424 = vpop.permute.xlu0 %4423
        %4425 = vrot.lane.b32.xlu0 %v4341, 64
        %v4426 = vpop.permute.xlu0 %4425
        %4427 = vrot.lane.b32.xlu0 %v4345, 64
        %v4428 = vpop.permute.xlu0 %4427
        %4429 = vrot.lane.b32.xlu0 %v4348, 64
        %v4430 = vpop.permute.xlu0 %4429
        %4431 = vrot.lane.b32.xlu0 %v4352, 64
        %v4432 = vpop.permute.xlu0 %4431
        %4433 = vrot.lane.b32.xlu0 %v4355, 64
        %v4434 = vpop.permute.xlu0 %4433
        %4435 = vrot.lane.b32.xlu0 %v4359, 64
        %v4436 = vpop.permute.xlu0 %4435
        %4437 = vrot.lane.b32.xlu0 %v4362, 64
        %v4438 = vpop.permute.xlu0 %4437
        %4439 = vrot.lane.b32.xlu0 %v4366, 64
        %v4440 = vpop.permute.xlu0 %4439
        %4441 = vrot.lane.b32.xlu0 %v4369, 64
        %v4442 = vpop.permute.xlu0 %4441
        %4443 = vrot.lane.b32.xlu0 %v4373, 64
        %v4444 = vpop.permute.xlu0 %4443
        %4445 = vrot.lane.b32.xlu0 %v4376, 64
        %v4446 = vpop.permute.xlu0 %4445
        %4447 = vrot.lane.b32.xlu0 %v4380, 64
        %v4448 = vpop.permute.xlu0 %4447
        %4449 = vrot.lane.b32.xlu0 %v4383, 64
        %v4450 = vpop.permute.xlu0 %4449
        %4451 = vrot.lane.b32.xlu0 %v4387, 64
        %v4452 = vpop.permute.xlu0 %4451
        %4453 = vrot.lane.b32.xlu0 %v4390, 64
        %v4454 = vpop.permute.xlu0 %4453
        %vm4487 = vcmask 585216
        %4488 = vst.msk [vmem:[#allocation4] sm:$0xf] %vm4487, %v4392
        %4489 = vst.msk [vmem:[#allocation4 + $0x4] sm:$0xf] %vm4487, %v4394
        %4490 = vst.msk [vmem:[#allocation4 + $0x8] sm:$0xf] %vm4487, %v4396
        %4491 = vst.msk [vmem:[#allocation4 + $0xc] sm:$0xf] %vm4487, %v4398
        %4492 = vst.msk [vmem:[#allocation4 + $0x10] sm:$0xf] %vm4487, %v4400
        %4493 = vst.msk [vmem:[#allocation4 + $0x14] sm:$0xf] %vm4487, %v4402
        %4494 = vst.msk [vmem:[#allocation4 + $0x18] sm:$0xf] %vm4487, %v4404
        %4495 = vst.msk [vmem:[#allocation4 + $0x1c] sm:$0xf] %vm4487, %v4406
        %4496 = vst.msk [vmem:[#allocation4 + $0x20] sm:$0xf] %vm4487, %v4408
        %4497 = vst.msk [vmem:[#allocation4 + $0x24] sm:$0xf] %vm4487, %v4410
        %4498 = vst.msk [vmem:[#allocation4 + $0x28] sm:$0xf] %vm4487, %v4412
        %4499 = vst.msk [vmem:[#allocation4 + $0x2c] sm:$0xf] %vm4487, %v4414
        %4500 = vst.msk [vmem:[#allocation4 + $0x30] sm:$0xf] %vm4487, %v4416
        %4501 = vst.msk [vmem:[#allocation4 + $0x34] sm:$0xf] %vm4487, %v4418
        %4502 = vst.msk [vmem:[#allocation4 + $0x38] sm:$0xf] %vm4487, %v4420
        %4503 = vst.msk [vmem:[#allocation4 + $0x3c] sm:$0xf] %vm4487, %v4422
        %4504 = vst.msk [vmem:[#allocation4 + $0x40] sm:$0xf] %vm4487, %v4424
        %4505 = vst.msk [vmem:[#allocation4 + $0x44] sm:$0xf] %vm4487, %v4426
        %4506 = vst.msk [vmem:[#allocation4 + $0x48] sm:$0xf] %vm4487, %v4428
        %4507 = vst.msk [vmem:[#allocation4 + $0x4c] sm:$0xf] %vm4487, %v4430
        %4508 = vst.msk [vmem:[#allocation4 + $0x50] sm:$0xf] %vm4487, %v4432
        %4509 = vst.msk [vmem:[#allocation4 + $0x54] sm:$0xf] %vm4487, %v4434
        %4510 = vst.msk [vmem:[#allocation4 + $0x58] sm:$0xf] %vm4487, %v4436
        %4511 = vst.msk [vmem:[#allocation4 + $0x5c] sm:$0xf] %vm4487, %v4438
        %4512 = vst.msk [vmem:[#allocation4 + $0x60] sm:$0xf] %vm4487, %v4440
        %4513 = vst.msk [vmem:[#allocation4 + $0x64] sm:$0xf] %vm4487, %v4442
        %4514 = vst.msk [vmem:[#allocation4 + $0x68] sm:$0xf] %vm4487, %v4444
        %4515 = vst.msk [vmem:[#allocation4 + $0x6c] sm:$0xf] %vm4487, %v4446
        %4516 = vst.msk [vmem:[#allocation4 + $0x70] sm:$0xf] %vm4487, %v4448
        %4517 = vst.msk [vmem:[#allocation4 + $0x74] sm:$0xf] %vm4487, %v4450
        %4518 = vst.msk [vmem:[#allocation4 + $0x78] sm:$0xf] %vm4487, %v4452
        %4519 = vst.msk [vmem:[#allocation4 + $0x7c] sm:$0xf] %vm4487, %v4454
        %v4520 = vld [vmem:[#allocation4] sm:$0xf]
        %v4521 = vld [vmem:[#allocation4 + $0x4] sm:$0xf]
        %v4522 = vld [vmem:[#allocation4 + $0x8] sm:$0xf]
        %v4523 = vld [vmem:[#allocation4 + $0xc] sm:$0xf]
        %v4524 = vld [vmem:[#allocation4 + $0x10] sm:$0xf]
        %v4525 = vld [vmem:[#allocation4 + $0x14] sm:$0xf]
        %v4526 = vld [vmem:[#allocation4 + $0x18] sm:$0xf]
        %v4527 = vld [vmem:[#allocation4 + $0x1c] sm:$0xf]
        %v4528 = vld [vmem:[#allocation4 + $0x20] sm:$0xf]
        %v4529 = vld [vmem:[#allocation4 + $0x24] sm:$0xf]
        %v4530 = vld [vmem:[#allocation4 + $0x28] sm:$0xf]
        %v4531 = vld [vmem:[#allocation4 + $0x2c] sm:$0xf]
        %v4532 = vld [vmem:[#allocation4 + $0x30] sm:$0xf]
        %v4533 = vld [vmem:[#allocation4 + $0x34] sm:$0xf]
        %v4534 = vld [vmem:[#allocation4 + $0x38] sm:$0xf]
        %v4535 = vld [vmem:[#allocation4 + $0x3c] sm:$0xf]
        %v4536 = vld [vmem:[#allocation4 + $0x40] sm:$0xf]
        %v4537 = vld [vmem:[#allocation4 + $0x44] sm:$0xf]
        %v4538 = vld [vmem:[#allocation4 + $0x48] sm:$0xf]
        %v4539 = vld [vmem:[#allocation4 + $0x4c] sm:$0xf]
        %v4540 = vld [vmem:[#allocation4 + $0x50] sm:$0xf]
        %v4541 = vld [vmem:[#allocation4 + $0x54] sm:$0xf]
        %v4542 = vld [vmem:[#allocation4 + $0x58] sm:$0xf]
        %v4543 = vld [vmem:[#allocation4 + $0x5c] sm:$0xf]
        %v4544 = vld [vmem:[#allocation4 + $0x60] sm:$0xf]
        %v4545 = vld [vmem:[#allocation4 + $0x64] sm:$0xf]
        %v4546 = vld [vmem:[#allocation4 + $0x68] sm:$0xf]
        %v4547 = vld [vmem:[#allocation4 + $0x6c] sm:$0xf]
        %v4548 = vld [vmem:[#allocation4 + $0x70] sm:$0xf]
        %v4549 = vld [vmem:[#allocation4 + $0x74] sm:$0xf]
        %v4550 = vld [vmem:[#allocation4 + $0x78] sm:$0xf]
        %v4551 = vld [vmem:[#allocation4 + $0x7c] sm:$0xf]
        %v4552 = vld [vmem:[%s2] sm:$0xf]
        %v4553 = vld [vmem:[%s2 + $0x4] sm:$0xf]
        %v4554 = vld [vmem:[%s2 + $0x8] sm:$0xf]
        %v4555 = vld [vmem:[%s2 + $0xc] sm:$0xf]
        %v4556 = vld [vmem:[%s2 + $0x10] sm:$0xf]
        %v4557 = vld [vmem:[%s2 + $0x14] sm:$0xf]
        %v4558 = vld [vmem:[%s2 + $0x18] sm:$0xf]
        %v4559 = vld [vmem:[%s2 + $0x1c] sm:$0xf]
        %v4560 = vld [vmem:[%s2 + $0x20] sm:$0xf]
        %v4561 = vld [vmem:[%s3] sm:$0x1]
        %v4563 = vlaneseq
        %v4564 = vshrl.u32 %v4563, 7
        %v4565 = vsub.s32 0, %v4564
        %v4566 = vrot.slane %v4561, %v4565
        %v4600 = vunpack.c.l.b16 %v4520
        %v4601 = vunpack.c.l.b16 %v4521
        %v4602 = vunpack.c.l.b16 %v4522
        %v4603 = vunpack.c.l.b16 %v4523
        %v4604 = vunpack.c.l.b16 %v4524
        %v4605 = vunpack.c.l.b16 %v4525
        %v4606 = vunpack.c.l.b16 %v4526
        %v4607 = vunpack.c.l.b16 %v4527
        %v4608 = vunpack.c.l.b16 %v4528
        %v4609 = vunpack.c.l.b16 %v4529
        %v4610 = vunpack.c.l.b16 %v4530
        %v4611 = vunpack.c.l.b16 %v4531
        %v4612 = vunpack.c.l.b16 %v4532
        %v4613 = vunpack.c.l.b16 %v4533
        %v4614 = vunpack.c.l.b16 %v4534
        %v4615 = vunpack.c.l.b16 %v4535
        %v4616 = vunpack.c.l.b16 %v4536
        %v4617 = vunpack.c.l.b16 %v4537
        %v4618 = vunpack.c.l.b16 %v4538
        %v4619 = vunpack.c.l.b16 %v4539
        %v4620 = vunpack.c.l.b16 %v4540
        %v4621 = vunpack.c.l.b16 %v4541
        %v4622 = vunpack.c.l.b16 %v4542
        %v4623 = vunpack.c.l.b16 %v4543
        %v4624 = vunpack.c.l.b16 %v4544
        %v4625 = vunpack.c.l.b16 %v4545
        %v4626 = vunpack.c.l.b16 %v4546
        %v4627 = vunpack.c.l.b16 %v4547
        %v4628 = vunpack.c.l.b16 %v4548
        %v4629 = vunpack.c.l.b16 %v4549
        %v4630 = vunpack.c.l.b16 %v4550
        %v4631 = vunpack.c.l.b16 %v4551
        %v4632 = vpack.c.b16 %v4601, %v4600
        %v4633 = vpack.c.b16 %v4603, %v4602
        %v4634 = vpack.c.b16 %v4605, %v4604
        %v4635 = vpack.c.b16 %v4607, %v4606
        %v4636 = vpack.c.b16 %v4609, %v4608
        %v4637 = vpack.c.b16 %v4611, %v4610
        %v4638 = vpack.c.b16 %v4613, %v4612
        %v4639 = vpack.c.b16 %v4615, %v4614
        %v4640 = vpack.c.b16 %v4617, %v4616
        %v4641 = vpack.c.b16 %v4619, %v4618
        %v4642 = vpack.c.b16 %v4621, %v4620
        %v4643 = vpack.c.b16 %v4623, %v4622
        %v4644 = vpack.c.b16 %v4625, %v4624
        %v4645 = vpack.c.b16 %v4627, %v4626
        %v4646 = vpack.c.b16 %v4629, %v4628
        %v4647 = vpack.c.b16 %v4631, %v4630
        %v4657 = vunpack.c.l.b16 %v4552
        %v4658 = vunpack.c.l.b16 %v4553
        %v4659 = vunpack.c.l.b16 %v4554
        %v4660 = vunpack.c.l.b16 %v4555
        %v4661 = vunpack.c.l.b16 %v4556
        %v4662 = vunpack.c.l.b16 %v4557
        %v4663 = vunpack.c.l.b16 %v4558
        %v4664 = vunpack.c.l.b16 %v4559
        %v4665 = vunpack.c.l.b16 %v4560
        %v4666 = vpack.c.b16 %v4658, %v4657
        %v4667 = vpack.c.b16 %v4660, %v4659
        %v4668 = vpack.c.b16 %v4662, %v4661
        %v4669 = vpack.c.b16 %v4664, %v4663
        %v4670 = vpack.c.b16 %v4665, %v4665
        %vm4675 = vcmask 588800
        %v4677 = vsel %vm4675, %v4632, 0
        %v4680 = vsel %vm4675, %v4633, 0
        %v4683 = vsel %vm4675, %v4634, 0
        %v4686 = vsel %vm4675, %v4635, 0
        %v4689 = vsel %vm4675, %v4636, 0
        %v4692 = vsel %vm4675, %v4637, 0
        %v4695 = vsel %vm4675, %v4638, 0
        %v4698 = vsel %vm4675, %v4639, 0
        %v4701 = vsel %vm4675, %v4640, 0
        %v4704 = vsel %vm4675, %v4641, 0
        %v4707 = vsel %vm4675, %v4642, 0
        %v4710 = vsel %vm4675, %v4643, 0
        %v4713 = vsel %vm4675, %v4644, 0
        %v4716 = vsel %vm4675, %v4645, 0
        %v4719 = vsel %vm4675, %v4646, 0
        %v4722 = vsel %vm4675, %v4647, 0
        %vm4724 = vcmask 1043456
        %v4726 = vsel %vm4724, %v4670, 0
        %4728 = vmatprep.subr.bf16.mxu0 0
        %4729 = vmatpush1.bf16.msra.mxu0 0
        %4730 = vmatprep.subr.bf16.mxu0 0
        %4731 = vmatpush1.bf16.msra.mxu0 0
        %4732 = vmatprep.subr.bf16.mxu0 0
        %4733 = vmatpush1.bf16.msra.mxu0 0
        %4734 = vmatprep.subr.bf16.mxu0 0
        %4735 = vmatpush1.bf16.msra.mxu0 %v4726
        %4736 = vmatprep.subr.bf16.mxu0 0
        %4737 = vmatpush1.bf16.msra.mxu0 %v4669
        %4738 = vmatprep.subr.bf16.mxu0 0
        %4739 = vmatpush1.bf16.msra.mxu0 %v4668
        %4740 = vmatprep.subr.bf16.mxu0 0
        %4741 = vmatpush1.bf16.msra.mxu0 %v4667
        %4742 = vmatprep.subr.bf16.mxu0 0
        %4743 = vmatpush1.bf16.msra.mxu0 %v4666
        %4744 = vmatprep.subr.bf16.mxu0 0
        %4745 = vmatpush2.bf16.msra.mxu0 0
        %4746 = vmatprep.subr.bf16.mxu0 0
        %4747 = vmatpush2.bf16.msra.mxu0 0
        %4748 = vmatprep.subr.bf16.mxu0 0
        %4749 = vmatpush2.bf16.msra.mxu0 0
        %4750 = vmatprep.subr.bf16.mxu0 0
        %4751 = vmatpush2.bf16.msra.mxu0 0
        %4752 = vmatprep.subr.bf16.mxu0 0
        %4753 = vmatpush2.bf16.msra.mxu0 0
        %4754 = vmatprep.subr.bf16.mxu0 0
        %4755 = vmatpush2.bf16.msra.mxu0 0
        %4756 = vmatprep.subr.bf16.mxu0 0
        %4757 = vmatpush2.bf16.msra.mxu0 0
        %4758 = vmatprep.subr.bf16.mxu0 0
        %4759 = vmatpush2.bf16.msra.mxu0 0
        %4760 = vmatprep.mubr.bf16.mxu0 0
        %4761 = vmatmul.mubr.bf16.gmra.mxu0 %v4677
        %v4762 = vpop.f32.mrf.mxu0
        %v4763 = vadd.f32 %v4566, %v4762
        %v4764 = vpop.f32.mrf.mxu0
        %v4765 = vpop.f32.mrf.mxu0
        %v4766 = vadd.f32 %v4566, %v4765
        %v4767 = vpop.f32.mrf.mxu0
        %4768 = vmatprep.mubr.bf16.mxu0 0
        %4769 = vmatmul.mubr.bf16.gmra.mxu0 %v4680
        %v4770 = vpop.f32.mrf.mxu0
        %v4771 = vadd.f32 %v4566, %v4770
        %v4772 = vpop.f32.mrf.mxu0
        %v4773 = vpop.f32.mrf.mxu0
        %v4774 = vadd.f32 %v4566, %v4773
        %v4775 = vpop.f32.mrf.mxu0
        %4776 = vmatprep.mubr.bf16.mxu0 0
        %4777 = vmatmul.mubr.bf16.gmra.mxu0 %v4683
        %v4778 = vpop.f32.mrf.mxu0
        %v4779 = vadd.f32 %v4566, %v4778
        %v4780 = vpop.f32.mrf.mxu0
        %v4781 = vpop.f32.mrf.mxu0
        %v4782 = vadd.f32 %v4566, %v4781
        %v4783 = vpop.f32.mrf.mxu0
        %4784 = vmatprep.mubr.bf16.mxu0 0
        %4785 = vmatmul.mubr.bf16.gmra.mxu0 %v4686
        %v4786 = vpop.f32.mrf.mxu0
        %v4787 = vadd.f32 %v4566, %v4786
        %v4788 = vpop.f32.mrf.mxu0
        %v4789 = vpop.f32.mrf.mxu0
        %v4790 = vadd.f32 %v4566, %v4789
        %v4791 = vpop.f32.mrf.mxu0
        %4792 = vmatprep.mubr.bf16.mxu0 0
        %4793 = vmatmul.mubr.bf16.gmra.mxu0 %v4689
        %v4794 = vpop.f32.mrf.mxu0
        %v4795 = vadd.f32 %v4566, %v4794
        %v4796 = vpop.f32.mrf.mxu0
        %v4797 = vpop.f32.mrf.mxu0
        %v4798 = vadd.f32 %v4566, %v4797
        %v4799 = vpop.f32.mrf.mxu0
        %4800 = vmatprep.mubr.bf16.mxu0 0
        %4801 = vmatmul.mubr.bf16.gmra.mxu0 %v4692
        %v4802 = vpop.f32.mrf.mxu0
        %v4803 = vadd.f32 %v4566, %v4802
        %v4804 = vpop.f32.mrf.mxu0
        %v4805 = vpop.f32.mrf.mxu0
        %v4806 = vadd.f32 %v4566, %v4805
        %v4807 = vpop.f32.mrf.mxu0
        %4808 = vmatprep.mubr.bf16.mxu0 0
        %4809 = vmatmul.mubr.bf16.gmra.mxu0 %v4695
        %v4810 = vpop.f32.mrf.mxu0
        %v4811 = vadd.f32 %v4566, %v4810
        %v4812 = vpop.f32.mrf.mxu0
        %v4813 = vpop.f32.mrf.mxu0
        %v4814 = vadd.f32 %v4566, %v4813
        %v4815 = vpop.f32.mrf.mxu0
        %4816 = vmatprep.mubr.bf16.mxu0 0
        %4817 = vmatmul.mubr.bf16.gmra.mxu0 %v4698
        %v4818 = vpop.f32.mrf.mxu0
        %v4819 = vadd.f32 %v4566, %v4818
        %v4820 = vpop.f32.mrf.mxu0
        %v4821 = vpop.f32.mrf.mxu0
        %v4822 = vadd.f32 %v4566, %v4821
        %v4823 = vpop.f32.mrf.mxu0
        %4824 = vmatprep.mubr.bf16.mxu0 0
        %4825 = vmatmul.mubr.bf16.gmra.mxu0 %v4701
        %v4826 = vpop.f32.mrf.mxu0
        %v4827 = vadd.f32 %v4566, %v4826
        %v4828 = vpop.f32.mrf.mxu0
        %v4829 = vpop.f32.mrf.mxu0
        %v4830 = vadd.f32 %v4566, %v4829
        %v4831 = vpop.f32.mrf.mxu0
        %4832 = vmatprep.mubr.bf16.mxu0 0
        %4833 = vmatmul.mubr.bf16.gmra.mxu0 %v4704
        %v4834 = vpop.f32.mrf.mxu0
        %v4835 = vadd.f32 %v4566, %v4834
        %v4836 = vpop.f32.mrf.mxu0
        %v4837 = vpop.f32.mrf.mxu0
        %v4838 = vadd.f32 %v4566, %v4837
        %v4839 = vpop.f32.mrf.mxu0
        %4840 = vmatprep.mubr.bf16.mxu0 0
        %4841 = vmatmul.mubr.bf16.gmra.mxu0 %v4707
        %v4842 = vpop.f32.mrf.mxu0
        %v4843 = vadd.f32 %v4566, %v4842
        %v4844 = vpop.f32.mrf.mxu0
        %v4845 = vpop.f32.mrf.mxu0
        %v4846 = vadd.f32 %v4566, %v4845
        %v4847 = vpop.f32.mrf.mxu0
        %4848 = vmatprep.mubr.bf16.mxu0 0
        %4849 = vmatmul.mubr.bf16.gmra.mxu0 %v4710
        %v4850 = vpop.f32.mrf.mxu0
        %v4851 = vadd.f32 %v4566, %v4850
        %v4852 = vpop.f32.mrf.mxu0
        %v4853 = vpop.f32.mrf.mxu0
        %v4854 = vadd.f32 %v4566, %v4853
        %v4855 = vpop.f32.mrf.mxu0
        %4856 = vmatprep.mubr.bf16.mxu0 0
        %4857 = vmatmul.mubr.bf16.gmra.mxu0 %v4713
        %v4858 = vpop.f32.mrf.mxu0
        %v4859 = vadd.f32 %v4566, %v4858
        %v4860 = vpop.f32.mrf.mxu0
        %v4861 = vpop.f32.mrf.mxu0
        %v4862 = vadd.f32 %v4566, %v4861
        %v4863 = vpop.f32.mrf.mxu0
        %4864 = vmatprep.mubr.bf16.mxu0 0
        %4865 = vmatmul.mubr.bf16.gmra.mxu0 %v4716
        %v4866 = vpop.f32.mrf.mxu0
        %v4867 = vadd.f32 %v4566, %v4866
        %v4868 = vpop.f32.mrf.mxu0
        %v4869 = vpop.f32.mrf.mxu0
        %v4870 = vadd.f32 %v4566, %v4869
        %v4871 = vpop.f32.mrf.mxu0
        %4872 = vmatprep.mubr.bf16.mxu0 0
        %4873 = vmatmul.mubr.bf16.gmra.mxu0 %v4719
        %v4874 = vpop.f32.mrf.mxu0
        %v4875 = vadd.f32 %v4566, %v4874
        %v4876 = vpop.f32.mrf.mxu0
        %v4877 = vpop.f32.mrf.mxu0
        %v4878 = vadd.f32 %v4566, %v4877
        %v4879 = vpop.f32.mrf.mxu0
        %4880 = vmatprep.mubr.bf16.mxu0 0
        %4881 = vmatmul.mubr.bf16.gmra.mxu0 %v4722
        %v4882 = vpop.f32.mrf.mxu0
        %v4883 = vadd.f32 %v4566, %v4882
        %v4884 = vpop.f32.mrf.mxu0
        %v4885 = vpop.f32.mrf.mxu0
        %v4886 = vadd.f32 %v4566, %v4885
        %v4887 = vpop.f32.mrf.mxu0
        %4888 = vdwg.mxu0
        %v4889 = vmax.f32 %v4763, 0.0
        %v4890 = vmax.f32 %v4766, 0.0
        %v4891 = vmax.f32 %v4771, 0.0
        %v4892 = vmax.f32 %v4774, 0.0
        %v4893 = vmax.f32 %v4779, 0.0
        %v4894 = vmax.f32 %v4782, 0.0
        %v4895 = vmax.f32 %v4787, 0.0
        %v4896 = vmax.f32 %v4790, 0.0
        %v4897 = vmax.f32 %v4795, 0.0
        %v4898 = vmax.f32 %v4798, 0.0
        %v4899 = vmax.f32 %v4803, 0.0
        %v4900 = vmax.f32 %v4806, 0.0
        %v4901 = vmax.f32 %v4811, 0.0
        %v4902 = vmax.f32 %v4814, 0.0
        %v4903 = vmax.f32 %v4819, 0.0
        %v4904 = vmax.f32 %v4822, 0.0
        %v4905 = vmax.f32 %v4827, 0.0
        %v4906 = vmax.f32 %v4830, 0.0
        %v4907 = vmax.f32 %v4835, 0.0
        %v4908 = vmax.f32 %v4838, 0.0
        %v4909 = vmax.f32 %v4843, 0.0
        %v4910 = vmax.f32 %v4846, 0.0
        %v4911 = vmax.f32 %v4851, 0.0
        %v4912 = vmax.f32 %v4854, 0.0
        %v4913 = vmax.f32 %v4859, 0.0
        %v4914 = vmax.f32 %v4862, 0.0
        %v4915 = vmax.f32 %v4867, 0.0
        %v4916 = vmax.f32 %v4870, 0.0
        %v4917 = vmax.f32 %v4875, 0.0
        %v4918 = vmax.f32 %v4878, 0.0
        %v4919 = vmax.f32 %v4883, 0.0
        %v4920 = vmax.f32 %v4886, 0.0
        %v4921 = vpack.c.bf16 %v4890, %v4889
        %v4922 = vpack.c.bf16 %v4892, %v4891
        %v4923 = vpack.c.bf16 %v4894, %v4893
        %v4924 = vpack.c.bf16 %v4896, %v4895
        %v4925 = vpack.c.bf16 %v4898, %v4897
        %v4926 = vpack.c.bf16 %v4900, %v4899
        %v4927 = vpack.c.bf16 %v4902, %v4901
        %v4928 = vpack.c.bf16 %v4904, %v4903
        %v4929 = vpack.c.bf16 %v4906, %v4905
        %v4930 = vpack.c.bf16 %v4908, %v4907
        %v4931 = vpack.c.bf16 %v4910, %v4909
        %v4932 = vpack.c.bf16 %v4912, %v4911
        %v4933 = vpack.c.bf16 %v4914, %v4913
        %v4934 = vpack.c.bf16 %v4916, %v4915
        %v4935 = vpack.c.bf16 %v4918, %v4917
        %v4936 = vpack.c.bf16 %v4920, %v4919
        %v4953 = vunpack.c.l.b16 %v4921
        %v4954 = vunpack.c.h.b16 %v4921
        %v4955 = vunpack.c.l.b16 %v4922
        %v4956 = vunpack.c.h.b16 %v4922
        %v4957 = vunpack.c.l.b16 %v4923
        %v4958 = vunpack.c.h.b16 %v4923
        %v4959 = vunpack.c.l.b16 %v4924
        %v4960 = vunpack.c.h.b16 %v4924
        %v4961 = vunpack.c.l.b16 %v4925
        %v4962 = vunpack.c.h.b16 %v4925
        %v4963 = vunpack.c.l.b16 %v4926
        %v4964 = vunpack.c.h.b16 %v4926
        %v4965 = vunpack.c.l.b16 %v4927
        %v4966 = vunpack.c.h.b16 %v4927
        %v4967 = vunpack.c.l.b16 %v4928
        %v4968 = vunpack.c.h.b16 %v4928
        %v4969 = vunpack.c.l.b16 %v4929
        %v4970 = vunpack.c.h.b16 %v4929
        %v4971 = vunpack.c.l.b16 %v4930
        %v4972 = vunpack.c.h.b16 %v4930
        %v4973 = vunpack.c.l.b16 %v4931
        %v4974 = vunpack.c.h.b16 %v4931
        %v4975 = vunpack.c.l.b16 %v4932
        %v4976 = vunpack.c.h.b16 %v4932
        %v4977 = vunpack.c.l.b16 %v4933
        %v4978 = vunpack.c.h.b16 %v4933
        %v4979 = vunpack.c.l.b16 %v4934
        %v4980 = vunpack.c.h.b16 %v4934
        %v4981 = vunpack.c.l.b16 %v4935
        %v4982 = vunpack.c.h.b16 %v4935
        %v4983 = vunpack.c.l.b16 %v4936
        %v4984 = vunpack.c.h.b16 %v4936
        %v4985 = vpack.c.b16 %v4953, %v4953
        %v4986 = vpack.c.b16 %v4954, %v4954
        %v4987 = vpack.c.b16 %v4955, %v4955
        %v4988 = vpack.c.b16 %v4956, %v4956
        %v4989 = vpack.c.b16 %v4957, %v4957
        %v4990 = vpack.c.b16 %v4958, %v4958
        %v4991 = vpack.c.b16 %v4959, %v4959
        %v4992 = vpack.c.b16 %v4960, %v4960
        %v4993 = vpack.c.b16 %v4961, %v4961
        %v4994 = vpack.c.b16 %v4962, %v4962
        %v4995 = vpack.c.b16 %v4963, %v4963
        %v4996 = vpack.c.b16 %v4964, %v4964
        %v4997 = vpack.c.b16 %v4965, %v4965
        %v4998 = vpack.c.b16 %v4966, %v4966
        %v4999 = vpack.c.b16 %v4967, %v4967
        %v5000 = vpack.c.b16 %v4968, %v4968
        %v5001 = vpack.c.b16 %v4969, %v4969
        %v5002 = vpack.c.b16 %v4970, %v4970
        %v5003 = vpack.c.b16 %v4971, %v4971
        %v5004 = vpack.c.b16 %v4972, %v4972
        %v5005 = vpack.c.b16 %v4973, %v4973
        %v5006 = vpack.c.b16 %v4974, %v4974
        %v5007 = vpack.c.b16 %v4975, %v4975
        %v5008 = vpack.c.b16 %v4976, %v4976
        %v5009 = vpack.c.b16 %v4977, %v4977
        %v5010 = vpack.c.b16 %v4978, %v4978
        %v5011 = vpack.c.b16 %v4979, %v4979
        %v5012 = vpack.c.b16 %v4980, %v4980
        %v5013 = vpack.c.b16 %v4981, %v4981
        %v5014 = vpack.c.b16 %v4982, %v4982
        %v5015 = vpack.c.b16 %v4983, %v4983
        %v5016 = vpack.c.b16 %v4984, %v4984
        %v5018 = vshrl.u32 %v4985, 16
        %v5020 = vrot.slane %v5018, 7
        %v5021 = vshll.u32 %v4985, 16
        %v5023 = vor.u32 %v5020, %v5021
        %v5024 = vrot.slane %v5020, 4
        %v5026 = vshrl.u32 %v4986, 16
        %v5028 = vrot.slane %v5026, 7
        %v5029 = vshll.u32 %v4986, 16
        %v5031 = vor.u32 %v5028, %v5029
        %v5032 = vsel %vm525, %v5024, %v5031
        %v5033 = vrot.slane %v5028, 4
        %v5035 = vshrl.u32 %v4987, 16
        %v5037 = vrot.slane %v5035, 7
        %v5038 = vshll.u32 %v4987, 16
        %v5040 = vor.u32 %v5037, %v5038
        %v5041 = vrot.slane %v5037, 4
        %v5043 = vshrl.u32 %v4988, 16
        %v5045 = vrot.slane %v5043, 7
        %v5046 = vshll.u32 %v4988, 16
        %v5048 = vor.u32 %v5045, %v5046
        %v5049 = vsel %vm525, %v5041, %v5048
        %v5050 = vrot.slane %v5045, 4
        %v5052 = vshrl.u32 %v4989, 16
        %v5054 = vrot.slane %v5052, 7
        %v5055 = vshll.u32 %v4989, 16
        %v5057 = vor.u32 %v5054, %v5055
        %v5058 = vrot.slane %v5054, 4
        %v5060 = vshrl.u32 %v4990, 16
        %v5062 = vrot.slane %v5060, 7
        %v5063 = vshll.u32 %v4990, 16
        %v5065 = vor.u32 %v5062, %v5063
        %v5066 = vsel %vm525, %v5058, %v5065
        %v5067 = vrot.slane %v5062, 4
        %v5069 = vshrl.u32 %v4991, 16
        %v5071 = vrot.slane %v5069, 7
        %v5072 = vshll.u32 %v4991, 16
        %v5074 = vor.u32 %v5071, %v5072
        %v5075 = vrot.slane %v5071, 4
        %v5077 = vshrl.u32 %v4992, 16
        %v5079 = vrot.slane %v5077, 7
        %v5080 = vshll.u32 %v4992, 16
        %v5082 = vor.u32 %v5079, %v5080
        %v5083 = vsel %vm525, %v5075, %v5082
        %v5084 = vrot.slane %v5079, 4
        %v5086 = vshrl.u32 %v4993, 16
        %v5088 = vrot.slane %v5086, 7
        %v5089 = vshll.u32 %v4993, 16
        %v5091 = vor.u32 %v5088, %v5089
        %v5092 = vrot.slane %v5088, 4
        %v5094 = vshrl.u32 %v4994, 16
        %v5096 = vrot.slane %v5094, 7
        %v5097 = vshll.u32 %v4994, 16
        %v5099 = vor.u32 %v5096, %v5097
        %v5100 = vsel %vm525, %v5092, %v5099
        %v5101 = vrot.slane %v5096, 4
        %v5103 = vshrl.u32 %v4995, 16
        %v5105 = vrot.slane %v5103, 7
        %v5106 = vshll.u32 %v4995, 16
        %v5108 = vor.u32 %v5105, %v5106
        %v5109 = vrot.slane %v5105, 4
        %v5111 = vshrl.u32 %v4996, 16
        %v5113 = vrot.slane %v5111, 7
        %v5114 = vshll.u32 %v4996, 16
        %v5116 = vor.u32 %v5113, %v5114
        %v5117 = vsel %vm525, %v5109, %v5116
        %v5118 = vrot.slane %v5113, 4
        %v5120 = vshrl.u32 %v4997, 16
        %v5122 = vrot.slane %v5120, 7
        %v5123 = vshll.u32 %v4997, 16
        %v5125 = vor.u32 %v5122, %v5123
        %v5126 = vrot.slane %v5122, 4
        %v5128 = vshrl.u32 %v4998, 16
        %v5130 = vrot.slane %v5128, 7
        %v5131 = vshll.u32 %v4998, 16
        %v5133 = vor.u32 %v5130, %v5131
        %v5134 = vsel %vm525, %v5126, %v5133
        %v5135 = vrot.slane %v5130, 4
        %v5137 = vshrl.u32 %v4999, 16
        %v5139 = vrot.slane %v5137, 7
        %v5140 = vshll.u32 %v4999, 16
        %v5142 = vor.u32 %v5139, %v5140
        %v5143 = vrot.slane %v5139, 4
        %v5145 = vshrl.u32 %v5000, 16
        %v5147 = vrot.slane %v5145, 7
        %v5148 = vshll.u32 %v5000, 16
        %v5150 = vor.u32 %v5147, %v5148
        %v5151 = vsel %vm525, %v5143, %v5150
        %v5152 = vrot.slane %v5147, 4
        %v5154 = vshrl.u32 %v5001, 16
        %v5156 = vrot.slane %v5154, 7
        %v5157 = vshll.u32 %v5001, 16
        %v5159 = vor.u32 %v5156, %v5157
        %v5160 = vrot.slane %v5156, 4
        %v5162 = vshrl.u32 %v5002, 16
        %v5164 = vrot.slane %v5162, 7
        %v5165 = vshll.u32 %v5002, 16
        %v5167 = vor.u32 %v5164, %v5165
        %v5168 = vsel %vm525, %v5160, %v5167
        %v5169 = vrot.slane %v5164, 4
        %v5171 = vshrl.u32 %v5003, 16
        %v5173 = vrot.slane %v5171, 7
        %v5174 = vshll.u32 %v5003, 16
        %v5176 = vor.u32 %v5173, %v5174
        %v5177 = vrot.slane %v5173, 4
        %v5179 = vshrl.u32 %v5004, 16
        %v5181 = vrot.slane %v5179, 7
        %v5182 = vshll.u32 %v5004, 16
        %v5184 = vor.u32 %v5181, %v5182
        %v5185 = vsel %vm525, %v5177, %v5184
        %v5186 = vrot.slane %v5181, 4
        %v5188 = vshrl.u32 %v5005, 16
        %v5190 = vrot.slane %v5188, 7
        %v5191 = vshll.u32 %v5005, 16
        %v5193 = vor.u32 %v5190, %v5191
        %v5194 = vrot.slane %v5190, 4
        %v5196 = vshrl.u32 %v5006, 16
        %v5198 = vrot.slane %v5196, 7
        %v5199 = vshll.u32 %v5006, 16
        %v5201 = vor.u32 %v5198, %v5199
        %v5202 = vsel %vm525, %v5194, %v5201
        %v5203 = vrot.slane %v5198, 4
        %v5205 = vshrl.u32 %v5007, 16
        %v5207 = vrot.slane %v5205, 7
        %v5208 = vshll.u32 %v5007, 16
        %v5210 = vor.u32 %v5207, %v5208
        %v5211 = vrot.slane %v5207, 4
        %v5213 = vshrl.u32 %v5008, 16
        %v5215 = vrot.slane %v5213, 7
        %v5216 = vshll.u32 %v5008, 16
        %v5218 = vor.u32 %v5215, %v5216
        %v5219 = vsel %vm525, %v5211, %v5218
        %v5220 = vrot.slane %v5215, 4
        %v5222 = vshrl.u32 %v5009, 16
        %v5224 = vrot.slane %v5222, 7
        %v5225 = vshll.u32 %v5009, 16
        %v5227 = vor.u32 %v5224, %v5225
        %v5228 = vrot.slane %v5224, 4
        %v5230 = vshrl.u32 %v5010, 16
        %v5232 = vrot.slane %v5230, 7
        %v5233 = vshll.u32 %v5010, 16
        %v5235 = vor.u32 %v5232, %v5233
        %v5236 = vsel %vm525, %v5228, %v5235
        %v5237 = vrot.slane %v5232, 4
        %v5239 = vshrl.u32 %v5011, 16
        %v5241 = vrot.slane %v5239, 7
        %v5242 = vshll.u32 %v5011, 16
        %v5244 = vor.u32 %v5241, %v5242
        %v5245 = vrot.slane %v5241, 4
        %v5247 = vshrl.u32 %v5012, 16
        %v5249 = vrot.slane %v5247, 7
        %v5250 = vshll.u32 %v5012, 16
        %v5252 = vor.u32 %v5249, %v5250
        %v5253 = vsel %vm525, %v5245, %v5252
        %v5254 = vrot.slane %v5249, 4
        %v5256 = vshrl.u32 %v5013, 16
        %v5258 = vrot.slane %v5256, 7
        %v5259 = vshll.u32 %v5013, 16
        %v5261 = vor.u32 %v5258, %v5259
        %v5262 = vrot.slane %v5258, 4
        %v5264 = vshrl.u32 %v5014, 16
        %v5266 = vrot.slane %v5264, 7
        %v5267 = vshll.u32 %v5014, 16
        %v5269 = vor.u32 %v5266, %v5267
        %v5270 = vsel %vm525, %v5262, %v5269
        %v5271 = vrot.slane %v5266, 4
        %v5273 = vshrl.u32 %v5015, 16
        %v5275 = vrot.slane %v5273, 7
        %v5276 = vshll.u32 %v5015, 16
        %v5278 = vor.u32 %v5275, %v5276
        %v5279 = vrot.slane %v5275, 4
        %v5281 = vshrl.u32 %v5016, 16
        %v5283 = vrot.slane %v5281, 7
        %v5284 = vshll.u32 %v5016, 16
        %v5286 = vor.u32 %v5283, %v5284
        %v5287 = vsel %vm525, %v5279, %v5286
        %v5288 = vrot.slane %v5283, 4
        %s5337 = scalar_lea.vmem [#allocation3], 12
        %vm5338 = vcmask 60416
        %vm5339 = vmand %vm5338, %vm337
        %v5340 = vld [vmem:[%s5337] sm:$0xf]
        %v5341 = vsel %vm5339, %v5023, %v5340
        %5342 = vst [vmem:[%s5337] sm:$0xf] %v5341
        %5343 = vst.msk [vmem:[%s5337 + $0x4] sm:$0xf] %vm271, %v5032
        %v5344 = vld [vmem:[%s5337 + $0x8] sm:$0x1]
        %v5345 = vsel %vm282, %v5033, %v5344
        %5346 = vst [vmem:[%s5337 + $0x8] sm:$0x1] %v5345
        %v5347 = vld [vmem:[%s5337 + $0xc] sm:$0xf]
        %v5348 = vsel %vm5339, %v5040, %v5347
        %5349 = vst [vmem:[%s5337 + $0xc] sm:$0xf] %v5348
        %5350 = vst.msk [vmem:[%s5337 + $0x10] sm:$0xf] %vm271, %v5049
        %v5351 = vld [vmem:[%s5337 + $0x14] sm:$0x1]
        %v5352 = vsel %vm282, %v5050, %v5351
        %5353 = vst [vmem:[%s5337 + $0x14] sm:$0x1] %v5352
        %v5354 = vld [vmem:[%s5337 + $0x18] sm:$0xf]
        %v5355 = vsel %vm5339, %v5057, %v5354
        %5356 = vst [vmem:[%s5337 + $0x18] sm:$0xf] %v5355
        %5357 = vst.msk [vmem:[%s5337 + $0x1c] sm:$0xf] %vm271, %v5066
        %v5358 = vld [vmem:[%s5337 + $0x20] sm:$0x1]
        %v5359 = vsel %vm282, %v5067, %v5358
        %5360 = vst [vmem:[%s5337 + $0x20] sm:$0x1] %v5359
        %v5361 = vld [vmem:[%s5337 + $0x24] sm:$0xf]
        %v5362 = vsel %vm5339, %v5074, %v5361
        %5363 = vst [vmem:[%s5337 + $0x24] sm:$0xf] %v5362
        %5364 = vst.msk [vmem:[%s5337 + $0x28] sm:$0xf] %vm271, %v5083
        %v5365 = vld [vmem:[%s5337 + $0x2c] sm:$0x1]
        %v5366 = vsel %vm282, %v5084, %v5365
        %5367 = vst [vmem:[%s5337 + $0x2c] sm:$0x1] %v5366
        %v5368 = vld [vmem:[%s5337 + $0x30] sm:$0xf]
        %v5369 = vsel %vm5339, %v5091, %v5368
        %5370 = vst [vmem:[%s5337 + $0x30] sm:$0xf] %v5369
        %5371 = vst.msk [vmem:[%s5337 + $0x34] sm:$0xf] %vm271, %v5100
        %v5372 = vld [vmem:[%s5337 + $0x38] sm:$0x1]
        %v5373 = vsel %vm282, %v5101, %v5372
        %5374 = vst [vmem:[%s5337 + $0x38] sm:$0x1] %v5373
        %v5375 = vld [vmem:[%s5337 + $0x3c] sm:$0xf]
        %v5376 = vsel %vm5339, %v5108, %v5375
        %5377 = vst [vmem:[%s5337 + $0x3c] sm:$0xf] %v5376
        %5378 = vst.msk [vmem:[%s5337 + $0x40] sm:$0xf] %vm271, %v5117
        %v5379 = vld [vmem:[%s5337 + $0x44] sm:$0x1]
        %v5380 = vsel %vm282, %v5118, %v5379
        %5381 = vst [vmem:[%s5337 + $0x44] sm:$0x1] %v5380
        %v5382 = vld [vmem:[%s5337 + $0x48] sm:$0xf]
        %v5383 = vsel %vm5339, %v5125, %v5382
        %5384 = vst [vmem:[%s5337 + $0x48] sm:$0xf] %v5383
        %5385 = vst.msk [vmem:[%s5337 + $0x4c] sm:$0xf] %vm271, %v5134
        %v5386 = vld [vmem:[%s5337 + $0x50] sm:$0x1]
        %v5387 = vsel %vm282, %v5135, %v5386
        %5388 = vst [vmem:[%s5337 + $0x50] sm:$0x1] %v5387
        %v5389 = vld [vmem:[%s5337 + $0x54] sm:$0xf]
        %v5390 = vsel %vm5339, %v5142, %v5389
        %5391 = vst [vmem:[%s5337 + $0x54] sm:$0xf] %v5390
        %5392 = vst.msk [vmem:[%s5337 + $0x58] sm:$0xf] %vm271, %v5151
        %v5393 = vld [vmem:[%s5337 + $0x5c] sm:$0x1]
        %v5394 = vsel %vm282, %v5152, %v5393
        %5395 = vst [vmem:[%s5337 + $0x5c] sm:$0x1] %v5394
        %v5396 = vld [vmem:[%s5337 + $0x60] sm:$0xf]
        %v5397 = vsel %vm5339, %v5159, %v5396
        %5398 = vst [vmem:[%s5337 + $0x60] sm:$0xf] %v5397
        %5399 = vst.msk [vmem:[%s5337 + $0x64] sm:$0xf] %vm271, %v5168
        %v5400 = vld [vmem:[%s5337 + $0x68] sm:$0x1]
        %v5401 = vsel %vm282, %v5169, %v5400
        %5402 = vst [vmem:[%s5337 + $0x68] sm:$0x1] %v5401
        %v5403 = vld [vmem:[%s5337 + $0x6c] sm:$0xf]
        %v5404 = vsel %vm5339, %v5176, %v5403
        %5405 = vst [vmem:[%s5337 + $0x6c] sm:$0xf] %v5404
        %5406 = vst.msk [vmem:[%s5337 + $0x70] sm:$0xf] %vm271, %v5185
        %v5407 = vld [vmem:[%s5337 + $0x74] sm:$0x1]
        %v5408 = vsel %vm282, %v5186, %v5407
        %5409 = vst [vmem:[%s5337 + $0x74] sm:$0x1] %v5408
        %v5410 = vld [vmem:[%s5337 + $0x78] sm:$0xf]
        %v5411 = vsel %vm5339, %v5193, %v5410
        %5412 = vst [vmem:[%s5337 + $0x78] sm:$0xf] %v5411
        %5413 = vst.msk [vmem:[%s5337 + $0x7c] sm:$0xf] %vm271, %v5202
        %v5414 = vld [vmem:[%s5337 + $0x80] sm:$0x1]
        %v5415 = vsel %vm282, %v5203, %v5414
        %5416 = vst [vmem:[%s5337 + $0x80] sm:$0x1] %v5415
        %v5417 = vld [vmem:[%s5337 + $0x84] sm:$0xf]
        %v5418 = vsel %vm5339, %v5210, %v5417
        %5419 = vst [vmem:[%s5337 + $0x84] sm:$0xf] %v5418
        %5420 = vst.msk [vmem:[%s5337 + $0x88] sm:$0xf] %vm271, %v5219
        %v5421 = vld [vmem:[%s5337 + $0x8c] sm:$0x1]
        %v5422 = vsel %vm282, %v5220, %v5421
        %5423 = vst [vmem:[%s5337 + $0x8c] sm:$0x1] %v5422
        %v5424 = vld [vmem:[%s5337 + $0x90] sm:$0xf]
        %v5425 = vsel %vm5339, %v5227, %v5424
        %5426 = vst [vmem:[%s5337 + $0x90] sm:$0xf] %v5425
        %5427 = vst.msk [vmem:[%s5337 + $0x94] sm:$0xf] %vm271, %v5236
        %v5428 = vld [vmem:[%s5337 + $0x98] sm:$0x1]
        %v5429 = vsel %vm282, %v5237, %v5428
        %5430 = vst [vmem:[%s5337 + $0x98] sm:$0x1] %v5429
        %v5431 = vld [vmem:[%s5337 + $0x9c] sm:$0xf]
        %v5432 = vsel %vm5339, %v5244, %v5431
        %5433 = vst [vmem:[%s5337 + $0x9c] sm:$0xf] %v5432
        %5434 = vst.msk [vmem:[%s5337 + $0xa0] sm:$0xf] %vm271, %v5253
        %v5435 = vld [vmem:[%s5337 + $0xa4] sm:$0x1]
        %v5436 = vsel %vm282, %v5254, %v5435
        %5437 = vst [vmem:[%s5337 + $0xa4] sm:$0x1] %v5436
        %v5438 = vld [vmem:[%s5337 + $0xa8] sm:$0xf]
        %v5439 = vsel %vm5339, %v5261, %v5438
        %5440 = vst [vmem:[%s5337 + $0xa8] sm:$0xf] %v5439
        %5441 = vst.msk [vmem:[%s5337 + $0xac] sm:$0xf] %vm271, %v5270
        %v5442 = vld [vmem:[%s5337 + $0xb0] sm:$0x1]
        %v5443 = vsel %vm282, %v5271, %v5442
        %5444 = vst [vmem:[%s5337 + $0xb0] sm:$0x1] %v5443
        %v5445 = vld [vmem:[%s5337 + $0xb4] sm:$0xf]
        %v5446 = vsel %vm5339, %v5278, %v5445
        %5447 = vst [vmem:[%s5337 + $0xb4] sm:$0xf] %v5446
        %5448 = vst.msk [vmem:[%s5337 + $0xb8] sm:$0xf] %vm271, %v5287
        %v5449 = vld [vmem:[%s5337 + $0xbc] sm:$0x1]
        %v5450 = vsel %vm282, %v5288, %v5449
        %5451 = vst [vmem:[%s5337 + $0xbc] sm:$0x1] %v5450
        %v5452 = vld [vmem:[#allocation3] sm:$0xf]
        %v5453 = vld [vmem:[#allocation3 + $0x4] sm:$0xf]
        %v5454 = vld [vmem:[#allocation3 + $0xc] sm:$0xf]
        %v5455 = vld [vmem:[#allocation3 + $0x10] sm:$0xf]
        %v5456 = vld [vmem:[#allocation3 + $0x18] sm:$0xf]
        %v5457 = vld [vmem:[#allocation3 + $0x1c] sm:$0xf]
        %v5458 = vld [vmem:[#allocation3 + $0x24] sm:$0xf]
        %v5459 = vld [vmem:[#allocation3 + $0x28] sm:$0xf]
        %v5460 = vld [vmem:[#allocation3 + $0x30] sm:$0xf]
        %v5461 = vld [vmem:[#allocation3 + $0x34] sm:$0xf]
        %v5462 = vld [vmem:[#allocation3 + $0x3c] sm:$0xf]
        %v5463 = vld [vmem:[#allocation3 + $0x40] sm:$0xf]
        %v5464 = vld [vmem:[#allocation3 + $0x48] sm:$0xf]
        %v5465 = vld [vmem:[#allocation3 + $0x4c] sm:$0xf]
        %v5466 = vld [vmem:[#allocation3 + $0x54] sm:$0xf]
        %v5467 = vld [vmem:[#allocation3 + $0x58] sm:$0xf]
        %v5468 = vld [vmem:[#allocation3 + $0x60] sm:$0xf]
        %v5469 = vld [vmem:[#allocation3 + $0x64] sm:$0xf]
        %v5470 = vld [vmem:[#allocation3 + $0x6c] sm:$0xf]
        %v5471 = vld [vmem:[#allocation3 + $0x70] sm:$0xf]
        %v5472 = vld [vmem:[#allocation3 + $0x78] sm:$0xf]
        %v5473 = vld [vmem:[#allocation3 + $0x7c] sm:$0xf]
        %v5474 = vld [vmem:[#allocation3 + $0x84] sm:$0xf]
        %v5475 = vld [vmem:[#allocation3 + $0x88] sm:$0xf]
        %v5476 = vld [vmem:[#allocation3 + $0x90] sm:$0xf]
        %v5477 = vld [vmem:[#allocation3 + $0x94] sm:$0xf]
        %v5478 = vld [vmem:[#allocation3 + $0x9c] sm:$0xf]
        %v5479 = vld [vmem:[#allocation3 + $0xa0] sm:$0xf]
        %v5480 = vld [vmem:[#allocation3 + $0xa8] sm:$0xf]
        %v5481 = vld [vmem:[#allocation3 + $0xac] sm:$0xf]
        %v5482 = vld [vmem:[#allocation3 + $0xb4] sm:$0xf]
        %v5483 = vld [vmem:[#allocation3 + $0xb8] sm:$0xf]
        %5484 = vst.msk [vmem:[#allocation5] sm:$0xf] %vm271, %v5452
        %5485 = vst.msk [vmem:[#allocation5 + $0x4] sm:$0xf] %vm271, %v5453
        %5486 = vst.msk [vmem:[#allocation5 + $0x8] sm:$0xf] %vm271, %v5454
        %5487 = vst.msk [vmem:[#allocation5 + $0xc] sm:$0xf] %vm271, %v5455
        %5488 = vst.msk [vmem:[#allocation5 + $0x10] sm:$0xf] %vm271, %v5456
        %5489 = vst.msk [vmem:[#allocation5 + $0x14] sm:$0xf] %vm271, %v5457
        %5490 = vst.msk [vmem:[#allocation5 + $0x18] sm:$0xf] %vm271, %v5458
        %5491 = vst.msk [vmem:[#allocation5 + $0x1c] sm:$0xf] %vm271, %v5459
        %5492 = vst.msk [vmem:[#allocation5 + $0x20] sm:$0xf] %vm271, %v5460
        %5493 = vst.msk [vmem:[#allocation5 + $0x24] sm:$0xf] %vm271, %v5461
        %5494 = vst.msk [vmem:[#allocation5 + $0x28] sm:$0xf] %vm271, %v5462
        %5495 = vst.msk [vmem:[#allocation5 + $0x2c] sm:$0xf] %vm271, %v5463
        %5496 = vst.msk [vmem:[#allocation5 + $0x30] sm:$0xf] %vm271, %v5464
        %5497 = vst.msk [vmem:[#allocation5 + $0x34] sm:$0xf] %vm271, %v5465
        %5498 = vst.msk [vmem:[#allocation5 + $0x38] sm:$0xf] %vm271, %v5466
        %5499 = vst.msk [vmem:[#allocation5 + $0x3c] sm:$0xf] %vm271, %v5467
        %5500 = vst.msk [vmem:[#allocation5 + $0x40] sm:$0xf] %vm271, %v5468
        %5501 = vst.msk [vmem:[#allocation5 + $0x44] sm:$0xf] %vm271, %v5469
        %5502 = vst.msk [vmem:[#allocation5 + $0x48] sm:$0xf] %vm271, %v5470
        %5503 = vst.msk [vmem:[#allocation5 + $0x4c] sm:$0xf] %vm271, %v5471
        %5504 = vst.msk [vmem:[#allocation5 + $0x50] sm:$0xf] %vm271, %v5472
        %5505 = vst.msk [vmem:[#allocation5 + $0x54] sm:$0xf] %vm271, %v5473
        %5506 = vst.msk [vmem:[#allocation5 + $0x58] sm:$0xf] %vm271, %v5474
        %5507 = vst.msk [vmem:[#allocation5 + $0x5c] sm:$0xf] %vm271, %v5475
        %5508 = vst.msk [vmem:[#allocation5 + $0x60] sm:$0xf] %vm271, %v5476
        %5509 = vst.msk [vmem:[#allocation5 + $0x64] sm:$0xf] %vm271, %v5477
        %5510 = vst.msk [vmem:[#allocation5 + $0x68] sm:$0xf] %vm271, %v5478
        %5511 = vst.msk [vmem:[#allocation5 + $0x6c] sm:$0xf] %vm271, %v5479
        %5512 = vst.msk [vmem:[#allocation5 + $0x70] sm:$0xf] %vm271, %v5480
        %5513 = vst.msk [vmem:[#allocation5 + $0x74] sm:$0xf] %vm271, %v5481
        %5514 = vst.msk [vmem:[#allocation5 + $0x78] sm:$0xf] %vm271, %v5482
        %5515 = vst.msk [vmem:[#allocation5 + $0x7c] sm:$0xf] %vm271, %v5483
        %v5516 = vld [vmem:[#allocation3] sm:$0xf]
        %v5517 = vld [vmem:[#allocation3 + $0x4] sm:$0xf]
        %v5518 = vld [vmem:[#allocation3 + $0x8] sm:$0x1]
        %v5519 = vld [vmem:[#allocation3 + $0xc] sm:$0xf]
        %v5520 = vld [vmem:[#allocation3 + $0x10] sm:$0xf]
        %v5521 = vld [vmem:[#allocation3 + $0x14] sm:$0x1]
        %v5522 = vld [vmem:[#allocation3 + $0x18] sm:$0xf]
        %v5523 = vld [vmem:[#allocation3 + $0x1c] sm:$0xf]
        %v5524 = vld [vmem:[#allocation3 + $0x20] sm:$0x1]
        %v5525 = vld [vmem:[#allocation3 + $0x24] sm:$0xf]
        %v5526 = vld [vmem:[#allocation3 + $0x28] sm:$0xf]
        %v5527 = vld [vmem:[#allocation3 + $0x2c] sm:$0x1]
        %v5528 = vld [vmem:[#allocation3 + $0x30] sm:$0xf]
        %v5529 = vld [vmem:[#allocation3 + $0x34] sm:$0xf]
        %v5530 = vld [vmem:[#allocation3 + $0x38] sm:$0x1]
        %v5531 = vld [vmem:[#allocation3 + $0x3c] sm:$0xf]
        %v5532 = vld [vmem:[#allocation3 + $0x40] sm:$0xf]
        %v5533 = vld [vmem:[#allocation3 + $0x44] sm:$0x1]
        %v5534 = vld [vmem:[#allocation3 + $0x48] sm:$0xf]
        %v5535 = vld [vmem:[#allocation3 + $0x4c] sm:$0xf]
        %v5536 = vld [vmem:[#allocation3 + $0x50] sm:$0x1]
        %v5537 = vld [vmem:[#allocation3 + $0x54] sm:$0xf]
        %v5538 = vld [vmem:[#allocation3 + $0x58] sm:$0xf]
        %v5539 = vld [vmem:[#allocation3 + $0x5c] sm:$0x1]
        %v5540 = vld [vmem:[#allocation3 + $0x60] sm:$0xf]
        %v5541 = vld [vmem:[#allocation3 + $0x64] sm:$0xf]
        %v5542 = vld [vmem:[#allocation3 + $0x68] sm:$0x1]
        %v5543 = vld [vmem:[#allocation3 + $0x6c] sm:$0xf]
        %v5544 = vld [vmem:[#allocation3 + $0x70] sm:$0xf]
        %v5545 = vld [vmem:[#allocation3 + $0x74] sm:$0x1]
        %v5546 = vld [vmem:[#allocation3 + $0x78] sm:$0xf]
        %v5547 = vld [vmem:[#allocation3 + $0x7c] sm:$0xf]
        %v5548 = vld [vmem:[#allocation3 + $0x80] sm:$0x1]
        %v5549 = vld [vmem:[#allocation3 + $0x84] sm:$0xf]
        %v5550 = vld [vmem:[#allocation3 + $0x88] sm:$0xf]
        %v5551 = vld [vmem:[#allocation3 + $0x8c] sm:$0x1]
        %v5552 = vld [vmem:[#allocation3 + $0x90] sm:$0xf]
        %v5553 = vld [vmem:[#allocation3 + $0x94] sm:$0xf]
        %v5554 = vld [vmem:[#allocation3 + $0x98] sm:$0x1]
        %v5555 = vld [vmem:[#allocation3 + $0x9c] sm:$0xf]
        %v5556 = vld [vmem:[#allocation3 + $0xa0] sm:$0xf]
        %v5557 = vld [vmem:[#allocation3 + $0xa4] sm:$0x1]
        %v5558 = vld [vmem:[#allocation3 + $0xa8] sm:$0xf]
        %v5559 = vld [vmem:[#allocation3 + $0xac] sm:$0xf]
        %v5560 = vld [vmem:[#allocation3 + $0xb0] sm:$0x1]
        %v5561 = vld [vmem:[#allocation3 + $0xb4] sm:$0xf]
        %v5562 = vld [vmem:[#allocation3 + $0xb8] sm:$0xf]
        %v5563 = vld [vmem:[#allocation3 + $0xbc] sm:$0x1]
        %v5565 = vshrl.u32 %v5516, 16
        %v5567 = vrot.slane %v5565, 4
        %v5568 = vshll.u32 %v5516, 16
        %v5570 = vrot.slane %v5568, 5
        %v5571 = vor.u32 %v5567, %v5570
        %v5572 = vrot.slane %v5571, 4
        %v5574 = vshll.u32 %v5517, 16
        %v5576 = vrot.slane %v5574, 5
        %v5577 = vsel %vm1483, %v5572, %v5576
        %v5578 = vshrl.u32 %v5517, 16
        %v5580 = vrot.slane %v5578, 4
        %v5581 = vor.u32 %v5580, %v5576
        %v5582 = vrot.slane %v5581, 4
        %v5584 = vshll.u32 %v5518, 16
        %v5586 = vrot.slane %v5584, 5
        %v5587 = vsel %vm1483, %v5582, %v5586
        %v5589 = vshrl.u32 %v5519, 16
        %v5591 = vrot.slane %v5589, 4
        %v5592 = vshll.u32 %v5519, 16
        %v5594 = vrot.slane %v5592, 5
        %v5595 = vor.u32 %v5591, %v5594
        %v5596 = vrot.slane %v5595, 4
        %v5598 = vshll.u32 %v5520, 16
        %v5600 = vrot.slane %v5598, 5
        %v5601 = vsel %vm1483, %v5596, %v5600
        %v5602 = vshrl.u32 %v5520, 16
        %v5604 = vrot.slane %v5602, 4
        %v5605 = vor.u32 %v5604, %v5600
        %v5606 = vrot.slane %v5605, 4
        %v5608 = vshll.u32 %v5521, 16
        %v5610 = vrot.slane %v5608, 5
        %v5611 = vsel %vm1483, %v5606, %v5610
        %v5613 = vshrl.u32 %v5522, 16
        %v5615 = vrot.slane %v5613, 4
        %v5616 = vshll.u32 %v5522, 16
        %v5618 = vrot.slane %v5616, 5
        %v5619 = vor.u32 %v5615, %v5618
        %v5620 = vrot.slane %v5619, 4
        %v5622 = vshll.u32 %v5523, 16
        %v5624 = vrot.slane %v5622, 5
        %v5625 = vsel %vm1483, %v5620, %v5624
        %v5626 = vshrl.u32 %v5523, 16
        %v5628 = vrot.slane %v5626, 4
        %v5629 = vor.u32 %v5628, %v5624
        %v5630 = vrot.slane %v5629, 4
        %v5632 = vshll.u32 %v5524, 16
        %v5634 = vrot.slane %v5632, 5
        %v5635 = vsel %vm1483, %v5630, %v5634
        %v5637 = vshrl.u32 %v5525, 16
        %v5639 = vrot.slane %v5637, 4
        %v5640 = vshll.u32 %v5525, 16
        %v5642 = vrot.slane %v5640, 5
        %v5643 = vor.u32 %v5639, %v5642
        %v5644 = vrot.slane %v5643, 4
        %v5646 = vshll.u32 %v5526, 16
        %v5648 = vrot.slane %v5646, 5
        %v5649 = vsel %vm1483, %v5644, %v5648
        %v5650 = vshrl.u32 %v5526, 16
        %v5652 = vrot.slane %v5650, 4
        %v5653 = vor.u32 %v5652, %v5648
        %v5654 = vrot.slane %v5653, 4
        %v5656 = vshll.u32 %v5527, 16
        %v5658 = vrot.slane %v5656, 5
        %v5659 = vsel %vm1483, %v5654, %v5658
        %v5661 = vshrl.u32 %v5528, 16
        %v5663 = vrot.slane %v5661, 4
        %v5664 = vshll.u32 %v5528, 16
        %v5666 = vrot.slane %v5664, 5
        %v5667 = vor.u32 %v5663, %v5666
        %v5668 = vrot.slane %v5667, 4
        %v5670 = vshll.u32 %v5529, 16
        %v5672 = vrot.slane %v5670, 5
        %v5673 = vsel %vm1483, %v5668, %v5672
        %v5674 = vshrl.u32 %v5529, 16
        %v5676 = vrot.slane %v5674, 4
        %v5677 = vor.u32 %v5676, %v5672
        %v5678 = vrot.slane %v5677, 4
        %v5680 = vshll.u32 %v5530, 16
        %v5682 = vrot.slane %v5680, 5
        %v5683 = vsel %vm1483, %v5678, %v5682
        %v5685 = vshrl.u32 %v5531, 16
        %v5687 = vrot.slane %v5685, 4
        %v5688 = vshll.u32 %v5531, 16
        %v5690 = vrot.slane %v5688, 5
        %v5691 = vor.u32 %v5687, %v5690
        %v5692 = vrot.slane %v5691, 4
        %v5694 = vshll.u32 %v5532, 16
        %v5696 = vrot.slane %v5694, 5
        %v5697 = vsel %vm1483, %v5692, %v5696
        %v5698 = vshrl.u32 %v5532, 16
        %v5700 = vrot.slane %v5698, 4
        %v5701 = vor.u32 %v5700, %v5696
        %v5702 = vrot.slane %v5701, 4
        %v5704 = vshll.u32 %v5533, 16
        %v5706 = vrot.slane %v5704, 5
        %v5707 = vsel %vm1483, %v5702, %v5706
        %v5709 = vshrl.u32 %v5534, 16
        %v5711 = vrot.slane %v5709, 4
        %v5712 = vshll.u32 %v5534, 16
        %v5714 = vrot.slane %v5712, 5
        %v5715 = vor.u32 %v5711, %v5714
        %v5716 = vrot.slane %v5715, 4
        %v5718 = vshll.u32 %v5535, 16
        %v5720 = vrot.slane %v5718, 5
        %v5721 = vsel %vm1483, %v5716, %v5720
        %v5722 = vshrl.u32 %v5535, 16
        %v5724 = vrot.slane %v5722, 4
        %v5725 = vor.u32 %v5724, %v5720
        %v5726 = vrot.slane %v5725, 4
        %v5728 = vshll.u32 %v5536, 16
        %v5730 = vrot.slane %v5728, 5
        %v5731 = vsel %vm1483, %v5726, %v5730
        %v5733 = vshrl.u32 %v5537, 16
        %v5735 = vrot.slane %v5733, 4
        %v5736 = vshll.u32 %v5537, 16
        %v5738 = vrot.slane %v5736, 5
        %v5739 = vor.u32 %v5735, %v5738
        %v5740 = vrot.slane %v5739, 4
        %v5742 = vshll.u32 %v5538, 16
        %v5744 = vrot.slane %v5742, 5
        %v5745 = vsel %vm1483, %v5740, %v5744
        %v5746 = vshrl.u32 %v5538, 16
        %v5748 = vrot.slane %v5746, 4
        %v5749 = vor.u32 %v5748, %v5744
        %v5750 = vrot.slane %v5749, 4
        %v5752 = vshll.u32 %v5539, 16
        %v5754 = vrot.slane %v5752, 5
        %v5755 = vsel %vm1483, %v5750, %v5754
        %v5757 = vshrl.u32 %v5540, 16
        %v5759 = vrot.slane %v5757, 4
        %v5760 = vshll.u32 %v5540, 16
        %v5762 = vrot.slane %v5760, 5
        %v5763 = vor.u32 %v5759, %v5762
        %v5764 = vrot.slane %v5763, 4
        %v5766 = vshll.u32 %v5541, 16
        %v5768 = vrot.slane %v5766, 5
        %v5769 = vsel %vm1483, %v5764, %v5768
        %v5770 = vshrl.u32 %v5541, 16
        %v5772 = vrot.slane %v5770, 4
        %v5773 = vor.u32 %v5772, %v5768
        %v5774 = vrot.slane %v5773, 4
        %v5776 = vshll.u32 %v5542, 16
        %v5778 = vrot.slane %v5776, 5
        %v5779 = vsel %vm1483, %v5774, %v5778
        %v5781 = vshrl.u32 %v5543, 16
        %v5783 = vrot.slane %v5781, 4
        %v5784 = vshll.u32 %v5543, 16
        %v5786 = vrot.slane %v5784, 5
        %v5787 = vor.u32 %v5783, %v5786
        %v5788 = vrot.slane %v5787, 4
        %v5790 = vshll.u32 %v5544, 16
        %v5792 = vrot.slane %v5790, 5
        %v5793 = vsel %vm1483, %v5788, %v5792
        %v5794 = vshrl.u32 %v5544, 16
        %v5796 = vrot.slane %v5794, 4
        %v5797 = vor.u32 %v5796, %v5792
        %v5798 = vrot.slane %v5797, 4
        %v5800 = vshll.u32 %v5545, 16
        %v5802 = vrot.slane %v5800, 5
        %v5803 = vsel %vm1483, %v5798, %v5802
        %v5805 = vshrl.u32 %v5546, 16
        %v5807 = vrot.slane %v5805, 4
        %v5808 = vshll.u32 %v5546, 16
        %v5810 = vrot.slane %v5808, 5
        %v5811 = vor.u32 %v5807, %v5810
        %v5812 = vrot.slane %v5811, 4
        %v5814 = vshll.u32 %v5547, 16
        %v5816 = vrot.slane %v5814, 5
        %v5817 = vsel %vm1483, %v5812, %v5816
        %v5818 = vshrl.u32 %v5547, 16
        %v5820 = vrot.slane %v5818, 4
        %v5821 = vor.u32 %v5820, %v5816
        %v5822 = vrot.slane %v5821, 4
        %v5824 = vshll.u32 %v5548, 16
        %v5826 = vrot.slane %v5824, 5
        %v5827 = vsel %vm1483, %v5822, %v5826
        %v5829 = vshrl.u32 %v5549, 16
        %v5831 = vrot.slane %v5829, 4
        %v5832 = vshll.u32 %v5549, 16
        %v5834 = vrot.slane %v5832, 5
        %v5835 = vor.u32 %v5831, %v5834
        %v5836 = vrot.slane %v5835, 4
        %v5838 = vshll.u32 %v5550, 16
        %v5840 = vrot.slane %v5838, 5
        %v5841 = vsel %vm1483, %v5836, %v5840
        %v5842 = vshrl.u32 %v5550, 16
        %v5844 = vrot.slane %v5842, 4
        %v5845 = vor.u32 %v5844, %v5840
        %v5846 = vrot.slane %v5845, 4
        %v5848 = vshll.u32 %v5551, 16
        %v5850 = vrot.slane %v5848, 5
        %v5851 = vsel %vm1483, %v5846, %v5850
        %v5853 = vshrl.u32 %v5552, 16
        %v5855 = vrot.slane %v5853, 4
        %v5856 = vshll.u32 %v5552, 16
        %v5858 = vrot.slane %v5856, 5
        %v5859 = vor.u32 %v5855, %v5858
        %v5860 = vrot.slane %v5859, 4
        %v5862 = vshll.u32 %v5553, 16
        %v5864 = vrot.slane %v5862, 5
        %v5865 = vsel %vm1483, %v5860, %v5864
        %v5866 = vshrl.u32 %v5553, 16
        %v5868 = vrot.slane %v5866, 4
        %v5869 = vor.u32 %v5868, %v5864
        %v5870 = vrot.slane %v5869, 4
        %v5872 = vshll.u32 %v5554, 16
        %v5874 = vrot.slane %v5872, 5
        %v5875 = vsel %vm1483, %v5870, %v5874
        %v5877 = vshrl.u32 %v5555, 16
        %v5879 = vrot.slane %v5877, 4
        %v5880 = vshll.u32 %v5555, 16
        %v5882 = vrot.slane %v5880, 5
        %v5883 = vor.u32 %v5879, %v5882
        %v5884 = vrot.slane %v5883, 4
        %v5886 = vshll.u32 %v5556, 16
        %v5888 = vrot.slane %v5886, 5
        %v5889 = vsel %vm1483, %v5884, %v5888
        %v5890 = vshrl.u32 %v5556, 16
        %v5892 = vrot.slane %v5890, 4
        %v5893 = vor.u32 %v5892, %v5888
        %v5894 = vrot.slane %v5893, 4
        %v5896 = vshll.u32 %v5557, 16
        %v5898 = vrot.slane %v5896, 5
        %v5899 = vsel %vm1483, %v5894, %v5898
        %v5901 = vshrl.u32 %v5558, 16
        %v5903 = vrot.slane %v5901, 4
        %v5904 = vshll.u32 %v5558, 16
        %v5906 = vrot.slane %v5904, 5
        %v5907 = vor.u32 %v5903, %v5906
        %v5908 = vrot.slane %v5907, 4
        %v5910 = vshll.u32 %v5559, 16
        %v5912 = vrot.slane %v5910, 5
        %v5913 = vsel %vm1483, %v5908, %v5912
        %v5914 = vshrl.u32 %v5559, 16
        %v5916 = vrot.slane %v5914, 4
        %v5917 = vor.u32 %v5916, %v5912
        %v5918 = vrot.slane %v5917, 4
        %v5920 = vshll.u32 %v5560, 16
        %v5922 = vrot.slane %v5920, 5
        %v5923 = vsel %vm1483, %v5918, %v5922
        %v5925 = vshrl.u32 %v5561, 16
        %v5927 = vrot.slane %v5925, 4
        %v5928 = vshll.u32 %v5561, 16
        %v5930 = vrot.slane %v5928, 5
        %v5931 = vor.u32 %v5927, %v5930
        %v5932 = vrot.slane %v5931, 4
        %v5934 = vshll.u32 %v5562, 16
        %v5936 = vrot.slane %v5934, 5
        %v5937 = vsel %vm1483, %v5932, %v5936
        %v5938 = vshrl.u32 %v5562, 16
        %v5940 = vrot.slane %v5938, 4
        %v5941 = vor.u32 %v5940, %v5936
        %v5942 = vrot.slane %v5941, 4
        %v5944 = vshll.u32 %v5563, 16
        %v5946 = vrot.slane %v5944, 5
        %v5947 = vsel %vm1483, %v5942, %v5946
        %5948 = vrot.lane.b32.xlu0 %v5577, 8
        %v5949 = vpop.permute.xlu0 %5948
        %5950 = vrot.lane.b32.xlu0 %v5587, 8
        %v5951 = vpop.permute.xlu0 %5950
        %5952 = vrot.lane.b32.xlu0 %v5601, 8
        %v5953 = vpop.permute.xlu0 %5952
        %5954 = vrot.lane.b32.xlu0 %v5611, 8
        %v5955 = vpop.permute.xlu0 %5954
        %5956 = vrot.lane.b32.xlu0 %v5625, 8
        %v5957 = vpop.permute.xlu0 %5956
        %5958 = vrot.lane.b32.xlu0 %v5635, 8
        %v5959 = vpop.permute.xlu0 %5958
        %5960 = vrot.lane.b32.xlu0 %v5649, 8
        %v5961 = vpop.permute.xlu0 %5960
        %5962 = vrot.lane.b32.xlu0 %v5659, 8
        %v5963 = vpop.permute.xlu0 %5962
        %5964 = vrot.lane.b32.xlu0 %v5673, 8
        %v5965 = vpop.permute.xlu0 %5964
        %5966 = vrot.lane.b32.xlu0 %v5683, 8
        %v5967 = vpop.permute.xlu0 %5966
        %5968 = vrot.lane.b32.xlu0 %v5697, 8
        %v5969 = vpop.permute.xlu0 %5968
        %5970 = vrot.lane.b32.xlu0 %v5707, 8
        %v5971 = vpop.permute.xlu0 %5970
        %5972 = vrot.lane.b32.xlu0 %v5721, 8
        %v5973 = vpop.permute.xlu0 %5972
        %5974 = vrot.lane.b32.xlu0 %v5731, 8
        %v5975 = vpop.permute.xlu0 %5974
        %5976 = vrot.lane.b32.xlu0 %v5745, 8
        %v5977 = vpop.permute.xlu0 %5976
        %5978 = vrot.lane.b32.xlu0 %v5755, 8
        %v5979 = vpop.permute.xlu0 %5978
        %5980 = vrot.lane.b32.xlu0 %v5769, 8
        %v5981 = vpop.permute.xlu0 %5980
        %5982 = vrot.lane.b32.xlu0 %v5779, 8
        %v5983 = vpop.permute.xlu0 %5982
        %5984 = vrot.lane.b32.xlu0 %v5793, 8
        %v5985 = vpop.permute.xlu0 %5984
        %5986 = vrot.lane.b32.xlu0 %v5803, 8
        %v5987 = vpop.permute.xlu0 %5986
        %5988 = vrot.lane.b32.xlu0 %v5817, 8
        %v5989 = vpop.permute.xlu0 %5988
        %5990 = vrot.lane.b32.xlu0 %v5827, 8
        %v5991 = vpop.permute.xlu0 %5990
        %5992 = vrot.lane.b32.xlu0 %v5841, 8
        %v5993 = vpop.permute.xlu0 %5992
        %5994 = vrot.lane.b32.xlu0 %v5851, 8
        %v5995 = vpop.permute.xlu0 %5994
        %5996 = vrot.lane.b32.xlu0 %v5865, 8
        %v5997 = vpop.permute.xlu0 %5996
        %5998 = vrot.lane.b32.xlu0 %v5875, 8
        %v5999 = vpop.permute.xlu0 %5998
        %6000 = vrot.lane.b32.xlu0 %v5889, 8
        %v6001 = vpop.permute.xlu0 %6000
        %6002 = vrot.lane.b32.xlu0 %v5899, 8
        %v6003 = vpop.permute.xlu0 %6002
        %6004 = vrot.lane.b32.xlu0 %v5913, 8
        %v6005 = vpop.permute.xlu0 %6004
        %6006 = vrot.lane.b32.xlu0 %v5923, 8
        %v6007 = vpop.permute.xlu0 %6006
        %6008 = vrot.lane.b32.xlu0 %v5937, 8
        %v6009 = vpop.permute.xlu0 %6008
        %6010 = vrot.lane.b32.xlu0 %v5947, 8
        %v6011 = vpop.permute.xlu0 %6010
        %6044 = vst.msk [vmem:[#allocation5] sm:$0xf] %vm1964, %v5949
        %6045 = vst.msk [vmem:[#allocation5 + $0x4] sm:$0xf] %vm1964, %v5951
        %6046 = vst.msk [vmem:[#allocation5 + $0x8] sm:$0xf] %vm1964, %v5953
        %6047 = vst.msk [vmem:[#allocation5 + $0xc] sm:$0xf] %vm1964, %v5955
        %6048 = vst.msk [vmem:[#allocation5 + $0x10] sm:$0xf] %vm1964, %v5957
        %6049 = vst.msk [vmem:[#allocation5 + $0x14] sm:$0xf] %vm1964, %v5959
        %6050 = vst.msk [vmem:[#allocation5 + $0x18] sm:$0xf] %vm1964, %v5961
        %6051 = vst.msk [vmem:[#allocation5 + $0x1c] sm:$0xf] %vm1964, %v5963
        %6052 = vst.msk [vmem:[#allocation5 + $0x20] sm:$0xf] %vm1964, %v5965
        %6053 = vst.msk [vmem:[#allocation5 + $0x24] sm:$0xf] %vm1964, %v5967
        %6054 = vst.msk [vmem:[#allocation5 + $0x28] sm:$0xf] %vm1964, %v5969
        %6055 = vst.msk [vmem:[#allocation5 + $0x2c] sm:$0xf] %vm1964, %v5971
        %6056 = vst.msk [vmem:[#allocation5 + $0x30] sm:$0xf] %vm1964, %v5973
        %6057 = vst.msk [vmem:[#allocation5 + $0x34] sm:$0xf] %vm1964, %v5975
        %6058 = vst.msk [vmem:[#allocation5 + $0x38] sm:$0xf] %vm1964, %v5977
        %6059 = vst.msk [vmem:[#allocation5 + $0x3c] sm:$0xf] %vm1964, %v5979
        %6060 = vst.msk [vmem:[#allocation5 + $0x40] sm:$0xf] %vm1964, %v5981
        %6061 = vst.msk [vmem:[#allocation5 + $0x44] sm:$0xf] %vm1964, %v5983
        %6062 = vst.msk [vmem:[#allocation5 + $0x48] sm:$0xf] %vm1964, %v5985
        %6063 = vst.msk [vmem:[#allocation5 + $0x4c] sm:$0xf] %vm1964, %v5987
        %6064 = vst.msk [vmem:[#allocation5 + $0x50] sm:$0xf] %vm1964, %v5989
        %6065 = vst.msk [vmem:[#allocation5 + $0x54] sm:$0xf] %vm1964, %v5991
        %6066 = vst.msk [vmem:[#allocation5 + $0x58] sm:$0xf] %vm1964, %v5993
        %6067 = vst.msk [vmem:[#allocation5 + $0x5c] sm:$0xf] %vm1964, %v5995
        %6068 = vst.msk [vmem:[#allocation5 + $0x60] sm:$0xf] %vm1964, %v5997
        %6069 = vst.msk [vmem:[#allocation5 + $0x64] sm:$0xf] %vm1964, %v5999
        %6070 = vst.msk [vmem:[#allocation5 + $0x68] sm:$0xf] %vm1964, %v6001
        %6071 = vst.msk [vmem:[#allocation5 + $0x6c] sm:$0xf] %vm1964, %v6003
        %6072 = vst.msk [vmem:[#allocation5 + $0x70] sm:$0xf] %vm1964, %v6005
        %6073 = vst.msk [vmem:[#allocation5 + $0x74] sm:$0xf] %vm1964, %v6007
        %6074 = vst.msk [vmem:[#allocation5 + $0x78] sm:$0xf] %vm1964, %v6009
        %6075 = vst.msk [vmem:[#allocation5 + $0x7c] sm:$0xf] %vm1964, %v6011
        %v6076 = vld [vmem:[#allocation3] sm:$0xe]
        %v6077 = vld [vmem:[#allocation3 + $0x4] sm:$0xf]
        %v6078 = vld [vmem:[#allocation3 + $0x8] sm:$0x1]
        %v6079 = vld [vmem:[#allocation3 + $0xc] sm:$0xe]
        %v6080 = vld [vmem:[#allocation3 + $0x10] sm:$0xf]
        %v6081 = vld [vmem:[#allocation3 + $0x14] sm:$0x1]
        %v6082 = vld [vmem:[#allocation3 + $0x18] sm:$0xe]
        %v6083 = vld [vmem:[#allocation3 + $0x1c] sm:$0xf]
        %v6084 = vld [vmem:[#allocation3 + $0x20] sm:$0x1]
        %v6085 = vld [vmem:[#allocation3 + $0x24] sm:$0xe]
        %v6086 = vld [vmem:[#allocation3 + $0x28] sm:$0xf]
        %v6087 = vld [vmem:[#allocation3 + $0x2c] sm:$0x1]
        %v6088 = vld [vmem:[#allocation3 + $0x30] sm:$0xe]
        %v6089 = vld [vmem:[#allocation3 + $0x34] sm:$0xf]
        %v6090 = vld [vmem:[#allocation3 + $0x38] sm:$0x1]
        %v6091 = vld [vmem:[#allocation3 + $0x3c] sm:$0xe]
        %v6092 = vld [vmem:[#allocation3 + $0x40] sm:$0xf]
        %v6093 = vld [vmem:[#allocation3 + $0x44] sm:$0x1]
        %v6094 = vld [vmem:[#allocation3 + $0x48] sm:$0xe]
        %v6095 = vld [vmem:[#allocation3 + $0x4c] sm:$0xf]
        %v6096 = vld [vmem:[#allocation3 + $0x50] sm:$0x1]
        %v6097 = vld [vmem:[#allocation3 + $0x54] sm:$0xe]
        %v6098 = vld [vmem:[#allocation3 + $0x58] sm:$0xf]
        %v6099 = vld [vmem:[#allocation3 + $0x5c] sm:$0x1]
        %v6100 = vld [vmem:[#allocation3 + $0x60] sm:$0xe]
        %v6101 = vld [vmem:[#allocation3 + $0x64] sm:$0xf]
        %v6102 = vld [vmem:[#allocation3 + $0x68] sm:$0x1]
        %v6103 = vld [vmem:[#allocation3 + $0x6c] sm:$0xe]
        %v6104 = vld [vmem:[#allocation3 + $0x70] sm:$0xf]
        %v6105 = vld [vmem:[#allocation3 + $0x74] sm:$0x1]
        %v6106 = vld [vmem:[#allocation3 + $0x78] sm:$0xe]
        %v6107 = vld [vmem:[#allocation3 + $0x7c] sm:$0xf]
        %v6108 = vld [vmem:[#allocation3 + $0x80] sm:$0x1]
        %v6109 = vld [vmem:[#allocation3 + $0x84] sm:$0xe]
        %v6110 = vld [vmem:[#allocation3 + $0x88] sm:$0xf]
        %v6111 = vld [vmem:[#allocation3 + $0x8c] sm:$0x1]
        %v6112 = vld [vmem:[#allocation3 + $0x90] sm:$0xe]
        %v6113 = vld [vmem:[#allocation3 + $0x94] sm:$0xf]
        %v6114 = vld [vmem:[#allocation3 + $0x98] sm:$0x1]
        %v6115 = vld [vmem:[#allocation3 + $0x9c] sm:$0xe]
        %v6116 = vld [vmem:[#allocation3 + $0xa0] sm:$0xf]
        %v6117 = vld [vmem:[#allocation3 + $0xa4] sm:$0x1]
        %v6118 = vld [vmem:[#allocation3 + $0xa8] sm:$0xe]
        %v6119 = vld [vmem:[#allocation3 + $0xac] sm:$0xf]
        %v6120 = vld [vmem:[#allocation3 + $0xb0] sm:$0x1]
        %v6121 = vld [vmem:[#allocation3 + $0xb4] sm:$0xe]
        %v6122 = vld [vmem:[#allocation3 + $0xb8] sm:$0xf]
        %v6123 = vld [vmem:[#allocation3 + $0xbc] sm:$0x1]
        %v6172 = vrot.slane %v6076, 5
        %v6173 = vrot.slane %v6172, 4
        %v6174 = vrot.slane %v6077, 5
        %v6175 = vsel %vm2095, %v6173, %v6174
        %v6176 = vrot.slane %v6174, 4
        %v6177 = vrot.slane %v6078, 5
        %v6178 = vsel %vm2095, %v6176, %v6177
        %v6179 = vrot.slane %v6079, 5
        %v6180 = vrot.slane %v6179, 4
        %v6181 = vrot.slane %v6080, 5
        %v6182 = vsel %vm2095, %v6180, %v6181
        %v6183 = vrot.slane %v6181, 4
        %v6184 = vrot.slane %v6081, 5
        %v6185 = vsel %vm2095, %v6183, %v6184
        %v6186 = vrot.slane %v6082, 5
        %v6187 = vrot.slane %v6186, 4
        %v6188 = vrot.slane %v6083, 5
        %v6189 = vsel %vm2095, %v6187, %v6188
        %v6190 = vrot.slane %v6188, 4
        %v6191 = vrot.slane %v6084, 5
        %v6192 = vsel %vm2095, %v6190, %v6191
        %v6193 = vrot.slane %v6085, 5
        %v6194 = vrot.slane %v6193, 4
        %v6195 = vrot.slane %v6086, 5
        %v6196 = vsel %vm2095, %v6194, %v6195
        %v6197 = vrot.slane %v6195, 4
        %v6198 = vrot.slane %v6087, 5
        %v6199 = vsel %vm2095, %v6197, %v6198
        %v6200 = vrot.slane %v6088, 5
        %v6201 = vrot.slane %v6200, 4
        %v6202 = vrot.slane %v6089, 5
        %v6203 = vsel %vm2095, %v6201, %v6202
        %v6204 = vrot.slane %v6202, 4
        %v6205 = vrot.slane %v6090, 5
        %v6206 = vsel %vm2095, %v6204, %v6205
        %v6207 = vrot.slane %v6091, 5
        %v6208 = vrot.slane %v6207, 4
        %v6209 = vrot.slane %v6092, 5
        %v6210 = vsel %vm2095, %v6208, %v6209
        %v6211 = vrot.slane %v6209, 4
        %v6212 = vrot.slane %v6093, 5
        %v6213 = vsel %vm2095, %v6211, %v6212
        %v6214 = vrot.slane %v6094, 5
        %v6215 = vrot.slane %v6214, 4
        %v6216 = vrot.slane %v6095, 5
        %v6217 = vsel %vm2095, %v6215, %v6216
        %v6218 = vrot.slane %v6216, 4
        %v6219 = vrot.slane %v6096, 5
        %v6220 = vsel %vm2095, %v6218, %v6219
        %v6221 = vrot.slane %v6097, 5
        %v6222 = vrot.slane %v6221, 4
        %v6223 = vrot.slane %v6098, 5
        %v6224 = vsel %vm2095, %v6222, %v6223
        %v6225 = vrot.slane %v6223, 4
        %v6226 = vrot.slane %v6099, 5
        %v6227 = vsel %vm2095, %v6225, %v6226
        %v6228 = vrot.slane %v6100, 5
        %v6229 = vrot.slane %v6228, 4
        %v6230 = vrot.slane %v6101, 5
        %v6231 = vsel %vm2095, %v6229, %v6230
        %v6232 = vrot.slane %v6230, 4
        %v6233 = vrot.slane %v6102, 5
        %v6234 = vsel %vm2095, %v6232, %v6233
        %v6235 = vrot.slane %v6103, 5
        %v6236 = vrot.slane %v6235, 4
        %v6237 = vrot.slane %v6104, 5
        %v6238 = vsel %vm2095, %v6236, %v6237
        %v6239 = vrot.slane %v6237, 4
        %v6240 = vrot.slane %v6105, 5
        %v6241 = vsel %vm2095, %v6239, %v6240
        %v6242 = vrot.slane %v6106, 5
        %v6243 = vrot.slane %v6242, 4
        %v6244 = vrot.slane %v6107, 5
        %v6245 = vsel %vm2095, %v6243, %v6244
        %v6246 = vrot.slane %v6244, 4
        %v6247 = vrot.slane %v6108, 5
        %v6248 = vsel %vm2095, %v6246, %v6247
        %v6249 = vrot.slane %v6109, 5
        %v6250 = vrot.slane %v6249, 4
        %v6251 = vrot.slane %v6110, 5
        %v6252 = vsel %vm2095, %v6250, %v6251
        %v6253 = vrot.slane %v6251, 4
        %v6254 = vrot.slane %v6111, 5
        %v6255 = vsel %vm2095, %v6253, %v6254
        %v6256 = vrot.slane %v6112, 5
        %v6257 = vrot.slane %v6256, 4
        %v6258 = vrot.slane %v6113, 5
        %v6259 = vsel %vm2095, %v6257, %v6258
        %v6260 = vrot.slane %v6258, 4
        %v6261 = vrot.slane %v6114, 5
        %v6262 = vsel %vm2095, %v6260, %v6261
        %v6263 = vrot.slane %v6115, 5
        %v6264 = vrot.slane %v6263, 4
        %v6265 = vrot.slane %v6116, 5
        %v6266 = vsel %vm2095, %v6264, %v6265
        %v6267 = vrot.slane %v6265, 4
        %v6268 = vrot.slane %v6117, 5
        %v6269 = vsel %vm2095, %v6267, %v6268
        %v6270 = vrot.slane %v6118, 5
        %v6271 = vrot.slane %v6270, 4
        %v6272 = vrot.slane %v6119, 5
        %v6273 = vsel %vm2095, %v6271, %v6272
        %v6274 = vrot.slane %v6272, 4
        %v6275 = vrot.slane %v6120, 5
        %v6276 = vsel %vm2095, %v6274, %v6275
        %v6277 = vrot.slane %v6121, 5
        %v6278 = vrot.slane %v6277, 4
        %v6279 = vrot.slane %v6122, 5
        %v6280 = vsel %vm2095, %v6278, %v6279
        %v6281 = vrot.slane %v6279, 4
        %v6282 = vrot.slane %v6123, 5
        %v6283 = vsel %vm2095, %v6281, %v6282
        %6284 = vrot.lane.b32.xlu0 %v6175, 16
        %v6285 = vpop.permute.xlu0 %6284
        %6286 = vrot.lane.b32.xlu0 %v6178, 16
        %v6287 = vpop.permute.xlu0 %6286
        %6288 = vrot.lane.b32.xlu0 %v6182, 16
        %v6289 = vpop.permute.xlu0 %6288
        %6290 = vrot.lane.b32.xlu0 %v6185, 16
        %v6291 = vpop.permute.xlu0 %6290
        %6292 = vrot.lane.b32.xlu0 %v6189, 16
        %v6293 = vpop.permute.xlu0 %6292
        %6294 = vrot.lane.b32.xlu0 %v6192, 16
        %v6295 = vpop.permute.xlu0 %6294
        %6296 = vrot.lane.b32.xlu0 %v6196, 16
        %v6297 = vpop.permute.xlu0 %6296
        %6298 = vrot.lane.b32.xlu0 %v6199, 16
        %v6299 = vpop.permute.xlu0 %6298
        %6300 = vrot.lane.b32.xlu0 %v6203, 16
        %v6301 = vpop.permute.xlu0 %6300
        %6302 = vrot.lane.b32.xlu0 %v6206, 16
        %v6303 = vpop.permute.xlu0 %6302
        %6304 = vrot.lane.b32.xlu0 %v6210, 16
        %v6305 = vpop.permute.xlu0 %6304
        %6306 = vrot.lane.b32.xlu0 %v6213, 16
        %v6307 = vpop.permute.xlu0 %6306
        %6308 = vrot.lane.b32.xlu0 %v6217, 16
        %v6309 = vpop.permute.xlu0 %6308
        %6310 = vrot.lane.b32.xlu0 %v6220, 16
        %v6311 = vpop.permute.xlu0 %6310
        %6312 = vrot.lane.b32.xlu0 %v6224, 16
        %v6313 = vpop.permute.xlu0 %6312
        %6314 = vrot.lane.b32.xlu0 %v6227, 16
        %v6315 = vpop.permute.xlu0 %6314
        %6316 = vrot.lane.b32.xlu0 %v6231, 16
        %v6317 = vpop.permute.xlu0 %6316
        %6318 = vrot.lane.b32.xlu0 %v6234, 16
        %v6319 = vpop.permute.xlu0 %6318
        %6320 = vrot.lane.b32.xlu0 %v6238, 16
        %v6321 = vpop.permute.xlu0 %6320
        %6322 = vrot.lane.b32.xlu0 %v6241, 16
        %v6323 = vpop.permute.xlu0 %6322
        %6324 = vrot.lane.b32.xlu0 %v6245, 16
        %v6325 = vpop.permute.xlu0 %6324
        %6326 = vrot.lane.b32.xlu0 %v6248, 16
        %v6327 = vpop.permute.xlu0 %6326
        %6328 = vrot.lane.b32.xlu0 %v6252, 16
        %v6329 = vpop.permute.xlu0 %6328
        %6330 = vrot.lane.b32.xlu0 %v6255, 16
        %v6331 = vpop.permute.xlu0 %6330
        %6332 = vrot.lane.b32.xlu0 %v6259, 16
        %v6333 = vpop.permute.xlu0 %6332
        %6334 = vrot.lane.b32.xlu0 %v6262, 16
        %v6335 = vpop.permute.xlu0 %6334
        %6336 = vrot.lane.b32.xlu0 %v6266, 16
        %v6337 = vpop.permute.xlu0 %6336
        %6338 = vrot.lane.b32.xlu0 %v6269, 16
        %v6339 = vpop.permute.xlu0 %6338
        %6340 = vrot.lane.b32.xlu0 %v6273, 16
        %v6341 = vpop.permute.xlu0 %6340
        %6342 = vrot.lane.b32.xlu0 %v6276, 16
        %v6343 = vpop.permute.xlu0 %6342
        %6344 = vrot.lane.b32.xlu0 %v6280, 16
        %v6345 = vpop.permute.xlu0 %6344
        %6346 = vrot.lane.b32.xlu0 %v6283, 16
        %v6347 = vpop.permute.xlu0 %6346
        %6380 = vst.msk [vmem:[#allocation5] sm:$0xf] %vm2304, %v6285
        %6381 = vst.msk [vmem:[#allocation5 + $0x4] sm:$0xf] %vm2304, %v6287
        %6382 = vst.msk [vmem:[#allocation5 + $0x8] sm:$0xf] %vm2304, %v6289
        %6383 = vst.msk [vmem:[#allocation5 + $0xc] sm:$0xf] %vm2304, %v6291
        %6384 = vst.msk [vmem:[#allocation5 + $0x10] sm:$0xf] %vm2304, %v6293
        %6385 = vst.msk [vmem:[#allocation5 + $0x14] sm:$0xf] %vm2304, %v6295
        %6386 = vst.msk [vmem:[#allocation5 + $0x18] sm:$0xf] %vm2304, %v6297
        %6387 = vst.msk [vmem:[#allocation5 + $0x1c] sm:$0xf] %vm2304, %v6299
        %6388 = vst.msk [vmem:[#allocation5 + $0x20] sm:$0xf] %vm2304, %v6301
        %6389 = vst.msk [vmem:[#allocation5 + $0x24] sm:$0xf] %vm2304, %v6303
        %6390 = vst.msk [vmem:[#allocation5 + $0x28] sm:$0xf] %vm2304, %v6305
        %6391 = vst.msk [vmem:[#allocation5 + $0x2c] sm:$0xf] %vm2304, %v6307
        %6392 = vst.msk [vmem:[#allocation5 + $0x30] sm:$0xf] %vm2304, %v6309
        %6393 = vst.msk [vmem:[#allocation5 + $0x34] sm:$0xf] %vm2304, %v6311
        %6394 = vst.msk [vmem:[#allocation5 + $0x38] sm:$0xf] %vm2304, %v6313
        %6395 = vst.msk [vmem:[#allocation5 + $0x3c] sm:$0xf] %vm2304, %v6315
        %6396 = vst.msk [vmem:[#allocation5 + $0x40] sm:$0xf] %vm2304, %v6317
        %6397 = vst.msk [vmem:[#allocation5 + $0x44] sm:$0xf] %vm2304, %v6319
        %6398 = vst.msk [vmem:[#allocation5 + $0x48] sm:$0xf] %vm2304, %v6321
        %6399 = vst.msk [vmem:[#allocation5 + $0x4c] sm:$0xf] %vm2304, %v6323
        %6400 = vst.msk [vmem:[#allocation5 + $0x50] sm:$0xf] %vm2304, %v6325
        %6401 = vst.msk [vmem:[#allocation5 + $0x54] sm:$0xf] %vm2304, %v6327
        %6402 = vst.msk [vmem:[#allocation5 + $0x58] sm:$0xf] %vm2304, %v6329
        %6403 = vst.msk [vmem:[#allocation5 + $0x5c] sm:$0xf] %vm2304, %v6331
        %6404 = vst.msk [vmem:[#allocation5 + $0x60] sm:$0xf] %vm2304, %v6333
        %6405 = vst.msk [vmem:[#allocation5 + $0x64] sm:$0xf] %vm2304, %v6335
        %6406 = vst.msk [vmem:[#allocation5 + $0x68] sm:$0xf] %vm2304, %v6337
        %6407 = vst.msk [vmem:[#allocation5 + $0x6c] sm:$0xf] %vm2304, %v6339
        %6408 = vst.msk [vmem:[#allocation5 + $0x70] sm:$0xf] %vm2304, %v6341
        %6409 = vst.msk [vmem:[#allocation5 + $0x74] sm:$0xf] %vm2304, %v6343
        %6410 = vst.msk [vmem:[#allocation5 + $0x78] sm:$0xf] %vm2304, %v6345
        %6411 = vst.msk [vmem:[#allocation5 + $0x7c] sm:$0xf] %vm2304, %v6347
        %v6412 = vld [vmem:[%s5337] sm:$0xf]
        %v6413 = vld [vmem:[%s5337 + $0x4] sm:$0xf]
        %v6414 = vld [vmem:[%s5337 + $0xc] sm:$0xf]
        %v6415 = vld [vmem:[%s5337 + $0x10] sm:$0xf]
        %v6416 = vld [vmem:[%s5337 + $0x18] sm:$0xf]
        %v6417 = vld [vmem:[%s5337 + $0x1c] sm:$0xf]
        %v6418 = vld [vmem:[%s5337 + $0x24] sm:$0xf]
        %v6419 = vld [vmem:[%s5337 + $0x28] sm:$0xf]
        %v6420 = vld [vmem:[%s5337 + $0x30] sm:$0xf]
        %v6421 = vld [vmem:[%s5337 + $0x34] sm:$0xf]
        %v6422 = vld [vmem:[%s5337 + $0x3c] sm:$0xf]
        %v6423 = vld [vmem:[%s5337 + $0x40] sm:$0xf]
        %v6424 = vld [vmem:[%s5337 + $0x48] sm:$0xf]
        %v6425 = vld [vmem:[%s5337 + $0x4c] sm:$0xf]
        %v6426 = vld [vmem:[%s5337 + $0x54] sm:$0xf]
        %v6427 = vld [vmem:[%s5337 + $0x58] sm:$0xf]
        %v6428 = vld [vmem:[%s5337 + $0x60] sm:$0xf]
        %v6429 = vld [vmem:[%s5337 + $0x64] sm:$0xf]
        %v6430 = vld [vmem:[%s5337 + $0x6c] sm:$0xf]
        %v6431 = vld [vmem:[%s5337 + $0x70] sm:$0xf]
        %v6432 = vld [vmem:[%s5337 + $0x78] sm:$0xf]
        %v6433 = vld [vmem:[%s5337 + $0x7c] sm:$0xf]
        %v6434 = vld [vmem:[%s5337 + $0x84] sm:$0xf]
        %v6435 = vld [vmem:[%s5337 + $0x88] sm:$0xf]
        %v6436 = vld [vmem:[%s5337 + $0x90] sm:$0xf]
        %v6437 = vld [vmem:[%s5337 + $0x94] sm:$0xf]
        %v6438 = vld [vmem:[%s5337 + $0x9c] sm:$0xf]
        %v6439 = vld [vmem:[%s5337 + $0xa0] sm:$0xf]
        %v6440 = vld [vmem:[%s5337 + $0xa8] sm:$0xf]
        %v6441 = vld [vmem:[%s5337 + $0xac] sm:$0xf]
        %v6442 = vld [vmem:[%s5337 + $0xb4] sm:$0xf]
        %v6443 = vld [vmem:[%s5337 + $0xb8] sm:$0xf]
        %6476 = vrot.lane.b32.xlu0 %v6412, 24
        %v6477 = vpop.permute.xlu0 %6476
        %6478 = vrot.lane.b32.xlu0 %v6413, 24
        %v6479 = vpop.permute.xlu0 %6478
        %6480 = vrot.lane.b32.xlu0 %v6414, 24
        %v6481 = vpop.permute.xlu0 %6480
        %6482 = vrot.lane.b32.xlu0 %v6415, 24
        %v6483 = vpop.permute.xlu0 %6482
        %6484 = vrot.lane.b32.xlu0 %v6416, 24
        %v6485 = vpop.permute.xlu0 %6484
        %6486 = vrot.lane.b32.xlu0 %v6417, 24
        %v6487 = vpop.permute.xlu0 %6486
        %6488 = vrot.lane.b32.xlu0 %v6418, 24
        %v6489 = vpop.permute.xlu0 %6488
        %6490 = vrot.lane.b32.xlu0 %v6419, 24
        %v6491 = vpop.permute.xlu0 %6490
        %6492 = vrot.lane.b32.xlu0 %v6420, 24
        %v6493 = vpop.permute.xlu0 %6492
        %6494 = vrot.lane.b32.xlu0 %v6421, 24
        %v6495 = vpop.permute.xlu0 %6494
        %6496 = vrot.lane.b32.xlu0 %v6422, 24
        %v6497 = vpop.permute.xlu0 %6496
        %6498 = vrot.lane.b32.xlu0 %v6423, 24
        %v6499 = vpop.permute.xlu0 %6498
        %6500 = vrot.lane.b32.xlu0 %v6424, 24
        %v6501 = vpop.permute.xlu0 %6500
        %6502 = vrot.lane.b32.xlu0 %v6425, 24
        %v6503 = vpop.permute.xlu0 %6502
        %6504 = vrot.lane.b32.xlu0 %v6426, 24
        %v6505 = vpop.permute.xlu0 %6504
        %6506 = vrot.lane.b32.xlu0 %v6427, 24
        %v6507 = vpop.permute.xlu0 %6506
        %6508 = vrot.lane.b32.xlu0 %v6428, 24
        %v6509 = vpop.permute.xlu0 %6508
        %6510 = vrot.lane.b32.xlu0 %v6429, 24
        %v6511 = vpop.permute.xlu0 %6510
        %6512 = vrot.lane.b32.xlu0 %v6430, 24
        %v6513 = vpop.permute.xlu0 %6512
        %6514 = vrot.lane.b32.xlu0 %v6431, 24
        %v6515 = vpop.permute.xlu0 %6514
        %6516 = vrot.lane.b32.xlu0 %v6432, 24
        %v6517 = vpop.permute.xlu0 %6516
        %6518 = vrot.lane.b32.xlu0 %v6433, 24
        %v6519 = vpop.permute.xlu0 %6518
        %6520 = vrot.lane.b32.xlu0 %v6434, 24
        %v6521 = vpop.permute.xlu0 %6520
        %6522 = vrot.lane.b32.xlu0 %v6435, 24
        %v6523 = vpop.permute.xlu0 %6522
        %6524 = vrot.lane.b32.xlu0 %v6436, 24
        %v6525 = vpop.permute.xlu0 %6524
        %6526 = vrot.lane.b32.xlu0 %v6437, 24
        %v6527 = vpop.permute.xlu0 %6526
        %6528 = vrot.lane.b32.xlu0 %v6438, 24
        %v6529 = vpop.permute.xlu0 %6528
        %6530 = vrot.lane.b32.xlu0 %v6439, 24
        %v6531 = vpop.permute.xlu0 %6530
        %6532 = vrot.lane.b32.xlu0 %v6440, 24
        %v6533 = vpop.permute.xlu0 %6532
        %6534 = vrot.lane.b32.xlu0 %v6441, 24
        %v6535 = vpop.permute.xlu0 %6534
        %6536 = vrot.lane.b32.xlu0 %v6442, 24
        %v6537 = vpop.permute.xlu0 %6536
        %6538 = vrot.lane.b32.xlu0 %v6443, 24
        %v6539 = vpop.permute.xlu0 %6538
        %6572 = vst.msk [vmem:[#allocation5] sm:$0xf] %vm2497, %v6477
        %6573 = vst.msk [vmem:[#allocation5 + $0x4] sm:$0xf] %vm2497, %v6479
        %6574 = vst.msk [vmem:[#allocation5 + $0x8] sm:$0xf] %vm2497, %v6481
        %6575 = vst.msk [vmem:[#allocation5 + $0xc] sm:$0xf] %vm2497, %v6483
        %6576 = vst.msk [vmem:[#allocation5 + $0x10] sm:$0xf] %vm2497, %v6485
        %6577 = vst.msk [vmem:[#allocation5 + $0x14] sm:$0xf] %vm2497, %v6487
        %6578 = vst.msk [vmem:[#allocation5 + $0x18] sm:$0xf] %vm2497, %v6489
        %6579 = vst.msk [vmem:[#allocation5 + $0x1c] sm:$0xf] %vm2497, %v6491
        %6580 = vst.msk [vmem:[#allocation5 + $0x20] sm:$0xf] %vm2497, %v6493
        %6581 = vst.msk [vmem:[#allocation5 + $0x24] sm:$0xf] %vm2497, %v6495
        %6582 = vst.msk [vmem:[#allocation5 + $0x28] sm:$0xf] %vm2497, %v6497
        %6583 = vst.msk [vmem:[#allocation5 + $0x2c] sm:$0xf] %vm2497, %v6499
        %6584 = vst.msk [vmem:[#allocation5 + $0x30] sm:$0xf] %vm2497, %v6501
        %6585 = vst.msk [vmem:[#allocation5 + $0x34] sm:$0xf] %vm2497, %v6503
        %6586 = vst.msk [vmem:[#allocation5 + $0x38] sm:$0xf] %vm2497, %v6505
        %6587 = vst.msk [vmem:[#allocation5 + $0x3c] sm:$0xf] %vm2497, %v6507
        %6588 = vst.msk [vmem:[#allocation5 + $0x40] sm:$0xf] %vm2497, %v6509
        %6589 = vst.msk [vmem:[#allocation5 + $0x44] sm:$0xf] %vm2497, %v6511
        %6590 = vst.msk [vmem:[#allocation5 + $0x48] sm:$0xf] %vm2497, %v6513
        %6591 = vst.msk [vmem:[#allocation5 + $0x4c] sm:$0xf] %vm2497, %v6515
        %6592 = vst.msk [vmem:[#allocation5 + $0x50] sm:$0xf] %vm2497, %v6517
        %6593 = vst.msk [vmem:[#allocation5 + $0x54] sm:$0xf] %vm2497, %v6519
        %6594 = vst.msk [vmem:[#allocation5 + $0x58] sm:$0xf] %vm2497, %v6521
        %6595 = vst.msk [vmem:[#allocation5 + $0x5c] sm:$0xf] %vm2497, %v6523
        %6596 = vst.msk [vmem:[#allocation5 + $0x60] sm:$0xf] %vm2497, %v6525
        %6597 = vst.msk [vmem:[#allocation5 + $0x64] sm:$0xf] %vm2497, %v6527
        %6598 = vst.msk [vmem:[#allocation5 + $0x68] sm:$0xf] %vm2497, %v6529
        %6599 = vst.msk [vmem:[#allocation5 + $0x6c] sm:$0xf] %vm2497, %v6531
        %6600 = vst.msk [vmem:[#allocation5 + $0x70] sm:$0xf] %vm2497, %v6533
        %6601 = vst.msk [vmem:[#allocation5 + $0x74] sm:$0xf] %vm2497, %v6535
        %6602 = vst.msk [vmem:[#allocation5 + $0x78] sm:$0xf] %vm2497, %v6537
        %6603 = vst.msk [vmem:[#allocation5 + $0x7c] sm:$0xf] %vm2497, %v6539
        %v6604 = vld [vmem:[%s5337] sm:$0xf]
        %v6605 = vld [vmem:[%s5337 + $0x4] sm:$0xf]
        %v6606 = vld [vmem:[%s5337 + $0x8] sm:$0x1]
        %v6607 = vld [vmem:[%s5337 + $0xc] sm:$0xf]
        %v6608 = vld [vmem:[%s5337 + $0x10] sm:$0xf]
        %v6609 = vld [vmem:[%s5337 + $0x14] sm:$0x1]
        %v6610 = vld [vmem:[%s5337 + $0x18] sm:$0xf]
        %v6611 = vld [vmem:[%s5337 + $0x1c] sm:$0xf]
        %v6612 = vld [vmem:[%s5337 + $0x20] sm:$0x1]
        %v6613 = vld [vmem:[%s5337 + $0x24] sm:$0xf]
        %v6614 = vld [vmem:[%s5337 + $0x28] sm:$0xf]
        %v6615 = vld [vmem:[%s5337 + $0x2c] sm:$0x1]
        %v6616 = vld [vmem:[%s5337 + $0x30] sm:$0xf]
        %v6617 = vld [vmem:[%s5337 + $0x34] sm:$0xf]
        %v6618 = vld [vmem:[%s5337 + $0x38] sm:$0x1]
        %v6619 = vld [vmem:[%s5337 + $0x3c] sm:$0xf]
        %v6620 = vld [vmem:[%s5337 + $0x40] sm:$0xf]
        %v6621 = vld [vmem:[%s5337 + $0x44] sm:$0x1]
        %v6622 = vld [vmem:[%s5337 + $0x48] sm:$0xf]
        %v6623 = vld [vmem:[%s5337 + $0x4c] sm:$0xf]
        %v6624 = vld [vmem:[%s5337 + $0x50] sm:$0x1]
        %v6625 = vld [vmem:[%s5337 + $0x54] sm:$0xf]
        %v6626 = vld [vmem:[%s5337 + $0x58] sm:$0xf]
        %v6627 = vld [vmem:[%s5337 + $0x5c] sm:$0x1]
        %v6628 = vld [vmem:[%s5337 + $0x60] sm:$0xf]
        %v6629 = vld [vmem:[%s5337 + $0x64] sm:$0xf]
        %v6630 = vld [vmem:[%s5337 + $0x68] sm:$0x1]
        %v6631 = vld [vmem:[%s5337 + $0x6c] sm:$0xf]
        %v6632 = vld [vmem:[%s5337 + $0x70] sm:$0xf]
        %v6633 = vld [vmem:[%s5337 + $0x74] sm:$0x1]
        %v6634 = vld [vmem:[%s5337 + $0x78] sm:$0xf]
        %v6635 = vld [vmem:[%s5337 + $0x7c] sm:$0xf]
        %v6636 = vld [vmem:[%s5337 + $0x80] sm:$0x1]
        %v6637 = vld [vmem:[%s5337 + $0x84] sm:$0xf]
        %v6638 = vld [vmem:[%s5337 + $0x88] sm:$0xf]
        %v6639 = vld [vmem:[%s5337 + $0x8c] sm:$0x1]
        %v6640 = vld [vmem:[%s5337 + $0x90] sm:$0xf]
        %v6641 = vld [vmem:[%s5337 + $0x94] sm:$0xf]
        %v6642 = vld [vmem:[%s5337 + $0x98] sm:$0x1]
        %v6643 = vld [vmem:[%s5337 + $0x9c] sm:$0xf]
        %v6644 = vld [vmem:[%s5337 + $0xa0] sm:$0xf]
        %v6645 = vld [vmem:[%s5337 + $0xa4] sm:$0x1]
        %v6646 = vld [vmem:[%s5337 + $0xa8] sm:$0xf]
        %v6647 = vld [vmem:[%s5337 + $0xac] sm:$0xf]
        %v6648 = vld [vmem:[%s5337 + $0xb0] sm:$0x1]
        %v6649 = vld [vmem:[%s5337 + $0xb4] sm:$0xf]
        %v6650 = vld [vmem:[%s5337 + $0xb8] sm:$0xf]
        %v6651 = vld [vmem:[%s5337 + $0xbc] sm:$0x1]
        %v6653 = vshrl.u32 %v6604, 16
        %v6655 = vrot.slane %v6653, 4
        %v6656 = vshll.u32 %v6604, 16
        %v6658 = vrot.slane %v6656, 5
        %v6659 = vor.u32 %v6655, %v6658
        %v6660 = vrot.slane %v6659, 4
        %v6662 = vshll.u32 %v6605, 16
        %v6664 = vrot.slane %v6662, 5
        %v6665 = vsel %vm1483, %v6660, %v6664
        %v6666 = vshrl.u32 %v6605, 16
        %v6668 = vrot.slane %v6666, 4
        %v6669 = vor.u32 %v6668, %v6664
        %v6670 = vrot.slane %v6669, 4
        %v6672 = vshll.u32 %v6606, 16
        %v6674 = vrot.slane %v6672, 5
        %v6675 = vsel %vm1483, %v6670, %v6674
        %v6677 = vshrl.u32 %v6607, 16
        %v6679 = vrot.slane %v6677, 4
        %v6680 = vshll.u32 %v6607, 16
        %v6682 = vrot.slane %v6680, 5
        %v6683 = vor.u32 %v6679, %v6682
        %v6684 = vrot.slane %v6683, 4
        %v6686 = vshll.u32 %v6608, 16
        %v6688 = vrot.slane %v6686, 5
        %v6689 = vsel %vm1483, %v6684, %v6688
        %v6690 = vshrl.u32 %v6608, 16
        %v6692 = vrot.slane %v6690, 4
        %v6693 = vor.u32 %v6692, %v6688
        %v6694 = vrot.slane %v6693, 4
        %v6696 = vshll.u32 %v6609, 16
        %v6698 = vrot.slane %v6696, 5
        %v6699 = vsel %vm1483, %v6694, %v6698
        %v6701 = vshrl.u32 %v6610, 16
        %v6703 = vrot.slane %v6701, 4
        %v6704 = vshll.u32 %v6610, 16
        %v6706 = vrot.slane %v6704, 5
        %v6707 = vor.u32 %v6703, %v6706
        %v6708 = vrot.slane %v6707, 4
        %v6710 = vshll.u32 %v6611, 16
        %v6712 = vrot.slane %v6710, 5
        %v6713 = vsel %vm1483, %v6708, %v6712
        %v6714 = vshrl.u32 %v6611, 16
        %v6716 = vrot.slane %v6714, 4
        %v6717 = vor.u32 %v6716, %v6712
        %v6718 = vrot.slane %v6717, 4
        %v6720 = vshll.u32 %v6612, 16
        %v6722 = vrot.slane %v6720, 5
        %v6723 = vsel %vm1483, %v6718, %v6722
        %v6725 = vshrl.u32 %v6613, 16
        %v6727 = vrot.slane %v6725, 4
        %v6728 = vshll.u32 %v6613, 16
        %v6730 = vrot.slane %v6728, 5
        %v6731 = vor.u32 %v6727, %v6730
        %v6732 = vrot.slane %v6731, 4
        %v6734 = vshll.u32 %v6614, 16
        %v6736 = vrot.slane %v6734, 5
        %v6737 = vsel %vm1483, %v6732, %v6736
        %v6738 = vshrl.u32 %v6614, 16
        %v6740 = vrot.slane %v6738, 4
        %v6741 = vor.u32 %v6740, %v6736
        %v6742 = vrot.slane %v6741, 4
        %v6744 = vshll.u32 %v6615, 16
        %v6746 = vrot.slane %v6744, 5
        %v6747 = vsel %vm1483, %v6742, %v6746
        %v6749 = vshrl.u32 %v6616, 16
        %v6751 = vrot.slane %v6749, 4
        %v6752 = vshll.u32 %v6616, 16
        %v6754 = vrot.slane %v6752, 5
        %v6755 = vor.u32 %v6751, %v6754
        %v6756 = vrot.slane %v6755, 4
        %v6758 = vshll.u32 %v6617, 16
        %v6760 = vrot.slane %v6758, 5
        %v6761 = vsel %vm1483, %v6756, %v6760
        %v6762 = vshrl.u32 %v6617, 16
        %v6764 = vrot.slane %v6762, 4
        %v6765 = vor.u32 %v6764, %v6760
        %v6766 = vrot.slane %v6765, 4
        %v6768 = vshll.u32 %v6618, 16
        %v6770 = vrot.slane %v6768, 5
        %v6771 = vsel %vm1483, %v6766, %v6770
        %v6773 = vshrl.u32 %v6619, 16
        %v6775 = vrot.slane %v6773, 4
        %v6776 = vshll.u32 %v6619, 16
        %v6778 = vrot.slane %v6776, 5
        %v6779 = vor.u32 %v6775, %v6778
        %v6780 = vrot.slane %v6779, 4
        %v6782 = vshll.u32 %v6620, 16
        %v6784 = vrot.slane %v6782, 5
        %v6785 = vsel %vm1483, %v6780, %v6784
        %v6786 = vshrl.u32 %v6620, 16
        %v6788 = vrot.slane %v6786, 4
        %v6789 = vor.u32 %v6788, %v6784
        %v6790 = vrot.slane %v6789, 4
        %v6792 = vshll.u32 %v6621, 16
        %v6794 = vrot.slane %v6792, 5
        %v6795 = vsel %vm1483, %v6790, %v6794
        %v6797 = vshrl.u32 %v6622, 16
        %v6799 = vrot.slane %v6797, 4
        %v6800 = vshll.u32 %v6622, 16
        %v6802 = vrot.slane %v6800, 5
        %v6803 = vor.u32 %v6799, %v6802
        %v6804 = vrot.slane %v6803, 4
        %v6806 = vshll.u32 %v6623, 16
        %v6808 = vrot.slane %v6806, 5
        %v6809 = vsel %vm1483, %v6804, %v6808
        %v6810 = vshrl.u32 %v6623, 16
        %v6812 = vrot.slane %v6810, 4
        %v6813 = vor.u32 %v6812, %v6808
        %v6814 = vrot.slane %v6813, 4
        %v6816 = vshll.u32 %v6624, 16
        %v6818 = vrot.slane %v6816, 5
        %v6819 = vsel %vm1483, %v6814, %v6818
        %v6821 = vshrl.u32 %v6625, 16
        %v6823 = vrot.slane %v6821, 4
        %v6824 = vshll.u32 %v6625, 16
        %v6826 = vrot.slane %v6824, 5
        %v6827 = vor.u32 %v6823, %v6826
        %v6828 = vrot.slane %v6827, 4
        %v6830 = vshll.u32 %v6626, 16
        %v6832 = vrot.slane %v6830, 5
        %v6833 = vsel %vm1483, %v6828, %v6832
        %v6834 = vshrl.u32 %v6626, 16
        %v6836 = vrot.slane %v6834, 4
        %v6837 = vor.u32 %v6836, %v6832
        %v6838 = vrot.slane %v6837, 4
        %v6840 = vshll.u32 %v6627, 16
        %v6842 = vrot.slane %v6840, 5
        %v6843 = vsel %vm1483, %v6838, %v6842
        %v6845 = vshrl.u32 %v6628, 16
        %v6847 = vrot.slane %v6845, 4
        %v6848 = vshll.u32 %v6628, 16
        %v6850 = vrot.slane %v6848, 5
        %v6851 = vor.u32 %v6847, %v6850
        %v6852 = vrot.slane %v6851, 4
        %v6854 = vshll.u32 %v6629, 16
        %v6856 = vrot.slane %v6854, 5
        %v6857 = vsel %vm1483, %v6852, %v6856
        %v6858 = vshrl.u32 %v6629, 16
        %v6860 = vrot.slane %v6858, 4
        %v6861 = vor.u32 %v6860, %v6856
        %v6862 = vrot.slane %v6861, 4
        %v6864 = vshll.u32 %v6630, 16
        %v6866 = vrot.slane %v6864, 5
        %v6867 = vsel %vm1483, %v6862, %v6866
        %v6869 = vshrl.u32 %v6631, 16
        %v6871 = vrot.slane %v6869, 4
        %v6872 = vshll.u32 %v6631, 16
        %v6874 = vrot.slane %v6872, 5
        %v6875 = vor.u32 %v6871, %v6874
        %v6876 = vrot.slane %v6875, 4
        %v6878 = vshll.u32 %v6632, 16
        %v6880 = vrot.slane %v6878, 5
        %v6881 = vsel %vm1483, %v6876, %v6880
        %v6882 = vshrl.u32 %v6632, 16
        %v6884 = vrot.slane %v6882, 4
        %v6885 = vor.u32 %v6884, %v6880
        %v6886 = vrot.slane %v6885, 4
        %v6888 = vshll.u32 %v6633, 16
        %v6890 = vrot.slane %v6888, 5
        %v6891 = vsel %vm1483, %v6886, %v6890
        %v6893 = vshrl.u32 %v6634, 16
        %v6895 = vrot.slane %v6893, 4
        %v6896 = vshll.u32 %v6634, 16
        %v6898 = vrot.slane %v6896, 5
        %v6899 = vor.u32 %v6895, %v6898
        %v6900 = vrot.slane %v6899, 4
        %v6902 = vshll.u32 %v6635, 16
        %v6904 = vrot.slane %v6902, 5
        %v6905 = vsel %vm1483, %v6900, %v6904
        %v6906 = vshrl.u32 %v6635, 16
        %v6908 = vrot.slane %v6906, 4
        %v6909 = vor.u32 %v6908, %v6904
        %v6910 = vrot.slane %v6909, 4
        %v6912 = vshll.u32 %v6636, 16
        %v6914 = vrot.slane %v6912, 5
        %v6915 = vsel %vm1483, %v6910, %v6914
        %v6917 = vshrl.u32 %v6637, 16
        %v6919 = vrot.slane %v6917, 4
        %v6920 = vshll.u32 %v6637, 16
        %v6922 = vrot.slane %v6920, 5
        %v6923 = vor.u32 %v6919, %v6922
        %v6924 = vrot.slane %v6923, 4
        %v6926 = vshll.u32 %v6638, 16
        %v6928 = vrot.slane %v6926, 5
        %v6929 = vsel %vm1483, %v6924, %v6928
        %v6930 = vshrl.u32 %v6638, 16
        %v6932 = vrot.slane %v6930, 4
        %v6933 = vor.u32 %v6932, %v6928
        %v6934 = vrot.slane %v6933, 4
        %v6936 = vshll.u32 %v6639, 16
        %v6938 = vrot.slane %v6936, 5
        %v6939 = vsel %vm1483, %v6934, %v6938
        %v6941 = vshrl.u32 %v6640, 16
        %v6943 = vrot.slane %v6941, 4
        %v6944 = vshll.u32 %v6640, 16
        %v6946 = vrot.slane %v6944, 5
        %v6947 = vor.u32 %v6943, %v6946
        %v6948 = vrot.slane %v6947, 4
        %v6950 = vshll.u32 %v6641, 16
        %v6952 = vrot.slane %v6950, 5
        %v6953 = vsel %vm1483, %v6948, %v6952
        %v6954 = vshrl.u32 %v6641, 16
        %v6956 = vrot.slane %v6954, 4
        %v6957 = vor.u32 %v6956, %v6952
        %v6958 = vrot.slane %v6957, 4
        %v6960 = vshll.u32 %v6642, 16
        %v6962 = vrot.slane %v6960, 5
        %v6963 = vsel %vm1483, %v6958, %v6962
        %v6965 = vshrl.u32 %v6643, 16
        %v6967 = vrot.slane %v6965, 4
        %v6968 = vshll.u32 %v6643, 16
        %v6970 = vrot.slane %v6968, 5
        %v6971 = vor.u32 %v6967, %v6970
        %v6972 = vrot.slane %v6971, 4
        %v6974 = vshll.u32 %v6644, 16
        %v6976 = vrot.slane %v6974, 5
        %v6977 = vsel %vm1483, %v6972, %v6976
        %v6978 = vshrl.u32 %v6644, 16
        %v6980 = vrot.slane %v6978, 4
        %v6981 = vor.u32 %v6980, %v6976
        %v6982 = vrot.slane %v6981, 4
        %v6984 = vshll.u32 %v6645, 16
        %v6986 = vrot.slane %v6984, 5
        %v6987 = vsel %vm1483, %v6982, %v6986
        %v6989 = vshrl.u32 %v6646, 16
        %v6991 = vrot.slane %v6989, 4
        %v6992 = vshll.u32 %v6646, 16
        %v6994 = vrot.slane %v6992, 5
        %v6995 = vor.u32 %v6991, %v6994
        %v6996 = vrot.slane %v6995, 4
        %v6998 = vshll.u32 %v6647, 16
        %v7000 = vrot.slane %v6998, 5
        %v7001 = vsel %vm1483, %v6996, %v7000
        %v7002 = vshrl.u32 %v6647, 16
        %v7004 = vrot.slane %v7002, 4
        %v7005 = vor.u32 %v7004, %v7000
        %v7006 = vrot.slane %v7005, 4
        %v7008 = vshll.u32 %v6648, 16
        %v7010 = vrot.slane %v7008, 5
        %v7011 = vsel %vm1483, %v7006, %v7010
        %v7013 = vshrl.u32 %v6649, 16
        %v7015 = vrot.slane %v7013, 4
        %v7016 = vshll.u32 %v6649, 16
        %v7018 = vrot.slane %v7016, 5
        %v7019 = vor.u32 %v7015, %v7018
        %v7020 = vrot.slane %v7019, 4
        %v7022 = vshll.u32 %v6650, 16
        %v7024 = vrot.slane %v7022, 5
        %v7025 = vsel %vm1483, %v7020, %v7024
        %v7026 = vshrl.u32 %v6650, 16
        %v7028 = vrot.slane %v7026, 4
        %v7029 = vor.u32 %v7028, %v7024
        %v7030 = vrot.slane %v7029, 4
        %v7032 = vshll.u32 %v6651, 16
        %v7034 = vrot.slane %v7032, 5
        %v7035 = vsel %vm1483, %v7030, %v7034
        %7036 = vrot.lane.b32.xlu0 %v6665, 32
        %v7037 = vpop.permute.xlu0 %7036
        %7038 = vrot.lane.b32.xlu0 %v6675, 32
        %v7039 = vpop.permute.xlu0 %7038
        %7040 = vrot.lane.b32.xlu0 %v6689, 32
        %v7041 = vpop.permute.xlu0 %7040
        %7042 = vrot.lane.b32.xlu0 %v6699, 32
        %v7043 = vpop.permute.xlu0 %7042
        %7044 = vrot.lane.b32.xlu0 %v6713, 32
        %v7045 = vpop.permute.xlu0 %7044
        %7046 = vrot.lane.b32.xlu0 %v6723, 32
        %v7047 = vpop.permute.xlu0 %7046
        %7048 = vrot.lane.b32.xlu0 %v6737, 32
        %v7049 = vpop.permute.xlu0 %7048
        %7050 = vrot.lane.b32.xlu0 %v6747, 32
        %v7051 = vpop.permute.xlu0 %7050
        %7052 = vrot.lane.b32.xlu0 %v6761, 32
        %v7053 = vpop.permute.xlu0 %7052
        %7054 = vrot.lane.b32.xlu0 %v6771, 32
        %v7055 = vpop.permute.xlu0 %7054
        %7056 = vrot.lane.b32.xlu0 %v6785, 32
        %v7057 = vpop.permute.xlu0 %7056
        %7058 = vrot.lane.b32.xlu0 %v6795, 32
        %v7059 = vpop.permute.xlu0 %7058
        %7060 = vrot.lane.b32.xlu0 %v6809, 32
        %v7061 = vpop.permute.xlu0 %7060
        %7062 = vrot.lane.b32.xlu0 %v6819, 32
        %v7063 = vpop.permute.xlu0 %7062
        %7064 = vrot.lane.b32.xlu0 %v6833, 32
        %v7065 = vpop.permute.xlu0 %7064
        %7066 = vrot.lane.b32.xlu0 %v6843, 32
        %v7067 = vpop.permute.xlu0 %7066
        %7068 = vrot.lane.b32.xlu0 %v6857, 32
        %v7069 = vpop.permute.xlu0 %7068
        %7070 = vrot.lane.b32.xlu0 %v6867, 32
        %v7071 = vpop.permute.xlu0 %7070
        %7072 = vrot.lane.b32.xlu0 %v6881, 32
        %v7073 = vpop.permute.xlu0 %7072
        %7074 = vrot.lane.b32.xlu0 %v6891, 32
        %v7075 = vpop.permute.xlu0 %7074
        %7076 = vrot.lane.b32.xlu0 %v6905, 32
        %v7077 = vpop.permute.xlu0 %7076
        %7078 = vrot.lane.b32.xlu0 %v6915, 32
        %v7079 = vpop.permute.xlu0 %7078
        %7080 = vrot.lane.b32.xlu0 %v6929, 32
        %v7081 = vpop.permute.xlu0 %7080
        %7082 = vrot.lane.b32.xlu0 %v6939, 32
        %v7083 = vpop.permute.xlu0 %7082
        %7084 = vrot.lane.b32.xlu0 %v6953, 32
        %v7085 = vpop.permute.xlu0 %7084
        %7086 = vrot.lane.b32.xlu0 %v6963, 32
        %v7087 = vpop.permute.xlu0 %7086
        %7088 = vrot.lane.b32.xlu0 %v6977, 32
        %v7089 = vpop.permute.xlu0 %7088
        %7090 = vrot.lane.b32.xlu0 %v6987, 32
        %v7091 = vpop.permute.xlu0 %7090
        %7092 = vrot.lane.b32.xlu0 %v7001, 32
        %v7093 = vpop.permute.xlu0 %7092
        %7094 = vrot.lane.b32.xlu0 %v7011, 32
        %v7095 = vpop.permute.xlu0 %7094
        %7096 = vrot.lane.b32.xlu0 %v7025, 32
        %v7097 = vpop.permute.xlu0 %7096
        %7098 = vrot.lane.b32.xlu0 %v7035, 32
        %v7099 = vpop.permute.xlu0 %7098
        %7132 = vst.msk [vmem:[#allocation5] sm:$0xf] %vm3058, %v7037
        %7133 = vst.msk [vmem:[#allocation5 + $0x4] sm:$0xf] %vm3058, %v7039
        %7134 = vst.msk [vmem:[#allocation5 + $0x8] sm:$0xf] %vm3058, %v7041
        %7135 = vst.msk [vmem:[#allocation5 + $0xc] sm:$0xf] %vm3058, %v7043
        %7136 = vst.msk [vmem:[#allocation5 + $0x10] sm:$0xf] %vm3058, %v7045
        %7137 = vst.msk [vmem:[#allocation5 + $0x14] sm:$0xf] %vm3058, %v7047
        %7138 = vst.msk [vmem:[#allocation5 + $0x18] sm:$0xf] %vm3058, %v7049
        %7139 = vst.msk [vmem:[#allocation5 + $0x1c] sm:$0xf] %vm3058, %v7051
        %7140 = vst.msk [vmem:[#allocation5 + $0x20] sm:$0xf] %vm3058, %v7053
        %7141 = vst.msk [vmem:[#allocation5 + $0x24] sm:$0xf] %vm3058, %v7055
        %7142 = vst.msk [vmem:[#allocation5 + $0x28] sm:$0xf] %vm3058, %v7057
        %7143 = vst.msk [vmem:[#allocation5 + $0x2c] sm:$0xf] %vm3058, %v7059
        %7144 = vst.msk [vmem:[#allocation5 + $0x30] sm:$0xf] %vm3058, %v7061
        %7145 = vst.msk [vmem:[#allocation5 + $0x34] sm:$0xf] %vm3058, %v7063
        %7146 = vst.msk [vmem:[#allocation5 + $0x38] sm:$0xf] %vm3058, %v7065
        %7147 = vst.msk [vmem:[#allocation5 + $0x3c] sm:$0xf] %vm3058, %v7067
        %7148 = vst.msk [vmem:[#allocation5 + $0x40] sm:$0xf] %vm3058, %v7069
        %7149 = vst.msk [vmem:[#allocation5 + $0x44] sm:$0xf] %vm3058, %v7071
        %7150 = vst.msk [vmem:[#allocation5 + $0x48] sm:$0xf] %vm3058, %v7073
        %7151 = vst.msk [vmem:[#allocation5 + $0x4c] sm:$0xf] %vm3058, %v7075
        %7152 = vst.msk [vmem:[#allocation5 + $0x50] sm:$0xf] %vm3058, %v7077
        %7153 = vst.msk [vmem:[#allocation5 + $0x54] sm:$0xf] %vm3058, %v7079
        %7154 = vst.msk [vmem:[#allocation5 + $0x58] sm:$0xf] %vm3058, %v7081
        %7155 = vst.msk [vmem:[#allocation5 + $0x5c] sm:$0xf] %vm3058, %v7083
        %7156 = vst.msk [vmem:[#allocation5 + $0x60] sm:$0xf] %vm3058, %v7085
        %7157 = vst.msk [vmem:[#allocation5 + $0x64] sm:$0xf] %vm3058, %v7087
        %7158 = vst.msk [vmem:[#allocation5 + $0x68] sm:$0xf] %vm3058, %v7089
        %7159 = vst.msk [vmem:[#allocation5 + $0x6c] sm:$0xf] %vm3058, %v7091
        %7160 = vst.msk [vmem:[#allocation5 + $0x70] sm:$0xf] %vm3058, %v7093
        %7161 = vst.msk [vmem:[#allocation5 + $0x74] sm:$0xf] %vm3058, %v7095
        %7162 = vst.msk [vmem:[#allocation5 + $0x78] sm:$0xf] %vm3058, %v7097
        %7163 = vst.msk [vmem:[#allocation5 + $0x7c] sm:$0xf] %vm3058, %v7099
        %v7164 = vld [vmem:[%s5337] sm:$0xe]
        %v7165 = vld [vmem:[%s5337 + $0x4] sm:$0xf]
        %v7166 = vld [vmem:[%s5337 + $0x8] sm:$0x1]
        %v7167 = vld [vmem:[%s5337 + $0xc] sm:$0xe]
        %v7168 = vld [vmem:[%s5337 + $0x10] sm:$0xf]
        %v7169 = vld [vmem:[%s5337 + $0x14] sm:$0x1]
        %v7170 = vld [vmem:[%s5337 + $0x18] sm:$0xe]
        %v7171 = vld [vmem:[%s5337 + $0x1c] sm:$0xf]
        %v7172 = vld [vmem:[%s5337 + $0x20] sm:$0x1]
        %v7173 = vld [vmem:[%s5337 + $0x24] sm:$0xe]
        %v7174 = vld [vmem:[%s5337 + $0x28] sm:$0xf]
        %v7175 = vld [vmem:[%s5337 + $0x2c] sm:$0x1]
        %v7176 = vld [vmem:[%s5337 + $0x30] sm:$0xe]
        %v7177 = vld [vmem:[%s5337 + $0x34] sm:$0xf]
        %v7178 = vld [vmem:[%s5337 + $0x38] sm:$0x1]
        %v7179 = vld [vmem:[%s5337 + $0x3c] sm:$0xe]
        %v7180 = vld [vmem:[%s5337 + $0x40] sm:$0xf]
        %v7181 = vld [vmem:[%s5337 + $0x44] sm:$0x1]
        %v7182 = vld [vmem:[%s5337 + $0x48] sm:$0xe]
        %v7183 = vld [vmem:[%s5337 + $0x4c] sm:$0xf]
        %v7184 = vld [vmem:[%s5337 + $0x50] sm:$0x1]
        %v7185 = vld [vmem:[%s5337 + $0x54] sm:$0xe]
        %v7186 = vld [vmem:[%s5337 + $0x58] sm:$0xf]
        %v7187 = vld [vmem:[%s5337 + $0x5c] sm:$0x1]
        %v7188 = vld [vmem:[%s5337 + $0x60] sm:$0xe]
        %v7189 = vld [vmem:[%s5337 + $0x64] sm:$0xf]
        %v7190 = vld [vmem:[%s5337 + $0x68] sm:$0x1]
        %v7191 = vld [vmem:[%s5337 + $0x6c] sm:$0xe]
        %v7192 = vld [vmem:[%s5337 + $0x70] sm:$0xf]
        %v7193 = vld [vmem:[%s5337 + $0x74] sm:$0x1]
        %v7194 = vld [vmem:[%s5337 + $0x78] sm:$0xe]
        %v7195 = vld [vmem:[%s5337 + $0x7c] sm:$0xf]
        %v7196 = vld [vmem:[%s5337 + $0x80] sm:$0x1]
        %v7197 = vld [vmem:[%s5337 + $0x84] sm:$0xe]
        %v7198 = vld [vmem:[%s5337 + $0x88] sm:$0xf]
        %v7199 = vld [vmem:[%s5337 + $0x8c] sm:$0x1]
        %v7200 = vld [vmem:[%s5337 + $0x90] sm:$0xe]
        %v7201 = vld [vmem:[%s5337 + $0x94] sm:$0xf]
        %v7202 = vld [vmem:[%s5337 + $0x98] sm:$0x1]
        %v7203 = vld [vmem:[%s5337 + $0x9c] sm:$0xe]
        %v7204 = vld [vmem:[%s5337 + $0xa0] sm:$0xf]
        %v7205 = vld [vmem:[%s5337 + $0xa4] sm:$0x1]
        %v7206 = vld [vmem:[%s5337 + $0xa8] sm:$0xe]
        %v7207 = vld [vmem:[%s5337 + $0xac] sm:$0xf]
        %v7208 = vld [vmem:[%s5337 + $0xb0] sm:$0x1]
        %v7209 = vld [vmem:[%s5337 + $0xb4] sm:$0xe]
        %v7210 = vld [vmem:[%s5337 + $0xb8] sm:$0xf]
        %v7211 = vld [vmem:[%s5337 + $0xbc] sm:$0x1]
        %v7260 = vrot.slane %v7164, 5
        %v7261 = vrot.slane %v7260, 4
        %v7262 = vrot.slane %v7165, 5
        %v7263 = vsel %vm2095, %v7261, %v7262
        %v7264 = vrot.slane %v7262, 4
        %v7265 = vrot.slane %v7166, 5
        %v7266 = vsel %vm2095, %v7264, %v7265
        %v7267 = vrot.slane %v7167, 5
        %v7268 = vrot.slane %v7267, 4
        %v7269 = vrot.slane %v7168, 5
        %v7270 = vsel %vm2095, %v7268, %v7269
        %v7271 = vrot.slane %v7269, 4
        %v7272 = vrot.slane %v7169, 5
        %v7273 = vsel %vm2095, %v7271, %v7272
        %v7274 = vrot.slane %v7170, 5
        %v7275 = vrot.slane %v7274, 4
        %v7276 = vrot.slane %v7171, 5
        %v7277 = vsel %vm2095, %v7275, %v7276
        %v7278 = vrot.slane %v7276, 4
        %v7279 = vrot.slane %v7172, 5
        %v7280 = vsel %vm2095, %v7278, %v7279
        %v7281 = vrot.slane %v7173, 5
        %v7282 = vrot.slane %v7281, 4
        %v7283 = vrot.slane %v7174, 5
        %v7284 = vsel %vm2095, %v7282, %v7283
        %v7285 = vrot.slane %v7283, 4
        %v7286 = vrot.slane %v7175, 5
        %v7287 = vsel %vm2095, %v7285, %v7286
        %v7288 = vrot.slane %v7176, 5
        %v7289 = vrot.slane %v7288, 4
        %v7290 = vrot.slane %v7177, 5
        %v7291 = vsel %vm2095, %v7289, %v7290
        %v7292 = vrot.slane %v7290, 4
        %v7293 = vrot.slane %v7178, 5
        %v7294 = vsel %vm2095, %v7292, %v7293
        %v7295 = vrot.slane %v7179, 5
        %v7296 = vrot.slane %v7295, 4
        %v7297 = vrot.slane %v7180, 5
        %v7298 = vsel %vm2095, %v7296, %v7297
        %v7299 = vrot.slane %v7297, 4
        %v7300 = vrot.slane %v7181, 5
        %v7301 = vsel %vm2095, %v7299, %v7300
        %v7302 = vrot.slane %v7182, 5
        %v7303 = vrot.slane %v7302, 4
        %v7304 = vrot.slane %v7183, 5
        %v7305 = vsel %vm2095, %v7303, %v7304
        %v7306 = vrot.slane %v7304, 4
        %v7307 = vrot.slane %v7184, 5
        %v7308 = vsel %vm2095, %v7306, %v7307
        %v7309 = vrot.slane %v7185, 5
        %v7310 = vrot.slane %v7309, 4
        %v7311 = vrot.slane %v7186, 5
        %v7312 = vsel %vm2095, %v7310, %v7311
        %v7313 = vrot.slane %v7311, 4
        %v7314 = vrot.slane %v7187, 5
        %v7315 = vsel %vm2095, %v7313, %v7314
        %v7316 = vrot.slane %v7188, 5
        %v7317 = vrot.slane %v7316, 4
        %v7318 = vrot.slane %v7189, 5
        %v7319 = vsel %vm2095, %v7317, %v7318
        %v7320 = vrot.slane %v7318, 4
        %v7321 = vrot.slane %v7190, 5
        %v7322 = vsel %vm2095, %v7320, %v7321
        %v7323 = vrot.slane %v7191, 5
        %v7324 = vrot.slane %v7323, 4
        %v7325 = vrot.slane %v7192, 5
        %v7326 = vsel %vm2095, %v7324, %v7325
        %v7327 = vrot.slane %v7325, 4
        %v7328 = vrot.slane %v7193, 5
        %v7329 = vsel %vm2095, %v7327, %v7328
        %v7330 = vrot.slane %v7194, 5
        %v7331 = vrot.slane %v7330, 4
        %v7332 = vrot.slane %v7195, 5
        %v7333 = vsel %vm2095, %v7331, %v7332
        %v7334 = vrot.slane %v7332, 4
        %v7335 = vrot.slane %v7196, 5
        %v7336 = vsel %vm2095, %v7334, %v7335
        %v7337 = vrot.slane %v7197, 5
        %v7338 = vrot.slane %v7337, 4
        %v7339 = vrot.slane %v7198, 5
        %v7340 = vsel %vm2095, %v7338, %v7339
        %v7341 = vrot.slane %v7339, 4
        %v7342 = vrot.slane %v7199, 5
        %v7343 = vsel %vm2095, %v7341, %v7342
        %v7344 = vrot.slane %v7200, 5
        %v7345 = vrot.slane %v7344, 4
        %v7346 = vrot.slane %v7201, 5
        %v7347 = vsel %vm2095, %v7345, %v7346
        %v7348 = vrot.slane %v7346, 4
        %v7349 = vrot.slane %v7202, 5
        %v7350 = vsel %vm2095, %v7348, %v7349
        %v7351 = vrot.slane %v7203, 5
        %v7352 = vrot.slane %v7351, 4
        %v7353 = vrot.slane %v7204, 5
        %v7354 = vsel %vm2095, %v7352, %v7353
        %v7355 = vrot.slane %v7353, 4
        %v7356 = vrot.slane %v7205, 5
        %v7357 = vsel %vm2095, %v7355, %v7356
        %v7358 = vrot.slane %v7206, 5
        %v7359 = vrot.slane %v7358, 4
        %v7360 = vrot.slane %v7207, 5
        %v7361 = vsel %vm2095, %v7359, %v7360
        %v7362 = vrot.slane %v7360, 4
        %v7363 = vrot.slane %v7208, 5
        %v7364 = vsel %vm2095, %v7362, %v7363
        %v7365 = vrot.slane %v7209, 5
        %v7366 = vrot.slane %v7365, 4
        %v7367 = vrot.slane %v7210, 5
        %v7368 = vsel %vm2095, %v7366, %v7367
        %v7369 = vrot.slane %v7367, 4
        %v7370 = vrot.slane %v7211, 5
        %v7371 = vsel %vm2095, %v7369, %v7370
        %7372 = vrot.lane.b32.xlu0 %v7263, 40
        %v7373 = vpop.permute.xlu0 %7372
        %7374 = vrot.lane.b32.xlu0 %v7266, 40
        %v7375 = vpop.permute.xlu0 %7374
        %7376 = vrot.lane.b32.xlu0 %v7270, 40
        %v7377 = vpop.permute.xlu0 %7376
        %7378 = vrot.lane.b32.xlu0 %v7273, 40
        %v7379 = vpop.permute.xlu0 %7378
        %7380 = vrot.lane.b32.xlu0 %v7277, 40
        %v7381 = vpop.permute.xlu0 %7380
        %7382 = vrot.lane.b32.xlu0 %v7280, 40
        %v7383 = vpop.permute.xlu0 %7382
        %7384 = vrot.lane.b32.xlu0 %v7284, 40
        %v7385 = vpop.permute.xlu0 %7384
        %7386 = vrot.lane.b32.xlu0 %v7287, 40
        %v7387 = vpop.permute.xlu0 %7386
        %7388 = vrot.lane.b32.xlu0 %v7291, 40
        %v7389 = vpop.permute.xlu0 %7388
        %7390 = vrot.lane.b32.xlu0 %v7294, 40
        %v7391 = vpop.permute.xlu0 %7390
        %7392 = vrot.lane.b32.xlu0 %v7298, 40
        %v7393 = vpop.permute.xlu0 %7392
        %7394 = vrot.lane.b32.xlu0 %v7301, 40
        %v7395 = vpop.permute.xlu0 %7394
        %7396 = vrot.lane.b32.xlu0 %v7305, 40
        %v7397 = vpop.permute.xlu0 %7396
        %7398 = vrot.lane.b32.xlu0 %v7308, 40
        %v7399 = vpop.permute.xlu0 %7398
        %7400 = vrot.lane.b32.xlu0 %v7312, 40
        %v7401 = vpop.permute.xlu0 %7400
        %7402 = vrot.lane.b32.xlu0 %v7315, 40
        %v7403 = vpop.permute.xlu0 %7402
        %7404 = vrot.lane.b32.xlu0 %v7319, 40
        %v7405 = vpop.permute.xlu0 %7404
        %7406 = vrot.lane.b32.xlu0 %v7322, 40
        %v7407 = vpop.permute.xlu0 %7406
        %7408 = vrot.lane.b32.xlu0 %v7326, 40
        %v7409 = vpop.permute.xlu0 %7408
        %7410 = vrot.lane.b32.xlu0 %v7329, 40
        %v7411 = vpop.permute.xlu0 %7410
        %7412 = vrot.lane.b32.xlu0 %v7333, 40
        %v7413 = vpop.permute.xlu0 %7412
        %7414 = vrot.lane.b32.xlu0 %v7336, 40
        %v7415 = vpop.permute.xlu0 %7414
        %7416 = vrot.lane.b32.xlu0 %v7340, 40
        %v7417 = vpop.permute.xlu0 %7416
        %7418 = vrot.lane.b32.xlu0 %v7343, 40
        %v7419 = vpop.permute.xlu0 %7418
        %7420 = vrot.lane.b32.xlu0 %v7347, 40
        %v7421 = vpop.permute.xlu0 %7420
        %7422 = vrot.lane.b32.xlu0 %v7350, 40
        %v7423 = vpop.permute.xlu0 %7422
        %7424 = vrot.lane.b32.xlu0 %v7354, 40
        %v7425 = vpop.permute.xlu0 %7424
        %7426 = vrot.lane.b32.xlu0 %v7357, 40
        %v7427 = vpop.permute.xlu0 %7426
        %7428 = vrot.lane.b32.xlu0 %v7361, 40
        %v7429 = vpop.permute.xlu0 %7428
        %7430 = vrot.lane.b32.xlu0 %v7364, 40
        %v7431 = vpop.permute.xlu0 %7430
        %7432 = vrot.lane.b32.xlu0 %v7368, 40
        %v7433 = vpop.permute.xlu0 %7432
        %7434 = vrot.lane.b32.xlu0 %v7371, 40
        %v7435 = vpop.permute.xlu0 %7434
        %7468 = vst.msk [vmem:[#allocation5] sm:$0xf] %vm3395, %v7373
        %7469 = vst.msk [vmem:[#allocation5 + $0x4] sm:$0xf] %vm3395, %v7375
        %7470 = vst.msk [vmem:[#allocation5 + $0x8] sm:$0xf] %vm3395, %v7377
        %7471 = vst.msk [vmem:[#allocation5 + $0xc] sm:$0xf] %vm3395, %v7379
        %7472 = vst.msk [vmem:[#allocation5 + $0x10] sm:$0xf] %vm3395, %v7381
        %7473 = vst.msk [vmem:[#allocation5 + $0x14] sm:$0xf] %vm3395, %v7383
        %7474 = vst.msk [vmem:[#allocation5 + $0x18] sm:$0xf] %vm3395, %v7385
        %7475 = vst.msk [vmem:[#allocation5 + $0x1c] sm:$0xf] %vm3395, %v7387
        %7476 = vst.msk [vmem:[#allocation5 + $0x20] sm:$0xf] %vm3395, %v7389
        %7477 = vst.msk [vmem:[#allocation5 + $0x24] sm:$0xf] %vm3395, %v7391
        %7478 = vst.msk [vmem:[#allocation5 + $0x28] sm:$0xf] %vm3395, %v7393
        %7479 = vst.msk [vmem:[#allocation5 + $0x2c] sm:$0xf] %vm3395, %v7395
        %7480 = vst.msk [vmem:[#allocation5 + $0x30] sm:$0xf] %vm3395, %v7397
        %7481 = vst.msk [vmem:[#allocation5 + $0x34] sm:$0xf] %vm3395, %v7399
        %7482 = vst.msk [vmem:[#allocation5 + $0x38] sm:$0xf] %vm3395, %v7401
        %7483 = vst.msk [vmem:[#allocation5 + $0x3c] sm:$0xf] %vm3395, %v7403
        %7484 = vst.msk [vmem:[#allocation5 + $0x40] sm:$0xf] %vm3395, %v7405
        %7485 = vst.msk [vmem:[#allocation5 + $0x44] sm:$0xf] %vm3395, %v7407
        %7486 = vst.msk [vmem:[#allocation5 + $0x48] sm:$0xf] %vm3395, %v7409
        %7487 = vst.msk [vmem:[#allocation5 + $0x4c] sm:$0xf] %vm3395, %v7411
        %7488 = vst.msk [vmem:[#allocation5 + $0x50] sm:$0xf] %vm3395, %v7413
        %7489 = vst.msk [vmem:[#allocation5 + $0x54] sm:$0xf] %vm3395, %v7415
        %7490 = vst.msk [vmem:[#allocation5 + $0x58] sm:$0xf] %vm3395, %v7417
        %7491 = vst.msk [vmem:[#allocation5 + $0x5c] sm:$0xf] %vm3395, %v7419
        %7492 = vst.msk [vmem:[#allocation5 + $0x60] sm:$0xf] %vm3395, %v7421
        %7493 = vst.msk [vmem:[#allocation5 + $0x64] sm:$0xf] %vm3395, %v7423
        %7494 = vst.msk [vmem:[#allocation5 + $0x68] sm:$0xf] %vm3395, %v7425
        %7495 = vst.msk [vmem:[#allocation5 + $0x6c] sm:$0xf] %vm3395, %v7427
        %7496 = vst.msk [vmem:[#allocation5 + $0x70] sm:$0xf] %vm3395, %v7429
        %7497 = vst.msk [vmem:[#allocation5 + $0x74] sm:$0xf] %vm3395, %v7431
        %7498 = vst.msk [vmem:[#allocation5 + $0x78] sm:$0xf] %vm3395, %v7433
        %7499 = vst.msk [vmem:[#allocation5 + $0x7c] sm:$0xf] %vm3395, %v7435
        %s7500 = scalar_lea.vmem [#allocation3], 24
        %v7501 = vld [vmem:[%s7500] sm:$0xf]
        %v7502 = vld [vmem:[%s7500 + $0x4] sm:$0xf]
        %v7503 = vld [vmem:[%s7500 + $0xc] sm:$0xf]
        %v7504 = vld [vmem:[%s7500 + $0x10] sm:$0xf]
        %v7505 = vld [vmem:[%s7500 + $0x18] sm:$0xf]
        %v7506 = vld [vmem:[%s7500 + $0x1c] sm:$0xf]
        %v7507 = vld [vmem:[%s7500 + $0x24] sm:$0xf]
        %v7508 = vld [vmem:[%s7500 + $0x28] sm:$0xf]
        %v7509 = vld [vmem:[%s7500 + $0x30] sm:$0xf]
        %v7510 = vld [vmem:[%s7500 + $0x34] sm:$0xf]
        %v7511 = vld [vmem:[%s7500 + $0x3c] sm:$0xf]
        %v7512 = vld [vmem:[%s7500 + $0x40] sm:$0xf]
        %v7513 = vld [vmem:[%s7500 + $0x48] sm:$0xf]
        %v7514 = vld [vmem:[%s7500 + $0x4c] sm:$0xf]
        %v7515 = vld [vmem:[%s7500 + $0x54] sm:$0xf]
        %v7516 = vld [vmem:[%s7500 + $0x58] sm:$0xf]
        %v7517 = vld [vmem:[%s7500 + $0x60] sm:$0xf]
        %v7518 = vld [vmem:[%s7500 + $0x64] sm:$0xf]
        %v7519 = vld [vmem:[%s7500 + $0x6c] sm:$0xf]
        %v7520 = vld [vmem:[%s7500 + $0x70] sm:$0xf]
        %v7521 = vld [vmem:[%s7500 + $0x78] sm:$0xf]
        %v7522 = vld [vmem:[%s7500 + $0x7c] sm:$0xf]
        %v7523 = vld [vmem:[%s7500 + $0x84] sm:$0xf]
        %v7524 = vld [vmem:[%s7500 + $0x88] sm:$0xf]
        %v7525 = vld [vmem:[%s7500 + $0x90] sm:$0xf]
        %v7526 = vld [vmem:[%s7500 + $0x94] sm:$0xf]
        %v7527 = vld [vmem:[%s7500 + $0x9c] sm:$0xf]
        %v7528 = vld [vmem:[%s7500 + $0xa0] sm:$0xf]
        %v7529 = vld [vmem:[%s7500 + $0xa8] sm:$0xf]
        %v7530 = vld [vmem:[%s7500 + $0xac] sm:$0xf]
        %v7531 = vld [vmem:[%s7500 + $0xb4] sm:$0xf]
        %v7532 = vld [vmem:[%s7500 + $0xb8] sm:$0xf]
        %7565 = vrot.lane.b32.xlu0 %v7501, 48
        %v7566 = vpop.permute.xlu0 %7565
        %7567 = vrot.lane.b32.xlu0 %v7502, 48
        %v7568 = vpop.permute.xlu0 %7567
        %7569 = vrot.lane.b32.xlu0 %v7503, 48
        %v7570 = vpop.permute.xlu0 %7569
        %7571 = vrot.lane.b32.xlu0 %v7504, 48
        %v7572 = vpop.permute.xlu0 %7571
        %7573 = vrot.lane.b32.xlu0 %v7505, 48
        %v7574 = vpop.permute.xlu0 %7573
        %7575 = vrot.lane.b32.xlu0 %v7506, 48
        %v7576 = vpop.permute.xlu0 %7575
        %7577 = vrot.lane.b32.xlu0 %v7507, 48
        %v7578 = vpop.permute.xlu0 %7577
        %7579 = vrot.lane.b32.xlu0 %v7508, 48
        %v7580 = vpop.permute.xlu0 %7579
        %7581 = vrot.lane.b32.xlu0 %v7509, 48
        %v7582 = vpop.permute.xlu0 %7581
        %7583 = vrot.lane.b32.xlu0 %v7510, 48
        %v7584 = vpop.permute.xlu0 %7583
        %7585 = vrot.lane.b32.xlu0 %v7511, 48
        %v7586 = vpop.permute.xlu0 %7585
        %7587 = vrot.lane.b32.xlu0 %v7512, 48
        %v7588 = vpop.permute.xlu0 %7587
        %7589 = vrot.lane.b32.xlu0 %v7513, 48
        %v7590 = vpop.permute.xlu0 %7589
        %7591 = vrot.lane.b32.xlu0 %v7514, 48
        %v7592 = vpop.permute.xlu0 %7591
        %7593 = vrot.lane.b32.xlu0 %v7515, 48
        %v7594 = vpop.permute.xlu0 %7593
        %7595 = vrot.lane.b32.xlu0 %v7516, 48
        %v7596 = vpop.permute.xlu0 %7595
        %7597 = vrot.lane.b32.xlu0 %v7517, 48
        %v7598 = vpop.permute.xlu0 %7597
        %7599 = vrot.lane.b32.xlu0 %v7518, 48
        %v7600 = vpop.permute.xlu0 %7599
        %7601 = vrot.lane.b32.xlu0 %v7519, 48
        %v7602 = vpop.permute.xlu0 %7601
        %7603 = vrot.lane.b32.xlu0 %v7520, 48
        %v7604 = vpop.permute.xlu0 %7603
        %7605 = vrot.lane.b32.xlu0 %v7521, 48
        %v7606 = vpop.permute.xlu0 %7605
        %7607 = vrot.lane.b32.xlu0 %v7522, 48
        %v7608 = vpop.permute.xlu0 %7607
        %7609 = vrot.lane.b32.xlu0 %v7523, 48
        %v7610 = vpop.permute.xlu0 %7609
        %7611 = vrot.lane.b32.xlu0 %v7524, 48
        %v7612 = vpop.permute.xlu0 %7611
        %7613 = vrot.lane.b32.xlu0 %v7525, 48
        %v7614 = vpop.permute.xlu0 %7613
        %7615 = vrot.lane.b32.xlu0 %v7526, 48
        %v7616 = vpop.permute.xlu0 %7615
        %7617 = vrot.lane.b32.xlu0 %v7527, 48
        %v7618 = vpop.permute.xlu0 %7617
        %7619 = vrot.lane.b32.xlu0 %v7528, 48
        %v7620 = vpop.permute.xlu0 %7619
        %7621 = vrot.lane.b32.xlu0 %v7529, 48
        %v7622 = vpop.permute.xlu0 %7621
        %7623 = vrot.lane.b32.xlu0 %v7530, 48
        %v7624 = vpop.permute.xlu0 %7623
        %7625 = vrot.lane.b32.xlu0 %v7531, 48
        %v7626 = vpop.permute.xlu0 %7625
        %7627 = vrot.lane.b32.xlu0 %v7532, 48
        %v7628 = vpop.permute.xlu0 %7627
        %7661 = vst.msk [vmem:[#allocation5] sm:$0xf] %vm3589, %v7566
        %7662 = vst.msk [vmem:[#allocation5 + $0x4] sm:$0xf] %vm3589, %v7568
        %7663 = vst.msk [vmem:[#allocation5 + $0x8] sm:$0xf] %vm3589, %v7570
        %7664 = vst.msk [vmem:[#allocation5 + $0xc] sm:$0xf] %vm3589, %v7572
        %7665 = vst.msk [vmem:[#allocation5 + $0x10] sm:$0xf] %vm3589, %v7574
        %7666 = vst.msk [vmem:[#allocation5 + $0x14] sm:$0xf] %vm3589, %v7576
        %7667 = vst.msk [vmem:[#allocation5 + $0x18] sm:$0xf] %vm3589, %v7578
        %7668 = vst.msk [vmem:[#allocation5 + $0x1c] sm:$0xf] %vm3589, %v7580
        %7669 = vst.msk [vmem:[#allocation5 + $0x20] sm:$0xf] %vm3589, %v7582
        %7670 = vst.msk [vmem:[#allocation5 + $0x24] sm:$0xf] %vm3589, %v7584
        %7671 = vst.msk [vmem:[#allocation5 + $0x28] sm:$0xf] %vm3589, %v7586
        %7672 = vst.msk [vmem:[#allocation5 + $0x2c] sm:$0xf] %vm3589, %v7588
        %7673 = vst.msk [vmem:[#allocation5 + $0x30] sm:$0xf] %vm3589, %v7590
        %7674 = vst.msk [vmem:[#allocation5 + $0x34] sm:$0xf] %vm3589, %v7592
        %7675 = vst.msk [vmem:[#allocation5 + $0x38] sm:$0xf] %vm3589, %v7594
        %7676 = vst.msk [vmem:[#allocation5 + $0x3c] sm:$0xf] %vm3589, %v7596
        %7677 = vst.msk [vmem:[#allocation5 + $0x40] sm:$0xf] %vm3589, %v7598
        %7678 = vst.msk [vmem:[#allocation5 + $0x44] sm:$0xf] %vm3589, %v7600
        %7679 = vst.msk [vmem:[#allocation5 + $0x48] sm:$0xf] %vm3589, %v7602
        %7680 = vst.msk [vmem:[#allocation5 + $0x4c] sm:$0xf] %vm3589, %v7604
        %7681 = vst.msk [vmem:[#allocation5 + $0x50] sm:$0xf] %vm3589, %v7606
        %7682 = vst.msk [vmem:[#allocation5 + $0x54] sm:$0xf] %vm3589, %v7608
        %7683 = vst.msk [vmem:[#allocation5 + $0x58] sm:$0xf] %vm3589, %v7610
        %7684 = vst.msk [vmem:[#allocation5 + $0x5c] sm:$0xf] %vm3589, %v7612
        %7685 = vst.msk [vmem:[#allocation5 + $0x60] sm:$0xf] %vm3589, %v7614
        %7686 = vst.msk [vmem:[#allocation5 + $0x64] sm:$0xf] %vm3589, %v7616
        %7687 = vst.msk [vmem:[#allocation5 + $0x68] sm:$0xf] %vm3589, %v7618
        %7688 = vst.msk [vmem:[#allocation5 + $0x6c] sm:$0xf] %vm3589, %v7620
        %7689 = vst.msk [vmem:[#allocation5 + $0x70] sm:$0xf] %vm3589, %v7622
        %7690 = vst.msk [vmem:[#allocation5 + $0x74] sm:$0xf] %vm3589, %v7624
        %7691 = vst.msk [vmem:[#allocation5 + $0x78] sm:$0xf] %vm3589, %v7626
        %7692 = vst.msk [vmem:[#allocation5 + $0x7c] sm:$0xf] %vm3589, %v7628
        %v7693 = vld [vmem:[%s7500] sm:$0xf]
        %v7694 = vld [vmem:[%s7500 + $0x4] sm:$0xf]
        %v7695 = vld [vmem:[%s7500 + $0x8] sm:$0x1]
        %v7696 = vld [vmem:[%s7500 + $0xc] sm:$0xf]
        %v7697 = vld [vmem:[%s7500 + $0x10] sm:$0xf]
        %v7698 = vld [vmem:[%s7500 + $0x14] sm:$0x1]
        %v7699 = vld [vmem:[%s7500 + $0x18] sm:$0xf]
        %v7700 = vld [vmem:[%s7500 + $0x1c] sm:$0xf]
        %v7701 = vld [vmem:[%s7500 + $0x20] sm:$0x1]
        %v7702 = vld [vmem:[%s7500 + $0x24] sm:$0xf]
        %v7703 = vld [vmem:[%s7500 + $0x28] sm:$0xf]
        %v7704 = vld [vmem:[%s7500 + $0x2c] sm:$0x1]
        %v7705 = vld [vmem:[%s7500 + $0x30] sm:$0xf]
        %v7706 = vld [vmem:[%s7500 + $0x34] sm:$0xf]
        %v7707 = vld [vmem:[%s7500 + $0x38] sm:$0x1]
        %v7708 = vld [vmem:[%s7500 + $0x3c] sm:$0xf]
        %v7709 = vld [vmem:[%s7500 + $0x40] sm:$0xf]
        %v7710 = vld [vmem:[%s7500 + $0x44] sm:$0x1]
        %v7711 = vld [vmem:[%s7500 + $0x48] sm:$0xf]
        %v7712 = vld [vmem:[%s7500 + $0x4c] sm:$0xf]
        %v7713 = vld [vmem:[%s7500 + $0x50] sm:$0x1]
        %v7714 = vld [vmem:[%s7500 + $0x54] sm:$0xf]
        %v7715 = vld [vmem:[%s7500 + $0x58] sm:$0xf]
        %v7716 = vld [vmem:[%s7500 + $0x5c] sm:$0x1]
        %v7717 = vld [vmem:[%s7500 + $0x60] sm:$0xf]
        %v7718 = vld [vmem:[%s7500 + $0x64] sm:$0xf]
        %v7719 = vld [vmem:[%s7500 + $0x68] sm:$0x1]
        %v7720 = vld [vmem:[%s7500 + $0x6c] sm:$0xf]
        %v7721 = vld [vmem:[%s7500 + $0x70] sm:$0xf]
        %v7722 = vld [vmem:[%s7500 + $0x74] sm:$0x1]
        %v7723 = vld [vmem:[%s7500 + $0x78] sm:$0xf]
        %v7724 = vld [vmem:[%s7500 + $0x7c] sm:$0xf]
        %v7725 = vld [vmem:[%s7500 + $0x80] sm:$0x1]
        %v7726 = vld [vmem:[%s7500 + $0x84] sm:$0xf]
        %v7727 = vld [vmem:[%s7500 + $0x88] sm:$0xf]
        %v7728 = vld [vmem:[%s7500 + $0x8c] sm:$0x1]
        %v7729 = vld [vmem:[%s7500 + $0x90] sm:$0xf]
        %v7730 = vld [vmem:[%s7500 + $0x94] sm:$0xf]
        %v7731 = vld [vmem:[%s7500 + $0x98] sm:$0x1]
        %v7732 = vld [vmem:[%s7500 + $0x9c] sm:$0xf]
        %v7733 = vld [vmem:[%s7500 + $0xa0] sm:$0xf]
        %v7734 = vld [vmem:[%s7500 + $0xa4] sm:$0x1]
        %v7735 = vld [vmem:[%s7500 + $0xa8] sm:$0xf]
        %v7736 = vld [vmem:[%s7500 + $0xac] sm:$0xf]
        %v7737 = vld [vmem:[%s7500 + $0xb0] sm:$0x1]
        %v7738 = vld [vmem:[%s7500 + $0xb4] sm:$0xf]
        %v7739 = vld [vmem:[%s7500 + $0xb8] sm:$0xf]
        %v7740 = vld [vmem:[%s7500 + $0xbc] sm:$0x1]
        %v7742 = vshrl.u32 %v7693, 16
        %v7744 = vrot.slane %v7742, 4
        %v7745 = vshll.u32 %v7693, 16
        %v7747 = vrot.slane %v7745, 5
        %v7748 = vor.u32 %v7744, %v7747
        %v7749 = vrot.slane %v7748, 4
        %v7751 = vshll.u32 %v7694, 16
        %v7753 = vrot.slane %v7751, 5
        %v7754 = vsel %vm1483, %v7749, %v7753
        %v7755 = vshrl.u32 %v7694, 16
        %v7757 = vrot.slane %v7755, 4
        %v7758 = vor.u32 %v7757, %v7753
        %v7759 = vrot.slane %v7758, 4
        %v7761 = vshll.u32 %v7695, 16
        %v7763 = vrot.slane %v7761, 5
        %v7764 = vsel %vm1483, %v7759, %v7763
        %v7766 = vshrl.u32 %v7696, 16
        %v7768 = vrot.slane %v7766, 4
        %v7769 = vshll.u32 %v7696, 16
        %v7771 = vrot.slane %v7769, 5
        %v7772 = vor.u32 %v7768, %v7771
        %v7773 = vrot.slane %v7772, 4
        %v7775 = vshll.u32 %v7697, 16
        %v7777 = vrot.slane %v7775, 5
        %v7778 = vsel %vm1483, %v7773, %v7777
        %v7779 = vshrl.u32 %v7697, 16
        %v7781 = vrot.slane %v7779, 4
        %v7782 = vor.u32 %v7781, %v7777
        %v7783 = vrot.slane %v7782, 4
        %v7785 = vshll.u32 %v7698, 16
        %v7787 = vrot.slane %v7785, 5
        %v7788 = vsel %vm1483, %v7783, %v7787
        %v7790 = vshrl.u32 %v7699, 16
        %v7792 = vrot.slane %v7790, 4
        %v7793 = vshll.u32 %v7699, 16
        %v7795 = vrot.slane %v7793, 5
        %v7796 = vor.u32 %v7792, %v7795
        %v7797 = vrot.slane %v7796, 4
        %v7799 = vshll.u32 %v7700, 16
        %v7801 = vrot.slane %v7799, 5
        %v7802 = vsel %vm1483, %v7797, %v7801
        %v7803 = vshrl.u32 %v7700, 16
        %v7805 = vrot.slane %v7803, 4
        %v7806 = vor.u32 %v7805, %v7801
        %v7807 = vrot.slane %v7806, 4
        %v7809 = vshll.u32 %v7701, 16
        %v7811 = vrot.slane %v7809, 5
        %v7812 = vsel %vm1483, %v7807, %v7811
        %v7814 = vshrl.u32 %v7702, 16
        %v7816 = vrot.slane %v7814, 4
        %v7817 = vshll.u32 %v7702, 16
        %v7819 = vrot.slane %v7817, 5
        %v7820 = vor.u32 %v7816, %v7819
        %v7821 = vrot.slane %v7820, 4
        %v7823 = vshll.u32 %v7703, 16
        %v7825 = vrot.slane %v7823, 5
        %v7826 = vsel %vm1483, %v7821, %v7825
        %v7827 = vshrl.u32 %v7703, 16
        %v7829 = vrot.slane %v7827, 4
        %v7830 = vor.u32 %v7829, %v7825
        %v7831 = vrot.slane %v7830, 4
        %v7833 = vshll.u32 %v7704, 16
        %v7835 = vrot.slane %v7833, 5
        %v7836 = vsel %vm1483, %v7831, %v7835
        %v7838 = vshrl.u32 %v7705, 16
        %v7840 = vrot.slane %v7838, 4
        %v7841 = vshll.u32 %v7705, 16
        %v7843 = vrot.slane %v7841, 5
        %v7844 = vor.u32 %v7840, %v7843
        %v7845 = vrot.slane %v7844, 4
        %v7847 = vshll.u32 %v7706, 16
        %v7849 = vrot.slane %v7847, 5
        %v7850 = vsel %vm1483, %v7845, %v7849
        %v7851 = vshrl.u32 %v7706, 16
        %v7853 = vrot.slane %v7851, 4
        %v7854 = vor.u32 %v7853, %v7849
        %v7855 = vrot.slane %v7854, 4
        %v7857 = vshll.u32 %v7707, 16
        %v7859 = vrot.slane %v7857, 5
        %v7860 = vsel %vm1483, %v7855, %v7859
        %v7862 = vshrl.u32 %v7708, 16
        %v7864 = vrot.slane %v7862, 4
        %v7865 = vshll.u32 %v7708, 16
        %v7867 = vrot.slane %v7865, 5
        %v7868 = vor.u32 %v7864, %v7867
        %v7869 = vrot.slane %v7868, 4
        %v7871 = vshll.u32 %v7709, 16
        %v7873 = vrot.slane %v7871, 5
        %v7874 = vsel %vm1483, %v7869, %v7873
        %v7875 = vshrl.u32 %v7709, 16
        %v7877 = vrot.slane %v7875, 4
        %v7878 = vor.u32 %v7877, %v7873
        %v7879 = vrot.slane %v7878, 4
        %v7881 = vshll.u32 %v7710, 16
        %v7883 = vrot.slane %v7881, 5
        %v7884 = vsel %vm1483, %v7879, %v7883
        %v7886 = vshrl.u32 %v7711, 16
        %v7888 = vrot.slane %v7886, 4
        %v7889 = vshll.u32 %v7711, 16
        %v7891 = vrot.slane %v7889, 5
        %v7892 = vor.u32 %v7888, %v7891
        %v7893 = vrot.slane %v7892, 4
        %v7895 = vshll.u32 %v7712, 16
        %v7897 = vrot.slane %v7895, 5
        %v7898 = vsel %vm1483, %v7893, %v7897
        %v7899 = vshrl.u32 %v7712, 16
        %v7901 = vrot.slane %v7899, 4
        %v7902 = vor.u32 %v7901, %v7897
        %v7903 = vrot.slane %v7902, 4
        %v7905 = vshll.u32 %v7713, 16
        %v7907 = vrot.slane %v7905, 5
        %v7908 = vsel %vm1483, %v7903, %v7907
        %v7910 = vshrl.u32 %v7714, 16
        %v7912 = vrot.slane %v7910, 4
        %v7913 = vshll.u32 %v7714, 16
        %v7915 = vrot.slane %v7913, 5
        %v7916 = vor.u32 %v7912, %v7915
        %v7917 = vrot.slane %v7916, 4
        %v7919 = vshll.u32 %v7715, 16
        %v7921 = vrot.slane %v7919, 5
        %v7922 = vsel %vm1483, %v7917, %v7921
        %v7923 = vshrl.u32 %v7715, 16
        %v7925 = vrot.slane %v7923, 4
        %v7926 = vor.u32 %v7925, %v7921
        %v7927 = vrot.slane %v7926, 4
        %v7929 = vshll.u32 %v7716, 16
        %v7931 = vrot.slane %v7929, 5
        %v7932 = vsel %vm1483, %v7927, %v7931
        %v7934 = vshrl.u32 %v7717, 16
        %v7936 = vrot.slane %v7934, 4
        %v7937 = vshll.u32 %v7717, 16
        %v7939 = vrot.slane %v7937, 5
        %v7940 = vor.u32 %v7936, %v7939
        %v7941 = vrot.slane %v7940, 4
        %v7943 = vshll.u32 %v7718, 16
        %v7945 = vrot.slane %v7943, 5
        %v7946 = vsel %vm1483, %v7941, %v7945
        %v7947 = vshrl.u32 %v7718, 16
        %v7949 = vrot.slane %v7947, 4
        %v7950 = vor.u32 %v7949, %v7945
        %v7951 = vrot.slane %v7950, 4
        %v7953 = vshll.u32 %v7719, 16
        %v7955 = vrot.slane %v7953, 5
        %v7956 = vsel %vm1483, %v7951, %v7955
        %v7958 = vshrl.u32 %v7720, 16
        %v7960 = vrot.slane %v7958, 4
        %v7961 = vshll.u32 %v7720, 16
        %v7963 = vrot.slane %v7961, 5
        %v7964 = vor.u32 %v7960, %v7963
        %v7965 = vrot.slane %v7964, 4
        %v7967 = vshll.u32 %v7721, 16
        %v7969 = vrot.slane %v7967, 5
        %v7970 = vsel %vm1483, %v7965, %v7969
        %v7971 = vshrl.u32 %v7721, 16
        %v7973 = vrot.slane %v7971, 4
        %v7974 = vor.u32 %v7973, %v7969
        %v7975 = vrot.slane %v7974, 4
        %v7977 = vshll.u32 %v7722, 16
        %v7979 = vrot.slane %v7977, 5
        %v7980 = vsel %vm1483, %v7975, %v7979
        %v7982 = vshrl.u32 %v7723, 16
        %v7984 = vrot.slane %v7982, 4
        %v7985 = vshll.u32 %v7723, 16
        %v7987 = vrot.slane %v7985, 5
        %v7988 = vor.u32 %v7984, %v7987
        %v7989 = vrot.slane %v7988, 4
        %v7991 = vshll.u32 %v7724, 16
        %v7993 = vrot.slane %v7991, 5
        %v7994 = vsel %vm1483, %v7989, %v7993
        %v7995 = vshrl.u32 %v7724, 16
        %v7997 = vrot.slane %v7995, 4
        %v7998 = vor.u32 %v7997, %v7993
        %v7999 = vrot.slane %v7998, 4
        %v8001 = vshll.u32 %v7725, 16
        %v8003 = vrot.slane %v8001, 5
        %v8004 = vsel %vm1483, %v7999, %v8003
        %v8006 = vshrl.u32 %v7726, 16
        %v8008 = vrot.slane %v8006, 4
        %v8009 = vshll.u32 %v7726, 16
        %v8011 = vrot.slane %v8009, 5
        %v8012 = vor.u32 %v8008, %v8011
        %v8013 = vrot.slane %v8012, 4
        %v8015 = vshll.u32 %v7727, 16
        %v8017 = vrot.slane %v8015, 5
        %v8018 = vsel %vm1483, %v8013, %v8017
        %v8019 = vshrl.u32 %v7727, 16
        %v8021 = vrot.slane %v8019, 4
        %v8022 = vor.u32 %v8021, %v8017
        %v8023 = vrot.slane %v8022, 4
        %v8025 = vshll.u32 %v7728, 16
        %v8027 = vrot.slane %v8025, 5
        %v8028 = vsel %vm1483, %v8023, %v8027
        %v8030 = vshrl.u32 %v7729, 16
        %v8032 = vrot.slane %v8030, 4
        %v8033 = vshll.u32 %v7729, 16
        %v8035 = vrot.slane %v8033, 5
        %v8036 = vor.u32 %v8032, %v8035
        %v8037 = vrot.slane %v8036, 4
        %v8039 = vshll.u32 %v7730, 16
        %v8041 = vrot.slane %v8039, 5
        %v8042 = vsel %vm1483, %v8037, %v8041
        %v8043 = vshrl.u32 %v7730, 16
        %v8045 = vrot.slane %v8043, 4
        %v8046 = vor.u32 %v8045, %v8041
        %v8047 = vrot.slane %v8046, 4
        %v8049 = vshll.u32 %v7731, 16
        %v8051 = vrot.slane %v8049, 5
        %v8052 = vsel %vm1483, %v8047, %v8051
        %v8054 = vshrl.u32 %v7732, 16
        %v8056 = vrot.slane %v8054, 4
        %v8057 = vshll.u32 %v7732, 16
        %v8059 = vrot.slane %v8057, 5
        %v8060 = vor.u32 %v8056, %v8059
        %v8061 = vrot.slane %v8060, 4
        %v8063 = vshll.u32 %v7733, 16
        %v8065 = vrot.slane %v8063, 5
        %v8066 = vsel %vm1483, %v8061, %v8065
        %v8067 = vshrl.u32 %v7733, 16
        %v8069 = vrot.slane %v8067, 4
        %v8070 = vor.u32 %v8069, %v8065
        %v8071 = vrot.slane %v8070, 4
        %v8073 = vshll.u32 %v7734, 16
        %v8075 = vrot.slane %v8073, 5
        %v8076 = vsel %vm1483, %v8071, %v8075
        %v8078 = vshrl.u32 %v7735, 16
        %v8080 = vrot.slane %v8078, 4
        %v8081 = vshll.u32 %v7735, 16
        %v8083 = vrot.slane %v8081, 5
        %v8084 = vor.u32 %v8080, %v8083
        %v8085 = vrot.slane %v8084, 4
        %v8087 = vshll.u32 %v7736, 16
        %v8089 = vrot.slane %v8087, 5
        %v8090 = vsel %vm1483, %v8085, %v8089
        %v8091 = vshrl.u32 %v7736, 16
        %v8093 = vrot.slane %v8091, 4
        %v8094 = vor.u32 %v8093, %v8089
        %v8095 = vrot.slane %v8094, 4
        %v8097 = vshll.u32 %v7737, 16
        %v8099 = vrot.slane %v8097, 5
        %v8100 = vsel %vm1483, %v8095, %v8099
        %v8102 = vshrl.u32 %v7738, 16
        %v8104 = vrot.slane %v8102, 4
        %v8105 = vshll.u32 %v7738, 16
        %v8107 = vrot.slane %v8105, 5
        %v8108 = vor.u32 %v8104, %v8107
        %v8109 = vrot.slane %v8108, 4
        %v8111 = vshll.u32 %v7739, 16
        %v8113 = vrot.slane %v8111, 5
        %v8114 = vsel %vm1483, %v8109, %v8113
        %v8115 = vshrl.u32 %v7739, 16
        %v8117 = vrot.slane %v8115, 4
        %v8118 = vor.u32 %v8117, %v8113
        %v8119 = vrot.slane %v8118, 4
        %v8121 = vshll.u32 %v7740, 16
        %v8123 = vrot.slane %v8121, 5
        %v8124 = vsel %vm1483, %v8119, %v8123
        %8125 = vrot.lane.b32.xlu0 %v7754, 56
        %v8126 = vpop.permute.xlu0 %8125
        %8127 = vrot.lane.b32.xlu0 %v7764, 56
        %v8128 = vpop.permute.xlu0 %8127
        %8129 = vrot.lane.b32.xlu0 %v7778, 56
        %v8130 = vpop.permute.xlu0 %8129
        %8131 = vrot.lane.b32.xlu0 %v7788, 56
        %v8132 = vpop.permute.xlu0 %8131
        %8133 = vrot.lane.b32.xlu0 %v7802, 56
        %v8134 = vpop.permute.xlu0 %8133
        %8135 = vrot.lane.b32.xlu0 %v7812, 56
        %v8136 = vpop.permute.xlu0 %8135
        %8137 = vrot.lane.b32.xlu0 %v7826, 56
        %v8138 = vpop.permute.xlu0 %8137
        %8139 = vrot.lane.b32.xlu0 %v7836, 56
        %v8140 = vpop.permute.xlu0 %8139
        %8141 = vrot.lane.b32.xlu0 %v7850, 56
        %v8142 = vpop.permute.xlu0 %8141
        %8143 = vrot.lane.b32.xlu0 %v7860, 56
        %v8144 = vpop.permute.xlu0 %8143
        %8145 = vrot.lane.b32.xlu0 %v7874, 56
        %v8146 = vpop.permute.xlu0 %8145
        %8147 = vrot.lane.b32.xlu0 %v7884, 56
        %v8148 = vpop.permute.xlu0 %8147
        %8149 = vrot.lane.b32.xlu0 %v7898, 56
        %v8150 = vpop.permute.xlu0 %8149
        %8151 = vrot.lane.b32.xlu0 %v7908, 56
        %v8152 = vpop.permute.xlu0 %8151
        %8153 = vrot.lane.b32.xlu0 %v7922, 56
        %v8154 = vpop.permute.xlu0 %8153
        %8155 = vrot.lane.b32.xlu0 %v7932, 56
        %v8156 = vpop.permute.xlu0 %8155
        %8157 = vrot.lane.b32.xlu0 %v7946, 56
        %v8158 = vpop.permute.xlu0 %8157
        %8159 = vrot.lane.b32.xlu0 %v7956, 56
        %v8160 = vpop.permute.xlu0 %8159
        %8161 = vrot.lane.b32.xlu0 %v7970, 56
        %v8162 = vpop.permute.xlu0 %8161
        %8163 = vrot.lane.b32.xlu0 %v7980, 56
        %v8164 = vpop.permute.xlu0 %8163
        %8165 = vrot.lane.b32.xlu0 %v7994, 56
        %v8166 = vpop.permute.xlu0 %8165
        %8167 = vrot.lane.b32.xlu0 %v8004, 56
        %v8168 = vpop.permute.xlu0 %8167
        %8169 = vrot.lane.b32.xlu0 %v8018, 56
        %v8170 = vpop.permute.xlu0 %8169
        %8171 = vrot.lane.b32.xlu0 %v8028, 56
        %v8172 = vpop.permute.xlu0 %8171
        %8173 = vrot.lane.b32.xlu0 %v8042, 56
        %v8174 = vpop.permute.xlu0 %8173
        %8175 = vrot.lane.b32.xlu0 %v8052, 56
        %v8176 = vpop.permute.xlu0 %8175
        %8177 = vrot.lane.b32.xlu0 %v8066, 56
        %v8178 = vpop.permute.xlu0 %8177
        %8179 = vrot.lane.b32.xlu0 %v8076, 56
        %v8180 = vpop.permute.xlu0 %8179
        %8181 = vrot.lane.b32.xlu0 %v8090, 56
        %v8182 = vpop.permute.xlu0 %8181
        %8183 = vrot.lane.b32.xlu0 %v8100, 56
        %v8184 = vpop.permute.xlu0 %8183
        %8185 = vrot.lane.b32.xlu0 %v8114, 56
        %v8186 = vpop.permute.xlu0 %8185
        %8187 = vrot.lane.b32.xlu0 %v8124, 56
        %v8188 = vpop.permute.xlu0 %8187
        %8221 = vst.msk [vmem:[#allocation5] sm:$0xf] %vm4150, %v8126
        %8222 = vst.msk [vmem:[#allocation5 + $0x4] sm:$0xf] %vm4150, %v8128
        %8223 = vst.msk [vmem:[#allocation5 + $0x8] sm:$0xf] %vm4150, %v8130
        %8224 = vst.msk [vmem:[#allocation5 + $0xc] sm:$0xf] %vm4150, %v8132
        %8225 = vst.msk [vmem:[#allocation5 + $0x10] sm:$0xf] %vm4150, %v8134
        %8226 = vst.msk [vmem:[#allocation5 + $0x14] sm:$0xf] %vm4150, %v8136
        %8227 = vst.msk [vmem:[#allocation5 + $0x18] sm:$0xf] %vm4150, %v8138
        %8228 = vst.msk [vmem:[#allocation5 + $0x1c] sm:$0xf] %vm4150, %v8140
        %8229 = vst.msk [vmem:[#allocation5 + $0x20] sm:$0xf] %vm4150, %v8142
        %8230 = vst.msk [vmem:[#allocation5 + $0x24] sm:$0xf] %vm4150, %v8144
        %8231 = vst.msk [vmem:[#allocation5 + $0x28] sm:$0xf] %vm4150, %v8146
        %8232 = vst.msk [vmem:[#allocation5 + $0x2c] sm:$0xf] %vm4150, %v8148
        %8233 = vst.msk [vmem:[#allocation5 + $0x30] sm:$0xf] %vm4150, %v8150
        %8234 = vst.msk [vmem:[#allocation5 + $0x34] sm:$0xf] %vm4150, %v8152
        %8235 = vst.msk [vmem:[#allocation5 + $0x38] sm:$0xf] %vm4150, %v8154
        %8236 = vst.msk [vmem:[#allocation5 + $0x3c] sm:$0xf] %vm4150, %v8156
        %8237 = vst.msk [vmem:[#allocation5 + $0x40] sm:$0xf] %vm4150, %v8158
        %8238 = vst.msk [vmem:[#allocation5 + $0x44] sm:$0xf] %vm4150, %v8160
        %8239 = vst.msk [vmem:[#allocation5 + $0x48] sm:$0xf] %vm4150, %v8162
        %8240 = vst.msk [vmem:[#allocation5 + $0x4c] sm:$0xf] %vm4150, %v8164
        %8241 = vst.msk [vmem:[#allocation5 + $0x50] sm:$0xf] %vm4150, %v8166
        %8242 = vst.msk [vmem:[#allocation5 + $0x54] sm:$0xf] %vm4150, %v8168
        %8243 = vst.msk [vmem:[#allocation5 + $0x58] sm:$0xf] %vm4150, %v8170
        %8244 = vst.msk [vmem:[#allocation5 + $0x5c] sm:$0xf] %vm4150, %v8172
        %8245 = vst.msk [vmem:[#allocation5 + $0x60] sm:$0xf] %vm4150, %v8174
        %8246 = vst.msk [vmem:[#allocation5 + $0x64] sm:$0xf] %vm4150, %v8176
        %8247 = vst.msk [vmem:[#allocation5 + $0x68] sm:$0xf] %vm4150, %v8178
        %8248 = vst.msk [vmem:[#allocation5 + $0x6c] sm:$0xf] %vm4150, %v8180
        %8249 = vst.msk [vmem:[#allocation5 + $0x70] sm:$0xf] %vm4150, %v8182
        %8250 = vst.msk [vmem:[#allocation5 + $0x74] sm:$0xf] %vm4150, %v8184
        %8251 = vst.msk [vmem:[#allocation5 + $0x78] sm:$0xf] %vm4150, %v8186
        %8252 = vst.msk [vmem:[#allocation5 + $0x7c] sm:$0xf] %vm4150, %v8188
        %v8253 = vld [vmem:[%s7500] sm:$0xe]
        %v8254 = vld [vmem:[%s7500 + $0x4] sm:$0xf]
        %v8255 = vld [vmem:[%s7500 + $0x8] sm:$0x1]
        %v8256 = vld [vmem:[%s7500 + $0xc] sm:$0xe]
        %v8257 = vld [vmem:[%s7500 + $0x10] sm:$0xf]
        %v8258 = vld [vmem:[%s7500 + $0x14] sm:$0x1]
        %v8259 = vld [vmem:[%s7500 + $0x18] sm:$0xe]
        %v8260 = vld [vmem:[%s7500 + $0x1c] sm:$0xf]
        %v8261 = vld [vmem:[%s7500 + $0x20] sm:$0x1]
        %v8262 = vld [vmem:[%s7500 + $0x24] sm:$0xe]
        %v8263 = vld [vmem:[%s7500 + $0x28] sm:$0xf]
        %v8264 = vld [vmem:[%s7500 + $0x2c] sm:$0x1]
        %v8265 = vld [vmem:[%s7500 + $0x30] sm:$0xe]
        %v8266 = vld [vmem:[%s7500 + $0x34] sm:$0xf]
        %v8267 = vld [vmem:[%s7500 + $0x38] sm:$0x1]
        %v8268 = vld [vmem:[%s7500 + $0x3c] sm:$0xe]
        %v8269 = vld [vmem:[%s7500 + $0x40] sm:$0xf]
        %v8270 = vld [vmem:[%s7500 + $0x44] sm:$0x1]
        %v8271 = vld [vmem:[%s7500 + $0x48] sm:$0xe]
        %v8272 = vld [vmem:[%s7500 + $0x4c] sm:$0xf]
        %v8273 = vld [vmem:[%s7500 + $0x50] sm:$0x1]
        %v8274 = vld [vmem:[%s7500 + $0x54] sm:$0xe]
        %v8275 = vld [vmem:[%s7500 + $0x58] sm:$0xf]
        %v8276 = vld [vmem:[%s7500 + $0x5c] sm:$0x1]
        %v8277 = vld [vmem:[%s7500 + $0x60] sm:$0xe]
        %v8278 = vld [vmem:[%s7500 + $0x64] sm:$0xf]
        %v8279 = vld [vmem:[%s7500 + $0x68] sm:$0x1]
        %v8280 = vld [vmem:[%s7500 + $0x6c] sm:$0xe]
        %v8281 = vld [vmem:[%s7500 + $0x70] sm:$0xf]
        %v8282 = vld [vmem:[%s7500 + $0x74] sm:$0x1]
        %v8283 = vld [vmem:[%s7500 + $0x78] sm:$0xe]
        %v8284 = vld [vmem:[%s7500 + $0x7c] sm:$0xf]
        %v8285 = vld [vmem:[%s7500 + $0x80] sm:$0x1]
        %v8286 = vld [vmem:[%s7500 + $0x84] sm:$0xe]
        %v8287 = vld [vmem:[%s7500 + $0x88] sm:$0xf]
        %v8288 = vld [vmem:[%s7500 + $0x8c] sm:$0x1]
        %v8289 = vld [vmem:[%s7500 + $0x90] sm:$0xe]
        %v8290 = vld [vmem:[%s7500 + $0x94] sm:$0xf]
        %v8291 = vld [vmem:[%s7500 + $0x98] sm:$0x1]
        %v8292 = vld [vmem:[%s7500 + $0x9c] sm:$0xe]
        %v8293 = vld [vmem:[%s7500 + $0xa0] sm:$0xf]
        %v8294 = vld [vmem:[%s7500 + $0xa4] sm:$0x1]
        %v8295 = vld [vmem:[%s7500 + $0xa8] sm:$0xe]
        %v8296 = vld [vmem:[%s7500 + $0xac] sm:$0xf]
        %v8297 = vld [vmem:[%s7500 + $0xb0] sm:$0x1]
        %v8298 = vld [vmem:[%s7500 + $0xb4] sm:$0xe]
        %v8299 = vld [vmem:[%s7500 + $0xb8] sm:$0xf]
        %v8300 = vld [vmem:[%s7500 + $0xbc] sm:$0x1]
        %v8349 = vrot.slane %v8253, 5
        %v8350 = vrot.slane %v8349, 4
        %v8351 = vrot.slane %v8254, 5
        %v8352 = vsel %vm2095, %v8350, %v8351
        %v8353 = vrot.slane %v8351, 4
        %v8354 = vrot.slane %v8255, 5
        %v8355 = vsel %vm2095, %v8353, %v8354
        %v8356 = vrot.slane %v8256, 5
        %v8357 = vrot.slane %v8356, 4
        %v8358 = vrot.slane %v8257, 5
        %v8359 = vsel %vm2095, %v8357, %v8358
        %v8360 = vrot.slane %v8358, 4
        %v8361 = vrot.slane %v8258, 5
        %v8362 = vsel %vm2095, %v8360, %v8361
        %v8363 = vrot.slane %v8259, 5
        %v8364 = vrot.slane %v8363, 4
        %v8365 = vrot.slane %v8260, 5
        %v8366 = vsel %vm2095, %v8364, %v8365
        %v8367 = vrot.slane %v8365, 4
        %v8368 = vrot.slane %v8261, 5
        %v8369 = vsel %vm2095, %v8367, %v8368
        %v8370 = vrot.slane %v8262, 5
        %v8371 = vrot.slane %v8370, 4
        %v8372 = vrot.slane %v8263, 5
        %v8373 = vsel %vm2095, %v8371, %v8372
        %v8374 = vrot.slane %v8372, 4
        %v8375 = vrot.slane %v8264, 5
        %v8376 = vsel %vm2095, %v8374, %v8375
        %v8377 = vrot.slane %v8265, 5
        %v8378 = vrot.slane %v8377, 4
        %v8379 = vrot.slane %v8266, 5
        %v8380 = vsel %vm2095, %v8378, %v8379
        %v8381 = vrot.slane %v8379, 4
        %v8382 = vrot.slane %v8267, 5
        %v8383 = vsel %vm2095, %v8381, %v8382
        %v8384 = vrot.slane %v8268, 5
        %v8385 = vrot.slane %v8384, 4
        %v8386 = vrot.slane %v8269, 5
        %v8387 = vsel %vm2095, %v8385, %v8386
        %v8388 = vrot.slane %v8386, 4
        %v8389 = vrot.slane %v8270, 5
        %v8390 = vsel %vm2095, %v8388, %v8389
        %v8391 = vrot.slane %v8271, 5
        %v8392 = vrot.slane %v8391, 4
        %v8393 = vrot.slane %v8272, 5
        %v8394 = vsel %vm2095, %v8392, %v8393
        %v8395 = vrot.slane %v8393, 4
        %v8396 = vrot.slane %v8273, 5
        %v8397 = vsel %vm2095, %v8395, %v8396
        %v8398 = vrot.slane %v8274, 5
        %v8399 = vrot.slane %v8398, 4
        %v8400 = vrot.slane %v8275, 5
        %v8401 = vsel %vm2095, %v8399, %v8400
        %v8402 = vrot.slane %v8400, 4
        %v8403 = vrot.slane %v8276, 5
        %v8404 = vsel %vm2095, %v8402, %v8403
        %v8405 = vrot.slane %v8277, 5
        %v8406 = vrot.slane %v8405, 4
        %v8407 = vrot.slane %v8278, 5
        %v8408 = vsel %vm2095, %v8406, %v8407
        %v8409 = vrot.slane %v8407, 4
        %v8410 = vrot.slane %v8279, 5
        %v8411 = vsel %vm2095, %v8409, %v8410
        %v8412 = vrot.slane %v8280, 5
        %v8413 = vrot.slane %v8412, 4
        %v8414 = vrot.slane %v8281, 5
        %v8415 = vsel %vm2095, %v8413, %v8414
        %v8416 = vrot.slane %v8414, 4
        %v8417 = vrot.slane %v8282, 5
        %v8418 = vsel %vm2095, %v8416, %v8417
        %v8419 = vrot.slane %v8283, 5
        %v8420 = vrot.slane %v8419, 4
        %v8421 = vrot.slane %v8284, 5
        %v8422 = vsel %vm2095, %v8420, %v8421
        %v8423 = vrot.slane %v8421, 4
        %v8424 = vrot.slane %v8285, 5
        %v8425 = vsel %vm2095, %v8423, %v8424
        %v8426 = vrot.slane %v8286, 5
        %v8427 = vrot.slane %v8426, 4
        %v8428 = vrot.slane %v8287, 5
        %v8429 = vsel %vm2095, %v8427, %v8428
        %v8430 = vrot.slane %v8428, 4
        %v8431 = vrot.slane %v8288, 5
        %v8432 = vsel %vm2095, %v8430, %v8431
        %v8433 = vrot.slane %v8289, 5
        %v8434 = vrot.slane %v8433, 4
        %v8435 = vrot.slane %v8290, 5
        %v8436 = vsel %vm2095, %v8434, %v8435
        %v8437 = vrot.slane %v8435, 4
        %v8438 = vrot.slane %v8291, 5
        %v8439 = vsel %vm2095, %v8437, %v8438
        %v8440 = vrot.slane %v8292, 5
        %v8441 = vrot.slane %v8440, 4
        %v8442 = vrot.slane %v8293, 5
        %v8443 = vsel %vm2095, %v8441, %v8442
        %v8444 = vrot.slane %v8442, 4
        %v8445 = vrot.slane %v8294, 5
        %v8446 = vsel %vm2095, %v8444, %v8445
        %v8447 = vrot.slane %v8295, 5
        %v8448 = vrot.slane %v8447, 4
        %v8449 = vrot.slane %v8296, 5
        %v8450 = vsel %vm2095, %v8448, %v8449
        %v8451 = vrot.slane %v8449, 4
        %v8452 = vrot.slane %v8297, 5
        %v8453 = vsel %vm2095, %v8451, %v8452
        %v8454 = vrot.slane %v8298, 5
        %v8455 = vrot.slane %v8454, 4
        %v8456 = vrot.slane %v8299, 5
        %v8457 = vsel %vm2095, %v8455, %v8456
        %v8458 = vrot.slane %v8456, 4
        %v8459 = vrot.slane %v8300, 5
        %v8460 = vsel %vm2095, %v8458, %v8459
        %8461 = vrot.lane.b32.xlu0 %v8352, 64
        %v8462 = vpop.permute.xlu0 %8461
        %8463 = vrot.lane.b32.xlu0 %v8355, 64
        %v8464 = vpop.permute.xlu0 %8463
        %8465 = vrot.lane.b32.xlu0 %v8359, 64
        %v8466 = vpop.permute.xlu0 %8465
        %8467 = vrot.lane.b32.xlu0 %v8362, 64
        %v8468 = vpop.permute.xlu0 %8467
        %8469 = vrot.lane.b32.xlu0 %v8366, 64
        %v8470 = vpop.permute.xlu0 %8469
        %8471 = vrot.lane.b32.xlu0 %v8369, 64
        %v8472 = vpop.permute.xlu0 %8471
        %8473 = vrot.lane.b32.xlu0 %v8373, 64
        %v8474 = vpop.permute.xlu0 %8473
        %8475 = vrot.lane.b32.xlu0 %v8376, 64
        %v8476 = vpop.permute.xlu0 %8475
        %8477 = vrot.lane.b32.xlu0 %v8380, 64
        %v8478 = vpop.permute.xlu0 %8477
        %8479 = vrot.lane.b32.xlu0 %v8383, 64
        %v8480 = vpop.permute.xlu0 %8479
        %8481 = vrot.lane.b32.xlu0 %v8387, 64
        %v8482 = vpop.permute.xlu0 %8481
        %8483 = vrot.lane.b32.xlu0 %v8390, 64
        %v8484 = vpop.permute.xlu0 %8483
        %8485 = vrot.lane.b32.xlu0 %v8394, 64
        %v8486 = vpop.permute.xlu0 %8485
        %8487 = vrot.lane.b32.xlu0 %v8397, 64
        %v8488 = vpop.permute.xlu0 %8487
        %8489 = vrot.lane.b32.xlu0 %v8401, 64
        %v8490 = vpop.permute.xlu0 %8489
        %8491 = vrot.lane.b32.xlu0 %v8404, 64
        %v8492 = vpop.permute.xlu0 %8491
        %8493 = vrot.lane.b32.xlu0 %v8408, 64
        %v8494 = vpop.permute.xlu0 %8493
        %8495 = vrot.lane.b32.xlu0 %v8411, 64
        %v8496 = vpop.permute.xlu0 %8495
        %8497 = vrot.lane.b32.xlu0 %v8415, 64
        %v8498 = vpop.permute.xlu0 %8497
        %8499 = vrot.lane.b32.xlu0 %v8418, 64
        %v8500 = vpop.permute.xlu0 %8499
        %8501 = vrot.lane.b32.xlu0 %v8422, 64
        %v8502 = vpop.permute.xlu0 %8501
        %8503 = vrot.lane.b32.xlu0 %v8425, 64
        %v8504 = vpop.permute.xlu0 %8503
        %8505 = vrot.lane.b32.xlu0 %v8429, 64
        %v8506 = vpop.permute.xlu0 %8505
        %8507 = vrot.lane.b32.xlu0 %v8432, 64
        %v8508 = vpop.permute.xlu0 %8507
        %8509 = vrot.lane.b32.xlu0 %v8436, 64
        %v8510 = vpop.permute.xlu0 %8509
        %8511 = vrot.lane.b32.xlu0 %v8439, 64
        %v8512 = vpop.permute.xlu0 %8511
        %8513 = vrot.lane.b32.xlu0 %v8443, 64
        %v8514 = vpop.permute.xlu0 %8513
        %8515 = vrot.lane.b32.xlu0 %v8446, 64
        %v8516 = vpop.permute.xlu0 %8515
        %8517 = vrot.lane.b32.xlu0 %v8450, 64
        %v8518 = vpop.permute.xlu0 %8517
        %8519 = vrot.lane.b32.xlu0 %v8453, 64
        %v8520 = vpop.permute.xlu0 %8519
        %8521 = vrot.lane.b32.xlu0 %v8457, 64
        %v8522 = vpop.permute.xlu0 %8521
        %8523 = vrot.lane.b32.xlu0 %v8460, 64
        %v8524 = vpop.permute.xlu0 %8523
        %8557 = vst.msk [vmem:[#allocation5] sm:$0xf] %vm4487, %v8462
        %8558 = vst.msk [vmem:[#allocation5 + $0x4] sm:$0xf] %vm4487, %v8464
        %8559 = vst.msk [vmem:[#allocation5 + $0x8] sm:$0xf] %vm4487, %v8466
        %8560 = vst.msk [vmem:[#allocation5 + $0xc] sm:$0xf] %vm4487, %v8468
        %8561 = vst.msk [vmem:[#allocation5 + $0x10] sm:$0xf] %vm4487, %v8470
        %8562 = vst.msk [vmem:[#allocation5 + $0x14] sm:$0xf] %vm4487, %v8472
        %8563 = vst.msk [vmem:[#allocation5 + $0x18] sm:$0xf] %vm4487, %v8474
        %8564 = vst.msk [vmem:[#allocation5 + $0x1c] sm:$0xf] %vm4487, %v8476
        %8565 = vst.msk [vmem:[#allocation5 + $0x20] sm:$0xf] %vm4487, %v8478
        %8566 = vst.msk [vmem:[#allocation5 + $0x24] sm:$0xf] %vm4487, %v8480
        %8567 = vst.msk [vmem:[#allocation5 + $0x28] sm:$0xf] %vm4487, %v8482
        %8568 = vst.msk [vmem:[#allocation5 + $0x2c] sm:$0xf] %vm4487, %v8484
        %8569 = vst.msk [vmem:[#allocation5 + $0x30] sm:$0xf] %vm4487, %v8486
        %8570 = vst.msk [vmem:[#allocation5 + $0x34] sm:$0xf] %vm4487, %v8488
        %8571 = vst.msk [vmem:[#allocation5 + $0x38] sm:$0xf] %vm4487, %v8490
        %8572 = vst.msk [vmem:[#allocation5 + $0x3c] sm:$0xf] %vm4487, %v8492
        %8573 = vst.msk [vmem:[#allocation5 + $0x40] sm:$0xf] %vm4487, %v8494
        %8574 = vst.msk [vmem:[#allocation5 + $0x44] sm:$0xf] %vm4487, %v8496
        %8575 = vst.msk [vmem:[#allocation5 + $0x48] sm:$0xf] %vm4487, %v8498
        %8576 = vst.msk [vmem:[#allocation5 + $0x4c] sm:$0xf] %vm4487, %v8500
        %8577 = vst.msk [vmem:[#allocation5 + $0x50] sm:$0xf] %vm4487, %v8502
        %8578 = vst.msk [vmem:[#allocation5 + $0x54] sm:$0xf] %vm4487, %v8504
        %8579 = vst.msk [vmem:[#allocation5 + $0x58] sm:$0xf] %vm4487, %v8506
        %8580 = vst.msk [vmem:[#allocation5 + $0x5c] sm:$0xf] %vm4487, %v8508
        %8581 = vst.msk [vmem:[#allocation5 + $0x60] sm:$0xf] %vm4487, %v8510
        %8582 = vst.msk [vmem:[#allocation5 + $0x64] sm:$0xf] %vm4487, %v8512
        %8583 = vst.msk [vmem:[#allocation5 + $0x68] sm:$0xf] %vm4487, %v8514
        %8584 = vst.msk [vmem:[#allocation5 + $0x6c] sm:$0xf] %vm4487, %v8516
        %8585 = vst.msk [vmem:[#allocation5 + $0x70] sm:$0xf] %vm4487, %v8518
        %8586 = vst.msk [vmem:[#allocation5 + $0x74] sm:$0xf] %vm4487, %v8520
        %8587 = vst.msk [vmem:[#allocation5 + $0x78] sm:$0xf] %vm4487, %v8522
        %8588 = vst.msk [vmem:[#allocation5 + $0x7c] sm:$0xf] %vm4487, %v8524
        %v8589 = vld [vmem:[#allocation5] sm:$0xf]
        %v8590 = vld [vmem:[#allocation5 + $0x4] sm:$0xf]
        %v8591 = vld [vmem:[#allocation5 + $0x8] sm:$0xf]
        %v8592 = vld [vmem:[#allocation5 + $0xc] sm:$0xf]
        %v8593 = vld [vmem:[#allocation5 + $0x10] sm:$0xf]
        %v8594 = vld [vmem:[#allocation5 + $0x14] sm:$0xf]
        %v8595 = vld [vmem:[#allocation5 + $0x18] sm:$0xf]
        %v8596 = vld [vmem:[#allocation5 + $0x1c] sm:$0xf]
        %v8597 = vld [vmem:[#allocation5 + $0x20] sm:$0xf]
        %v8598 = vld [vmem:[#allocation5 + $0x24] sm:$0xf]
        %v8599 = vld [vmem:[#allocation5 + $0x28] sm:$0xf]
        %v8600 = vld [vmem:[#allocation5 + $0x2c] sm:$0xf]
        %v8601 = vld [vmem:[#allocation5 + $0x30] sm:$0xf]
        %v8602 = vld [vmem:[#allocation5 + $0x34] sm:$0xf]
        %v8603 = vld [vmem:[#allocation5 + $0x38] sm:$0xf]
        %v8604 = vld [vmem:[#allocation5 + $0x3c] sm:$0xf]
        %v8605 = vld [vmem:[#allocation5 + $0x40] sm:$0xf]
        %v8606 = vld [vmem:[#allocation5 + $0x44] sm:$0xf]
        %v8607 = vld [vmem:[#allocation5 + $0x48] sm:$0xf]
        %v8608 = vld [vmem:[#allocation5 + $0x4c] sm:$0xf]
        %v8609 = vld [vmem:[#allocation5 + $0x50] sm:$0xf]
        %v8610 = vld [vmem:[#allocation5 + $0x54] sm:$0xf]
        %v8611 = vld [vmem:[#allocation5 + $0x58] sm:$0xf]
        %v8612 = vld [vmem:[#allocation5 + $0x5c] sm:$0xf]
        %v8613 = vld [vmem:[#allocation5 + $0x60] sm:$0xf]
        %v8614 = vld [vmem:[#allocation5 + $0x64] sm:$0xf]
        %v8615 = vld [vmem:[#allocation5 + $0x68] sm:$0xf]
        %v8616 = vld [vmem:[#allocation5 + $0x6c] sm:$0xf]
        %v8617 = vld [vmem:[#allocation5 + $0x70] sm:$0xf]
        %v8618 = vld [vmem:[#allocation5 + $0x74] sm:$0xf]
        %v8619 = vld [vmem:[#allocation5 + $0x78] sm:$0xf]
        %v8620 = vld [vmem:[#allocation5 + $0x7c] sm:$0xf]
        %v8621 = vld [vmem:[%s4] sm:$0xf]
        %v8622 = vld [vmem:[%s4 + $0x4] sm:$0xf]
        %v8623 = vld [vmem:[%s4 + $0x8] sm:$0xf]
        %v8624 = vld [vmem:[%s4 + $0xc] sm:$0xf]
        %v8625 = vld [vmem:[%s4 + $0x10] sm:$0xf]
        %v8626 = vld [vmem:[%s4 + $0x14] sm:$0xf]
        %v8627 = vld [vmem:[%s4 + $0x18] sm:$0xf]
        %v8628 = vld [vmem:[%s4 + $0x1c] sm:$0xf]
        %v8629 = vld [vmem:[%s4 + $0x20] sm:$0xf]
        %v8630 = vld [vmem:[%s5] sm:$0x1]
        %v8632 = vlaneseq
        %v8633 = vshrl.u32 %v8632, 7
        %v8634 = vsub.s32 0, %v8633
        %v8635 = vrot.slane %v8630, %v8634
        %v8669 = vunpack.c.l.b16 %v8589
        %v8670 = vunpack.c.l.b16 %v8590
        %v8671 = vunpack.c.l.b16 %v8591
        %v8672 = vunpack.c.l.b16 %v8592
        %v8673 = vunpack.c.l.b16 %v8593
        %v8674 = vunpack.c.l.b16 %v8594
        %v8675 = vunpack.c.l.b16 %v8595
        %v8676 = vunpack.c.l.b16 %v8596
        %v8677 = vunpack.c.l.b16 %v8597
        %v8678 = vunpack.c.l.b16 %v8598
        %v8679 = vunpack.c.l.b16 %v8599
        %v8680 = vunpack.c.l.b16 %v8600
        %v8681 = vunpack.c.l.b16 %v8601
        %v8682 = vunpack.c.l.b16 %v8602
        %v8683 = vunpack.c.l.b16 %v8603
        %v8684 = vunpack.c.l.b16 %v8604
        %v8685 = vunpack.c.l.b16 %v8605
        %v8686 = vunpack.c.l.b16 %v8606
        %v8687 = vunpack.c.l.b16 %v8607
        %v8688 = vunpack.c.l.b16 %v8608
        %v8689 = vunpack.c.l.b16 %v8609
        %v8690 = vunpack.c.l.b16 %v8610
        %v8691 = vunpack.c.l.b16 %v8611
        %v8692 = vunpack.c.l.b16 %v8612
        %v8693 = vunpack.c.l.b16 %v8613
        %v8694 = vunpack.c.l.b16 %v8614
        %v8695 = vunpack.c.l.b16 %v8615
        %v8696 = vunpack.c.l.b16 %v8616
        %v8697 = vunpack.c.l.b16 %v8617
        %v8698 = vunpack.c.l.b16 %v8618
        %v8699 = vunpack.c.l.b16 %v8619
        %v8700 = vunpack.c.l.b16 %v8620
        %v8701 = vpack.c.b16 %v8670, %v8669
        %v8702 = vpack.c.b16 %v8672, %v8671
        %v8703 = vpack.c.b16 %v8674, %v8673
        %v8704 = vpack.c.b16 %v8676, %v8675
        %v8705 = vpack.c.b16 %v8678, %v8677
        %v8706 = vpack.c.b16 %v8680, %v8679
        %v8707 = vpack.c.b16 %v8682, %v8681
        %v8708 = vpack.c.b16 %v8684, %v8683
        %v8709 = vpack.c.b16 %v8686, %v8685
        %v8710 = vpack.c.b16 %v8688, %v8687
        %v8711 = vpack.c.b16 %v8690, %v8689
        %v8712 = vpack.c.b16 %v8692, %v8691
        %v8713 = vpack.c.b16 %v8694, %v8693
        %v8714 = vpack.c.b16 %v8696, %v8695
        %v8715 = vpack.c.b16 %v8698, %v8697
        %v8716 = vpack.c.b16 %v8700, %v8699
        %v8726 = vunpack.c.l.b16 %v8621
        %v8727 = vunpack.c.l.b16 %v8622
        %v8728 = vunpack.c.l.b16 %v8623
        %v8729 = vunpack.c.l.b16 %v8624
        %v8730 = vunpack.c.l.b16 %v8625
        %v8731 = vunpack.c.l.b16 %v8626
        %v8732 = vunpack.c.l.b16 %v8627
        %v8733 = vunpack.c.l.b16 %v8628
        %v8734 = vunpack.c.l.b16 %v8629
        %v8735 = vpack.c.b16 %v8727, %v8726
        %v8736 = vpack.c.b16 %v8729, %v8728
        %v8737 = vpack.c.b16 %v8731, %v8730
        %v8738 = vpack.c.b16 %v8733, %v8732
        %v8739 = vpack.c.b16 %v8734, %v8734
        %v8745 = vsel %vm4675, %v8701, 0
        %v8748 = vsel %vm4675, %v8702, 0
        %v8751 = vsel %vm4675, %v8703, 0
        %v8754 = vsel %vm4675, %v8704, 0
        %v8757 = vsel %vm4675, %v8705, 0
        %v8760 = vsel %vm4675, %v8706, 0
        %v8763 = vsel %vm4675, %v8707, 0
        %v8766 = vsel %vm4675, %v8708, 0
        %v8769 = vsel %vm4675, %v8709, 0
        %v8772 = vsel %vm4675, %v8710, 0
        %v8775 = vsel %vm4675, %v8711, 0
        %v8778 = vsel %vm4675, %v8712, 0
        %v8781 = vsel %vm4675, %v8713, 0
        %v8784 = vsel %vm4675, %v8714, 0
        %v8787 = vsel %vm4675, %v8715, 0
        %v8790 = vsel %vm4675, %v8716, 0
        %v8793 = vsel %vm4724, %v8739, 0
        %8795 = vmatprep.subr.bf16.mxu0 0
        %8796 = vmatpush1.bf16.msra.mxu0 0
        %8797 = vmatprep.subr.bf16.mxu0 0
        %8798 = vmatpush1.bf16.msra.mxu0 0
        %8799 = vmatprep.subr.bf16.mxu0 0
        %8800 = vmatpush1.bf16.msra.mxu0 0
        %8801 = vmatprep.subr.bf16.mxu0 0
        %8802 = vmatpush1.bf16.msra.mxu0 %v8793
        %8803 = vmatprep.subr.bf16.mxu0 0
        %8804 = vmatpush1.bf16.msra.mxu0 %v8738
        %8805 = vmatprep.subr.bf16.mxu0 0
        %8806 = vmatpush1.bf16.msra.mxu0 %v8737
        %8807 = vmatprep.subr.bf16.mxu0 0
        %8808 = vmatpush1.bf16.msra.mxu0 %v8736
        %8809 = vmatprep.subr.bf16.mxu0 0
        %8810 = vmatpush1.bf16.msra.mxu0 %v8735
        %8811 = vmatprep.subr.bf16.mxu0 0
        %8812 = vmatpush2.bf16.msra.mxu0 0
        %8813 = vmatprep.subr.bf16.mxu0 0
        %8814 = vmatpush2.bf16.msra.mxu0 0
        %8815 = vmatprep.subr.bf16.mxu0 0
        %8816 = vmatpush2.bf16.msra.mxu0 0
        %8817 = vmatprep.subr.bf16.mxu0 0
        %8818 = vmatpush2.bf16.msra.mxu0 0
        %8819 = vmatprep.subr.bf16.mxu0 0
        %8820 = vmatpush2.bf16.msra.mxu0 0
        %8821 = vmatprep.subr.bf16.mxu0 0
        %8822 = vmatpush2.bf16.msra.mxu0 0
        %8823 = vmatprep.subr.bf16.mxu0 0
        %8824 = vmatpush2.bf16.msra.mxu0 0
        %8825 = vmatprep.subr.bf16.mxu0 0
        %8826 = vmatpush2.bf16.msra.mxu0 0
        %8827 = vmatprep.mubr.bf16.mxu0 0
        %8828 = vmatmul.mubr.bf16.gmra.mxu0 %v8745
        %v8829 = vpop.f32.mrf.mxu0
        %v8830 = vadd.f32 %v8635, %v8829
        %v8831 = vpop.f32.mrf.mxu0
        %v8832 = vpop.f32.mrf.mxu0
        %v8833 = vadd.f32 %v8635, %v8832
        %v8834 = vpop.f32.mrf.mxu0
        %8835 = vmatprep.mubr.bf16.mxu0 0
        %8836 = vmatmul.mubr.bf16.gmra.mxu0 %v8748
        %v8837 = vpop.f32.mrf.mxu0
        %v8838 = vadd.f32 %v8635, %v8837
        %v8839 = vpop.f32.mrf.mxu0
        %v8840 = vpop.f32.mrf.mxu0
        %v8841 = vadd.f32 %v8635, %v8840
        %v8842 = vpop.f32.mrf.mxu0
        %8843 = vmatprep.mubr.bf16.mxu0 0
        %8844 = vmatmul.mubr.bf16.gmra.mxu0 %v8751
        %v8845 = vpop.f32.mrf.mxu0
        %v8846 = vadd.f32 %v8635, %v8845
        %v8847 = vpop.f32.mrf.mxu0
        %v8848 = vpop.f32.mrf.mxu0
        %v8849 = vadd.f32 %v8635, %v8848
        %v8850 = vpop.f32.mrf.mxu0
        %8851 = vmatprep.mubr.bf16.mxu0 0
        %8852 = vmatmul.mubr.bf16.gmra.mxu0 %v8754
        %v8853 = vpop.f32.mrf.mxu0
        %v8854 = vadd.f32 %v8635, %v8853
        %v8855 = vpop.f32.mrf.mxu0
        %v8856 = vpop.f32.mrf.mxu0
        %v8857 = vadd.f32 %v8635, %v8856
        %v8858 = vpop.f32.mrf.mxu0
        %8859 = vmatprep.mubr.bf16.mxu0 0
        %8860 = vmatmul.mubr.bf16.gmra.mxu0 %v8757
        %v8861 = vpop.f32.mrf.mxu0
        %v8862 = vadd.f32 %v8635, %v8861
        %v8863 = vpop.f32.mrf.mxu0
        %v8864 = vpop.f32.mrf.mxu0
        %v8865 = vadd.f32 %v8635, %v8864
        %v8866 = vpop.f32.mrf.mxu0
        %8867 = vmatprep.mubr.bf16.mxu0 0
        %8868 = vmatmul.mubr.bf16.gmra.mxu0 %v8760
        %v8869 = vpop.f32.mrf.mxu0
        %v8870 = vadd.f32 %v8635, %v8869
        %v8871 = vpop.f32.mrf.mxu0
        %v8872 = vpop.f32.mrf.mxu0
        %v8873 = vadd.f32 %v8635, %v8872
        %v8874 = vpop.f32.mrf.mxu0
        %8875 = vmatprep.mubr.bf16.mxu0 0
        %8876 = vmatmul.mubr.bf16.gmra.mxu0 %v8763
        %v8877 = vpop.f32.mrf.mxu0
        %v8878 = vadd.f32 %v8635, %v8877
        %v8879 = vpop.f32.mrf.mxu0
        %v8880 = vpop.f32.mrf.mxu0
        %v8881 = vadd.f32 %v8635, %v8880
        %v8882 = vpop.f32.mrf.mxu0
        %8883 = vmatprep.mubr.bf16.mxu0 0
        %8884 = vmatmul.mubr.bf16.gmra.mxu0 %v8766
        %v8885 = vpop.f32.mrf.mxu0
        %v8886 = vadd.f32 %v8635, %v8885
        %v8887 = vpop.f32.mrf.mxu0
        %v8888 = vpop.f32.mrf.mxu0
        %v8889 = vadd.f32 %v8635, %v8888
        %v8890 = vpop.f32.mrf.mxu0
        %8891 = vmatprep.mubr.bf16.mxu0 0
        %8892 = vmatmul.mubr.bf16.gmra.mxu0 %v8769
        %v8893 = vpop.f32.mrf.mxu0
        %v8894 = vadd.f32 %v8635, %v8893
        %v8895 = vpop.f32.mrf.mxu0
        %v8896 = vpop.f32.mrf.mxu0
        %v8897 = vadd.f32 %v8635, %v8896
        %v8898 = vpop.f32.mrf.mxu0
        %8899 = vmatprep.mubr.bf16.mxu0 0
        %8900 = vmatmul.mubr.bf16.gmra.mxu0 %v8772
        %v8901 = vpop.f32.mrf.mxu0
        %v8902 = vadd.f32 %v8635, %v8901
        %v8903 = vpop.f32.mrf.mxu0
        %v8904 = vpop.f32.mrf.mxu0
        %v8905 = vadd.f32 %v8635, %v8904
        %v8906 = vpop.f32.mrf.mxu0
        %8907 = vmatprep.mubr.bf16.mxu0 0
        %8908 = vmatmul.mubr.bf16.gmra.mxu0 %v8775
        %v8909 = vpop.f32.mrf.mxu0
        %v8910 = vadd.f32 %v8635, %v8909
        %v8911 = vpop.f32.mrf.mxu0
        %v8912 = vpop.f32.mrf.mxu0
        %v8913 = vadd.f32 %v8635, %v8912
        %v8914 = vpop.f32.mrf.mxu0
        %8915 = vmatprep.mubr.bf16.mxu0 0
        %8916 = vmatmul.mubr.bf16.gmra.mxu0 %v8778
        %v8917 = vpop.f32.mrf.mxu0
        %v8918 = vadd.f32 %v8635, %v8917
        %v8919 = vpop.f32.mrf.mxu0
        %v8920 = vpop.f32.mrf.mxu0
        %v8921 = vadd.f32 %v8635, %v8920
        %v8922 = vpop.f32.mrf.mxu0
        %8923 = vmatprep.mubr.bf16.mxu0 0
        %8924 = vmatmul.mubr.bf16.gmra.mxu0 %v8781
        %v8925 = vpop.f32.mrf.mxu0
        %v8926 = vadd.f32 %v8635, %v8925
        %v8927 = vpop.f32.mrf.mxu0
        %v8928 = vpop.f32.mrf.mxu0
        %v8929 = vadd.f32 %v8635, %v8928
        %v8930 = vpop.f32.mrf.mxu0
        %8931 = vmatprep.mubr.bf16.mxu0 0
        %8932 = vmatmul.mubr.bf16.gmra.mxu0 %v8784
        %v8933 = vpop.f32.mrf.mxu0
        %v8934 = vadd.f32 %v8635, %v8933
        %v8935 = vpop.f32.mrf.mxu0
        %v8936 = vpop.f32.mrf.mxu0
        %v8937 = vadd.f32 %v8635, %v8936
        %v8938 = vpop.f32.mrf.mxu0
        %8939 = vmatprep.mubr.bf16.mxu0 0
        %8940 = vmatmul.mubr.bf16.gmra.mxu0 %v8787
        %v8941 = vpop.f32.mrf.mxu0
        %v8942 = vadd.f32 %v8635, %v8941
        %v8943 = vpop.f32.mrf.mxu0
        %v8944 = vpop.f32.mrf.mxu0
        %v8945 = vadd.f32 %v8635, %v8944
        %v8946 = vpop.f32.mrf.mxu0
        %8947 = vmatprep.mubr.bf16.mxu0 0
        %8948 = vmatmul.mubr.bf16.gmra.mxu0 %v8790
        %v8949 = vpop.f32.mrf.mxu0
        %v8950 = vadd.f32 %v8635, %v8949
        %v8951 = vpop.f32.mrf.mxu0
        %v8952 = vpop.f32.mrf.mxu0
        %v8953 = vadd.f32 %v8635, %v8952
        %v8954 = vpop.f32.mrf.mxu0
        %8955 = vdwg.mxu0
        %v8956 = vmax.f32 %v8830, 0.0
        %v8957 = vmax.f32 %v8833, 0.0
        %v8958 = vmax.f32 %v8838, 0.0
        %v8959 = vmax.f32 %v8841, 0.0
        %v8960 = vmax.f32 %v8846, 0.0
        %v8961 = vmax.f32 %v8849, 0.0
        %v8962 = vmax.f32 %v8854, 0.0
        %v8963 = vmax.f32 %v8857, 0.0
        %v8964 = vmax.f32 %v8862, 0.0
        %v8965 = vmax.f32 %v8865, 0.0
        %v8966 = vmax.f32 %v8870, 0.0
        %v8967 = vmax.f32 %v8873, 0.0
        %v8968 = vmax.f32 %v8878, 0.0
        %v8969 = vmax.f32 %v8881, 0.0
        %v8970 = vmax.f32 %v8886, 0.0
        %v8971 = vmax.f32 %v8889, 0.0
        %v8972 = vmax.f32 %v8894, 0.0
        %v8973 = vmax.f32 %v8897, 0.0
        %v8974 = vmax.f32 %v8902, 0.0
        %v8975 = vmax.f32 %v8905, 0.0
        %v8976 = vmax.f32 %v8910, 0.0
        %v8977 = vmax.f32 %v8913, 0.0
        %v8978 = vmax.f32 %v8918, 0.0
        %v8979 = vmax.f32 %v8921, 0.0
        %v8980 = vmax.f32 %v8926, 0.0
        %v8981 = vmax.f32 %v8929, 0.0
        %v8982 = vmax.f32 %v8934, 0.0
        %v8983 = vmax.f32 %v8937, 0.0
        %v8984 = vmax.f32 %v8942, 0.0
        %v8985 = vmax.f32 %v8945, 0.0
        %v8986 = vmax.f32 %v8950, 0.0
        %v8987 = vmax.f32 %v8953, 0.0
        %8988 = vst [vmem:[%s259] sm:$0xff] %v8956
        %8989 = vst [vmem:[%s259 + $0x8] sm:$0xff] %v8957
        %8990 = vst [vmem:[%s259 + $0x10] sm:$0xff] %v8958
        %8991 = vst [vmem:[%s259 + $0x18] sm:$0xff] %v8959
        %8992 = vst [vmem:[%s259 + $0x20] sm:$0xff] %v8960
        %8993 = vst [vmem:[%s259 + $0x28] sm:$0xff] %v8961
        %8994 = vst [vmem:[%s259 + $0x30] sm:$0xff] %v8962
        %8995 = vst [vmem:[%s259 + $0x38] sm:$0xff] %v8963
        %8996 = vst [vmem:[%s259 + $0x40] sm:$0xff] %v8964
        %8997 = vst [vmem:[%s259 + $0x48] sm:$0xff] %v8965
        %8998 = vst [vmem:[%s259 + $0x50] sm:$0xff] %v8966
        %8999 = vst [vmem:[%s259 + $0x58] sm:$0xff] %v8967
        %9000 = vst [vmem:[%s259 + $0x60] sm:$0xff] %v8968
        %9001 = vst [vmem:[%s259 + $0x68] sm:$0xff] %v8969
        %9002 = vst [vmem:[%s259 + $0x70] sm:$0xff] %v8970
        %9003 = vst [vmem:[%s259 + $0x78] sm:$0xff] %v8971
        %9004 = vst [vmem:[%s259 + $0x80] sm:$0xff] %v8972
        %9005 = vst [vmem:[%s259 + $0x88] sm:$0xff] %v8973
        %9006 = vst [vmem:[%s259 + $0x90] sm:$0xff] %v8974
        %9007 = vst [vmem:[%s259 + $0x98] sm:$0xff] %v8975
        %9008 = vst [vmem:[%s259 + $0xa0] sm:$0xff] %v8976
        %9009 = vst [vmem:[%s259 + $0xa8] sm:$0xff] %v8977
        %9010 = vst [vmem:[%s259 + $0xb0] sm:$0xff] %v8978
        %9011 = vst [vmem:[%s259 + $0xb8] sm:$0xff] %v8979
        %9012 = vst [vmem:[%s259 + $0xc0] sm:$0xff] %v8980
        %9013 = vst [vmem:[%s259 + $0xc8] sm:$0xff] %v8981
        %9014 = vst [vmem:[%s259 + $0xd0] sm:$0xff] %v8982
        %9015 = vst [vmem:[%s259 + $0xd8] sm:$0xff] %v8983
        %9016 = vst [vmem:[%s259 + $0xe0] sm:$0xff] %v8984
        %9017 = vst [vmem:[%s259 + $0xe8] sm:$0xff] %v8985
        %9018 = vst [vmem:[%s259 + $0xf0] sm:$0xff] %v8986
        %9019 = vst [vmem:[%s259 + $0xf8] sm:$0xff] %v8987
        %s9020 = sand.u32 %s164, 1
        %s9021 = scalar_lea.sflag [#allocation7], %s9020
        %s9022 = sand.u32 %s164, 1
        %s9023 = smul.addr %s9022, 256
        %s9024 = scalar_lea.vmem [#allocation6], %s9023
        // Predicated region
        $region45: #{tpu_custom_call.1} parent=43 // pred_check
          %p9025 = pneg %p174
        $region46: #{tpu_custom_call.1} parent=43 // pred_check_branch
          %9027 = sbr.rel (%p9025) target = $region48
        $region47: #{tpu_custom_call.1} parent=43 // pred_region
          %s9029 = ssub.s32 4096, 4096
          %9030 = vsyncadd %s9021, %s9029
          %s9031 = smul.addr %s20, 32
          %s9032 = smul.addr %s9031, 128
          %s9033 = scalar_lea.hbm %s6, %s9032
          %s9034 = sshll.u32 %s9024, 4
          %s9035 = int_to_ptr.vmem [resolvable:$true] %s9034
          %9040 = dma.vmem_to_hbm [thread:$0]  %s9035, 4096, %s9033, %s9021, 128, 128, 8
        $region48: #{tpu_custom_call.1} parent=43 // pred_fallthru
          _
      $region44: #{tpu_custom_call.1} parent=5 // pred_fallthru
        _
      %p9041 = scmp.le.s32.totalorder 2, %s15
      // Predicated region
      $region49: #{tpu_custom_call.1} parent=5 // pred_check
        %p9042 = pneg %p9041
      $region50: #{tpu_custom_call.1} parent=5 // pred_check_branch
        %9044 = sbr.rel (%p9042) target = $region52
      $region51: #{tpu_custom_call.1} parent=5 // pred_region
        %s9045 = ssub.s32 %s15, 2
        // Predicated region
        $region53: #{tpu_custom_call.1} parent=51 // pred_check
          %p9046 = pneg %p180
        $region54: #{tpu_custom_call.1} parent=51 // pred_check_branch
          %9048 = sbr.rel (%p9046) target = $region56
        $region55: #{tpu_custom_call.1} parent=51 // pred_region
          %s9049 = sand.u32 %s165, 1
          %s9050 = scalar_lea.sflag [#allocation7], %s9049
          %s9051 = sand.u32 %s165, 1
          %s9052 = smul.addr %s9051, 256
          %s9053 = scalar_lea.vmem [#allocation6], %s9052
          %9054 = dma.done %s9050, 4096
        $region56: #{tpu_custom_call.1} parent=51 // pred_fallthru
          _
      $region52: #{tpu_custom_call.1} parent=5 // pred_fallthru
        _
    $region6: #{tpu_custom_call.1} parent=1 // loop_footer
      %s19 = sadd.s32 1, %s15
    $region7: #{tpu_custom_call.1} parent=1 // loop_footer_branch
      %14 = sbr.rel target = $region3
    $region8: #{tpu_custom_call.1} parent=1 // loop_exit
      _
    %9055 = vsyncpa [#allocation7], 1
    %s9056 = scalar_lea.sflag [#allocation7], 1
    %9057 = vsyncpa %s9056, 1

</llo_original>
